<compile_context>
chip_gen: v5e
topology: v5e:2x2
jax: 0.10.0
libtpu: 0.0.40
codegen_flags: <defaults>
</compile_context>

<pallas_src>
import functools

import jax
import jax.numpy as jnp
from jax.experimental import pallas as pl
from jax.experimental.pallas import tpu as pltpu

C_PAD = 128                       # lane-dense channel width carried between blocks
_VMEM_LIMIT = 32 * 1024 * 1024    # explicit scoped-VMEM limit (safe on v5e/v6e/v7x)


def _round_up(x, m):
    return ((x + m - 1) // m) * m


# --------------------------------------------------------------------------
# Pallas kernels
# --------------------------------------------------------------------------

def _gemm_bias_kernel(a_ref, w_ref, b_ref, o_ref, *, relu):
    # BN scale already folded into w at init -> epilogue is just bias (+ ReLU).
    acc = jnp.dot(a_ref[...], w_ref[...], preferred_element_type=jnp.float32)
    out = acc + b_ref[...]
    if relu:
        out = jnp.maximum(out, 0.0)
    o_ref[...] = out.astype(o_ref.dtype)


def _gemm_bias_res_kernel(a_ref, w_ref, b_ref, r_ref, o_ref, *, relu):
    acc = jnp.dot(a_ref[...], w_ref[...], preferred_element_type=jnp.float32)
    out = acc + b_ref[...] + r_ref[...].astype(jnp.float32)
    if relu:
        out = jnp.maximum(out, 0.0)
    o_ref[...] = out.astype(o_ref.dtype)


def _maxpool_kernel(p_ref, o_ref):
    # (TM, kvol, 128) -> max over the window axis, reduced directly in bf16 (exact).
    o_ref[...] = jnp.max(p_ref[...], axis=1)


def _head_kernel(x_ref, w1_ref, b1_ref, w2_ref, b2_ref, o_ref, *, inv_s):
    # Fused: global average pool + fc1 + ReLU + (dropout = identity) + fc2.
    feat = jnp.sum(x_ref[...].astype(jnp.float32), axis=1) * inv_s           # (Np, 128)
    h = jnp.dot(feat.astype(jnp.bfloat16), w1_ref[...],
                preferred_element_type=jnp.float32) + b1_ref[...]
    h = jnp.maximum(h, 0.0)
    logits = jnp.dot(h.astype(jnp.bfloat16), w2_ref[...],
                     preferred_element_type=jnp.float32) + b2_ref[...]
    o_ref[...] = logits


# --------------------------------------------------------------------------
# Pallas wrappers
# --------------------------------------------------------------------------

def _row_tiles(M):
    """Pick (Mp, TM): TM is a divisor of Mp (no padded-row inflation); >=2 grid
    steps whenever M >= 16 so a v7x megacore can use both TensorCores."""
    Mp = _round_up(max(M, 8), 8)
    TM = 8
    for cand in (512, 256, 128, 64, 32, 16, 8):
        if Mp % cand == 0:
            TM = cand
            break
    if Mp // TM == 1 and Mp >= 16:
        TM //= 2
    return Mp, TM


def _pad_rows(x, Mp):
    M = x.shape[0]
    if Mp == M:
        return x
    return jnp.pad(x, ((0, Mp - M),) + ((0, 0),) * (x.ndim - 1))


def pallas_gemm(a, w, bias, residual=None, relu=True, out_dtype=jnp.bfloat16):
    """y = act(a @ w + bias [+ residual]); a/w bf16 MXU inputs, f32 epilogue."""
    M, K = a.shape
    N = w.shape[1]
    Mp, TM = _row_tiles(M)
    a_p = _pad_rows(a, Mp)

    in_specs = [
        pl.BlockSpec((TM, K), lambda i: (i, 0)),
        pl.BlockSpec((K, N), lambda i: (0, 0)),
        pl.BlockSpec((1, N), lambda i: (0, 0)),
    ]
    args = [a_p, w, bias]
    if residual is not None:
        in_specs.append(pl.BlockSpec((TM, N), lambda i: (i, 0)))
        args.append(_pad_rows(residual, Mp))
        kernel = functools.partial(_gemm_bias_res_kernel, relu=relu)
    else:
        kernel = functools.partial(_gemm_bias_kernel, relu=relu)

    out = pl.pallas_call(
        kernel,
        out_shape=jax.ShapeDtypeStruct((Mp, N), out_dtype),
        grid=(Mp // TM,),
        in_specs=in_specs,
        out_specs=pl.BlockSpec((TM, N), lambda i: (i, 0)),
        compiler_params=pltpu.CompilerParams(
            dimension_semantics=("parallel",),
            vmem_limit_bytes=_VMEM_LIMIT),
    )(*args)
    return out[:M] if Mp != M else out


def pallas_max_over_window(patches):
    """patches: (M, kvol, 128) bf16 -> (M, 128) max over the window axis."""
    M, KV, C = patches.shape
    Mp, TM = _row_tiles(M)
    p_p = _pad_rows(patches, Mp)
    out = pl.pallas_call(
        _maxpool_kernel,
        out_shape=jax.ShapeDtypeStruct((Mp, C), patches.dtype),
        grid=(Mp // TM,),
        in_specs=[pl.BlockSpec((TM, KV, C), lambda i: (i, 0, 0))],
        out_specs=pl.BlockSpec((TM, C), lambda i: (i, 0)),
        compiler_params=pltpu.CompilerParams(
            dimension_semantics=("parallel",),
            vmem_limit_bytes=_VMEM_LIMIT),
    )(p_p)
    return out[:M] if Mp != M else out


def pallas_head(x3, w1, b1, w2, b2):
    """x3: (N, S, 128) -> fused avgpool + fc1 + ReLU + fc2 -> (N, 128) logits (f32)."""
    N, S, C = x3.shape
    Np = _round_up(max(N, 8), 8)
    x_p = _pad_rows(x3, Np)
    H = w1.shape[1]
    L = w2.shape[1]
    out = pl.pallas_call(
        functools.partial(_head_kernel, inv_s=1.0 / S),
        out_shape=jax.ShapeDtypeStruct((Np, L), jnp.float32),
        grid=(1,),
        in_specs=[
            pl.BlockSpec((Np, S, C), lambda i: (0, 0, 0)),
            pl.BlockSpec((C, H), lambda i: (0, 0)),
            pl.BlockSpec((1, H), lambda i: (0, 0)),
            pl.BlockSpec((H, L), lambda i: (0, 0)),
            pl.BlockSpec((1, L), lambda i: (0, 0)),
        ],
        out_specs=pl.BlockSpec((Np, L), lambda i: (0, 0)),
    )(x_p, w1, b1, w2, b2)
    return out[:N]


# --------------------------------------------------------------------------
# im2col glue (real-Cin patches, one fused concat per conv) + conv / pool / block
# --------------------------------------------------------------------------

def conv_gemm(x, wmat, bias, *, cin, ksize, stride, padding,
              extra_tap=None, residual=None, relu=True):
    """Conv3d (no bias) + folded eval-BN (+ 1x1-downsample K-tap) (+ residual) (+ ReLU).

    Patches use only the `cin` REAL channels of x; the optional downsample input is
    appended as an extra K chunk; a zero chunk pads K up to wmat.shape[0] (mult of 128).
    """
    N, D, H, W, _ = x.shape
    xs = x[..., :cin]
    if padding > 0:
        xs = jnp.pad(xs, ((0, 0), (padding, padding), (padding, padding),
                          (padding, padding), (0, 0)))
    Dp, Hp, Wp = D + 2 * padding, H + 2 * padding, W + 2 * padding
    Do = (Dp - ksize) // stride + 1
    Ho = (Hp - ksize) // stride + 1
    Wo = (Wp - ksize) // stride + 1
    M = N * Do * Ho * Wo

    cols = []
    for dz in range(ksize):
        for dy in range(ksize):
            for dx in range(ksize):
                sl = xs[:, dz:dz + stride * (Do - 1) + 1:stride,
                        dy:dy + stride * (Ho - 1) + 1:stride,
                        dx:dx + stride * (Wo - 1) + 1:stride, :]
                cols.append(sl.reshape(M, cin))
    if extra_tap is not None:
        cols.append(extra_tap.reshape(M, extra_tap.shape[-1]))
    K = sum(c.shape[1] for c in cols)
    Kp = wmat.shape[0]
    if Kp > K:
        cols.append(jnp.zeros((M, Kp - K), xs.dtype))   # fused into the single concat
    a = jnp.concatenate(cols, axis=1)                    # (M, Kp) bf16

    out = pallas_gemm(a, wmat, bias, residual=residual, relu=relu)
    return out.reshape(N, Do, Ho, Wo, wmat.shape[1])


def maxpool3d(x, *, ksize=3, stride=2, padding=1):
    N, D, H, W, C = x.shape
    xp = jnp.pad(x, ((0, 0), (padding, padding), (padding, padding),
                     (padding, padding), (0, 0)), constant_values=-jnp.inf)
    Dp, Hp, Wp = D + 2 * padding, H + 2 * padding, W + 2 * padding
    Do = (Dp - ksize) // stride + 1
    Ho = (Hp - ksize) // stride + 1
    Wo = (Wp - ksize) // stride + 1
    cols = []
    for dz in range(ksize):
        for dy in range(ksize):
            for dx in range(ksize):
                cols.append(xp[:, dz:dz + stride * (Do - 1) + 1:stride,
                               dy:dy + stride * (Ho - 1) + 1:stride,
                               dx:dx + stride * (Wo - 1) + 1:stride, :])
    patches = jnp.stack(cols, axis=-2)                   # (N,Do,Ho,Wo,kvol,C)
    M = N * Do * Ho * Wo
    out = pallas_max_over_window(patches.reshape(M, ksize ** 3, C))
    return out.reshape(N, Do, Ho, Wo, C)


def block3d(x, p):
    """Block3D: conv3-bn-relu -> conv3-bn (+identity / fused 1x1 downsample) -> relu."""
    stride, cin, cout = p['stride'], p['cin'], p['cout']
    out1 = conv_gemm(x, p['w1'], p['b1'], cin=cin, ksize=3, stride=stride, padding=1,
                     relu=True)
    if p['has_ds']:
        # Downsample fused as an extra K chunk of the conv2 GEMM (one MXU pass).
        ds_tap = x[:, ::stride, ::stride, ::stride, :cin]
        out = conv_gemm(out1, p['w2'], p['b2'], cin=cout, ksize=3, stride=1, padding=1,
                        extra_tap=ds_tap, relu=True)
    else:
        res = x.reshape(-1, x.shape[-1])                 # (M, 128), padded cols are 0
        out = conv_gemm(out1, p['w2'], p['b2'], cin=cout, ksize=3, stride=1, padding=1,
                        residual=res, relu=True)
    return out


# --------------------------------------------------------------------------
# Parameter init: BN-scale folded, K/column padded, bf16 — ONCE here
# --------------------------------------------------------------------------

def _conv_w(key, k, cin, cout):
    fan_in = (k ** 3) * cin
    return jax.random.normal(key, (k, k, k, cin, cout), jnp.float32) * (2.0 / fan_in) ** 0.5


def _bn_sb(key, c, eps=1e-5):
    k1, k2 = jax.random.split(key)
    gamma = 1.0 + 0.1 * jax.random.normal(k1, (c,), jnp.float32)
    beta = 0.1 * jax.random.normal(k2, (c,), jnp.float32)
    # eval-mode BN with running_mean=0, running_var=1 -> scale/shift
    return gamma / jnp.sqrt(1.0 + eps), beta


def _fold(w, scale):
    # fold BN scale into the conv weight's output-channel axis
    return w * scale.reshape((1,) * (w.ndim - 1) + (-1,))


def _wmat_cols(w):
    """(k,k,k,cin,cout) f32 -> (K, 128) f32 with cout columns, rest zero."""
    k1, k2, k3, cin, cout = w.shape
    K = k1 * k2 * k3 * cin
    return jnp.zeros((K, C_PAD), jnp.float32).at[:, :cout].set(w.reshape(K, cout))


def _bias_row(shift):
    c = shift.shape[0]
    return jnp.zeros((1, C_PAD), jnp.float32).at[0, :c].set(shift)


def _pad_k(wm, Kp):
    K = wm.shape[0]
    if Kp > K:
        wm = jnp.pad(wm, ((0, Kp - K), (0, 0)))
    return wm.astype(jnp.bfloat16)


def _block_params(key, cin, cout, stride):
    ks = jax.random.split(key, 6)
    s1, b1 = _bn_sb(ks[2], cout)
    s2, b2 = _bn_sb(ks[3], cout)
    p = {'cin': cin, 'cout': cout, 'stride': stride}

    w1 = _fold(_conv_w(ks[0], 3, cin, cout), s1)
    p['w1'] = _pad_k(_wmat_cols(w1), _round_up(27 * cin, 128))
    p['b1'] = _bias_row(b1)

    w2 = _fold(_conv_w(ks[1], 3, cout, cout), s2)
    if stride != 1 or cin != cout:
        sd, bd = _bn_sb(ks[5], cout)
        wd = _fold(_conv_w(ks[4], 1, cin, cout), sd)
        wm = jnp.concatenate([_wmat_cols(w2), _wmat_cols(wd)], axis=0)   # K-concat tail
        p['w2'] = _pad_k(wm, _round_up(27 * cout + cin, 128))
        p['b2'] = _bias_row(b2) + _bias_row(bd)
        p['has_ds'] = True
    else:
        p['w2'] = _pad_k(_wmat_cols(w2), _round_up(27 * cout, 128))
        p['b2'] = _bias_row(b2)
        p['has_ds'] = False
    return p


def init_params(key, num_labels, stem_c=8, hidden=32):
    keys = jax.random.split(key, 16)
    params = {}

    # stem: conv7 s2 p3, Cin=1 -> K = 343 -> padded to 384
    s0, b0 = _bn_sb(keys[1], stem_c)
    w0 = _fold(_conv_w(keys[0], 7, 1, stem_c), s0)
    params['w1'] = _pad_k(_wmat_cols(w0), _round_up(343, 128))
    params['b1'] = _bias_row(b0)

    # (cin, cout, stride) per block; consistent scaled-down channel plan
    layer_cfg = [
        [(stem_c, 8, 1), (8, 8, 1)],   # layer1
        [(8, 16, 2)],                  # layer2
        [(16, 32, 2)],                 # layer3
        [(32, 64, 2)],                 # layer4
    ]
    layers = []
    ki = 2
    for cfg in layer_cfg:
        blocks = []
        for (cin, cout, s_) in cfg:
            blocks.append(_block_params(keys[ki], cin, cout, s_))
            ki += 1
        layers.append(blocks)
    params['layers'] = layers

    # fc head (dropout = identity), lane-dense padded once here.
    feat_c = 64
    hid_p = _round_up(hidden, 128)
    lab_p = _round_up(num_labels, 128)
    fc1 = jax.random.normal(keys[ki], (feat_c, hidden), jnp.float32) * (2.0 / feat_c) ** 0.5
    ki += 1
    fc1_b = 0.01 * jnp.arange(hidden, dtype=jnp.float32)
    fc2 = jax.random.normal(keys[ki], (hidden, num_labels), jnp.float32) * (2.0 / hidden) ** 0.5
    ki += 1
    fc2_b = 0.01 * jnp.arange(num_labels, dtype=jnp.float32)
    params['fc1_w'] = jnp.zeros((C_PAD, hid_p), jnp.float32).at[:feat_c, :hidden].set(fc1).astype(jnp.bfloat16)
    params['fc1_b'] = jnp.zeros((1, hid_p), jnp.float32).at[0, :hidden].set(fc1_b)
    params['fc2_w'] = jnp.zeros((hid_p, lab_p), jnp.float32).at[:hidden, :num_labels].set(fc2).astype(jnp.bfloat16)
    params['fc2_b'] = jnp.zeros((1, lab_p), jnp.float32).at[0, :num_labels].set(fc2_b)
    params['num_labels'] = num_labels
    return params


# --------------------------------------------------------------------------
# Forward pass
# --------------------------------------------------------------------------

def cnn3d_forward(x_ncdhw, params):
    """x_ncdhw: (N, 1, D, H, W) float32 -> logits (N, num_labels)."""
    num_labels = params['num_labels']
    # NCDHW -> channels-last bf16 (MXU-native inputs; epilogues stay f32)
    x = jnp.transpose(x_ncdhw, (0, 2, 3, 4, 1)).astype(jnp.bfloat16)
    # stem: conv7 s2 p3 -> BN(folded) -> ReLU  (K = 343 real, padded to 384)
    x = conv_gemm(x, params['w1'], params['b1'], cin=1, ksize=7, stride=2, padding=3,
                  relu=True)
    # maxpool k3 s2 p1 on the lane-dense activation (bf16 reduce)
    x = maxpool3d(x, ksize=3, stride=2, padding=1)
    # residual stages
    for layer in params['layers']:
        for blk in layer:
            x = block3d(x, blk)
    # fused global avgpool + fc1 + ReLU + Dropout(identity) + fc2
    N, D, H, W, C = x.shape
    logits = pallas_head(x.reshape(N, D * H * W, C),
                         params['fc1_w'], params['fc1_b'],
                         params['fc2_w'], params['fc2_b'])
    return logits[:, :num_labels]


if __name__ == "__main__":
    key = jax.random.PRNGKey(0)
    kp, kx = jax.random.split(key)
    num_labels = 5
    params = init_params(kp, num_labels)
    # Small input consistent with the module: single-channel 3D volume, NCDHW.
    x = jax.random.normal(kx, (2, 1, 16, 16, 16), jnp.float32)
    fwd = jax.jit(lambda xx: cnn3d_forward(xx, params))
    out = jax.block_until_ready(fwd(x))
    assert out.shape == (2, num_labels)
    assert bool(jnp.all(jnp.isfinite(out)))
    print("KERNEL_OK")
</pallas_src>

<mosaic_0001>
module attributes {stable_mosaic.version = 11 : i64} {
  func.func @_gemm_bias_kernel(%arg0: i32, %arg1: memref<512x384xbf16, #tpu.memory_space<vmem>>, %arg2: memref<384x128xbf16, #tpu.memory_space<vmem>>, %arg3: memref<1x128xf32, #tpu.memory_space<vmem>>, %arg4: memref<512x128xbf16, #tpu.memory_space<vmem>>) attributes {dimension_semantics = [#tpu.dimension_semantics<parallel>], iteration_bounds = array<i64: 2>, scalar_prefetch = 0 : i64, scratch_operands = 0 : i64, tpu.core_type = #tpu.core_type<tc>, window_params = [{transform_indices = @transform_0, window_bounds = array<i64: 512, 384>}, {pipeline_mode = #tpu.pipeline_mode<synchronous>, transform_indices = @transform_1, window_bounds = array<i64: 384, 128>}, {pipeline_mode = #tpu.pipeline_mode<synchronous>, transform_indices = @transform_2, window_bounds = array<i64: 1, 128>}, {transform_indices = @transform_3, window_bounds = array<i64: 512, 128>}]} {
    %c0 = arith.constant 0 : index
    %c0_0 = arith.constant 0 : index
    %0 = vector.load %arg1[%c0, %c0_0] : memref<512x384xbf16, #tpu.memory_space<vmem>>, vector<512x384xbf16>
    %c0_1 = arith.constant 0 : index
    %c0_2 = arith.constant 0 : index
    %1 = vector.load %arg2[%c0_1, %c0_2] : memref<384x128xbf16, #tpu.memory_space<vmem>>, vector<384x128xbf16>
    %cst = arith.constant dense<0.000000e+00> : vector<512x128xf32>
    %2 = tpu.matmul %0, %1, %cst {dimension_numbers = #tpu.dot_dimension_numbers<[1], [0], [0], [1], [0, 0, 1, 1], [], []>} : vector<512x384xbf16>, vector<384x128xbf16>, vector<512x128xf32> -> vector<512x128xf32>
    %c0_3 = arith.constant 0 : index
    %c0_4 = arith.constant 0 : index
    %3 = vector.load %arg3[%c0_3, %c0_4] : memref<1x128xf32, #tpu.memory_space<vmem>>, vector<1x128xf32>
    %4 = vector.broadcast %3 : vector<1x128xf32> to vector<512x128xf32>
    %5 = arith.addf %2, %4 : vector<512x128xf32>
    %cst_5 = arith.constant 0.000000e+00 : f32
    %6 = vector.broadcast %cst_5 : f32 to vector<512x128xf32>
    %7 = arith.maximumf %5, %6 : vector<512x128xf32>
    %8 = arith.truncf %7 : vector<512x128xf32> to vector<512x128xbf16>
    %c0_6 = arith.constant 0 : index
    %c0_7 = arith.constant 0 : index
    %9 = vector.load %arg4[%c0_6, %c0_7] : memref<512x128xbf16, #tpu.memory_space<vmem>>, vector<512x128xbf16>
    tpu.vector_store %arg4[%c0_6, %c0_7], %8 {strides = array<i32>} : memref<512x128xbf16, #tpu.memory_space<vmem>>, vector<512x128xbf16>,
    return
  }
  func.func @transform_0(%arg0: i32) -> (i32, i32) {
    %c0_i32 = arith.constant 0 : i32
    %c0_i32_0 = arith.constant 0 : i32
    return %arg0, %c0_i32 : i32, i32
  }
  func.func @transform_1(%arg0: i32) -> (i32, i32) {
    %c0_i32 = arith.constant 0 : i32
    %c0_i32_0 = arith.constant 0 : i32
    %c0_i32_1 = arith.constant 0 : i32
    return %c0_i32, %c0_i32_0 : i32, i32
  }
  func.func @transform_2(%arg0: i32) -> (i32, i32) {
    %c0_i32 = arith.constant 0 : i32
    %c0_i32_0 = arith.constant 0 : i32
    %c0_i32_1 = arith.constant 0 : i32
    return %c0_i32, %c0_i32_0 : i32, i32
  }
  func.func @transform_3(%arg0: i32) -> (i32, i32) {
    %c0_i32 = arith.constant 0 : i32
    %c0_i32_0 = arith.constant 0 : i32
    return %arg0, %c0_i32 : i32, i32
  }
}

module attributes {stable_mosaic.version = 11 : i64} {
  func.func @_maxpool_kernel(%arg0: i32, %arg1: memref<64x27x128xbf16, #tpu.memory_space<vmem>>, %arg2: memref<64x128xbf16, #tpu.memory_space<vmem>>) attributes {dimension_semantics = [#tpu.dimension_semantics<parallel>], iteration_bounds = array<i64: 2>, scalar_prefetch = 0 : i64, scratch_operands = 0 : i64, tpu.core_type = #tpu.core_type<tc>, window_params = [{transform_indices = @transform_0, window_bounds = array<i64: 64, 27, 128>}, {transform_indices = @transform_1, window_bounds = array<i64: 64, 128>}]} {
    %c0 = arith.constant 0 : index
    %c0_0 = arith.constant 0 : index
    %c0_1 = arith.constant 0 : index
    %0 = vector.load %arg1[%c0, %c0_0, %c0_1] : memref<64x27x128xbf16, #tpu.memory_space<vmem>>, vector<64x27x128xbf16>
    %cst = arith.constant dense<0xFF80> : vector<64x128xbf16>
    %1 = vector.multi_reduction <maximumf>, %0, %cst [1] : vector<64x27x128xbf16> to vector<64x128xbf16>
    %c0_2 = arith.constant 0 : index
    %c0_3 = arith.constant 0 : index
    %2 = vector.load %arg2[%c0_2, %c0_3] : memref<64x128xbf16, #tpu.memory_space<vmem>>, vector<64x128xbf16>
    tpu.vector_store %arg2[%c0_2, %c0_3], %1 {strides = array<i32>} : memref<64x128xbf16, #tpu.memory_space<vmem>>, vector<64x128xbf16>,
    return
  }
  func.func @transform_0(%arg0: i32) -> (i32, i32, i32) {
    %c0_i32 = arith.constant 0 : i32
    %c0_i32_0 = arith.constant 0 : i32
    %c0_i32_1 = arith.constant 0 : i32
    return %arg0, %c0_i32, %c0_i32_0 : i32, i32, i32
  }
  func.func @transform_1(%arg0: i32) -> (i32, i32) {
    %c0_i32 = arith.constant 0 : i32
    %c0_i32_0 = arith.constant 0 : i32
    return %arg0, %c0_i32 : i32, i32
  }
}

module attributes {stable_mosaic.version = 11 : i64} {
  func.func @_gemm_bias_kernel(%arg0: i32, %arg1: memref<64x256xbf16, #tpu.memory_space<vmem>>, %arg2: memref<256x128xbf16, #tpu.memory_space<vmem>>, %arg3: memref<1x128xf32, #tpu.memory_space<vmem>>, %arg4: memref<64x128xbf16, #tpu.memory_space<vmem>>) attributes {dimension_semantics = [#tpu.dimension_semantics<parallel>], iteration_bounds = array<i64: 2>, scalar_prefetch = 0 : i64, scratch_operands = 0 : i64, tpu.core_type = #tpu.core_type<tc>, window_params = [{transform_indices = @transform_0, window_bounds = array<i64: 64, 256>}, {pipeline_mode = #tpu.pipeline_mode<synchronous>, transform_indices = @transform_1, window_bounds = array<i64: 256, 128>}, {pipeline_mode = #tpu.pipeline_mode<synchronous>, transform_indices = @transform_2, window_bounds = array<i64: 1, 128>}, {transform_indices = @transform_3, window_bounds = array<i64: 64, 128>}]} {
    %c0 = arith.constant 0 : index
    %c0_0 = arith.constant 0 : index
    %0 = vector.load %arg1[%c0, %c0_0] : memref<64x256xbf16, #tpu.memory_space<vmem>>, vector<64x256xbf16>
    %c0_1 = arith.constant 0 : index
    %c0_2 = arith.constant 0 : index
    %1 = vector.load %arg2[%c0_1, %c0_2] : memref<256x128xbf16, #tpu.memory_space<vmem>>, vector<256x128xbf16>
    %cst = arith.constant dense<0.000000e+00> : vector<64x128xf32>
    %2 = tpu.matmul %0, %1, %cst {dimension_numbers = #tpu.dot_dimension_numbers<[1], [0], [0], [1], [0, 0, 1, 1], [], []>} : vector<64x256xbf16>, vector<256x128xbf16>, vector<64x128xf32> -> vector<64x128xf32>
    %c0_3 = arith.constant 0 : index
    %c0_4 = arith.constant 0 : index
    %3 = vector.load %arg3[%c0_3, %c0_4] : memref<1x128xf32, #tpu.memory_space<vmem>>, vector<1x128xf32>
    %4 = vector.broadcast %3 : vector<1x128xf32> to vector<64x128xf32>
    %5 = arith.addf %2, %4 : vector<64x128xf32>
    %cst_5 = arith.constant 0.000000e+00 : f32
    %6 = vector.broadcast %cst_5 : f32 to vector<64x128xf32>
    %7 = arith.maximumf %5, %6 : vector<64x128xf32>
    %8 = arith.truncf %7 : vector<64x128xf32> to vector<64x128xbf16>
    %c0_6 = arith.constant 0 : index
    %c0_7 = arith.constant 0 : index
    %9 = vector.load %arg4[%c0_6, %c0_7] : memref<64x128xbf16, #tpu.memory_space<vmem>>, vector<64x128xbf16>
    tpu.vector_store %arg4[%c0_6, %c0_7], %8 {strides = array<i32>} : memref<64x128xbf16, #tpu.memory_space<vmem>>, vector<64x128xbf16>,
    return
  }
  func.func @transform_0(%arg0: i32) -> (i32, i32) {
    %c0_i32 = arith.constant 0 : i32
    %c0_i32_0 = arith.constant 0 : i32
    return %arg0, %c0_i32 : i32, i32
  }
  func.func @transform_1(%arg0: i32) -> (i32, i32) {
    %c0_i32 = arith.constant 0 : i32
    %c0_i32_0 = arith.constant 0 : i32
    %c0_i32_1 = arith.constant 0 : i32
    return %c0_i32, %c0_i32_0 : i32, i32
  }
  func.func @transform_2(%arg0: i32) -> (i32, i32) {
    %c0_i32 = arith.constant 0 : i32
    %c0_i32_0 = arith.constant 0 : i32
    %c0_i32_1 = arith.constant 0 : i32
    return %c0_i32, %c0_i32_0 : i32, i32
  }
  func.func @transform_3(%arg0: i32) -> (i32, i32) {
    %c0_i32 = arith.constant 0 : i32
    %c0_i32_0 = arith.constant 0 : i32
    return %arg0, %c0_i32 : i32, i32
  }
}

module attributes {stable_mosaic.version = 11 : i64} {
  func.func @_gemm_bias_res_kernel(%arg0: i32, %arg1: memref<64x256xbf16, #tpu.memory_space<vmem>>, %arg2: memref<256x128xbf16, #tpu.memory_space<vmem>>, %arg3: memref<1x128xf32, #tpu.memory_space<vmem>>, %arg4: memref<64x128xbf16, #tpu.memory_space<vmem>>, %arg5: memref<64x128xbf16, #tpu.memory_space<vmem>>) attributes {dimension_semantics = [#tpu.dimension_semantics<parallel>], iteration_bounds = array<i64: 2>, scalar_prefetch = 0 : i64, scratch_operands = 0 : i64, tpu.core_type = #tpu.core_type<tc>, window_params = [{transform_indices = @transform_0, window_bounds = array<i64: 64, 256>}, {pipeline_mode = #tpu.pipeline_mode<synchronous>, transform_indices = @transform_1, window_bounds = array<i64: 256, 128>}, {pipeline_mode = #tpu.pipeline_mode<synchronous>, transform_indices = @transform_2, window_bounds = array<i64: 1, 128>}, {transform_indices = @transform_3, window_bounds = array<i64: 64, 128>}, {transform_indices = @transform_4, window_bounds = array<i64: 64, 128>}]} {
    %c0 = arith.constant 0 : index
    %c0_0 = arith.constant 0 : index
    %0 = vector.load %arg1[%c0, %c0_0] : memref<64x256xbf16, #tpu.memory_space<vmem>>, vector<64x256xbf16>
    %c0_1 = arith.constant 0 : index
    %c0_2 = arith.constant 0 : index
    %1 = vector.load %arg2[%c0_1, %c0_2] : memref<256x128xbf16, #tpu.memory_space<vmem>>, vector<256x128xbf16>
    %cst = arith.constant dense<0.000000e+00> : vector<64x128xf32>
    %2 = tpu.matmul %0, %1, %cst {dimension_numbers = #tpu.dot_dimension_numbers<[1], [0], [0], [1], [0, 0, 1, 1], [], []>} : vector<64x256xbf16>, vector<256x128xbf16>, vector<64x128xf32> -> vector<64x128xf32>
    %c0_3 = arith.constant 0 : index
    %c0_4 = arith.constant 0 : index
    %3 = vector.load %arg3[%c0_3, %c0_4] : memref<1x128xf32, #tpu.memory_space<vmem>>, vector<1x128xf32>
    %4 = vector.broadcast %3 : vector<1x128xf32> to vector<64x128xf32>
    %5 = arith.addf %2, %4 : vector<64x128xf32>
    %c0_5 = arith.constant 0 : index
    %c0_6 = arith.constant 0 : index
    %6 = vector.load %arg4[%c0_5, %c0_6] : memref<64x128xbf16, #tpu.memory_space<vmem>>, vector<64x128xbf16>
    %7 = arith.extf %6 : vector<64x128xbf16> to vector<64x128xf32>
    %8 = arith.addf %5, %7 : vector<64x128xf32>
    %cst_7 = arith.constant 0.000000e+00 : f32
    %9 = vector.broadcast %cst_7 : f32 to vector<64x128xf32>
    %10 = arith.maximumf %8, %9 : vector<64x128xf32>
    %11 = arith.truncf %10 : vector<64x128xf32> to vector<64x128xbf16>
    %c0_8 = arith.constant 0 : index
    %c0_9 = arith.constant 0 : index
    %12 = vector.load %arg5[%c0_8, %c0_9] : memref<64x128xbf16, #tpu.memory_space<vmem>>, vector<64x128xbf16>
    tpu.vector_store %arg5[%c0_8, %c0_9], %11 {strides = array<i32>} : memref<64x128xbf16, #tpu.memory_space<vmem>>, vector<64x128xbf16>,
    return
  }
  func.func @transform_0(%arg0: i32) -> (i32, i32) {
    %c0_i32 = arith.constant 0 : i32
    %c0_i32_0 = arith.constant 0 : i32
    return %arg0, %c0_i32 : i32, i32
  }
  func.func @transform_1(%arg0: i32) -> (i32, i32) {
    %c0_i32 = arith.constant 0 : i32
    %c0_i32_0 = arith.constant 0 : i32
    %c0_i32_1 = arith.constant 0 : i32
    return %c0_i32, %c0_i32_0 : i32, i32
  }
  func.func @transform_2(%arg0: i32) -> (i32, i32) {
    %c0_i32 = arith.constant 0 : i32
    %c0_i32_0 = arith.constant 0 : i32
    %c0_i32_1 = arith.constant 0 : i32
    return %c0_i32, %c0_i32_0 : i32, i32
  }
  func.func @transform_3(%arg0: i32) -> (i32, i32) {
    %c0_i32 = arith.constant 0 : i32
    %c0_i32_0 = arith.constant 0 : i32
    return %arg0, %c0_i32 : i32, i32
  }
  func.func @transform_4(%arg0: i32) -> (i32, i32) {
    %c0_i32 = arith.constant 0 : i32
    %c0_i32_0 = arith.constant 0 : i32
    return %arg0, %c0_i32 : i32, i32
  }
}

module attributes {stable_mosaic.version = 11 : i64} {
  func.func @_gemm_bias_kernel(%arg0: i32, %arg1: memref<8x256xbf16, #tpu.memory_space<vmem>>, %arg2: memref<256x128xbf16, #tpu.memory_space<vmem>>, %arg3: memref<1x128xf32, #tpu.memory_space<vmem>>, %arg4: memref<8x128xbf16, #tpu.memory_space<vmem>>) attributes {dimension_semantics = [#tpu.dimension_semantics<parallel>], iteration_bounds = array<i64: 2>, scalar_prefetch = 0 : i64, scratch_operands = 0 : i64, tpu.core_type = #tpu.core_type<tc>, window_params = [{transform_indices = @transform_0, window_bounds = array<i64: 8, 256>}, {pipeline_mode = #tpu.pipeline_mode<synchronous>, transform_indices = @transform_1, window_bounds = array<i64: 256, 128>}, {pipeline_mode = #tpu.pipeline_mode<synchronous>, transform_indices = @transform_2, window_bounds = array<i64: 1, 128>}, {transform_indices = @transform_3, window_bounds = array<i64: 8, 128>}]} {
    %c0 = arith.constant 0 : index
    %c0_0 = arith.constant 0 : index
    %0 = vector.load %arg1[%c0, %c0_0] : memref<8x256xbf16, #tpu.memory_space<vmem>>, vector<8x256xbf16>
    %c0_1 = arith.constant 0 : index
    %c0_2 = arith.constant 0 : index
    %1 = vector.load %arg2[%c0_1, %c0_2] : memref<256x128xbf16, #tpu.memory_space<vmem>>, vector<256x128xbf16>
    %cst = arith.constant dense<0.000000e+00> : vector<8x128xf32>
    %2 = tpu.matmul %0, %1, %cst {dimension_numbers = #tpu.dot_dimension_numbers<[1], [0], [0], [1], [0, 0, 1, 1], [], []>} : vector<8x256xbf16>, vector<256x128xbf16>, vector<8x128xf32> -> vector<8x128xf32>
    %c0_3 = arith.constant 0 : index
    %c0_4 = arith.constant 0 : index
    %3 = vector.load %arg3[%c0_3, %c0_4] : memref<1x128xf32, #tpu.memory_space<vmem>>, vector<1x128xf32>
    %4 = vector.broadcast %3 : vector<1x128xf32> to vector<8x128xf32>
    %5 = arith.addf %2, %4 : vector<8x128xf32>
    %cst_5 = arith.constant 0.000000e+00 : f32
    %6 = vector.broadcast %cst_5 : f32 to vector<8x128xf32>
    %7 = arith.maximumf %5, %6 : vector<8x128xf32>
    %8 = arith.truncf %7 : vector<8x128xf32> to vector<8x128xbf16>
    %c0_6 = arith.constant 0 : index
    %c0_7 = arith.constant 0 : index
    %9 = vector.load %arg4[%c0_6, %c0_7] : memref<8x128xbf16, #tpu.memory_space<vmem>>, vector<8x128xbf16>
    tpu.vector_store %arg4[%c0_6, %c0_7], %8 {strides = array<i32>} : memref<8x128xbf16, #tpu.memory_space<vmem>>, vector<8x128xbf16>,
    return
  }
  func.func @transform_0(%arg0: i32) -> (i32, i32) {
    %c0_i32 = arith.constant 0 : i32
    %c0_i32_0 = arith.constant 0 : i32
    return %arg0, %c0_i32 : i32, i32
  }
  func.func @transform_1(%arg0: i32) -> (i32, i32) {
    %c0_i32 = arith.constant 0 : i32
    %c0_i32_0 = arith.constant 0 : i32
    %c0_i32_1 = arith.constant 0 : i32
    return %c0_i32, %c0_i32_0 : i32, i32
  }
  func.func @transform_2(%arg0: i32) -> (i32, i32) {
    %c0_i32 = arith.constant 0 : i32
    %c0_i32_0 = arith.constant 0 : i32
    %c0_i32_1 = arith.constant 0 : i32
    return %c0_i32, %c0_i32_0 : i32, i32
  }
  func.func @transform_3(%arg0: i32) -> (i32, i32) {
    %c0_i32 = arith.constant 0 : i32
    %c0_i32_0 = arith.constant 0 : i32
    return %arg0, %c0_i32 : i32, i32
  }
}

module attributes {stable_mosaic.version = 11 : i64} {
  func.func @_gemm_bias_kernel(%arg0: i32, %arg1: memref<8x512xbf16, #tpu.memory_space<vmem>>, %arg2: memref<512x128xbf16, #tpu.memory_space<vmem>>, %arg3: memref<1x128xf32, #tpu.memory_space<vmem>>, %arg4: memref<8x128xbf16, #tpu.memory_space<vmem>>) attributes {dimension_semantics = [#tpu.dimension_semantics<parallel>], iteration_bounds = array<i64: 2>, scalar_prefetch = 0 : i64, scratch_operands = 0 : i64, tpu.core_type = #tpu.core_type<tc>, window_params = [{transform_indices = @transform_0, window_bounds = array<i64: 8, 512>}, {pipeline_mode = #tpu.pipeline_mode<synchronous>, transform_indices = @transform_1, window_bounds = array<i64: 512, 128>}, {pipeline_mode = #tpu.pipeline_mode<synchronous>, transform_indices = @transform_2, window_bounds = array<i64: 1, 128>}, {transform_indices = @transform_3, window_bounds = array<i64: 8, 128>}]} {
    %c0 = arith.constant 0 : index
    %c0_0 = arith.constant 0 : index
    %0 = vector.load %arg1[%c0, %c0_0] : memref<8x512xbf16, #tpu.memory_space<vmem>>, vector<8x512xbf16>
    %c0_1 = arith.constant 0 : index
    %c0_2 = arith.constant 0 : index
    %1 = vector.load %arg2[%c0_1, %c0_2] : memref<512x128xbf16, #tpu.memory_space<vmem>>, vector<512x128xbf16>
    %cst = arith.constant dense<0.000000e+00> : vector<8x128xf32>
    %2 = tpu.matmul %0, %1, %cst {dimension_numbers = #tpu.dot_dimension_numbers<[1], [0], [0], [1], [0, 0, 1, 1], [], []>} : vector<8x512xbf16>, vector<512x128xbf16>, vector<8x128xf32> -> vector<8x128xf32>
    %c0_3 = arith.constant 0 : index
    %c0_4 = arith.constant 0 : index
    %3 = vector.load %arg3[%c0_3, %c0_4] : memref<1x128xf32, #tpu.memory_space<vmem>>, vector<1x128xf32>
    %4 = vector.broadcast %3 : vector<1x128xf32> to vector<8x128xf32>
    %5 = arith.addf %2, %4 : vector<8x128xf32>
    %cst_5 = arith.constant 0.000000e+00 : f32
    %6 = vector.broadcast %cst_5 : f32 to vector<8x128xf32>
    %7 = arith.maximumf %5, %6 : vector<8x128xf32>
    %8 = arith.truncf %7 : vector<8x128xf32> to vector<8x128xbf16>
    %c0_6 = arith.constant 0 : index
    %c0_7 = arith.constant 0 : index
    %9 = vector.load %arg4[%c0_6, %c0_7] : memref<8x128xbf16, #tpu.memory_space<vmem>>, vector<8x128xbf16>
    tpu.vector_store %arg4[%c0_6, %c0_7], %8 {strides = array<i32>} : memref<8x128xbf16, #tpu.memory_space<vmem>>, vector<8x128xbf16>,
    return
  }
  func.func @transform_0(%arg0: i32) -> (i32, i32) {
    %c0_i32 = arith.constant 0 : i32
    %c0_i32_0 = arith.constant 0 : i32
    return %arg0, %c0_i32 : i32, i32
  }
  func.func @transform_1(%arg0: i32) -> (i32, i32) {
    %c0_i32 = arith.constant 0 : i32
    %c0_i32_0 = arith.constant 0 : i32
    %c0_i32_1 = arith.constant 0 : i32
    return %c0_i32, %c0_i32_0 : i32, i32
  }
  func.func @transform_2(%arg0: i32) -> (i32, i32) {
    %c0_i32 = arith.constant 0 : i32
    %c0_i32_0 = arith.constant 0 : i32
    %c0_i32_1 = arith.constant 0 : i32
    return %c0_i32, %c0_i32_0 : i32, i32
  }
  func.func @transform_3(%arg0: i32) -> (i32, i32) {
    %c0_i32 = arith.constant 0 : i32
    %c0_i32_0 = arith.constant 0 : i32
    return %arg0, %c0_i32 : i32, i32
  }
}

module attributes {stable_mosaic.version = 11 : i64} {
  func.func @_gemm_bias_kernel(%arg0: i32, %arg1: memref<8x512xbf16, #tpu.memory_space<vmem>>, %arg2: memref<512x128xbf16, #tpu.memory_space<vmem>>, %arg3: memref<1x128xf32, #tpu.memory_space<vmem>>, %arg4: memref<8x128xbf16, #tpu.memory_space<vmem>>) attributes {dimension_semantics = [#tpu.dimension_semantics<parallel>], iteration_bounds = array<i64: 1>, scalar_prefetch = 0 : i64, scratch_operands = 0 : i64, tpu.core_type = #tpu.core_type<tc>, window_params = [{transform_indices = @transform_0, window_bounds = array<i64: 8, 512>}, {pipeline_mode = #tpu.pipeline_mode<synchronous>, transform_indices = @transform_1, window_bounds = array<i64: 512, 128>}, {pipeline_mode = #tpu.pipeline_mode<synchronous>, transform_indices = @transform_2, window_bounds = array<i64: 1, 128>}, {transform_indices = @transform_3, window_bounds = array<i64: 8, 128>}]} {
    %c0 = arith.constant 0 : index
    %c0_0 = arith.constant 0 : index
    %0 = vector.load %arg1[%c0, %c0_0] : memref<8x512xbf16, #tpu.memory_space<vmem>>, vector<8x512xbf16>
    %c0_1 = arith.constant 0 : index
    %c0_2 = arith.constant 0 : index
    %1 = vector.load %arg2[%c0_1, %c0_2] : memref<512x128xbf16, #tpu.memory_space<vmem>>, vector<512x128xbf16>
    %cst = arith.constant dense<0.000000e+00> : vector<8x128xf32>
    %2 = tpu.matmul %0, %1, %cst {dimension_numbers = #tpu.dot_dimension_numbers<[1], [0], [0], [1], [0, 0, 1, 1], [], []>} : vector<8x512xbf16>, vector<512x128xbf16>, vector<8x128xf32> -> vector<8x128xf32>
    %c0_3 = arith.constant 0 : index
    %c0_4 = arith.constant 0 : index
    %3 = vector.load %arg3[%c0_3, %c0_4] : memref<1x128xf32, #tpu.memory_space<vmem>>, vector<1x128xf32>
    %4 = vector.broadcast %3 : vector<1x128xf32> to vector<8x128xf32>
    %5 = arith.addf %2, %4 : vector<8x128xf32>
    %cst_5 = arith.constant 0.000000e+00 : f32
    %6 = vector.broadcast %cst_5 : f32 to vector<8x128xf32>
    %7 = arith.maximumf %5, %6 : vector<8x128xf32>
    %8 = arith.truncf %7 : vector<8x128xf32> to vector<8x128xbf16>
    %c0_6 = arith.constant 0 : index
    %c0_7 = arith.constant 0 : index
    %9 = vector.load %arg4[%c0_6, %c0_7] : memref<8x128xbf16, #tpu.memory_space<vmem>>, vector<8x128xbf16>
    tpu.vector_store %arg4[%c0_6, %c0_7], %8 {strides = array<i32>} : memref<8x128xbf16, #tpu.memory_space<vmem>>, vector<8x128xbf16>,
    return
  }
  func.func @transform_0(%arg0: i32) -> (i32, i32) {
    %c0_i32 = arith.constant 0 : i32
    %c0_i32_0 = arith.constant 0 : i32
    return %arg0, %c0_i32 : i32, i32
  }
  func.func @transform_1(%arg0: i32) -> (i32, i32) {
    %c0_i32 = arith.constant 0 : i32
    %c0_i32_0 = arith.constant 0 : i32
    %c0_i32_1 = arith.constant 0 : i32
    return %c0_i32, %c0_i32_0 : i32, i32
  }
  func.func @transform_2(%arg0: i32) -> (i32, i32) {
    %c0_i32 = arith.constant 0 : i32
    %c0_i32_0 = arith.constant 0 : i32
    %c0_i32_1 = arith.constant 0 : i32
    return %c0_i32, %c0_i32_0 : i32, i32
  }
  func.func @transform_3(%arg0: i32) -> (i32, i32) {
    %c0_i32 = arith.constant 0 : i32
    %c0_i32_0 = arith.constant 0 : i32
    return %arg0, %c0_i32 : i32, i32
  }
}

module attributes {stable_mosaic.version = 11 : i64} {
  func.func @_gemm_bias_kernel(%arg0: i32, %arg1: memref<8x896xbf16, #tpu.memory_space<vmem>>, %arg2: memref<896x128xbf16, #tpu.memory_space<vmem>>, %arg3: memref<1x128xf32, #tpu.memory_space<vmem>>, %arg4: memref<8x128xbf16, #tpu.memory_space<vmem>>) attributes {dimension_semantics = [#tpu.dimension_semantics<parallel>], iteration_bounds = array<i64: 1>, scalar_prefetch = 0 : i64, scratch_operands = 0 : i64, tpu.core_type = #tpu.core_type<tc>, window_params = [{transform_indices = @transform_0, window_bounds = array<i64: 8, 896>}, {pipeline_mode = #tpu.pipeline_mode<synchronous>, transform_indices = @transform_1, window_bounds = array<i64: 896, 128>}, {pipeline_mode = #tpu.pipeline_mode<synchronous>, transform_indices = @transform_2, window_bounds = array<i64: 1, 128>}, {transform_indices = @transform_3, window_bounds = array<i64: 8, 128>}]} {
    %c0 = arith.constant 0 : index
    %c0_0 = arith.constant 0 : index
    %0 = vector.load %arg1[%c0, %c0_0] : memref<8x896xbf16, #tpu.memory_space<vmem>>, vector<8x896xbf16>
    %c0_1 = arith.constant 0 : index
    %c0_2 = arith.constant 0 : index
    %1 = vector.load %arg2[%c0_1, %c0_2] : memref<896x128xbf16, #tpu.memory_space<vmem>>, vector<896x128xbf16>
    %cst = arith.constant dense<0.000000e+00> : vector<8x128xf32>
    %2 = tpu.matmul %0, %1, %cst {dimension_numbers = #tpu.dot_dimension_numbers<[1], [0], [0], [1], [0, 0, 1, 1], [], []>} : vector<8x896xbf16>, vector<896x128xbf16>, vector<8x128xf32> -> vector<8x128xf32>
    %c0_3 = arith.constant 0 : index
    %c0_4 = arith.constant 0 : index
    %3 = vector.load %arg3[%c0_3, %c0_4] : memref<1x128xf32, #tpu.memory_space<vmem>>, vector<1x128xf32>
    %4 = vector.broadcast %3 : vector<1x128xf32> to vector<8x128xf32>
    %5 = arith.addf %2, %4 : vector<8x128xf32>
    %cst_5 = arith.constant 0.000000e+00 : f32
    %6 = vector.broadcast %cst_5 : f32 to vector<8x128xf32>
    %7 = arith.maximumf %5, %6 : vector<8x128xf32>
    %8 = arith.truncf %7 : vector<8x128xf32> to vector<8x128xbf16>
    %c0_6 = arith.constant 0 : index
    %c0_7 = arith.constant 0 : index
    %9 = vector.load %arg4[%c0_6, %c0_7] : memref<8x128xbf16, #tpu.memory_space<vmem>>, vector<8x128xbf16>
    tpu.vector_store %arg4[%c0_6, %c0_7], %8 {strides = array<i32>} : memref<8x128xbf16, #tpu.memory_space<vmem>>, vector<8x128xbf16>,
    return
  }
  func.func @transform_0(%arg0: i32) -> (i32, i32) {
    %c0_i32 = arith.constant 0 : i32
    %c0_i32_0 = arith.constant 0 : i32
    return %arg0, %c0_i32 : i32, i32
  }
  func.func @transform_1(%arg0: i32) -> (i32, i32) {
    %c0_i32 = arith.constant 0 : i32
    %c0_i32_0 = arith.constant 0 : i32
    %c0_i32_1 = arith.constant 0 : i32
    return %c0_i32, %c0_i32_0 : i32, i32
  }
  func.func @transform_2(%arg0: i32) -> (i32, i32) {
    %c0_i32 = arith.constant 0 : i32
    %c0_i32_0 = arith.constant 0 : i32
    %c0_i32_1 = arith.constant 0 : i32
    return %c0_i32, %c0_i32_0 : i32, i32
  }
  func.func @transform_3(%arg0: i32) -> (i32, i32) {
    %c0_i32 = arith.constant 0 : i32
    %c0_i32_0 = arith.constant 0 : i32
    return %arg0, %c0_i32 : i32, i32
  }
}

module attributes {stable_mosaic.version = 11 : i64} {
  func.func @_gemm_bias_kernel(%arg0: i32, %arg1: memref<8x1792xbf16, #tpu.memory_space<vmem>>, %arg2: memref<1792x128xbf16, #tpu.memory_space<vmem>>, %arg3: memref<1x128xf32, #tpu.memory_space<vmem>>, %arg4: memref<8x128xbf16, #tpu.memory_space<vmem>>) attributes {dimension_semantics = [#tpu.dimension_semantics<parallel>], iteration_bounds = array<i64: 1>, scalar_prefetch = 0 : i64, scratch_operands = 0 : i64, tpu.core_type = #tpu.core_type<tc>, window_params = [{transform_indices = @transform_0, window_bounds = array<i64: 8, 1792>}, {pipeline_mode = #tpu.pipeline_mode<synchronous>, transform_indices = @transform_1, window_bounds = array<i64: 1792, 128>}, {pipeline_mode = #tpu.pipeline_mode<synchronous>, transform_indices = @transform_2, window_bounds = array<i64: 1, 128>}, {transform_indices = @transform_3, window_bounds = array<i64: 8, 128>}]} {
    %c0 = arith.constant 0 : index
    %c0_0 = arith.constant 0 : index
    %0 = vector.load %arg1[%c0, %c0_0] : memref<8x1792xbf16, #tpu.memory_space<vmem>>, vector<8x1792xbf16>
    %c0_1 = arith.constant 0 : index
    %c0_2 = arith.constant 0 : index
    %1 = vector.load %arg2[%c0_1, %c0_2] : memref<1792x128xbf16, #tpu.memory_space<vmem>>, vector<1792x128xbf16>
    %cst = arith.constant dense<0.000000e+00> : vector<8x128xf32>
    %2 = tpu.matmul %0, %1, %cst {dimension_numbers = #tpu.dot_dimension_numbers<[1], [0], [0], [1], [0, 0, 1, 1], [], []>} : vector<8x1792xbf16>, vector<1792x128xbf16>, vector<8x128xf32> -> vector<8x128xf32>
    %c0_3 = arith.constant 0 : index
    %c0_4 = arith.constant 0 : index
    %3 = vector.load %arg3[%c0_3, %c0_4] : memref<1x128xf32, #tpu.memory_space<vmem>>, vector<1x128xf32>
    %4 = vector.broadcast %3 : vector<1x128xf32> to vector<8x128xf32>
    %5 = arith.addf %2, %4 : vector<8x128xf32>
    %cst_5 = arith.constant 0.000000e+00 : f32
    %6 = vector.broadcast %cst_5 : f32 to vector<8x128xf32>
    %7 = arith.maximumf %5, %6 : vector<8x128xf32>
    %8 = arith.truncf %7 : vector<8x128xf32> to vector<8x128xbf16>
    %c0_6 = arith.constant 0 : index
    %c0_7 = arith.constant 0 : index
    %9 = vector.load %arg4[%c0_6, %c0_7] : memref<8x128xbf16, #tpu.memory_space<vmem>>, vector<8x128xbf16>
    tpu.vector_store %arg4[%c0_6, %c0_7], %8 {strides = array<i32>} : memref<8x128xbf16, #tpu.memory_space<vmem>>, vector<8x128xbf16>,
    return
  }
  func.func @transform_0(%arg0: i32) -> (i32, i32) {
    %c0_i32 = arith.constant 0 : i32
    %c0_i32_0 = arith.constant 0 : i32
    return %arg0, %c0_i32 : i32, i32
  }
  func.func @transform_1(%arg0: i32) -> (i32, i32) {
    %c0_i32 = arith.constant 0 : i32
    %c0_i32_0 = arith.constant 0 : i32
    %c0_i32_1 = arith.constant 0 : i32
    return %c0_i32, %c0_i32_0 : i32, i32
  }
  func.func @transform_2(%arg0: i32) -> (i32, i32) {
    %c0_i32 = arith.constant 0 : i32
    %c0_i32_0 = arith.constant 0 : i32
    %c0_i32_1 = arith.constant 0 : i32
    return %c0_i32, %c0_i32_0 : i32, i32
  }
  func.func @transform_3(%arg0: i32) -> (i32, i32) {
    %c0_i32 = arith.constant 0 : i32
    %c0_i32_0 = arith.constant 0 : i32
    return %arg0, %c0_i32 : i32, i32
  }
}

module attributes {stable_mosaic.version = 11 : i64} {
  func.func @_head_kernel(%arg0: i32, %arg1: memref<8x1x128xbf16, #tpu.memory_space<vmem>>, %arg2: memref<128x128xbf16, #tpu.memory_space<vmem>>, %arg3: memref<1x128xf32, #tpu.memory_space<vmem>>, %arg4: memref<128x128xbf16, #tpu.memory_space<vmem>>, %arg5: memref<1x128xf32, #tpu.memory_space<vmem>>, %arg6: memref<8x128xf32, #tpu.memory_space<vmem>>) attributes {dimension_semantics = [#tpu.dimension_semantics<arbitrary>], iteration_bounds = array<i64: 1>, scalar_prefetch = 0 : i64, scratch_operands = 0 : i64, tpu.core_type = #tpu.core_type<tc>, window_params = [{pipeline_mode = #tpu.pipeline_mode<synchronous>, transform_indices = @transform_0, window_bounds = array<i64: 8, 1, 128>}, {pipeline_mode = #tpu.pipeline_mode<synchronous>, transform_indices = @transform_1, window_bounds = array<i64: 128, 128>}, {pipeline_mode = #tpu.pipeline_mode<synchronous>, transform_indices = @transform_2, window_bounds = array<i64: 1, 128>}, {pipeline_mode = #tpu.pipeline_mode<synchronous>, transform_indices = @transform_3, window_bounds = array<i64: 128, 128>}, {pipeline_mode = #tpu.pipeline_mode<synchronous>, transform_indices = @transform_4, window_bounds = array<i64: 1, 128>}, {pipeline_mode = #tpu.pipeline_mode<synchronous>, transform_indices = @transform_5, window_bounds = array<i64: 8, 128>}]} {
    %c0 = arith.constant 0 : index
    %c0_0 = arith.constant 0 : index
    %c0_1 = arith.constant 0 : index
    %0 = vector.load %arg1[%c0, %c0_0, %c0_1] : memref<8x1x128xbf16, #tpu.memory_space<vmem>>, vector<8x1x128xbf16>
    %1 = arith.extf %0 : vector<8x1x128xbf16> to vector<8x1x128xf32>
    %cst = arith.constant dense<0.000000e+00> : vector<8x128xf32>
    %2 = vector.multi_reduction <add>, %1, %cst [1] : vector<8x1x128xf32> to vector<8x128xf32>
    %cst_2 = arith.constant 1.000000e+00 : f32
    %3 = vector.broadcast %cst_2 : f32 to vector<8x128xf32>
    %4 = arith.mulf %2, %3 : vector<8x128xf32>
    %5 = arith.truncf %4 : vector<8x128xf32> to vector<8x128xbf16>
    %c0_3 = arith.constant 0 : index
    %c0_4 = arith.constant 0 : index
    %6 = vector.load %arg2[%c0_3, %c0_4] : memref<128x128xbf16, #tpu.memory_space<vmem>>, vector<128x128xbf16>
    %cst_5 = arith.constant dense<0.000000e+00> : vector<8x128xf32>
    %7 = tpu.matmul %5, %6, %cst_5 {dimension_numbers = #tpu.dot_dimension_numbers<[1], [0], [0], [1], [0, 0, 1, 1], [], []>} : vector<8x128xbf16>, vector<128x128xbf16>, vector<8x128xf32> -> vector<8x128xf32>
    %c0_6 = arith.constant 0 : index
    %c0_7 = arith.constant 0 : index
    %8 = vector.load %arg3[%c0_6, %c0_7] : memref<1x128xf32, #tpu.memory_space<vmem>>, vector<1x128xf32>
    %9 = vector.broadcast %8 : vector<1x128xf32> to vector<8x128xf32>
    %10 = arith.addf %7, %9 : vector<8x128xf32>
    %cst_8 = arith.constant 0.000000e+00 : f32
    %11 = vector.broadcast %cst_8 : f32 to vector<8x128xf32>
    %12 = arith.maximumf %10, %11 : vector<8x128xf32>
    %13 = arith.truncf %12 : vector<8x128xf32> to vector<8x128xbf16>
    %c0_9 = arith.constant 0 : index
    %c0_10 = arith.constant 0 : index
    %14 = vector.load %arg4[%c0_9, %c0_10] : memref<128x128xbf16, #tpu.memory_space<vmem>>, vector<128x128xbf16>
    %cst_11 = arith.constant dense<0.000000e+00> : vector<8x128xf32>
    %15 = tpu.matmul %13, %14, %cst_11 {dimension_numbers = #tpu.dot_dimension_numbers<[1], [0], [0], [1], [0, 0, 1, 1], [], []>} : vector<8x128xbf16>, vector<128x128xbf16>, vector<8x128xf32> -> vector<8x128xf32>
    %c0_12 = arith.constant 0 : index
    %c0_13 = arith.constant 0 : index
    %16 = vector.load %arg5[%c0_12, %c0_13] : memref<1x128xf32, #tpu.memory_space<vmem>>, vector<1x128xf32>
    %17 = vector.broadcast %16 : vector<1x128xf32> to vector<8x128xf32>
    %18 = arith.addf %15, %17 : vector<8x128xf32>
    %c0_14 = arith.constant 0 : index
    %c0_15 = arith.constant 0 : index
    %19 = vector.load %arg6[%c0_14, %c0_15] : memref<8x128xf32, #tpu.memory_space<vmem>>, vector<8x128xf32>
    tpu.vector_store %arg6[%c0_14, %c0_15], %18 {strides = array<i32>} : memref<8x128xf32, #tpu.memory_space<vmem>>, vector<8x128xf32>,
    return
  }
  func.func @transform_0(%arg0: i32) -> (i32, i32, i32) {
    %c0_i32 = arith.constant 0 : i32
    %c0_i32_0 = arith.constant 0 : i32
    %c0_i32_1 = arith.constant 0 : i32
    %c0_i32_2 = arith.constant 0 : i32
    return %c0_i32, %c0_i32_0, %c0_i32_1 : i32, i32, i32
  }
  func.func @transform_1(%arg0: i32) -> (i32, i32) {
    %c0_i32 = arith.constant 0 : i32
    %c0_i32_0 = arith.constant 0 : i32
    %c0_i32_1 = arith.constant 0 : i32
    return %c0_i32, %c0_i32_0 : i32, i32
  }
  func.func @transform_2(%arg0: i32) -> (i32, i32) {
    %c0_i32 = arith.constant 0 : i32
    %c0_i32_0 = arith.constant 0 : i32
    %c0_i32_1 = arith.constant 0 : i32
    return %c0_i32, %c0_i32_0 : i32, i32
  }
  func.func @transform_3(%arg0: i32) -> (i32, i32) {
    %c0_i32 = arith.constant 0 : i32
    %c0_i32_0 = arith.constant 0 : i32
    %c0_i32_1 = arith.constant 0 : i32
    return %c0_i32, %c0_i32_0 : i32, i32
  }
  func.func @transform_4(%arg0: i32) -> (i32, i32) {
    %c0_i32 = arith.constant 0 : i32
    %c0_i32_0 = arith.constant 0 : i32
    %c0_i32_1 = arith.constant 0 : i32
    return %c0_i32, %c0_i32_0 : i32, i32
  }
  func.func @transform_5(%arg0: i32) -> (i32, i32) {
    %c0_i32 = arith.constant 0 : i32
    %c0_i32_0 = arith.constant 0 : i32
    %c0_i32_1 = arith.constant 0 : i32
    return %c0_i32, %c0_i32_0 : i32, i32
  }
}

</mosaic_0001>

<llo_original>
// kernel: _lambda_.13
$region0: #{_lambda_.13}
  #allocation0 [shape = 'u32[]', space=smem, size = 0x4, offset = 0x4, fixed_abs, tag = 'smem constant byte address 0x4 - core index']
  #allocation1 [shape = 'u32[72,128]{1,0:T(1,128)}', space=vmem, size = 0x9000, scoped, tag = 'internal scratch']
  %s0 = inlined_call_operand.vmem [shape: bf16[1024,384], index: 0, kind: input, shape index: {}]
  %s1 = inlined_call_operand.vmem [shape: bf16[384,128], index: 1, kind: input, shape index: {}]
  %s2 = inlined_call_operand.vmem [shape: f32[1,128], index: 2, kind: input, shape index: {}]
  %s3 = inlined_call_operand.vmem [shape: bf16[1024,128], index: 3, kind: output, shape index: {}]
  %s4 = sld [smem:[#allocation0]]
  $region45: #{_lambda_.13} parent=0
    _
  %s6 = ssub.s32 1, %s4
  %s7 = scalar_select 0, %s6, %s4
  loop: start=0, step=1, limit=4
  $region2: #{_lambda_.13} parent=0 // loop_pre_header
    _
  $region3: #{_lambda_.13} parent=0 // loop_header
    %s9 = sphi 0, %s13
    %p10 = scmp.ge.s32.totalorder %s9, 4
    %s19 = sphi 0, %s21
    %s22 = sphi 0, %s19
    %s23 = sphi 0, %s22
    %s39 = sphi 0, %s23
    %s43 = sphi 0, %s43
    %s45 = sphi 0, %s43
    %s46 = sphi 0, %s45
    %s60 = sphi 0, %s46
    %s64 = sphi 0, %s64
    %s66 = sphi 0, %s64
    %s67 = sphi 0, %s66
    %s81 = sphi 0, %s67
    %s87 = sphi 0, %s89
    %s90 = sphi 0, %s87
    %s91 = sphi 0, %s90
    %s107 = sphi 0, %s91
  $region4: #{_lambda_.13} parent=0 // loop_header_branch
    %12 = sbr.rel (%p10) target = $region8
  $region5: #{_lambda_.13} parent=0 // loop_body
    %s14 = ssub.s32 %s9, 1
    %s15 = ssub.s32 %s9, 2
    %s16 = sadd.s32 %s9, 1
    %s17 = ssub.s32 %s9, %s16
    %p18 = scmp.eq.s32.totalorder %s17, 0
    %s20 = sadd.s32 %s19, 1
    %s21 = scalar_select %p18, %s19, %s20
    %p24 = pneg %p18
    %p25 = scmp.eq.s32.totalorder %s9, 1
    %p26 = por %p24, %p25
    %p27 = scmp.ne.s32.totalorder %s19, %s22
    %p28 = scmp.eq.s32.totalorder %s9, 0
    %p29 = por %p27, %p28
    %p30 = scmp.ne.s32.totalorder %s19, %s22
    %p31 = scmp.eq.s32.totalorder %s14, 1
    %p32 = por %p30, %p31
    %p33 = scmp.ne.s32.totalorder %s22, %s23
    %p34 = scmp.eq.s32.totalorder %s14, 0
    %p35 = por %p33, %p34
    %p36 = scmp.ne.s32.totalorder %s22, %s23
    %p37 = scmp.eq.s32.totalorder %s15, 1
    %p38 = por %p36, %p37
    %p40 = scmp.ne.s32.totalorder %s23, %s39
    %p41 = scmp.eq.s32.totalorder %s15, 0
    %p42 = por %p40, %p41
    %s44 = sadd.s32 %s43, 1
    %p47 = scmp.eq.s32.totalorder %s9, 1
    %p48 = scmp.ne.s32.totalorder %s43, %s45
    %p49 = scmp.eq.s32.totalorder %s9, 0
    %p50 = por %p48, %p49
    %p51 = scmp.ne.s32.totalorder %s43, %s45
    %p52 = scmp.eq.s32.totalorder %s14, 1
    %p53 = por %p51, %p52
    %p54 = scmp.ne.s32.totalorder %s45, %s46
    %p55 = scmp.eq.s32.totalorder %s14, 0
    %p56 = por %p54, %p55
    %p57 = scmp.ne.s32.totalorder %s45, %s46
    %p58 = scmp.eq.s32.totalorder %s15, 1
    %p59 = por %p57, %p58
    %p61 = scmp.ne.s32.totalorder %s46, %s60
    %p62 = scmp.eq.s32.totalorder %s15, 0
    %p63 = por %p61, %p62
    %s65 = sadd.s32 %s64, 1
    %p68 = scmp.eq.s32.totalorder %s9, 1
    %p69 = scmp.ne.s32.totalorder %s64, %s66
    %p70 = scmp.eq.s32.totalorder %s9, 0
    %p71 = por %p69, %p70
    %p72 = scmp.ne.s32.totalorder %s64, %s66
    %p73 = scmp.eq.s32.totalorder %s14, 1
    %p74 = por %p72, %p73
    %p75 = scmp.ne.s32.totalorder %s66, %s67
    %p76 = scmp.eq.s32.totalorder %s14, 0
    %p77 = por %p75, %p76
    %p78 = scmp.ne.s32.totalorder %s66, %s67
    %p79 = scmp.eq.s32.totalorder %s15, 1
    %p80 = por %p78, %p79
    %p82 = scmp.ne.s32.totalorder %s67, %s81
    %p83 = scmp.eq.s32.totalorder %s15, 0
    %p84 = por %p82, %p83
    %s85 = ssub.s32 %s9, %s16
    %p86 = scmp.eq.s32.totalorder %s85, 0
    %s88 = sadd.s32 %s87, 1
    %s89 = scalar_select %p86, %s87, %s88
    %p92 = pneg %p86
    %p93 = scmp.eq.s32.totalorder %s9, 1
    %p94 = por %p92, %p93
    %p95 = scmp.ne.s32.totalorder %s87, %s90
    %p96 = scmp.eq.s32.totalorder %s9, 0
    %p97 = por %p95, %p96
    %p98 = scmp.ne.s32.totalorder %s87, %s90
    %p99 = scmp.eq.s32.totalorder %s14, 1
    %p100 = por %p98, %p99
    %p101 = scmp.ne.s32.totalorder %s90, %s91
    %p102 = scmp.eq.s32.totalorder %s14, 0
    %p103 = por %p101, %p102
    %p104 = scmp.ne.s32.totalorder %s90, %s91
    %p105 = scmp.eq.s32.totalorder %s15, 1
    %p106 = por %p104, %p105
    %p108 = scmp.ne.s32.totalorder %s91, %s107
    %p109 = scmp.eq.s32.totalorder %s15, 0
    %p110 = por %p108, %p109
    %p111 = scmp.le.s32.totalorder 1, %s9
    %p112 = scmp.lt.s32.totalorder %s9, 3
    %p113 = pnand %p111, %p112
    %p114 = pneg %p113
    // Predicated region
    $region9: #{_lambda_.13} parent=5 // pred_check
      _
    $region10: #{_lambda_.13} parent=5 // pred_check_branch
      %116 = sbr.rel (%p113) target = $region12
    $region11: #{_lambda_.13} parent=5 // pred_region
      %s117 = ssub.s32 %s9, 1
      // Predicated region
      $region13: #{_lambda_.13} parent=11 // pred_check
        %p118 = pneg %p56
      $region14: #{_lambda_.13} parent=11 // pred_check_branch
        %120 = sbr.rel (%p118) target = $region16
      $region15: #{_lambda_.13} parent=11 // pred_region
        _
      $region16: #{_lambda_.13} parent=11 // pred_fallthru
        _
      // Predicated region
      $region17: #{_lambda_.13} parent=11 // pred_check
        %p121 = pneg %p77
      $region18: #{_lambda_.13} parent=11 // pred_check_branch
        %123 = sbr.rel (%p121) target = $region20
      $region19: #{_lambda_.13} parent=11 // pred_region
        _
      $region20: #{_lambda_.13} parent=11 // pred_fallthru
        _
    $region12: #{_lambda_.13} parent=5 // pred_fallthru
      _
    %p124 = scmp.lt.s32.totalorder %s9, 2
    // Predicated region
    $region21: #{_lambda_.13} parent=5 // pred_check
      %p125 = pneg %p124
    $region22: #{_lambda_.13} parent=5 // pred_check_branch
      %127 = sbr.rel (%p125) target = $region24
    $region23: #{_lambda_.13} parent=5 // pred_region
      // Predicated region
      $region25: #{_lambda_.13} parent=23 // pred_check
        %p128 = pneg %p29
      $region26: #{_lambda_.13} parent=23 // pred_check_branch
        %130 = sbr.rel (%p128) target = $region28
      $region27: #{_lambda_.13} parent=23 // pred_region
        %s131 = smul.u32 64, %s9
        %p132 = scmp.lt.s32.totalorder %s131, 127
        %s133 = scalar_select %p132, %s131, 127
        %s134 = smul.addr %s133, 3
        %s135 = smul.addr %s134, 4
        %s136 = scalar_lea.vmem %s0, %s135
        %s137 = smul.u32 64, %s9
      $region28: #{_lambda_.13} parent=23 // pred_fallthru
        _
    $region24: #{_lambda_.13} parent=5 // pred_fallthru
      _
    %p138 = scmp.le.s32.totalorder 1, %s9
    %p139 = scmp.lt.s32.totalorder %s9, 3
    %p140 = pnand %p138, %p139
    %p141 = pneg %p140
    // Predicated region
    $region29: #{_lambda_.13} parent=5 // pred_check
      _
    $region30: #{_lambda_.13} parent=5 // pred_check_branch
      %143 = sbr.rel (%p140) target = $region32
    $region31: #{_lambda_.13} parent=5 // pred_region
      %s144 = ssub.s32 %s9, 1
      %s145 = smul.u32 64, %s14
      %p146 = scmp.lt.s32.totalorder %s145, 127
      %s147 = scalar_select %p146, %s145, 127
      %s148 = smul.addr %s147, 3
      %s149 = smul.addr %s148, 4
      %s150 = scalar_lea.vmem %s0, %s149
      %p151 = pneg %p35
      %p152 = pneg %p32
      %p153 = pneg %p56
      %p154 = pneg %p53
      %p155 = pneg %p77
      %p156 = pneg %p74
      %p157 = pneg %p103
      %p158 = pneg %p100
      %s159 = smul.u32 64, %s14
      %p160 = scmp.lt.s32.totalorder %s159, 127
      %s161 = scalar_select %p160, %s159, 127
      %s162 = smul.addr %s161, 4
      %s163 = scalar_lea.vmem %s3, %s162
      %s164 = smul.u32 64, %s14
      %p165 = scmp.lt.s32.totalorder %s164, 127
      %s166 = scalar_select %p165, %s164, 127
      %s167 = smul.addr %s166, 3
      %s168 = smul.addr %s167, 4
      %s169 = scalar_lea.vmem %s0, %s168
      %s170 = smul.u32 64, %s14
      %s171 = smul.u32 64, %s14
      %p172 = scmp.lt.s32.totalorder %s171, 127
      %s173 = scalar_select %p172, %s171, 127
      %s174 = smul.addr %s173, 4
      %s175 = scalar_lea.vmem %s3, %s174
      %s176 = smul.u32 64, %s14
      %v177 = vld [vmem:[%s169] sm:$0xff]
      %v178 = vld [vmem:[%s169 + $0x8] sm:$0xf]
      %v179 = vld [vmem:[%s169 + $0xc] sm:$0xff]
      %v180 = vld [vmem:[%s169 + $0x14] sm:$0xf]
      %v181 = vld [vmem:[%s169 + $0x18] sm:$0xff]
      %v182 = vld [vmem:[%s169 + $0x20] sm:$0xf]
      %v183 = vld [vmem:[%s169 + $0x24] sm:$0xff]
      %v184 = vld [vmem:[%s169 + $0x2c] sm:$0xf]
      %v185 = vld [vmem:[%s169 + $0x30] sm:$0xff]
      %v186 = vld [vmem:[%s169 + $0x38] sm:$0xf]
      %v187 = vld [vmem:[%s169 + $0x3c] sm:$0xff]
      %v188 = vld [vmem:[%s169 + $0x44] sm:$0xf]
      %v189 = vld [vmem:[%s169 + $0x48] sm:$0xff]
      %v190 = vld [vmem:[%s169 + $0x50] sm:$0xf]
      %v191 = vld [vmem:[%s169 + $0x54] sm:$0xff]
      %v192 = vld [vmem:[%s169 + $0x5c] sm:$0xf]
      %v193 = vld [vmem:[%s169 + $0x60] sm:$0xff]
      %v194 = vld [vmem:[%s169 + $0x68] sm:$0xf]
      %v195 = vld [vmem:[%s169 + $0x6c] sm:$0xff]
      %v196 = vld [vmem:[%s169 + $0x74] sm:$0xf]
      %v197 = vld [vmem:[%s169 + $0x78] sm:$0xff]
      %v198 = vld [vmem:[%s169 + $0x80] sm:$0xf]
      %v199 = vld [vmem:[%s169 + $0x84] sm:$0xff]
      %v200 = vld [vmem:[%s169 + $0x8c] sm:$0xf]
      %v201 = vld [vmem:[%s169 + $0x90] sm:$0xff]
      %v202 = vld [vmem:[%s169 + $0x98] sm:$0xf]
      %v203 = vld [vmem:[%s169 + $0x9c] sm:$0xff]
      %v204 = vld [vmem:[%s169 + $0xa4] sm:$0xf]
      %v205 = vld [vmem:[%s169 + $0xa8] sm:$0xff]
      %v206 = vld [vmem:[%s169 + $0xb0] sm:$0xf]
      %v207 = vld [vmem:[%s169 + $0xb4] sm:$0xff]
      %v208 = vld [vmem:[%s169 + $0xbc] sm:$0xf]
      %v209 = vld [vmem:[%s169 + $0xc0] sm:$0xff]
      %v210 = vld [vmem:[%s169 + $0xc8] sm:$0xf]
      %v211 = vld [vmem:[%s169 + $0xcc] sm:$0xff]
      %v212 = vld [vmem:[%s169 + $0xd4] sm:$0xf]
      %v213 = vld [vmem:[%s169 + $0xd8] sm:$0xff]
      %v214 = vld [vmem:[%s169 + $0xe0] sm:$0xf]
      %v215 = vld [vmem:[%s169 + $0xe4] sm:$0xff]
      %v216 = vld [vmem:[%s169 + $0xec] sm:$0xf]
      %v217 = vld [vmem:[%s169 + $0xf0] sm:$0xff]
      %v218 = vld [vmem:[%s169 + $0xf8] sm:$0xf]
      %v219 = vld [vmem:[%s169 + $0xfc] sm:$0xff]
      %v220 = vld [vmem:[%s169 + $0x104] sm:$0xf]
      %v221 = vld [vmem:[%s169 + $0x108] sm:$0xff]
      %v222 = vld [vmem:[%s169 + $0x110] sm:$0xf]
      %v223 = vld [vmem:[%s169 + $0x114] sm:$0xff]
      %v224 = vld [vmem:[%s169 + $0x11c] sm:$0xf]
      %v225 = vld [vmem:[%s169 + $0x120] sm:$0xff]
      %v226 = vld [vmem:[%s169 + $0x128] sm:$0xf]
      %v227 = vld [vmem:[%s169 + $0x12c] sm:$0xff]
      %v228 = vld [vmem:[%s169 + $0x134] sm:$0xf]
      %v229 = vld [vmem:[%s169 + $0x138] sm:$0xff]
      %v230 = vld [vmem:[%s169 + $0x140] sm:$0xf]
      %v231 = vld [vmem:[%s169 + $0x144] sm:$0xff]
      %v232 = vld [vmem:[%s169 + $0x14c] sm:$0xf]
      %v233 = vld [vmem:[%s169 + $0x150] sm:$0xff]
      %v234 = vld [vmem:[%s169 + $0x158] sm:$0xf]
      %v235 = vld [vmem:[%s169 + $0x15c] sm:$0xff]
      %v236 = vld [vmem:[%s169 + $0x164] sm:$0xf]
      %v237 = vld [vmem:[%s169 + $0x168] sm:$0xff]
      %v238 = vld [vmem:[%s169 + $0x170] sm:$0xf]
      %v239 = vld [vmem:[%s169 + $0x174] sm:$0xff]
      %v240 = vld [vmem:[%s169 + $0x17c] sm:$0xf]
      %v241 = vld [vmem:[%s169 + $0x180] sm:$0xff]
      %v242 = vld [vmem:[%s169 + $0x188] sm:$0xf]
      %v243 = vld [vmem:[%s169 + $0x18c] sm:$0xff]
      %v244 = vld [vmem:[%s169 + $0x194] sm:$0xf]
      %v245 = vld [vmem:[%s169 + $0x198] sm:$0xff]
      %v246 = vld [vmem:[%s169 + $0x1a0] sm:$0xf]
      %v247 = vld [vmem:[%s169 + $0x1a4] sm:$0xff]
      %v248 = vld [vmem:[%s169 + $0x1ac] sm:$0xf]
      %v249 = vld [vmem:[%s169 + $0x1b0] sm:$0xff]
      %v250 = vld [vmem:[%s169 + $0x1b8] sm:$0xf]
      %v251 = vld [vmem:[%s169 + $0x1bc] sm:$0xff]
      %v252 = vld [vmem:[%s169 + $0x1c4] sm:$0xf]
      %v253 = vld [vmem:[%s169 + $0x1c8] sm:$0xff]
      %v254 = vld [vmem:[%s169 + $0x1d0] sm:$0xf]
      %v255 = vld [vmem:[%s169 + $0x1d4] sm:$0xff]
      %v256 = vld [vmem:[%s169 + $0x1dc] sm:$0xf]
      %v257 = vld [vmem:[%s169 + $0x1e0] sm:$0xff]
      %v258 = vld [vmem:[%s169 + $0x1e8] sm:$0xf]
      %v259 = vld [vmem:[%s169 + $0x1ec] sm:$0xff]
      %v260 = vld [vmem:[%s169 + $0x1f4] sm:$0xf]
      %v261 = vld [vmem:[%s169 + $0x1f8] sm:$0xff]
      %v262 = vld [vmem:[%s169 + $0x200] sm:$0xf]
      %v263 = vld [vmem:[%s169 + $0x204] sm:$0xff]
      %v264 = vld [vmem:[%s169 + $0x20c] sm:$0xf]
      %v265 = vld [vmem:[%s169 + $0x210] sm:$0xff]
      %v266 = vld [vmem:[%s169 + $0x218] sm:$0xf]
      %v267 = vld [vmem:[%s169 + $0x21c] sm:$0xff]
      %v268 = vld [vmem:[%s169 + $0x224] sm:$0xf]
      %v269 = vld [vmem:[%s169 + $0x228] sm:$0xff]
      %v270 = vld [vmem:[%s169 + $0x230] sm:$0xf]
      %v271 = vld [vmem:[%s169 + $0x234] sm:$0xff]
      %v272 = vld [vmem:[%s169 + $0x23c] sm:$0xf]
      %v273 = vld [vmem:[%s169 + $0x240] sm:$0xff]
      %v274 = vld [vmem:[%s169 + $0x248] sm:$0xf]
      %v275 = vld [vmem:[%s169 + $0x24c] sm:$0xff]
      %v276 = vld [vmem:[%s169 + $0x254] sm:$0xf]
      %v277 = vld [vmem:[%s169 + $0x258] sm:$0xff]
      %v278 = vld [vmem:[%s169 + $0x260] sm:$0xf]
      %v279 = vld [vmem:[%s169 + $0x264] sm:$0xff]
      %v280 = vld [vmem:[%s169 + $0x26c] sm:$0xf]
      %v281 = vld [vmem:[%s169 + $0x270] sm:$0xff]
      %v282 = vld [vmem:[%s169 + $0x278] sm:$0xf]
      %v283 = vld [vmem:[%s169 + $0x27c] sm:$0xff]
      %v284 = vld [vmem:[%s169 + $0x284] sm:$0xf]
      %v285 = vld [vmem:[%s169 + $0x288] sm:$0xff]
      %v286 = vld [vmem:[%s169 + $0x290] sm:$0xf]
      %v287 = vld [vmem:[%s169 + $0x294] sm:$0xff]
      %v288 = vld [vmem:[%s169 + $0x29c] sm:$0xf]
      %v289 = vld [vmem:[%s169 + $0x2a0] sm:$0xff]
      %v290 = vld [vmem:[%s169 + $0x2a8] sm:$0xf]
      %v291 = vld [vmem:[%s169 + $0x2ac] sm:$0xff]
      %v292 = vld [vmem:[%s169 + $0x2b4] sm:$0xf]
      %v293 = vld [vmem:[%s169 + $0x2b8] sm:$0xff]
      %v294 = vld [vmem:[%s169 + $0x2c0] sm:$0xf]
      %v295 = vld [vmem:[%s169 + $0x2c4] sm:$0xff]
      %v296 = vld [vmem:[%s169 + $0x2cc] sm:$0xf]
      %v297 = vld [vmem:[%s169 + $0x2d0] sm:$0xff]
      %v298 = vld [vmem:[%s169 + $0x2d8] sm:$0xf]
      %v299 = vld [vmem:[%s169 + $0x2dc] sm:$0xff]
      %v300 = vld [vmem:[%s169 + $0x2e4] sm:$0xf]
      %v301 = vld [vmem:[%s169 + $0x2e8] sm:$0xff]
      %v302 = vld [vmem:[%s169 + $0x2f0] sm:$0xf]
      %v303 = vld [vmem:[%s169 + $0x2f4] sm:$0xff]
      %v304 = vld [vmem:[%s169 + $0x2fc] sm:$0xf]
      %v305 = vld [vmem:[%s1] sm:$0xf]
      %v306 = vld [vmem:[%s1 + $0x4] sm:$0xf]
      %v307 = vld [vmem:[%s1 + $0x8] sm:$0xf]
      %v308 = vld [vmem:[%s1 + $0xc] sm:$0xf]
      %v309 = vld [vmem:[%s1 + $0x10] sm:$0xf]
      %v310 = vld [vmem:[%s1 + $0x14] sm:$0xf]
      %v311 = vld [vmem:[%s1 + $0x18] sm:$0xf]
      %v312 = vld [vmem:[%s1 + $0x1c] sm:$0xf]
      %v313 = vld [vmem:[%s1 + $0x20] sm:$0xf]
      %v314 = vld [vmem:[%s1 + $0x24] sm:$0xf]
      %v315 = vld [vmem:[%s1 + $0x28] sm:$0xf]
      %v316 = vld [vmem:[%s1 + $0x2c] sm:$0xf]
      %v317 = vld [vmem:[%s1 + $0x30] sm:$0xf]
      %v318 = vld [vmem:[%s1 + $0x34] sm:$0xf]
      %v319 = vld [vmem:[%s1 + $0x38] sm:$0xf]
      %v320 = vld [vmem:[%s1 + $0x3c] sm:$0xf]
      %v321 = vld [vmem:[%s1 + $0x40] sm:$0xf]
      %v322 = vld [vmem:[%s1 + $0x44] sm:$0xf]
      %v323 = vld [vmem:[%s1 + $0x48] sm:$0xf]
      %v324 = vld [vmem:[%s1 + $0x4c] sm:$0xf]
      %v325 = vld [vmem:[%s1 + $0x50] sm:$0xf]
      %v326 = vld [vmem:[%s1 + $0x54] sm:$0xf]
      %v327 = vld [vmem:[%s1 + $0x58] sm:$0xf]
      %v328 = vld [vmem:[%s1 + $0x5c] sm:$0xf]
      %v329 = vld [vmem:[%s1 + $0x60] sm:$0xf]
      %v330 = vld [vmem:[%s1 + $0x64] sm:$0xf]
      %v331 = vld [vmem:[%s1 + $0x68] sm:$0xf]
      %v332 = vld [vmem:[%s1 + $0x6c] sm:$0xf]
      %v333 = vld [vmem:[%s1 + $0x70] sm:$0xf]
      %v334 = vld [vmem:[%s1 + $0x74] sm:$0xf]
      %v335 = vld [vmem:[%s1 + $0x78] sm:$0xf]
      %v336 = vld [vmem:[%s1 + $0x7c] sm:$0xf]
      %v337 = vld [vmem:[%s1 + $0x80] sm:$0xf]
      %v338 = vld [vmem:[%s1 + $0x84] sm:$0xf]
      %v339 = vld [vmem:[%s1 + $0x88] sm:$0xf]
      %v340 = vld [vmem:[%s1 + $0x8c] sm:$0xf]
      %v341 = vld [vmem:[%s1 + $0x90] sm:$0xf]
      %v342 = vld [vmem:[%s1 + $0x94] sm:$0xf]
      %v343 = vld [vmem:[%s1 + $0x98] sm:$0xf]
      %v344 = vld [vmem:[%s1 + $0x9c] sm:$0xf]
      %v345 = vld [vmem:[%s1 + $0xa0] sm:$0xf]
      %v346 = vld [vmem:[%s1 + $0xa4] sm:$0xf]
      %v347 = vld [vmem:[%s1 + $0xa8] sm:$0xf]
      %v348 = vld [vmem:[%s1 + $0xac] sm:$0xf]
      %v349 = vld [vmem:[%s1 + $0xb0] sm:$0xf]
      %v350 = vld [vmem:[%s1 + $0xb4] sm:$0xf]
      %v351 = vld [vmem:[%s1 + $0xb8] sm:$0xf]
      %v352 = vld [vmem:[%s1 + $0xbc] sm:$0xf]
      %v353 = vld [vmem:[%s2] sm:$0x1]
      %v355 = vperm.slane %v353, 0
      %v485 = vunpack.c.l.b16 %v177
      %v486 = vunpack.c.h.b16 %v177
      %v487 = vunpack.c.l.b16 %v178
      %v488 = vunpack.c.l.b16 %v179
      %v489 = vunpack.c.h.b16 %v179
      %v490 = vunpack.c.l.b16 %v180
      %v491 = vunpack.c.l.b16 %v181
      %v492 = vunpack.c.h.b16 %v181
      %v493 = vunpack.c.l.b16 %v182
      %v494 = vunpack.c.l.b16 %v183
      %v495 = vunpack.c.h.b16 %v183
      %v496 = vunpack.c.l.b16 %v184
      %v497 = vunpack.c.l.b16 %v185
      %v498 = vunpack.c.h.b16 %v185
      %v499 = vunpack.c.l.b16 %v186
      %v500 = vunpack.c.l.b16 %v187
      %v501 = vunpack.c.h.b16 %v187
      %v502 = vunpack.c.l.b16 %v188
      %v503 = vunpack.c.l.b16 %v189
      %v504 = vunpack.c.h.b16 %v189
      %v505 = vunpack.c.l.b16 %v190
      %v506 = vunpack.c.l.b16 %v191
      %v507 = vunpack.c.h.b16 %v191
      %v508 = vunpack.c.l.b16 %v192
      %v509 = vunpack.c.l.b16 %v193
      %v510 = vunpack.c.h.b16 %v193
      %v511 = vunpack.c.l.b16 %v194
      %v512 = vunpack.c.l.b16 %v195
      %v513 = vunpack.c.h.b16 %v195
      %v514 = vunpack.c.l.b16 %v196
      %v515 = vunpack.c.l.b16 %v197
      %v516 = vunpack.c.h.b16 %v197
      %v517 = vunpack.c.l.b16 %v198
      %v518 = vunpack.c.l.b16 %v199
      %v519 = vunpack.c.h.b16 %v199
      %v520 = vunpack.c.l.b16 %v200
      %v521 = vunpack.c.l.b16 %v201
      %v522 = vunpack.c.h.b16 %v201
      %v523 = vunpack.c.l.b16 %v202
      %v524 = vunpack.c.l.b16 %v203
      %v525 = vunpack.c.h.b16 %v203
      %v526 = vunpack.c.l.b16 %v204
      %v527 = vunpack.c.l.b16 %v205
      %v528 = vunpack.c.h.b16 %v205
      %v529 = vunpack.c.l.b16 %v206
      %v530 = vunpack.c.l.b16 %v207
      %v531 = vunpack.c.h.b16 %v207
      %v532 = vunpack.c.l.b16 %v208
      %v533 = vunpack.c.l.b16 %v209
      %v534 = vunpack.c.h.b16 %v209
      %v535 = vunpack.c.l.b16 %v210
      %v536 = vunpack.c.l.b16 %v211
      %v537 = vunpack.c.h.b16 %v211
      %v538 = vunpack.c.l.b16 %v212
      %v539 = vunpack.c.l.b16 %v213
      %v540 = vunpack.c.h.b16 %v213
      %v541 = vunpack.c.l.b16 %v214
      %v542 = vunpack.c.l.b16 %v215
      %v543 = vunpack.c.h.b16 %v215
      %v544 = vunpack.c.l.b16 %v216
      %v545 = vunpack.c.l.b16 %v217
      %v546 = vunpack.c.h.b16 %v217
      %v547 = vunpack.c.l.b16 %v218
      %v548 = vunpack.c.l.b16 %v219
      %v549 = vunpack.c.h.b16 %v219
      %v550 = vunpack.c.l.b16 %v220
      %v551 = vunpack.c.l.b16 %v221
      %v552 = vunpack.c.h.b16 %v221
      %v553 = vunpack.c.l.b16 %v222
      %v554 = vunpack.c.l.b16 %v223
      %v555 = vunpack.c.h.b16 %v223
      %v556 = vunpack.c.l.b16 %v224
      %v557 = vunpack.c.l.b16 %v225
      %v558 = vunpack.c.h.b16 %v225
      %v559 = vunpack.c.l.b16 %v226
      %v560 = vunpack.c.l.b16 %v227
      %v561 = vunpack.c.h.b16 %v227
      %v562 = vunpack.c.l.b16 %v228
      %v563 = vunpack.c.l.b16 %v229
      %v564 = vunpack.c.h.b16 %v229
      %v565 = vunpack.c.l.b16 %v230
      %v566 = vunpack.c.l.b16 %v231
      %v567 = vunpack.c.h.b16 %v231
      %v568 = vunpack.c.l.b16 %v232
      %v569 = vunpack.c.l.b16 %v233
      %v570 = vunpack.c.h.b16 %v233
      %v571 = vunpack.c.l.b16 %v234
      %v572 = vunpack.c.l.b16 %v235
      %v573 = vunpack.c.h.b16 %v235
      %v574 = vunpack.c.l.b16 %v236
      %v575 = vunpack.c.l.b16 %v237
      %v576 = vunpack.c.h.b16 %v237
      %v577 = vunpack.c.l.b16 %v238
      %v578 = vunpack.c.l.b16 %v239
      %v579 = vunpack.c.h.b16 %v239
      %v580 = vunpack.c.l.b16 %v240
      %v581 = vunpack.c.l.b16 %v241
      %v582 = vunpack.c.h.b16 %v241
      %v583 = vunpack.c.l.b16 %v242
      %v584 = vunpack.c.l.b16 %v243
      %v585 = vunpack.c.h.b16 %v243
      %v586 = vunpack.c.l.b16 %v244
      %v587 = vunpack.c.l.b16 %v245
      %v588 = vunpack.c.h.b16 %v245
      %v589 = vunpack.c.l.b16 %v246
      %v590 = vunpack.c.l.b16 %v247
      %v591 = vunpack.c.h.b16 %v247
      %v592 = vunpack.c.l.b16 %v248
      %v593 = vunpack.c.l.b16 %v249
      %v594 = vunpack.c.h.b16 %v249
      %v595 = vunpack.c.l.b16 %v250
      %v596 = vunpack.c.l.b16 %v251
      %v597 = vunpack.c.h.b16 %v251
      %v598 = vunpack.c.l.b16 %v252
      %v599 = vunpack.c.l.b16 %v253
      %v600 = vunpack.c.h.b16 %v253
      %v601 = vunpack.c.l.b16 %v254
      %v602 = vunpack.c.l.b16 %v255
      %v603 = vunpack.c.h.b16 %v255
      %v604 = vunpack.c.l.b16 %v256
      %v605 = vunpack.c.l.b16 %v257
      %v606 = vunpack.c.h.b16 %v257
      %v607 = vunpack.c.l.b16 %v258
      %v608 = vunpack.c.l.b16 %v259
      %v609 = vunpack.c.h.b16 %v259
      %v610 = vunpack.c.l.b16 %v260
      %v611 = vunpack.c.l.b16 %v261
      %v612 = vunpack.c.h.b16 %v261
      %v613 = vunpack.c.l.b16 %v262
      %v614 = vunpack.c.l.b16 %v263
      %v615 = vunpack.c.h.b16 %v263
      %v616 = vunpack.c.l.b16 %v264
      %v617 = vunpack.c.l.b16 %v265
      %v618 = vunpack.c.h.b16 %v265
      %v619 = vunpack.c.l.b16 %v266
      %v620 = vunpack.c.l.b16 %v267
      %v621 = vunpack.c.h.b16 %v267
      %v622 = vunpack.c.l.b16 %v268
      %v623 = vunpack.c.l.b16 %v269
      %v624 = vunpack.c.h.b16 %v269
      %v625 = vunpack.c.l.b16 %v270
      %v626 = vunpack.c.l.b16 %v271
      %v627 = vunpack.c.h.b16 %v271
      %v628 = vunpack.c.l.b16 %v272
      %v629 = vunpack.c.l.b16 %v273
      %v630 = vunpack.c.h.b16 %v273
      %v631 = vunpack.c.l.b16 %v274
      %v632 = vunpack.c.l.b16 %v275
      %v633 = vunpack.c.h.b16 %v275
      %v634 = vunpack.c.l.b16 %v276
      %v635 = vunpack.c.l.b16 %v277
      %v636 = vunpack.c.h.b16 %v277
      %v637 = vunpack.c.l.b16 %v278
      %v638 = vunpack.c.l.b16 %v279
      %v639 = vunpack.c.h.b16 %v279
      %v640 = vunpack.c.l.b16 %v280
      %v641 = vunpack.c.l.b16 %v281
      %v642 = vunpack.c.h.b16 %v281
      %v643 = vunpack.c.l.b16 %v282
      %v644 = vunpack.c.l.b16 %v283
      %v645 = vunpack.c.h.b16 %v283
      %v646 = vunpack.c.l.b16 %v284
      %v647 = vunpack.c.l.b16 %v285
      %v648 = vunpack.c.h.b16 %v285
      %v649 = vunpack.c.l.b16 %v286
      %v650 = vunpack.c.l.b16 %v287
      %v651 = vunpack.c.h.b16 %v287
      %v652 = vunpack.c.l.b16 %v288
      %v653 = vunpack.c.l.b16 %v289
      %v654 = vunpack.c.h.b16 %v289
      %v655 = vunpack.c.l.b16 %v290
      %v656 = vunpack.c.l.b16 %v291
      %v657 = vunpack.c.h.b16 %v291
      %v658 = vunpack.c.l.b16 %v292
      %v659 = vunpack.c.l.b16 %v293
      %v660 = vunpack.c.h.b16 %v293
      %v661 = vunpack.c.l.b16 %v294
      %v662 = vunpack.c.l.b16 %v295
      %v663 = vunpack.c.h.b16 %v295
      %v664 = vunpack.c.l.b16 %v296
      %v665 = vunpack.c.l.b16 %v297
      %v666 = vunpack.c.h.b16 %v297
      %v667 = vunpack.c.l.b16 %v298
      %v668 = vunpack.c.l.b16 %v299
      %v669 = vunpack.c.h.b16 %v299
      %v670 = vunpack.c.l.b16 %v300
      %v671 = vunpack.c.l.b16 %v301
      %v672 = vunpack.c.h.b16 %v301
      %v673 = vunpack.c.l.b16 %v302
      %v674 = vunpack.c.l.b16 %v303
      %v675 = vunpack.c.h.b16 %v303
      %v676 = vunpack.c.l.b16 %v304
      %v677 = vpack.c.b16 %v488, %v485
      %v678 = vpack.c.b16 %v489, %v486
      %v679 = vpack.c.b16 %v490, %v487
      %v680 = vpack.c.b16 %v494, %v491
      %v681 = vpack.c.b16 %v495, %v492
      %v682 = vpack.c.b16 %v496, %v493
      %v683 = vpack.c.b16 %v500, %v497
      %v684 = vpack.c.b16 %v501, %v498
      %v685 = vpack.c.b16 %v502, %v499
      %v686 = vpack.c.b16 %v506, %v503
      %v687 = vpack.c.b16 %v507, %v504
      %v688 = vpack.c.b16 %v508, %v505
      %v689 = vpack.c.b16 %v512, %v509
      %v690 = vpack.c.b16 %v513, %v510
      %v691 = vpack.c.b16 %v514, %v511
      %v692 = vpack.c.b16 %v518, %v515
      %v693 = vpack.c.b16 %v519, %v516
      %v694 = vpack.c.b16 %v520, %v517
      %v695 = vpack.c.b16 %v524, %v521
      %v696 = vpack.c.b16 %v525, %v522
      %v697 = vpack.c.b16 %v526, %v523
      %v698 = vpack.c.b16 %v530, %v527
      %v699 = vpack.c.b16 %v531, %v528
      %v700 = vpack.c.b16 %v532, %v529
      %v701 = vpack.c.b16 %v536, %v533
      %v702 = vpack.c.b16 %v537, %v534
      %v703 = vpack.c.b16 %v538, %v535
      %v704 = vpack.c.b16 %v542, %v539
      %v705 = vpack.c.b16 %v543, %v540
      %v706 = vpack.c.b16 %v544, %v541
      %v707 = vpack.c.b16 %v548, %v545
      %v708 = vpack.c.b16 %v549, %v546
      %v709 = vpack.c.b16 %v550, %v547
      %v710 = vpack.c.b16 %v554, %v551
      %v711 = vpack.c.b16 %v555, %v552
      %v712 = vpack.c.b16 %v556, %v553
      %v713 = vpack.c.b16 %v560, %v557
      %v714 = vpack.c.b16 %v561, %v558
      %v715 = vpack.c.b16 %v562, %v559
      %v716 = vpack.c.b16 %v566, %v563
      %v717 = vpack.c.b16 %v567, %v564
      %v718 = vpack.c.b16 %v568, %v565
      %v719 = vpack.c.b16 %v572, %v569
      %v720 = vpack.c.b16 %v573, %v570
      %v721 = vpack.c.b16 %v574, %v571
      %v722 = vpack.c.b16 %v578, %v575
      %v723 = vpack.c.b16 %v579, %v576
      %v724 = vpack.c.b16 %v580, %v577
      %v725 = vpack.c.b16 %v584, %v581
      %v726 = vpack.c.b16 %v585, %v582
      %v727 = vpack.c.b16 %v586, %v583
      %v728 = vpack.c.b16 %v590, %v587
      %v729 = vpack.c.b16 %v591, %v588
      %v730 = vpack.c.b16 %v592, %v589
      %v731 = vpack.c.b16 %v596, %v593
      %v732 = vpack.c.b16 %v597, %v594
      %v733 = vpack.c.b16 %v598, %v595
      %v734 = vpack.c.b16 %v602, %v599
      %v735 = vpack.c.b16 %v603, %v600
      %v736 = vpack.c.b16 %v604, %v601
      %v737 = vpack.c.b16 %v608, %v605
      %v738 = vpack.c.b16 %v609, %v606
      %v739 = vpack.c.b16 %v610, %v607
      %v740 = vpack.c.b16 %v614, %v611
      %v741 = vpack.c.b16 %v615, %v612
      %v742 = vpack.c.b16 %v616, %v613
      %v743 = vpack.c.b16 %v620, %v617
      %v744 = vpack.c.b16 %v621, %v618
      %v745 = vpack.c.b16 %v622, %v619
      %v746 = vpack.c.b16 %v626, %v623
      %v747 = vpack.c.b16 %v627, %v624
      %v748 = vpack.c.b16 %v628, %v625
      %v749 = vpack.c.b16 %v632, %v629
      %v750 = vpack.c.b16 %v633, %v630
      %v751 = vpack.c.b16 %v634, %v631
      %v752 = vpack.c.b16 %v638, %v635
      %v753 = vpack.c.b16 %v639, %v636
      %v754 = vpack.c.b16 %v640, %v637
      %v755 = vpack.c.b16 %v644, %v641
      %v756 = vpack.c.b16 %v645, %v642
      %v757 = vpack.c.b16 %v646, %v643
      %v758 = vpack.c.b16 %v650, %v647
      %v759 = vpack.c.b16 %v651, %v648
      %v760 = vpack.c.b16 %v652, %v649
      %v761 = vpack.c.b16 %v656, %v653
      %v762 = vpack.c.b16 %v657, %v654
      %v763 = vpack.c.b16 %v658, %v655
      %v764 = vpack.c.b16 %v662, %v659
      %v765 = vpack.c.b16 %v663, %v660
      %v766 = vpack.c.b16 %v664, %v661
      %v767 = vpack.c.b16 %v668, %v665
      %v768 = vpack.c.b16 %v669, %v666
      %v769 = vpack.c.b16 %v670, %v667
      %v770 = vpack.c.b16 %v674, %v671
      %v771 = vpack.c.b16 %v675, %v672
      %v772 = vpack.c.b16 %v676, %v673
      %v917 = vunpack.c.l.b16 %v305
      %v918 = vunpack.c.l.b16 %v306
      %v919 = vunpack.c.l.b16 %v307
      %v920 = vunpack.c.l.b16 %v308
      %v921 = vunpack.c.l.b16 %v309
      %v922 = vunpack.c.l.b16 %v310
      %v923 = vunpack.c.l.b16 %v311
      %v924 = vunpack.c.l.b16 %v312
      %v925 = vunpack.c.l.b16 %v313
      %v926 = vunpack.c.l.b16 %v314
      %v927 = vunpack.c.l.b16 %v315
      %v928 = vunpack.c.l.b16 %v316
      %v929 = vunpack.c.l.b16 %v317
      %v930 = vunpack.c.l.b16 %v318
      %v931 = vunpack.c.l.b16 %v319
      %v932 = vunpack.c.l.b16 %v320
      %v933 = vunpack.c.l.b16 %v321
      %v934 = vunpack.c.l.b16 %v322
      %v935 = vunpack.c.l.b16 %v323
      %v936 = vunpack.c.l.b16 %v324
      %v937 = vunpack.c.l.b16 %v325
      %v938 = vunpack.c.l.b16 %v326
      %v939 = vunpack.c.l.b16 %v327
      %v940 = vunpack.c.l.b16 %v328
      %v941 = vunpack.c.l.b16 %v329
      %v942 = vunpack.c.l.b16 %v330
      %v943 = vunpack.c.l.b16 %v331
      %v944 = vunpack.c.l.b16 %v332
      %v945 = vunpack.c.l.b16 %v333
      %v946 = vunpack.c.l.b16 %v334
      %v947 = vunpack.c.l.b16 %v335
      %v948 = vunpack.c.l.b16 %v336
      %v949 = vunpack.c.l.b16 %v337
      %v950 = vunpack.c.l.b16 %v338
      %v951 = vunpack.c.l.b16 %v339
      %v952 = vunpack.c.l.b16 %v340
      %v953 = vunpack.c.l.b16 %v341
      %v954 = vunpack.c.l.b16 %v342
      %v955 = vunpack.c.l.b16 %v343
      %v956 = vunpack.c.l.b16 %v344
      %v957 = vunpack.c.l.b16 %v345
      %v958 = vunpack.c.l.b16 %v346
      %v959 = vunpack.c.l.b16 %v347
      %v960 = vunpack.c.l.b16 %v348
      %v961 = vunpack.c.l.b16 %v349
      %v962 = vunpack.c.l.b16 %v350
      %v963 = vunpack.c.l.b16 %v351
      %v964 = vunpack.c.l.b16 %v352
      %v965 = vpack.c.b16 %v918, %v917
      %v966 = vpack.c.b16 %v920, %v919
      %v967 = vpack.c.b16 %v922, %v921
      %v968 = vpack.c.b16 %v924, %v923
      %v969 = vpack.c.b16 %v926, %v925
      %v970 = vpack.c.b16 %v928, %v927
      %v971 = vpack.c.b16 %v930, %v929
      %v972 = vpack.c.b16 %v932, %v931
      %v973 = vpack.c.b16 %v934, %v933
      %v974 = vpack.c.b16 %v936, %v935
      %v975 = vpack.c.b16 %v938, %v937
      %v976 = vpack.c.b16 %v940, %v939
      %v977 = vpack.c.b16 %v942, %v941
      %v978 = vpack.c.b16 %v944, %v943
      %v979 = vpack.c.b16 %v946, %v945
      %v980 = vpack.c.b16 %v948, %v947
      %v981 = vpack.c.b16 %v950, %v949
      %v982 = vpack.c.b16 %v952, %v951
      %v983 = vpack.c.b16 %v954, %v953
      %v984 = vpack.c.b16 %v956, %v955
      %v985 = vpack.c.b16 %v958, %v957
      %v986 = vpack.c.b16 %v960, %v959
      %v987 = vpack.c.b16 %v962, %v961
      %v988 = vpack.c.b16 %v964, %v963
      %1013 = vmatpush.bf16.msra.mxu0 %v972
      %1014 = vmatpush.bf16.msra.mxu0 %v971
      %1015 = vmatpush.bf16.msra.mxu0 %v970
      %1016 = vmatpush.bf16.msra.mxu0 %v969
      %1017 = vmatpush.bf16.msra.mxu0 %v968
      %1018 = vmatpush.bf16.msra.mxu0 %v967
      %1019 = vmatpush.bf16.msra.mxu0 %v966
      %1020 = vmatpush.bf16.msra.mxu0 %v965
      %1021 = vmatmul.bf16.gmra.mxu0 %v677
      %v1022 = vpop.f32.mrf.mxu0
      %v1023 = vadd.f32 %v355, %v1022
      %v1024 = vpop.f32.mrf.mxu0
      %v1025 = vadd.f32 %v355, %v1024
      %1026 = vmatmul.bf16.gmra.mxu0 %v680
      %v1027 = vpop.f32.mrf.mxu0
      %v1028 = vadd.f32 %v355, %v1027
      %v1029 = vpop.f32.mrf.mxu0
      %v1030 = vadd.f32 %v355, %v1029
      %1031 = vmatmul.bf16.gmra.mxu0 %v683
      %v1032 = vpop.f32.mrf.mxu0
      %v1033 = vadd.f32 %v355, %v1032
      %v1034 = vpop.f32.mrf.mxu0
      %v1035 = vadd.f32 %v355, %v1034
      %1036 = vmatmul.bf16.gmra.mxu0 %v686
      %v1037 = vpop.f32.mrf.mxu0
      %v1038 = vadd.f32 %v355, %v1037
      %v1039 = vpop.f32.mrf.mxu0
      %v1040 = vadd.f32 %v355, %v1039
      %1041 = vmatmul.bf16.gmra.mxu0 %v689
      %v1042 = vpop.f32.mrf.mxu0
      %v1043 = vadd.f32 %v355, %v1042
      %v1044 = vpop.f32.mrf.mxu0
      %v1045 = vadd.f32 %v355, %v1044
      %1046 = vmatmul.bf16.gmra.mxu0 %v692
      %v1047 = vpop.f32.mrf.mxu0
      %v1048 = vadd.f32 %v355, %v1047
      %v1049 = vpop.f32.mrf.mxu0
      %v1050 = vadd.f32 %v355, %v1049
      %1051 = vmatmul.bf16.gmra.mxu0 %v695
      %v1052 = vpop.f32.mrf.mxu0
      %v1053 = vadd.f32 %v355, %v1052
      %v1054 = vpop.f32.mrf.mxu0
      %v1055 = vadd.f32 %v355, %v1054
      %1056 = vmatmul.bf16.gmra.mxu0 %v698
      %v1057 = vpop.f32.mrf.mxu0
      %v1058 = vadd.f32 %v355, %v1057
      %v1059 = vpop.f32.mrf.mxu0
      %v1060 = vadd.f32 %v355, %v1059
      %1061 = vmatmul.bf16.gmra.mxu0 %v701
      %v1062 = vpop.f32.mrf.mxu0
      %v1063 = vadd.f32 %v355, %v1062
      %v1064 = vpop.f32.mrf.mxu0
      %v1065 = vadd.f32 %v355, %v1064
      %1066 = vmatmul.bf16.gmra.mxu0 %v704
      %v1067 = vpop.f32.mrf.mxu0
      %v1068 = vadd.f32 %v355, %v1067
      %v1069 = vpop.f32.mrf.mxu0
      %v1070 = vadd.f32 %v355, %v1069
      %1071 = vmatmul.bf16.gmra.mxu0 %v707
      %v1072 = vpop.f32.mrf.mxu0
      %v1073 = vadd.f32 %v355, %v1072
      %v1074 = vpop.f32.mrf.mxu0
      %v1075 = vadd.f32 %v355, %v1074
      %1076 = vmatmul.bf16.gmra.mxu0 %v710
      %v1077 = vpop.f32.mrf.mxu0
      %v1078 = vadd.f32 %v355, %v1077
      %v1079 = vpop.f32.mrf.mxu0
      %v1080 = vadd.f32 %v355, %v1079
      %1081 = vmatmul.bf16.gmra.mxu0 %v713
      %v1082 = vpop.f32.mrf.mxu0
      %v1083 = vadd.f32 %v355, %v1082
      %v1084 = vpop.f32.mrf.mxu0
      %v1085 = vadd.f32 %v355, %v1084
      %1086 = vmatmul.bf16.gmra.mxu0 %v716
      %v1087 = vpop.f32.mrf.mxu0
      %v1088 = vadd.f32 %v355, %v1087
      %v1089 = vpop.f32.mrf.mxu0
      %v1090 = vadd.f32 %v355, %v1089
      %1091 = vmatmul.bf16.gmra.mxu0 %v719
      %v1092 = vpop.f32.mrf.mxu0
      %v1093 = vadd.f32 %v355, %v1092
      %v1094 = vpop.f32.mrf.mxu0
      %v1095 = vadd.f32 %v355, %v1094
      %1096 = vmatmul.bf16.gmra.mxu0 %v722
      %v1097 = vpop.f32.mrf.mxu0
      %v1098 = vadd.f32 %v355, %v1097
      %v1099 = vpop.f32.mrf.mxu0
      %v1100 = vadd.f32 %v355, %v1099
      %1101 = vmatmul.bf16.gmra.mxu0 %v725
      %v1102 = vpop.f32.mrf.mxu0
      %v1103 = vadd.f32 %v355, %v1102
      %v1104 = vpop.f32.mrf.mxu0
      %v1105 = vadd.f32 %v355, %v1104
      %1106 = vmatmul.bf16.gmra.mxu0 %v728
      %v1107 = vpop.f32.mrf.mxu0
      %v1108 = vadd.f32 %v355, %v1107
      %v1109 = vpop.f32.mrf.mxu0
      %v1110 = vadd.f32 %v355, %v1109
      %1111 = vmatmul.bf16.gmra.mxu0 %v731
      %v1112 = vpop.f32.mrf.mxu0
      %v1113 = vadd.f32 %v355, %v1112
      %v1114 = vpop.f32.mrf.mxu0
      %v1115 = vadd.f32 %v355, %v1114
      %1116 = vmatmul.bf16.gmra.mxu0 %v734
      %v1117 = vpop.f32.mrf.mxu0
      %v1118 = vadd.f32 %v355, %v1117
      %v1119 = vpop.f32.mrf.mxu0
      %v1120 = vadd.f32 %v355, %v1119
      %1121 = vmatmul.bf16.gmra.mxu0 %v737
      %v1122 = vpop.f32.mrf.mxu0
      %v1123 = vadd.f32 %v355, %v1122
      %v1124 = vpop.f32.mrf.mxu0
      %v1125 = vadd.f32 %v355, %v1124
      %1126 = vmatmul.bf16.gmra.mxu0 %v740
      %v1127 = vpop.f32.mrf.mxu0
      %v1128 = vadd.f32 %v355, %v1127
      %v1129 = vpop.f32.mrf.mxu0
      %v1130 = vadd.f32 %v355, %v1129
      %1131 = vmatmul.bf16.gmra.mxu0 %v743
      %v1132 = vpop.f32.mrf.mxu0
      %v1133 = vadd.f32 %v355, %v1132
      %v1134 = vpop.f32.mrf.mxu0
      %v1135 = vadd.f32 %v355, %v1134
      %1136 = vmatmul.bf16.gmra.mxu0 %v746
      %v1137 = vpop.f32.mrf.mxu0
      %v1138 = vadd.f32 %v355, %v1137
      %v1139 = vpop.f32.mrf.mxu0
      %v1140 = vadd.f32 %v355, %v1139
      %1141 = vmatmul.bf16.gmra.mxu0 %v749
      %v1142 = vpop.f32.mrf.mxu0
      %v1143 = vadd.f32 %v355, %v1142
      %v1144 = vpop.f32.mrf.mxu0
      %v1145 = vadd.f32 %v355, %v1144
      %1146 = vmatmul.bf16.gmra.mxu0 %v752
      %v1147 = vpop.f32.mrf.mxu0
      %v1148 = vadd.f32 %v355, %v1147
      %v1149 = vpop.f32.mrf.mxu0
      %v1150 = vadd.f32 %v355, %v1149
      %1151 = vmatmul.bf16.gmra.mxu0 %v755
      %v1152 = vpop.f32.mrf.mxu0
      %v1153 = vadd.f32 %v355, %v1152
      %v1154 = vpop.f32.mrf.mxu0
      %v1155 = vadd.f32 %v355, %v1154
      %1156 = vmatmul.bf16.gmra.mxu0 %v758
      %v1157 = vpop.f32.mrf.mxu0
      %v1158 = vadd.f32 %v355, %v1157
      %v1159 = vpop.f32.mrf.mxu0
      %v1160 = vadd.f32 %v355, %v1159
      %1161 = vmatmul.bf16.gmra.mxu0 %v761
      %v1162 = vpop.f32.mrf.mxu0
      %v1163 = vadd.f32 %v355, %v1162
      %v1164 = vpop.f32.mrf.mxu0
      %v1165 = vadd.f32 %v355, %v1164
      %1166 = vmatmul.bf16.gmra.mxu0 %v764
      %v1167 = vpop.f32.mrf.mxu0
      %v1168 = vadd.f32 %v355, %v1167
      %v1169 = vpop.f32.mrf.mxu0
      %v1170 = vadd.f32 %v355, %v1169
      %1171 = vmatmul.bf16.gmra.mxu0 %v767
      %v1172 = vpop.f32.mrf.mxu0
      %v1173 = vadd.f32 %v355, %v1172
      %v1174 = vpop.f32.mrf.mxu0
      %v1175 = vadd.f32 %v355, %v1174
      %1176 = vmatmul.bf16.gmra.mxu0 %v770
      %v1177 = vpop.f32.mrf.mxu0
      %v1178 = vadd.f32 %v355, %v1177
      %v1179 = vpop.f32.mrf.mxu0
      %v1180 = vadd.f32 %v355, %v1179
      %1181 = vdwg.mxu0
      %1182 = vmatpush.bf16.msra.mxu0 %v980
      %1183 = vmatpush.bf16.msra.mxu0 %v979
      %1184 = vmatpush.bf16.msra.mxu0 %v978
      %1185 = vmatpush.bf16.msra.mxu0 %v977
      %1186 = vmatpush.bf16.msra.mxu0 %v976
      %1187 = vmatpush.bf16.msra.mxu0 %v975
      %1188 = vmatpush.bf16.msra.mxu0 %v974
      %1189 = vmatpush.bf16.msra.mxu0 %v973
      %1190 = vmatmul.bf16.gmra.mxu0 %v678
      %v1191 = vpop.f32.mrf.mxu0
      %v1192 = vadd.f32 %v1023, %v1191
      %v1193 = vpop.f32.mrf.mxu0
      %v1194 = vadd.f32 %v1025, %v1193
      %1195 = vmatmul.bf16.gmra.mxu0 %v681
      %v1196 = vpop.f32.mrf.mxu0
      %v1197 = vadd.f32 %v1028, %v1196
      %v1198 = vpop.f32.mrf.mxu0
      %v1199 = vadd.f32 %v1030, %v1198
      %1200 = vmatmul.bf16.gmra.mxu0 %v684
      %v1201 = vpop.f32.mrf.mxu0
      %v1202 = vadd.f32 %v1033, %v1201
      %v1203 = vpop.f32.mrf.mxu0
      %v1204 = vadd.f32 %v1035, %v1203
      %1205 = vmatmul.bf16.gmra.mxu0 %v687
      %v1206 = vpop.f32.mrf.mxu0
      %v1207 = vadd.f32 %v1038, %v1206
      %v1208 = vpop.f32.mrf.mxu0
      %v1209 = vadd.f32 %v1040, %v1208
      %1210 = vmatmul.bf16.gmra.mxu0 %v690
      %v1211 = vpop.f32.mrf.mxu0
      %v1212 = vadd.f32 %v1043, %v1211
      %v1213 = vpop.f32.mrf.mxu0
      %v1214 = vadd.f32 %v1045, %v1213
      %1215 = vmatmul.bf16.gmra.mxu0 %v693
      %v1216 = vpop.f32.mrf.mxu0
      %v1217 = vadd.f32 %v1048, %v1216
      %v1218 = vpop.f32.mrf.mxu0
      %v1219 = vadd.f32 %v1050, %v1218
      %1220 = vmatmul.bf16.gmra.mxu0 %v696
      %v1221 = vpop.f32.mrf.mxu0
      %v1222 = vadd.f32 %v1053, %v1221
      %v1223 = vpop.f32.mrf.mxu0
      %v1224 = vadd.f32 %v1055, %v1223
      %1225 = vmatmul.bf16.gmra.mxu0 %v699
      %v1226 = vpop.f32.mrf.mxu0
      %v1227 = vadd.f32 %v1058, %v1226
      %v1228 = vpop.f32.mrf.mxu0
      %v1229 = vadd.f32 %v1060, %v1228
      %1230 = vmatmul.bf16.gmra.mxu0 %v702
      %v1231 = vpop.f32.mrf.mxu0
      %v1232 = vadd.f32 %v1063, %v1231
      %v1233 = vpop.f32.mrf.mxu0
      %v1234 = vadd.f32 %v1065, %v1233
      %1235 = vmatmul.bf16.gmra.mxu0 %v705
      %v1236 = vpop.f32.mrf.mxu0
      %v1237 = vadd.f32 %v1068, %v1236
      %v1238 = vpop.f32.mrf.mxu0
      %v1239 = vadd.f32 %v1070, %v1238
      %1240 = vmatmul.bf16.gmra.mxu0 %v708
      %v1241 = vpop.f32.mrf.mxu0
      %v1242 = vadd.f32 %v1073, %v1241
      %v1243 = vpop.f32.mrf.mxu0
      %v1244 = vadd.f32 %v1075, %v1243
      %1245 = vmatmul.bf16.gmra.mxu0 %v711
      %v1246 = vpop.f32.mrf.mxu0
      %v1247 = vadd.f32 %v1078, %v1246
      %v1248 = vpop.f32.mrf.mxu0
      %v1249 = vadd.f32 %v1080, %v1248
      %1250 = vmatmul.bf16.gmra.mxu0 %v714
      %v1251 = vpop.f32.mrf.mxu0
      %v1252 = vadd.f32 %v1083, %v1251
      %v1253 = vpop.f32.mrf.mxu0
      %v1254 = vadd.f32 %v1085, %v1253
      %1255 = vmatmul.bf16.gmra.mxu0 %v717
      %v1256 = vpop.f32.mrf.mxu0
      %v1257 = vadd.f32 %v1088, %v1256
      %v1258 = vpop.f32.mrf.mxu0
      %v1259 = vadd.f32 %v1090, %v1258
      %1260 = vmatmul.bf16.gmra.mxu0 %v720
      %v1261 = vpop.f32.mrf.mxu0
      %v1262 = vadd.f32 %v1093, %v1261
      %v1263 = vpop.f32.mrf.mxu0
      %v1264 = vadd.f32 %v1095, %v1263
      %1265 = vmatmul.bf16.gmra.mxu0 %v723
      %v1266 = vpop.f32.mrf.mxu0
      %v1267 = vadd.f32 %v1098, %v1266
      %v1268 = vpop.f32.mrf.mxu0
      %v1269 = vadd.f32 %v1100, %v1268
      %1270 = vmatmul.bf16.gmra.mxu0 %v726
      %v1271 = vpop.f32.mrf.mxu0
      %v1272 = vadd.f32 %v1103, %v1271
      %v1273 = vpop.f32.mrf.mxu0
      %v1274 = vadd.f32 %v1105, %v1273
      %1275 = vmatmul.bf16.gmra.mxu0 %v729
      %v1276 = vpop.f32.mrf.mxu0
      %v1277 = vadd.f32 %v1108, %v1276
      %v1278 = vpop.f32.mrf.mxu0
      %v1279 = vadd.f32 %v1110, %v1278
      %1280 = vmatmul.bf16.gmra.mxu0 %v732
      %v1281 = vpop.f32.mrf.mxu0
      %v1282 = vadd.f32 %v1113, %v1281
      %v1283 = vpop.f32.mrf.mxu0
      %v1284 = vadd.f32 %v1115, %v1283
      %1285 = vmatmul.bf16.gmra.mxu0 %v735
      %v1286 = vpop.f32.mrf.mxu0
      %v1287 = vadd.f32 %v1118, %v1286
      %v1288 = vpop.f32.mrf.mxu0
      %v1289 = vadd.f32 %v1120, %v1288
      %1290 = vmatmul.bf16.gmra.mxu0 %v738
      %v1291 = vpop.f32.mrf.mxu0
      %v1292 = vadd.f32 %v1123, %v1291
      %v1293 = vpop.f32.mrf.mxu0
      %v1294 = vadd.f32 %v1125, %v1293
      %1295 = vmatmul.bf16.gmra.mxu0 %v741
      %v1296 = vpop.f32.mrf.mxu0
      %v1297 = vadd.f32 %v1128, %v1296
      %v1298 = vpop.f32.mrf.mxu0
      %v1299 = vadd.f32 %v1130, %v1298
      %1300 = vmatmul.bf16.gmra.mxu0 %v744
      %v1301 = vpop.f32.mrf.mxu0
      %v1302 = vadd.f32 %v1133, %v1301
      %v1303 = vpop.f32.mrf.mxu0
      %v1304 = vadd.f32 %v1135, %v1303
      %1305 = vmatmul.bf16.gmra.mxu0 %v747
      %v1306 = vpop.f32.mrf.mxu0
      %v1307 = vadd.f32 %v1138, %v1306
      %v1308 = vpop.f32.mrf.mxu0
      %v1309 = vadd.f32 %v1140, %v1308
      %1310 = vmatmul.bf16.gmra.mxu0 %v750
      %v1311 = vpop.f32.mrf.mxu0
      %v1312 = vadd.f32 %v1143, %v1311
      %v1313 = vpop.f32.mrf.mxu0
      %v1314 = vadd.f32 %v1145, %v1313
      %1315 = vmatmul.bf16.gmra.mxu0 %v753
      %v1316 = vpop.f32.mrf.mxu0
      %v1317 = vadd.f32 %v1148, %v1316
      %v1318 = vpop.f32.mrf.mxu0
      %v1319 = vadd.f32 %v1150, %v1318
      %1320 = vmatmul.bf16.gmra.mxu0 %v756
      %v1321 = vpop.f32.mrf.mxu0
      %v1322 = vadd.f32 %v1153, %v1321
      %v1323 = vpop.f32.mrf.mxu0
      %v1324 = vadd.f32 %v1155, %v1323
      %1325 = vmatmul.bf16.gmra.mxu0 %v759
      %v1326 = vpop.f32.mrf.mxu0
      %v1327 = vadd.f32 %v1158, %v1326
      %v1328 = vpop.f32.mrf.mxu0
      %v1329 = vadd.f32 %v1160, %v1328
      %1330 = vmatmul.bf16.gmra.mxu0 %v762
      %v1331 = vpop.f32.mrf.mxu0
      %v1332 = vadd.f32 %v1163, %v1331
      %v1333 = vpop.f32.mrf.mxu0
      %v1334 = vadd.f32 %v1165, %v1333
      %1335 = vmatmul.bf16.gmra.mxu0 %v765
      %v1336 = vpop.f32.mrf.mxu0
      %v1337 = vadd.f32 %v1168, %v1336
      %v1338 = vpop.f32.mrf.mxu0
      %v1339 = vadd.f32 %v1170, %v1338
      %1340 = vmatmul.bf16.gmra.mxu0 %v768
      %v1341 = vpop.f32.mrf.mxu0
      %v1342 = vadd.f32 %v1173, %v1341
      %v1343 = vpop.f32.mrf.mxu0
      %v1344 = vadd.f32 %v1175, %v1343
      %1345 = vmatmul.bf16.gmra.mxu0 %v771
      %v1346 = vpop.f32.mrf.mxu0
      %v1347 = vadd.f32 %v1178, %v1346
      %v1348 = vpop.f32.mrf.mxu0
      %v1349 = vadd.f32 %v1180, %v1348
      %1350 = vdwg.mxu0
      %1351 = vmatpush.bf16.msra.mxu0 %v988
      %1352 = vmatpush.bf16.msra.mxu0 %v987
      %1353 = vmatpush.bf16.msra.mxu0 %v986
      %1354 = vmatpush.bf16.msra.mxu0 %v985
      %1355 = vmatpush.bf16.msra.mxu0 %v984
      %1356 = vmatpush.bf16.msra.mxu0 %v983
      %1357 = vmatpush.bf16.msra.mxu0 %v982
      %1358 = vmatpush.bf16.msra.mxu0 %v981
      %1359 = vmatmul.bf16.gmra.mxu0 %v679
      %v1360 = vpop.f32.mrf.mxu0
      %v1361 = vadd.f32 %v1192, %v1360
      %v1362 = vpop.f32.mrf.mxu0
      %v1363 = vadd.f32 %v1194, %v1362
      %1364 = vmatmul.bf16.gmra.mxu0 %v682
      %v1365 = vpop.f32.mrf.mxu0
      %v1366 = vadd.f32 %v1197, %v1365
      %v1367 = vpop.f32.mrf.mxu0
      %v1368 = vadd.f32 %v1199, %v1367
      %1369 = vmatmul.bf16.gmra.mxu0 %v685
      %v1370 = vpop.f32.mrf.mxu0
      %v1371 = vadd.f32 %v1202, %v1370
      %v1372 = vpop.f32.mrf.mxu0
      %v1373 = vadd.f32 %v1204, %v1372
      %1374 = vmatmul.bf16.gmra.mxu0 %v688
      %v1375 = vpop.f32.mrf.mxu0
      %v1376 = vadd.f32 %v1207, %v1375
      %v1377 = vpop.f32.mrf.mxu0
      %v1378 = vadd.f32 %v1209, %v1377
      %1379 = vmatmul.bf16.gmra.mxu0 %v691
      %v1380 = vpop.f32.mrf.mxu0
      %v1381 = vadd.f32 %v1212, %v1380
      %v1382 = vpop.f32.mrf.mxu0
      %v1383 = vadd.f32 %v1214, %v1382
      %1384 = vmatmul.bf16.gmra.mxu0 %v694
      %v1385 = vpop.f32.mrf.mxu0
      %v1386 = vadd.f32 %v1217, %v1385
      %v1387 = vpop.f32.mrf.mxu0
      %v1388 = vadd.f32 %v1219, %v1387
      %1389 = vmatmul.bf16.gmra.mxu0 %v697
      %v1390 = vpop.f32.mrf.mxu0
      %v1391 = vadd.f32 %v1222, %v1390
      %v1392 = vpop.f32.mrf.mxu0
      %v1393 = vadd.f32 %v1224, %v1392
      %1394 = vmatmul.bf16.gmra.mxu0 %v700
      %v1395 = vpop.f32.mrf.mxu0
      %v1396 = vadd.f32 %v1227, %v1395
      %v1397 = vpop.f32.mrf.mxu0
      %v1398 = vadd.f32 %v1229, %v1397
      %1399 = vmatmul.bf16.gmra.mxu0 %v703
      %v1400 = vpop.f32.mrf.mxu0
      %v1401 = vadd.f32 %v1232, %v1400
      %v1402 = vpop.f32.mrf.mxu0
      %v1403 = vadd.f32 %v1234, %v1402
      %1404 = vmatmul.bf16.gmra.mxu0 %v706
      %v1405 = vpop.f32.mrf.mxu0
      %v1406 = vadd.f32 %v1237, %v1405
      %v1407 = vpop.f32.mrf.mxu0
      %v1408 = vadd.f32 %v1239, %v1407
      %1409 = vmatmul.bf16.gmra.mxu0 %v709
      %v1410 = vpop.f32.mrf.mxu0
      %v1411 = vadd.f32 %v1242, %v1410
      %v1412 = vpop.f32.mrf.mxu0
      %v1413 = vadd.f32 %v1244, %v1412
      %1414 = vmatmul.bf16.gmra.mxu0 %v712
      %v1415 = vpop.f32.mrf.mxu0
      %v1416 = vadd.f32 %v1247, %v1415
      %v1417 = vpop.f32.mrf.mxu0
      %v1418 = vadd.f32 %v1249, %v1417
      %1419 = vmatmul.bf16.gmra.mxu0 %v715
      %v1420 = vpop.f32.mrf.mxu0
      %v1421 = vadd.f32 %v1252, %v1420
      %v1422 = vpop.f32.mrf.mxu0
      %v1423 = vadd.f32 %v1254, %v1422
      %1424 = vmatmul.bf16.gmra.mxu0 %v718
      %v1425 = vpop.f32.mrf.mxu0
      %v1426 = vadd.f32 %v1257, %v1425
      %v1427 = vpop.f32.mrf.mxu0
      %v1428 = vadd.f32 %v1259, %v1427
      %1429 = vmatmul.bf16.gmra.mxu0 %v721
      %v1430 = vpop.f32.mrf.mxu0
      %v1431 = vadd.f32 %v1262, %v1430
      %v1432 = vpop.f32.mrf.mxu0
      %v1433 = vadd.f32 %v1264, %v1432
      %1434 = vmatmul.bf16.gmra.mxu0 %v724
      %v1435 = vpop.f32.mrf.mxu0
      %v1436 = vadd.f32 %v1267, %v1435
      %v1437 = vpop.f32.mrf.mxu0
      %v1438 = vadd.f32 %v1269, %v1437
      %1439 = vmatmul.bf16.gmra.mxu0 %v727
      %v1440 = vpop.f32.mrf.mxu0
      %v1441 = vadd.f32 %v1272, %v1440
      %v1442 = vpop.f32.mrf.mxu0
      %v1443 = vadd.f32 %v1274, %v1442
      %1444 = vmatmul.bf16.gmra.mxu0 %v730
      %v1445 = vpop.f32.mrf.mxu0
      %v1446 = vadd.f32 %v1277, %v1445
      %v1447 = vpop.f32.mrf.mxu0
      %v1448 = vadd.f32 %v1279, %v1447
      %1449 = vmatmul.bf16.gmra.mxu0 %v733
      %v1450 = vpop.f32.mrf.mxu0
      %v1451 = vadd.f32 %v1282, %v1450
      %v1452 = vpop.f32.mrf.mxu0
      %v1453 = vadd.f32 %v1284, %v1452
      %1454 = vmatmul.bf16.gmra.mxu0 %v736
      %v1455 = vpop.f32.mrf.mxu0
      %v1456 = vadd.f32 %v1287, %v1455
      %v1457 = vpop.f32.mrf.mxu0
      %v1458 = vadd.f32 %v1289, %v1457
      %1459 = vmatmul.bf16.gmra.mxu0 %v739
      %v1460 = vpop.f32.mrf.mxu0
      %v1461 = vadd.f32 %v1292, %v1460
      %v1462 = vpop.f32.mrf.mxu0
      %v1463 = vadd.f32 %v1294, %v1462
      %1464 = vmatmul.bf16.gmra.mxu0 %v742
      %v1465 = vpop.f32.mrf.mxu0
      %v1466 = vadd.f32 %v1297, %v1465
      %v1467 = vpop.f32.mrf.mxu0
      %v1468 = vadd.f32 %v1299, %v1467
      %1469 = vmatmul.bf16.gmra.mxu0 %v745
      %v1470 = vpop.f32.mrf.mxu0
      %v1471 = vadd.f32 %v1302, %v1470
      %v1472 = vpop.f32.mrf.mxu0
      %v1473 = vadd.f32 %v1304, %v1472
      %1474 = vmatmul.bf16.gmra.mxu0 %v748
      %v1475 = vpop.f32.mrf.mxu0
      %v1476 = vadd.f32 %v1307, %v1475
      %v1477 = vpop.f32.mrf.mxu0
      %v1478 = vadd.f32 %v1309, %v1477
      %1479 = vmatmul.bf16.gmra.mxu0 %v751
      %v1480 = vpop.f32.mrf.mxu0
      %v1481 = vadd.f32 %v1312, %v1480
      %v1482 = vpop.f32.mrf.mxu0
      %v1483 = vadd.f32 %v1314, %v1482
      %1484 = vmatmul.bf16.gmra.mxu0 %v754
      %v1485 = vpop.f32.mrf.mxu0
      %v1486 = vadd.f32 %v1317, %v1485
      %v1487 = vpop.f32.mrf.mxu0
      %v1488 = vadd.f32 %v1319, %v1487
      %1489 = vmatmul.bf16.gmra.mxu0 %v757
      %v1490 = vpop.f32.mrf.mxu0
      %v1491 = vadd.f32 %v1322, %v1490
      %v1492 = vpop.f32.mrf.mxu0
      %v1493 = vadd.f32 %v1324, %v1492
      %1494 = vmatmul.bf16.gmra.mxu0 %v760
      %v1495 = vpop.f32.mrf.mxu0
      %v1496 = vadd.f32 %v1327, %v1495
      %v1497 = vpop.f32.mrf.mxu0
      %v1498 = vadd.f32 %v1329, %v1497
      %1499 = vmatmul.bf16.gmra.mxu0 %v763
      %v1500 = vpop.f32.mrf.mxu0
      %v1501 = vadd.f32 %v1332, %v1500
      %v1502 = vpop.f32.mrf.mxu0
      %v1503 = vadd.f32 %v1334, %v1502
      %1504 = vmatmul.bf16.gmra.mxu0 %v766
      %v1505 = vpop.f32.mrf.mxu0
      %v1506 = vadd.f32 %v1337, %v1505
      %v1507 = vpop.f32.mrf.mxu0
      %v1508 = vadd.f32 %v1339, %v1507
      %1509 = vmatmul.bf16.gmra.mxu0 %v769
      %v1510 = vpop.f32.mrf.mxu0
      %v1511 = vadd.f32 %v1342, %v1510
      %v1512 = vpop.f32.mrf.mxu0
      %v1513 = vadd.f32 %v1344, %v1512
      %1514 = vmatmul.bf16.gmra.mxu0 %v772
      %v1515 = vpop.f32.mrf.mxu0
      %v1516 = vadd.f32 %v1347, %v1515
      %v1517 = vpop.f32.mrf.mxu0
      %v1518 = vadd.f32 %v1349, %v1517
      %1519 = vdwg.mxu0
      %v1520 = vmax.f32 %v1361, 0.0
      %v1521 = vmax.f32 %v1363, 0.0
      %v1522 = vmax.f32 %v1366, 0.0
      %v1523 = vmax.f32 %v1368, 0.0
      %v1524 = vmax.f32 %v1371, 0.0
      %v1525 = vmax.f32 %v1373, 0.0
      %v1526 = vmax.f32 %v1376, 0.0
      %v1527 = vmax.f32 %v1378, 0.0
      %v1528 = vmax.f32 %v1381, 0.0
      %v1529 = vmax.f32 %v1383, 0.0
      %v1530 = vmax.f32 %v1386, 0.0
      %v1531 = vmax.f32 %v1388, 0.0
      %v1532 = vmax.f32 %v1391, 0.0
      %v1533 = vmax.f32 %v1393, 0.0
      %v1534 = vmax.f32 %v1396, 0.0
      %v1535 = vmax.f32 %v1398, 0.0
      %v1536 = vmax.f32 %v1401, 0.0
      %v1537 = vmax.f32 %v1403, 0.0
      %v1538 = vmax.f32 %v1406, 0.0
      %v1539 = vmax.f32 %v1408, 0.0
      %v1540 = vmax.f32 %v1411, 0.0
      %v1541 = vmax.f32 %v1413, 0.0
      %v1542 = vmax.f32 %v1416, 0.0
      %v1543 = vmax.f32 %v1418, 0.0
      %v1544 = vmax.f32 %v1421, 0.0
      %v1545 = vmax.f32 %v1423, 0.0
      %v1546 = vmax.f32 %v1426, 0.0
      %v1547 = vmax.f32 %v1428, 0.0
      %v1548 = vmax.f32 %v1431, 0.0
      %v1549 = vmax.f32 %v1433, 0.0
      %v1550 = vmax.f32 %v1436, 0.0
      %v1551 = vmax.f32 %v1438, 0.0
      %v1552 = vmax.f32 %v1441, 0.0
      %v1553 = vmax.f32 %v1443, 0.0
      %v1554 = vmax.f32 %v1446, 0.0
      %v1555 = vmax.f32 %v1448, 0.0
      %v1556 = vmax.f32 %v1451, 0.0
      %v1557 = vmax.f32 %v1453, 0.0
      %v1558 = vmax.f32 %v1456, 0.0
      %v1559 = vmax.f32 %v1458, 0.0
      %v1560 = vmax.f32 %v1461, 0.0
      %v1561 = vmax.f32 %v1463, 0.0
      %v1562 = vmax.f32 %v1466, 0.0
      %v1563 = vmax.f32 %v1468, 0.0
      %v1564 = vmax.f32 %v1471, 0.0
      %v1565 = vmax.f32 %v1473, 0.0
      %v1566 = vmax.f32 %v1476, 0.0
      %v1567 = vmax.f32 %v1478, 0.0
      %v1568 = vmax.f32 %v1481, 0.0
      %v1569 = vmax.f32 %v1483, 0.0
      %v1570 = vmax.f32 %v1486, 0.0
      %v1571 = vmax.f32 %v1488, 0.0
      %v1572 = vmax.f32 %v1491, 0.0
      %v1573 = vmax.f32 %v1493, 0.0
      %v1574 = vmax.f32 %v1496, 0.0
      %v1575 = vmax.f32 %v1498, 0.0
      %v1576 = vmax.f32 %v1501, 0.0
      %v1577 = vmax.f32 %v1503, 0.0
      %v1578 = vmax.f32 %v1506, 0.0
      %v1579 = vmax.f32 %v1508, 0.0
      %v1580 = vmax.f32 %v1511, 0.0
      %v1581 = vmax.f32 %v1513, 0.0
      %v1582 = vmax.f32 %v1516, 0.0
      %v1583 = vmax.f32 %v1518, 0.0
      %v1584 = vpack.c.bf16 %v1520, %v1520
      %v1585 = vpack.c.bf16 %v1521, %v1521
      %v1586 = vpack.c.bf16 %v1522, %v1522
      %v1587 = vpack.c.bf16 %v1523, %v1523
      %v1588 = vpack.c.bf16 %v1524, %v1524
      %v1589 = vpack.c.bf16 %v1525, %v1525
      %v1590 = vpack.c.bf16 %v1526, %v1526
      %v1591 = vpack.c.bf16 %v1527, %v1527
      %v1592 = vpack.c.bf16 %v1528, %v1528
      %v1593 = vpack.c.bf16 %v1529, %v1529
      %v1594 = vpack.c.bf16 %v1530, %v1530
      %v1595 = vpack.c.bf16 %v1531, %v1531
      %v1596 = vpack.c.bf16 %v1532, %v1532
      %v1597 = vpack.c.bf16 %v1533, %v1533
      %v1598 = vpack.c.bf16 %v1534, %v1534
      %v1599 = vpack.c.bf16 %v1535, %v1535
      %v1600 = vpack.c.bf16 %v1536, %v1536
      %v1601 = vpack.c.bf16 %v1537, %v1537
      %v1602 = vpack.c.bf16 %v1538, %v1538
      %v1603 = vpack.c.bf16 %v1539, %v1539
      %v1604 = vpack.c.bf16 %v1540, %v1540
      %v1605 = vpack.c.bf16 %v1541, %v1541
      %v1606 = vpack.c.bf16 %v1542, %v1542
      %v1607 = vpack.c.bf16 %v1543, %v1543
      %v1608 = vpack.c.bf16 %v1544, %v1544
      %v1609 = vpack.c.bf16 %v1545, %v1545
      %v1610 = vpack.c.bf16 %v1546, %v1546
      %v1611 = vpack.c.bf16 %v1547, %v1547
      %v1612 = vpack.c.bf16 %v1548, %v1548
      %v1613 = vpack.c.bf16 %v1549, %v1549
      %v1614 = vpack.c.bf16 %v1550, %v1550
      %v1615 = vpack.c.bf16 %v1551, %v1551
      %v1616 = vpack.c.bf16 %v1552, %v1552
      %v1617 = vpack.c.bf16 %v1553, %v1553
      %v1618 = vpack.c.bf16 %v1554, %v1554
      %v1619 = vpack.c.bf16 %v1555, %v1555
      %v1620 = vpack.c.bf16 %v1556, %v1556
      %v1621 = vpack.c.bf16 %v1557, %v1557
      %v1622 = vpack.c.bf16 %v1558, %v1558
      %v1623 = vpack.c.bf16 %v1559, %v1559
      %v1624 = vpack.c.bf16 %v1560, %v1560
      %v1625 = vpack.c.bf16 %v1561, %v1561
      %v1626 = vpack.c.bf16 %v1562, %v1562
      %v1627 = vpack.c.bf16 %v1563, %v1563
      %v1628 = vpack.c.bf16 %v1564, %v1564
      %v1629 = vpack.c.bf16 %v1565, %v1565
      %v1630 = vpack.c.bf16 %v1566, %v1566
      %v1631 = vpack.c.bf16 %v1567, %v1567
      %v1632 = vpack.c.bf16 %v1568, %v1568
      %v1633 = vpack.c.bf16 %v1569, %v1569
      %v1634 = vpack.c.bf16 %v1570, %v1570
      %v1635 = vpack.c.bf16 %v1571, %v1571
      %v1636 = vpack.c.bf16 %v1572, %v1572
      %v1637 = vpack.c.bf16 %v1573, %v1573
      %v1638 = vpack.c.bf16 %v1574, %v1574
      %v1639 = vpack.c.bf16 %v1575, %v1575
      %v1640 = vpack.c.bf16 %v1576, %v1576
      %v1641 = vpack.c.bf16 %v1577, %v1577
      %v1642 = vpack.c.bf16 %v1578, %v1578
      %v1643 = vpack.c.bf16 %v1579, %v1579
      %v1644 = vpack.c.bf16 %v1580, %v1580
      %v1645 = vpack.c.bf16 %v1581, %v1581
      %v1646 = vpack.c.bf16 %v1582, %v1582
      %v1647 = vpack.c.bf16 %v1583, %v1583
      %1648 = vst [vmem:[%s175] sm:$0xf] %v1584
      %1649 = vst [vmem:[%s175 + $0x4] sm:$0xf] %v1585
      %1650 = vst [vmem:[%s175 + $0x8] sm:$0xf] %v1586
      %1651 = vst [vmem:[%s175 + $0xc] sm:$0xf] %v1587
      %1652 = vst [vmem:[%s175 + $0x10] sm:$0xf] %v1588
      %1653 = vst [vmem:[%s175 + $0x14] sm:$0xf] %v1589
      %1654 = vst [vmem:[%s175 + $0x18] sm:$0xf] %v1590
      %1655 = vst [vmem:[%s175 + $0x1c] sm:$0xf] %v1591
      %1656 = vst [vmem:[%s175 + $0x20] sm:$0xf] %v1592
      %1657 = vst [vmem:[%s175 + $0x24] sm:$0xf] %v1593
      %1658 = vst [vmem:[%s175 + $0x28] sm:$0xf] %v1594
      %1659 = vst [vmem:[%s175 + $0x2c] sm:$0xf] %v1595
      %1660 = vst [vmem:[%s175 + $0x30] sm:$0xf] %v1596
      %1661 = vst [vmem:[%s175 + $0x34] sm:$0xf] %v1597
      %1662 = vst [vmem:[%s175 + $0x38] sm:$0xf] %v1598
      %1663 = vst [vmem:[%s175 + $0x3c] sm:$0xf] %v1599
      %1664 = vst [vmem:[%s175 + $0x40] sm:$0xf] %v1600
      %1665 = vst [vmem:[%s175 + $0x44] sm:$0xf] %v1601
      %1666 = vst [vmem:[%s175 + $0x48] sm:$0xf] %v1602
      %1667 = vst [vmem:[%s175 + $0x4c] sm:$0xf] %v1603
      %1668 = vst [vmem:[%s175 + $0x50] sm:$0xf] %v1604
      %1669 = vst [vmem:[%s175 + $0x54] sm:$0xf] %v1605
      %1670 = vst [vmem:[%s175 + $0x58] sm:$0xf] %v1606
      %1671 = vst [vmem:[%s175 + $0x5c] sm:$0xf] %v1607
      %1672 = vst [vmem:[%s175 + $0x60] sm:$0xf] %v1608
      %1673 = vst [vmem:[%s175 + $0x64] sm:$0xf] %v1609
      %1674 = vst [vmem:[%s175 + $0x68] sm:$0xf] %v1610
      %1675 = vst [vmem:[%s175 + $0x6c] sm:$0xf] %v1611
      %1676 = vst [vmem:[%s175 + $0x70] sm:$0xf] %v1612
      %1677 = vst [vmem:[%s175 + $0x74] sm:$0xf] %v1613
      %1678 = vst [vmem:[%s175 + $0x78] sm:$0xf] %v1614
      %1679 = vst [vmem:[%s175 + $0x7c] sm:$0xf] %v1615
      %1680 = vst [vmem:[%s175 + $0x80] sm:$0xf] %v1616
      %1681 = vst [vmem:[%s175 + $0x84] sm:$0xf] %v1617
      %1682 = vst [vmem:[%s175 + $0x88] sm:$0xf] %v1618
      %1683 = vst [vmem:[%s175 + $0x8c] sm:$0xf] %v1619
      %1684 = vst [vmem:[%s175 + $0x90] sm:$0xf] %v1620
      %1685 = vst [vmem:[%s175 + $0x94] sm:$0xf] %v1621
      %1686 = vst [vmem:[%s175 + $0x98] sm:$0xf] %v1622
      %1687 = vst [vmem:[%s175 + $0x9c] sm:$0xf] %v1623
      %1688 = vst [vmem:[%s175 + $0xa0] sm:$0xf] %v1624
      %1689 = vst [vmem:[%s175 + $0xa4] sm:$0xf] %v1625
      %1690 = vst [vmem:[%s175 + $0xa8] sm:$0xf] %v1626
      %1691 = vst [vmem:[%s175 + $0xac] sm:$0xf] %v1627
      %1692 = vst [vmem:[%s175 + $0xb0] sm:$0xf] %v1628
      %1693 = vst [vmem:[%s175 + $0xb4] sm:$0xf] %v1629
      %1694 = vst [vmem:[%s175 + $0xb8] sm:$0xf] %v1630
      %1695 = vst [vmem:[%s175 + $0xbc] sm:$0xf] %v1631
      %1696 = vst [vmem:[%s175 + $0xc0] sm:$0xf] %v1632
      %1697 = vst [vmem:[%s175 + $0xc4] sm:$0xf] %v1633
      %1698 = vst [vmem:[%s175 + $0xc8] sm:$0xf] %v1634
      %1699 = vst [vmem:[%s175 + $0xcc] sm:$0xf] %v1635
      %1700 = vst [vmem:[%s175 + $0xd0] sm:$0xf] %v1636
      %1701 = vst [vmem:[%s175 + $0xd4] sm:$0xf] %v1637
      %1702 = vst [vmem:[%s175 + $0xd8] sm:$0xf] %v1638
      %1703 = vst [vmem:[%s175 + $0xdc] sm:$0xf] %v1639
      %1704 = vst [vmem:[%s175 + $0xe0] sm:$0xf] %v1640
      %1705 = vst [vmem:[%s175 + $0xe4] sm:$0xf] %v1641
      %1706 = vst [vmem:[%s175 + $0xe8] sm:$0xf] %v1642
      %1707 = vst [vmem:[%s175 + $0xec] sm:$0xf] %v1643
      %1708 = vst [vmem:[%s175 + $0xf0] sm:$0xf] %v1644
      %1709 = vst [vmem:[%s175 + $0xf4] sm:$0xf] %v1645
      %1710 = vst [vmem:[%s175 + $0xf8] sm:$0xf] %v1646
      %1711 = vst [vmem:[%s175 + $0xfc] sm:$0xf] %v1647
      %s1712 = smul.u32 64, %s14
      %p1713 = scmp.lt.s32.totalorder %s1712, 127
      %s1714 = scalar_select %p1713, %s1712, 127
      %s1715 = smul.addr %s1714, 4
      %s1716 = scalar_lea.vmem %s3, %s1715
      // Predicated region
      $region33: #{_lambda_.13} parent=31 // pred_check
        %p1717 = pneg %p100
      $region34: #{_lambda_.13} parent=31 // pred_check_branch
        %1719 = sbr.rel (%p1717) target = $region36
      $region35: #{_lambda_.13} parent=31 // pred_region
        %s1720 = smul.u32 64, %s14
      $region36: #{_lambda_.13} parent=31 // pred_fallthru
        _
    $region32: #{_lambda_.13} parent=5 // pred_fallthru
      _
    %p1721 = scmp.le.s32.totalorder 2, %s9
    // Predicated region
    $region37: #{_lambda_.13} parent=5 // pred_check
      %p1722 = pneg %p1721
    $region38: #{_lambda_.13} parent=5 // pred_check_branch
      %1724 = sbr.rel (%p1722) target = $region40
    $region39: #{_lambda_.13} parent=5 // pred_region
      %s1725 = ssub.s32 %s9, 2
      // Predicated region
      $region41: #{_lambda_.13} parent=39 // pred_check
        %p1726 = pneg %p106
      $region42: #{_lambda_.13} parent=39 // pred_check_branch
        %1728 = sbr.rel (%p1726) target = $region44
      $region43: #{_lambda_.13} parent=39 // pred_region
        %s1729 = smul.u32 64, %s15
        %p1730 = scmp.lt.s32.totalorder %s1729, 127
        %s1731 = scalar_select %p1730, %s1729, 127
        %s1732 = smul.addr %s1731, 4
        %s1733 = scalar_lea.vmem %s3, %s1732
      $region44: #{_lambda_.13} parent=39 // pred_fallthru
        _
    $region40: #{_lambda_.13} parent=5 // pred_fallthru
      _
  $region6: #{_lambda_.13} parent=0 // loop_footer
    %s13 = sadd.s32 1, %s9
  $region7: #{_lambda_.13} parent=0 // loop_footer_branch
    %8 = sbr.rel target = $region3
  $region8: #{_lambda_.13} parent=0 // loop_exit
    _

// kernel: _lambda_.14
$region0: #{_lambda_.14}
  #allocation0 [shape = 'u32[]', space=smem, size = 0x4, offset = 0x4, fixed_abs, tag = 'smem constant byte address 0x4 - core index']
  #allocation1 [shape = 'u32[72,128]{1,0:T(1,128)}', space=vmem, size = 0x9000, scoped, tag = 'internal scratch']
  %s0 = inlined_call_operand.vmem [shape: bf16[128,27,128], index: 0, kind: input, shape index: {}]
  %s1 = inlined_call_operand.vmem [shape: bf16[128,128], index: 1, kind: output, shape index: {}]
  %s2 = sld [smem:[#allocation0]]
  $region37: #{_lambda_.14} parent=0
    _
  %s4 = ssub.s32 1, %s2
  %s5 = scalar_select 0, %s4, %s2
  loop: start=0, step=1, limit=4
  $region2: #{_lambda_.14} parent=0 // loop_pre_header
    _
  $region3: #{_lambda_.14} parent=0 // loop_header
    %s7 = sphi 0, %s11
    %p8 = scmp.ge.s32.totalorder %s7, 4
    %s17 = sphi 0, %s19
    %s20 = sphi 0, %s17
    %s21 = sphi 0, %s20
    %s37 = sphi 0, %s21
    %s43 = sphi 0, %s45
    %s46 = sphi 0, %s43
    %s47 = sphi 0, %s46
    %s63 = sphi 0, %s47
  $region4: #{_lambda_.14} parent=0 // loop_header_branch
    %10 = sbr.rel (%p8) target = $region8
  $region5: #{_lambda_.14} parent=0 // loop_body
    %s12 = ssub.s32 %s7, 1
    %s13 = ssub.s32 %s7, 2
    %s14 = sadd.s32 %s7, 1
    %s15 = ssub.s32 %s7, %s14
    %p16 = scmp.eq.s32.totalorder %s15, 0
    %s18 = sadd.s32 %s17, 1
    %s19 = scalar_select %p16, %s17, %s18
    %p22 = pneg %p16
    %p23 = scmp.eq.s32.totalorder %s7, 1
    %p24 = por %p22, %p23
    %p25 = scmp.ne.s32.totalorder %s17, %s20
    %p26 = scmp.eq.s32.totalorder %s7, 0
    %p27 = por %p25, %p26
    %p28 = scmp.ne.s32.totalorder %s17, %s20
    %p29 = scmp.eq.s32.totalorder %s12, 1
    %p30 = por %p28, %p29
    %p31 = scmp.ne.s32.totalorder %s20, %s21
    %p32 = scmp.eq.s32.totalorder %s12, 0
    %p33 = por %p31, %p32
    %p34 = scmp.ne.s32.totalorder %s20, %s21
    %p35 = scmp.eq.s32.totalorder %s13, 1
    %p36 = por %p34, %p35
    %p38 = scmp.ne.s32.totalorder %s21, %s37
    %p39 = scmp.eq.s32.totalorder %s13, 0
    %p40 = por %p38, %p39
    %s41 = ssub.s32 %s7, %s14
    %p42 = scmp.eq.s32.totalorder %s41, 0
    %s44 = sadd.s32 %s43, 1
    %s45 = scalar_select %p42, %s43, %s44
    %p48 = pneg %p42
    %p49 = scmp.eq.s32.totalorder %s7, 1
    %p50 = por %p48, %p49
    %p51 = scmp.ne.s32.totalorder %s43, %s46
    %p52 = scmp.eq.s32.totalorder %s7, 0
    %p53 = por %p51, %p52
    %p54 = scmp.ne.s32.totalorder %s43, %s46
    %p55 = scmp.eq.s32.totalorder %s12, 1
    %p56 = por %p54, %p55
    %p57 = scmp.ne.s32.totalorder %s46, %s47
    %p58 = scmp.eq.s32.totalorder %s12, 0
    %p59 = por %p57, %p58
    %p60 = scmp.ne.s32.totalorder %s46, %s47
    %p61 = scmp.eq.s32.totalorder %s13, 1
    %p62 = por %p60, %p61
    %p64 = scmp.ne.s32.totalorder %s47, %s63
    %p65 = scmp.eq.s32.totalorder %s13, 0
    %p66 = por %p64, %p65
    %p67 = scmp.le.s32.totalorder 1, %s7
    %p68 = scmp.lt.s32.totalorder %s7, 3
    %p69 = pnand %p67, %p68
    %p70 = pneg %p69
    // Predicated region
    $region9: #{_lambda_.14} parent=5 // pred_check
      _
    $region10: #{_lambda_.14} parent=5 // pred_check_branch
      %72 = sbr.rel (%p69) target = $region12
    $region11: #{_lambda_.14} parent=5 // pred_region
      %s73 = ssub.s32 %s7, 1
    $region12: #{_lambda_.14} parent=5 // pred_fallthru
      _
    %p74 = scmp.lt.s32.totalorder %s7, 2
    // Predicated region
    $region13: #{_lambda_.14} parent=5 // pred_check
      %p75 = pneg %p74
    $region14: #{_lambda_.14} parent=5 // pred_check_branch
      %77 = sbr.rel (%p75) target = $region16
    $region15: #{_lambda_.14} parent=5 // pred_region
      // Predicated region
      $region17: #{_lambda_.14} parent=15 // pred_check
        %p78 = pneg %p27
      $region18: #{_lambda_.14} parent=15 // pred_check_branch
        %80 = sbr.rel (%p78) target = $region20
      $region19: #{_lambda_.14} parent=15 // pred_region
        %s81 = smul.u32 64, %s7
        %p82 = scmp.lt.s32.totalorder %s81, 127
        %s83 = scalar_select %p82, %s81, 127
        %s84 = smul.addr %s83, 4
        %s85 = smul.addr %s84, 4
        %s86 = scalar_lea.vmem %s0, %s85
        %s87 = smul.u32 64, %s7
      $region20: #{_lambda_.14} parent=15 // pred_fallthru
        _
    $region16: #{_lambda_.14} parent=5 // pred_fallthru
      _
    %p88 = scmp.le.s32.totalorder 1, %s7
    %p89 = scmp.lt.s32.totalorder %s7, 3
    %p90 = pnand %p88, %p89
    %p91 = pneg %p90
    // Predicated region
    $region21: #{_lambda_.14} parent=5 // pred_check
      _
    $region22: #{_lambda_.14} parent=5 // pred_check_branch
      %93 = sbr.rel (%p90) target = $region24
    $region23: #{_lambda_.14} parent=5 // pred_region
      %s94 = ssub.s32 %s7, 1
      %s95 = smul.u32 64, %s12
      %p96 = scmp.lt.s32.totalorder %s95, 127
      %s97 = scalar_select %p96, %s95, 127
      %s98 = smul.addr %s97, 4
      %s99 = smul.addr %s98, 4
      %s100 = scalar_lea.vmem %s0, %s99
      %p101 = pneg %p33
      %p102 = pneg %p30
      %p103 = pneg %p59
      %p104 = pneg %p56
      %s105 = smul.u32 8, %s12
      %p106 = scmp.lt.s32.totalorder %s105, 15
      %s107 = scalar_select %p106, %s105, 15
      %s108 = smul.addr %s107, 4
      %s109 = scalar_lea.vmem %s1, %s108
      %s110 = smul.u32 64, %s12
      %p111 = scmp.lt.s32.totalorder %s110, 127
      %s112 = scalar_select %p111, %s110, 127
      %s113 = smul.addr %s112, 4
      %s114 = smul.addr %s113, 4
      %s115 = scalar_lea.vmem %s0, %s114
      %s116 = smul.u32 64, %s12
      %s117 = smul.u32 8, %s12
      %p118 = scmp.lt.s32.totalorder %s117, 15
      %s119 = scalar_select %p118, %s117, 15
      %s120 = smul.addr %s119, 4
      %s121 = scalar_lea.vmem %s1, %s120
      %s122 = smul.u32 8, %s12
      %v123 = vld [vmem:[%s115] sm:$0xf]
      %v124 = vld [vmem:[%s115 + $0x4] sm:$0xf]
      %v125 = vld [vmem:[%s115 + $0x8] sm:$0xf]
      %v126 = vld [vmem:[%s115 + $0xc] sm:$0x3]
      %v127 = vld [vmem:[%s115 + $0x10] sm:$0xf]
      %v128 = vld [vmem:[%s115 + $0x14] sm:$0xf]
      %v129 = vld [vmem:[%s115 + $0x18] sm:$0xf]
      %v130 = vld [vmem:[%s115 + $0x1c] sm:$0x3]
      %v131 = vld [vmem:[%s115 + $0x20] sm:$0xf]
      %v132 = vld [vmem:[%s115 + $0x24] sm:$0xf]
      %v133 = vld [vmem:[%s115 + $0x28] sm:$0xf]
      %v134 = vld [vmem:[%s115 + $0x2c] sm:$0x3]
      %v135 = vld [vmem:[%s115 + $0x30] sm:$0xf]
      %v136 = vld [vmem:[%s115 + $0x34] sm:$0xf]
      %v137 = vld [vmem:[%s115 + $0x38] sm:$0xf]
      %v138 = vld [vmem:[%s115 + $0x3c] sm:$0x3]
      %v139 = vld [vmem:[%s115 + $0x40] sm:$0xf]
      %v140 = vld [vmem:[%s115 + $0x44] sm:$0xf]
      %v141 = vld [vmem:[%s115 + $0x48] sm:$0xf]
      %v142 = vld [vmem:[%s115 + $0x4c] sm:$0x3]
      %v143 = vld [vmem:[%s115 + $0x50] sm:$0xf]
      %v144 = vld [vmem:[%s115 + $0x54] sm:$0xf]
      %v145 = vld [vmem:[%s115 + $0x58] sm:$0xf]
      %v146 = vld [vmem:[%s115 + $0x5c] sm:$0x3]
      %v147 = vld [vmem:[%s115 + $0x60] sm:$0xf]
      %v148 = vld [vmem:[%s115 + $0x64] sm:$0xf]
      %v149 = vld [vmem:[%s115 + $0x68] sm:$0xf]
      %v150 = vld [vmem:[%s115 + $0x6c] sm:$0x3]
      %v151 = vld [vmem:[%s115 + $0x70] sm:$0xf]
      %v152 = vld [vmem:[%s115 + $0x74] sm:$0xf]
      %v153 = vld [vmem:[%s115 + $0x78] sm:$0xf]
      %v154 = vld [vmem:[%s115 + $0x7c] sm:$0x3]
      %v155 = vld [vmem:[%s115 + $0x80] sm:$0xf]
      %v156 = vld [vmem:[%s115 + $0x84] sm:$0xf]
      %v157 = vld [vmem:[%s115 + $0x88] sm:$0xf]
      %v158 = vld [vmem:[%s115 + $0x8c] sm:$0x3]
      %v159 = vld [vmem:[%s115 + $0x90] sm:$0xf]
      %v160 = vld [vmem:[%s115 + $0x94] sm:$0xf]
      %v161 = vld [vmem:[%s115 + $0x98] sm:$0xf]
      %v162 = vld [vmem:[%s115 + $0x9c] sm:$0x3]
      %v163 = vld [vmem:[%s115 + $0xa0] sm:$0xf]
      %v164 = vld [vmem:[%s115 + $0xa4] sm:$0xf]
      %v165 = vld [vmem:[%s115 + $0xa8] sm:$0xf]
      %v166 = vld [vmem:[%s115 + $0xac] sm:$0x3]
      %v167 = vld [vmem:[%s115 + $0xb0] sm:$0xf]
      %v168 = vld [vmem:[%s115 + $0xb4] sm:$0xf]
      %v169 = vld [vmem:[%s115 + $0xb8] sm:$0xf]
      %v170 = vld [vmem:[%s115 + $0xbc] sm:$0x3]
      %v171 = vld [vmem:[%s115 + $0xc0] sm:$0xf]
      %v172 = vld [vmem:[%s115 + $0xc4] sm:$0xf]
      %v173 = vld [vmem:[%s115 + $0xc8] sm:$0xf]
      %v174 = vld [vmem:[%s115 + $0xcc] sm:$0x3]
      %v175 = vld [vmem:[%s115 + $0xd0] sm:$0xf]
      %v176 = vld [vmem:[%s115 + $0xd4] sm:$0xf]
      %v177 = vld [vmem:[%s115 + $0xd8] sm:$0xf]
      %v178 = vld [vmem:[%s115 + $0xdc] sm:$0x3]
      %v179 = vld [vmem:[%s115 + $0xe0] sm:$0xf]
      %v180 = vld [vmem:[%s115 + $0xe4] sm:$0xf]
      %v181 = vld [vmem:[%s115 + $0xe8] sm:$0xf]
      %v182 = vld [vmem:[%s115 + $0xec] sm:$0x3]
      %v183 = vld [vmem:[%s115 + $0xf0] sm:$0xf]
      %v184 = vld [vmem:[%s115 + $0xf4] sm:$0xf]
      %v185 = vld [vmem:[%s115 + $0xf8] sm:$0xf]
      %v186 = vld [vmem:[%s115 + $0xfc] sm:$0x3]
      %v187 = vld [vmem:[%s115 + $0x100] sm:$0xf]
      %v188 = vld [vmem:[%s115 + $0x104] sm:$0xf]
      %v189 = vld [vmem:[%s115 + $0x108] sm:$0xf]
      %v190 = vld [vmem:[%s115 + $0x10c] sm:$0x3]
      %v191 = vld [vmem:[%s115 + $0x110] sm:$0xf]
      %v192 = vld [vmem:[%s115 + $0x114] sm:$0xf]
      %v193 = vld [vmem:[%s115 + $0x118] sm:$0xf]
      %v194 = vld [vmem:[%s115 + $0x11c] sm:$0x3]
      %v195 = vld [vmem:[%s115 + $0x120] sm:$0xf]
      %v196 = vld [vmem:[%s115 + $0x124] sm:$0xf]
      %v197 = vld [vmem:[%s115 + $0x128] sm:$0xf]
      %v198 = vld [vmem:[%s115 + $0x12c] sm:$0x3]
      %v199 = vld [vmem:[%s115 + $0x130] sm:$0xf]
      %v200 = vld [vmem:[%s115 + $0x134] sm:$0xf]
      %v201 = vld [vmem:[%s115 + $0x138] sm:$0xf]
      %v202 = vld [vmem:[%s115 + $0x13c] sm:$0x3]
      %v203 = vld [vmem:[%s115 + $0x140] sm:$0xf]
      %v204 = vld [vmem:[%s115 + $0x144] sm:$0xf]
      %v205 = vld [vmem:[%s115 + $0x148] sm:$0xf]
      %v206 = vld [vmem:[%s115 + $0x14c] sm:$0x3]
      %v207 = vld [vmem:[%s115 + $0x150] sm:$0xf]
      %v208 = vld [vmem:[%s115 + $0x154] sm:$0xf]
      %v209 = vld [vmem:[%s115 + $0x158] sm:$0xf]
      %v210 = vld [vmem:[%s115 + $0x15c] sm:$0x3]
      %v211 = vld [vmem:[%s115 + $0x160] sm:$0xf]
      %v212 = vld [vmem:[%s115 + $0x164] sm:$0xf]
      %v213 = vld [vmem:[%s115 + $0x168] sm:$0xf]
      %v214 = vld [vmem:[%s115 + $0x16c] sm:$0x3]
      %v215 = vld [vmem:[%s115 + $0x170] sm:$0xf]
      %v216 = vld [vmem:[%s115 + $0x174] sm:$0xf]
      %v217 = vld [vmem:[%s115 + $0x178] sm:$0xf]
      %v218 = vld [vmem:[%s115 + $0x17c] sm:$0x3]
      %v219 = vld [vmem:[%s115 + $0x180] sm:$0xf]
      %v220 = vld [vmem:[%s115 + $0x184] sm:$0xf]
      %v221 = vld [vmem:[%s115 + $0x188] sm:$0xf]
      %v222 = vld [vmem:[%s115 + $0x18c] sm:$0x3]
      %v223 = vld [vmem:[%s115 + $0x190] sm:$0xf]
      %v224 = vld [vmem:[%s115 + $0x194] sm:$0xf]
      %v225 = vld [vmem:[%s115 + $0x198] sm:$0xf]
      %v226 = vld [vmem:[%s115 + $0x19c] sm:$0x3]
      %v227 = vld [vmem:[%s115 + $0x1a0] sm:$0xf]
      %v228 = vld [vmem:[%s115 + $0x1a4] sm:$0xf]
      %v229 = vld [vmem:[%s115 + $0x1a8] sm:$0xf]
      %v230 = vld [vmem:[%s115 + $0x1ac] sm:$0x3]
      %v231 = vld [vmem:[%s115 + $0x1b0] sm:$0xf]
      %v232 = vld [vmem:[%s115 + $0x1b4] sm:$0xf]
      %v233 = vld [vmem:[%s115 + $0x1b8] sm:$0xf]
      %v234 = vld [vmem:[%s115 + $0x1bc] sm:$0x3]
      %v235 = vld [vmem:[%s115 + $0x1c0] sm:$0xf]
      %v236 = vld [vmem:[%s115 + $0x1c4] sm:$0xf]
      %v237 = vld [vmem:[%s115 + $0x1c8] sm:$0xf]
      %v238 = vld [vmem:[%s115 + $0x1cc] sm:$0x3]
      %v239 = vld [vmem:[%s115 + $0x1d0] sm:$0xf]
      %v240 = vld [vmem:[%s115 + $0x1d4] sm:$0xf]
      %v241 = vld [vmem:[%s115 + $0x1d8] sm:$0xf]
      %v242 = vld [vmem:[%s115 + $0x1dc] sm:$0x3]
      %v243 = vld [vmem:[%s115 + $0x1e0] sm:$0xf]
      %v244 = vld [vmem:[%s115 + $0x1e4] sm:$0xf]
      %v245 = vld [vmem:[%s115 + $0x1e8] sm:$0xf]
      %v246 = vld [vmem:[%s115 + $0x1ec] sm:$0x3]
      %v247 = vld [vmem:[%s115 + $0x1f0] sm:$0xf]
      %v248 = vld [vmem:[%s115 + $0x1f4] sm:$0xf]
      %v249 = vld [vmem:[%s115 + $0x1f8] sm:$0xf]
      %v250 = vld [vmem:[%s115 + $0x1fc] sm:$0x3]
      %v251 = vld [vmem:[%s115 + $0x200] sm:$0xf]
      %v252 = vld [vmem:[%s115 + $0x204] sm:$0xf]
      %v253 = vld [vmem:[%s115 + $0x208] sm:$0xf]
      %v254 = vld [vmem:[%s115 + $0x20c] sm:$0x3]
      %v255 = vld [vmem:[%s115 + $0x210] sm:$0xf]
      %v256 = vld [vmem:[%s115 + $0x214] sm:$0xf]
      %v257 = vld [vmem:[%s115 + $0x218] sm:$0xf]
      %v258 = vld [vmem:[%s115 + $0x21c] sm:$0x3]
      %v259 = vld [vmem:[%s115 + $0x220] sm:$0xf]
      %v260 = vld [vmem:[%s115 + $0x224] sm:$0xf]
      %v261 = vld [vmem:[%s115 + $0x228] sm:$0xf]
      %v262 = vld [vmem:[%s115 + $0x22c] sm:$0x3]
      %v263 = vld [vmem:[%s115 + $0x230] sm:$0xf]
      %v264 = vld [vmem:[%s115 + $0x234] sm:$0xf]
      %v265 = vld [vmem:[%s115 + $0x238] sm:$0xf]
      %v266 = vld [vmem:[%s115 + $0x23c] sm:$0x3]
      %v267 = vld [vmem:[%s115 + $0x240] sm:$0xf]
      %v268 = vld [vmem:[%s115 + $0x244] sm:$0xf]
      %v269 = vld [vmem:[%s115 + $0x248] sm:$0xf]
      %v270 = vld [vmem:[%s115 + $0x24c] sm:$0x3]
      %v271 = vld [vmem:[%s115 + $0x250] sm:$0xf]
      %v272 = vld [vmem:[%s115 + $0x254] sm:$0xf]
      %v273 = vld [vmem:[%s115 + $0x258] sm:$0xf]
      %v274 = vld [vmem:[%s115 + $0x25c] sm:$0x3]
      %v275 = vld [vmem:[%s115 + $0x260] sm:$0xf]
      %v276 = vld [vmem:[%s115 + $0x264] sm:$0xf]
      %v277 = vld [vmem:[%s115 + $0x268] sm:$0xf]
      %v278 = vld [vmem:[%s115 + $0x26c] sm:$0x3]
      %v279 = vld [vmem:[%s115 + $0x270] sm:$0xf]
      %v280 = vld [vmem:[%s115 + $0x274] sm:$0xf]
      %v281 = vld [vmem:[%s115 + $0x278] sm:$0xf]
      %v282 = vld [vmem:[%s115 + $0x27c] sm:$0x3]
      %v283 = vld [vmem:[%s115 + $0x280] sm:$0xf]
      %v284 = vld [vmem:[%s115 + $0x284] sm:$0xf]
      %v285 = vld [vmem:[%s115 + $0x288] sm:$0xf]
      %v286 = vld [vmem:[%s115 + $0x28c] sm:$0x3]
      %v287 = vld [vmem:[%s115 + $0x290] sm:$0xf]
      %v288 = vld [vmem:[%s115 + $0x294] sm:$0xf]
      %v289 = vld [vmem:[%s115 + $0x298] sm:$0xf]
      %v290 = vld [vmem:[%s115 + $0x29c] sm:$0x3]
      %v291 = vld [vmem:[%s115 + $0x2a0] sm:$0xf]
      %v292 = vld [vmem:[%s115 + $0x2a4] sm:$0xf]
      %v293 = vld [vmem:[%s115 + $0x2a8] sm:$0xf]
      %v294 = vld [vmem:[%s115 + $0x2ac] sm:$0x3]
      %v295 = vld [vmem:[%s115 + $0x2b0] sm:$0xf]
      %v296 = vld [vmem:[%s115 + $0x2b4] sm:$0xf]
      %v297 = vld [vmem:[%s115 + $0x2b8] sm:$0xf]
      %v298 = vld [vmem:[%s115 + $0x2bc] sm:$0x3]
      %v299 = vld [vmem:[%s115 + $0x2c0] sm:$0xf]
      %v300 = vld [vmem:[%s115 + $0x2c4] sm:$0xf]
      %v301 = vld [vmem:[%s115 + $0x2c8] sm:$0xf]
      %v302 = vld [vmem:[%s115 + $0x2cc] sm:$0x3]
      %v303 = vld [vmem:[%s115 + $0x2d0] sm:$0xf]
      %v304 = vld [vmem:[%s115 + $0x2d4] sm:$0xf]
      %v305 = vld [vmem:[%s115 + $0x2d8] sm:$0xf]
      %v306 = vld [vmem:[%s115 + $0x2dc] sm:$0x3]
      %v307 = vld [vmem:[%s115 + $0x2e0] sm:$0xf]
      %v308 = vld [vmem:[%s115 + $0x2e4] sm:$0xf]
      %v309 = vld [vmem:[%s115 + $0x2e8] sm:$0xf]
      %v310 = vld [vmem:[%s115 + $0x2ec] sm:$0x3]
      %v311 = vld [vmem:[%s115 + $0x2f0] sm:$0xf]
      %v312 = vld [vmem:[%s115 + $0x2f4] sm:$0xf]
      %v313 = vld [vmem:[%s115 + $0x2f8] sm:$0xf]
      %v314 = vld [vmem:[%s115 + $0x2fc] sm:$0x3]
      %v315 = vld [vmem:[%s115 + $0x300] sm:$0xf]
      %v316 = vld [vmem:[%s115 + $0x304] sm:$0xf]
      %v317 = vld [vmem:[%s115 + $0x308] sm:$0xf]
      %v318 = vld [vmem:[%s115 + $0x30c] sm:$0x3]
      %v319 = vld [vmem:[%s115 + $0x310] sm:$0xf]
      %v320 = vld [vmem:[%s115 + $0x314] sm:$0xf]
      %v321 = vld [vmem:[%s115 + $0x318] sm:$0xf]
      %v322 = vld [vmem:[%s115 + $0x31c] sm:$0x3]
      %v323 = vld [vmem:[%s115 + $0x320] sm:$0xf]
      %v324 = vld [vmem:[%s115 + $0x324] sm:$0xf]
      %v325 = vld [vmem:[%s115 + $0x328] sm:$0xf]
      %v326 = vld [vmem:[%s115 + $0x32c] sm:$0x3]
      %v327 = vld [vmem:[%s115 + $0x330] sm:$0xf]
      %v328 = vld [vmem:[%s115 + $0x334] sm:$0xf]
      %v329 = vld [vmem:[%s115 + $0x338] sm:$0xf]
      %v330 = vld [vmem:[%s115 + $0x33c] sm:$0x3]
      %v331 = vld [vmem:[%s115 + $0x340] sm:$0xf]
      %v332 = vld [vmem:[%s115 + $0x344] sm:$0xf]
      %v333 = vld [vmem:[%s115 + $0x348] sm:$0xf]
      %v334 = vld [vmem:[%s115 + $0x34c] sm:$0x3]
      %v335 = vld [vmem:[%s115 + $0x350] sm:$0xf]
      %v336 = vld [vmem:[%s115 + $0x354] sm:$0xf]
      %v337 = vld [vmem:[%s115 + $0x358] sm:$0xf]
      %v338 = vld [vmem:[%s115 + $0x35c] sm:$0x3]
      %v339 = vld [vmem:[%s115 + $0x360] sm:$0xf]
      %v340 = vld [vmem:[%s115 + $0x364] sm:$0xf]
      %v341 = vld [vmem:[%s115 + $0x368] sm:$0xf]
      %v342 = vld [vmem:[%s115 + $0x36c] sm:$0x3]
      %v343 = vld [vmem:[%s115 + $0x370] sm:$0xf]
      %v344 = vld [vmem:[%s115 + $0x374] sm:$0xf]
      %v345 = vld [vmem:[%s115 + $0x378] sm:$0xf]
      %v346 = vld [vmem:[%s115 + $0x37c] sm:$0x3]
      %v347 = vld [vmem:[%s115 + $0x380] sm:$0xf]
      %v348 = vld [vmem:[%s115 + $0x384] sm:$0xf]
      %v349 = vld [vmem:[%s115 + $0x388] sm:$0xf]
      %v350 = vld [vmem:[%s115 + $0x38c] sm:$0x3]
      %v351 = vld [vmem:[%s115 + $0x390] sm:$0xf]
      %v352 = vld [vmem:[%s115 + $0x394] sm:$0xf]
      %v353 = vld [vmem:[%s115 + $0x398] sm:$0xf]
      %v354 = vld [vmem:[%s115 + $0x39c] sm:$0x3]
      %v355 = vld [vmem:[%s115 + $0x3a0] sm:$0xf]
      %v356 = vld [vmem:[%s115 + $0x3a4] sm:$0xf]
      %v357 = vld [vmem:[%s115 + $0x3a8] sm:$0xf]
      %v358 = vld [vmem:[%s115 + $0x3ac] sm:$0x3]
      %v359 = vld [vmem:[%s115 + $0x3b0] sm:$0xf]
      %v360 = vld [vmem:[%s115 + $0x3b4] sm:$0xf]
      %v361 = vld [vmem:[%s115 + $0x3b8] sm:$0xf]
      %v362 = vld [vmem:[%s115 + $0x3bc] sm:$0x3]
      %v363 = vld [vmem:[%s115 + $0x3c0] sm:$0xf]
      %v364 = vld [vmem:[%s115 + $0x3c4] sm:$0xf]
      %v365 = vld [vmem:[%s115 + $0x3c8] sm:$0xf]
      %v366 = vld [vmem:[%s115 + $0x3cc] sm:$0x3]
      %v367 = vld [vmem:[%s115 + $0x3d0] sm:$0xf]
      %v368 = vld [vmem:[%s115 + $0x3d4] sm:$0xf]
      %v369 = vld [vmem:[%s115 + $0x3d8] sm:$0xf]
      %v370 = vld [vmem:[%s115 + $0x3dc] sm:$0x3]
      %v371 = vld [vmem:[%s115 + $0x3e0] sm:$0xf]
      %v372 = vld [vmem:[%s115 + $0x3e4] sm:$0xf]
      %v373 = vld [vmem:[%s115 + $0x3e8] sm:$0xf]
      %v374 = vld [vmem:[%s115 + $0x3ec] sm:$0x3]
      %v375 = vld [vmem:[%s115 + $0x3f0] sm:$0xf]
      %v376 = vld [vmem:[%s115 + $0x3f4] sm:$0xf]
      %v377 = vld [vmem:[%s115 + $0x3f8] sm:$0xf]
      %v378 = vld [vmem:[%s115 + $0x3fc] sm:$0x3]
      %v379 = vunpack.c.l.bf16 %v123
      %v380 = vunpack.c.l.bf16 %v124
      %v381 = vunpack.c.l.bf16 %v125
      %v382 = vunpack.c.l.bf16 %v126
      %v383 = vunpack.c.l.bf16 %v127
      %v384 = vunpack.c.l.bf16 %v128
      %v385 = vunpack.c.l.bf16 %v129
      %v386 = vunpack.c.l.bf16 %v130
      %v387 = vunpack.c.l.bf16 %v131
      %v388 = vunpack.c.l.bf16 %v132
      %v389 = vunpack.c.l.bf16 %v133
      %v390 = vunpack.c.l.bf16 %v134
      %v391 = vunpack.c.l.bf16 %v135
      %v392 = vunpack.c.l.bf16 %v136
      %v393 = vunpack.c.l.bf16 %v137
      %v394 = vunpack.c.l.bf16 %v138
      %v395 = vunpack.c.l.bf16 %v139
      %v396 = vunpack.c.l.bf16 %v140
      %v397 = vunpack.c.l.bf16 %v141
      %v398 = vunpack.c.l.bf16 %v142
      %v399 = vunpack.c.l.bf16 %v143
      %v400 = vunpack.c.l.bf16 %v144
      %v401 = vunpack.c.l.bf16 %v145
      %v402 = vunpack.c.l.bf16 %v146
      %v403 = vunpack.c.l.bf16 %v147
      %v404 = vunpack.c.l.bf16 %v148
      %v405 = vunpack.c.l.bf16 %v149
      %v406 = vunpack.c.l.bf16 %v150
      %v407 = vunpack.c.l.bf16 %v151
      %v408 = vunpack.c.l.bf16 %v152
      %v409 = vunpack.c.l.bf16 %v153
      %v410 = vunpack.c.l.bf16 %v154
      %v411 = vunpack.c.l.bf16 %v155
      %v412 = vunpack.c.l.bf16 %v156
      %v413 = vunpack.c.l.bf16 %v157
      %v414 = vunpack.c.l.bf16 %v158
      %v415 = vunpack.c.l.bf16 %v159
      %v416 = vunpack.c.l.bf16 %v160
      %v417 = vunpack.c.l.bf16 %v161
      %v418 = vunpack.c.l.bf16 %v162
      %v419 = vunpack.c.l.bf16 %v163
      %v420 = vunpack.c.l.bf16 %v164
      %v421 = vunpack.c.l.bf16 %v165
      %v422 = vunpack.c.l.bf16 %v166
      %v423 = vunpack.c.l.bf16 %v167
      %v424 = vunpack.c.l.bf16 %v168
      %v425 = vunpack.c.l.bf16 %v169
      %v426 = vunpack.c.l.bf16 %v170
      %v427 = vunpack.c.l.bf16 %v171
      %v428 = vunpack.c.l.bf16 %v172
      %v429 = vunpack.c.l.bf16 %v173
      %v430 = vunpack.c.l.bf16 %v174
      %v431 = vunpack.c.l.bf16 %v175
      %v432 = vunpack.c.l.bf16 %v176
      %v433 = vunpack.c.l.bf16 %v177
      %v434 = vunpack.c.l.bf16 %v178
      %v435 = vunpack.c.l.bf16 %v179
      %v436 = vunpack.c.l.bf16 %v180
      %v437 = vunpack.c.l.bf16 %v181
      %v438 = vunpack.c.l.bf16 %v182
      %v439 = vunpack.c.l.bf16 %v183
      %v440 = vunpack.c.l.bf16 %v184
      %v441 = vunpack.c.l.bf16 %v185
      %v442 = vunpack.c.l.bf16 %v186
      %v443 = vunpack.c.l.bf16 %v187
      %v444 = vunpack.c.l.bf16 %v188
      %v445 = vunpack.c.l.bf16 %v189
      %v446 = vunpack.c.l.bf16 %v190
      %v447 = vunpack.c.l.bf16 %v191
      %v448 = vunpack.c.l.bf16 %v192
      %v449 = vunpack.c.l.bf16 %v193
      %v450 = vunpack.c.l.bf16 %v194
      %v451 = vunpack.c.l.bf16 %v195
      %v452 = vunpack.c.l.bf16 %v196
      %v453 = vunpack.c.l.bf16 %v197
      %v454 = vunpack.c.l.bf16 %v198
      %v455 = vunpack.c.l.bf16 %v199
      %v456 = vunpack.c.l.bf16 %v200
      %v457 = vunpack.c.l.bf16 %v201
      %v458 = vunpack.c.l.bf16 %v202
      %v459 = vunpack.c.l.bf16 %v203
      %v460 = vunpack.c.l.bf16 %v204
      %v461 = vunpack.c.l.bf16 %v205
      %v462 = vunpack.c.l.bf16 %v206
      %v463 = vunpack.c.l.bf16 %v207
      %v464 = vunpack.c.l.bf16 %v208
      %v465 = vunpack.c.l.bf16 %v209
      %v466 = vunpack.c.l.bf16 %v210
      %v467 = vunpack.c.l.bf16 %v211
      %v468 = vunpack.c.l.bf16 %v212
      %v469 = vunpack.c.l.bf16 %v213
      %v470 = vunpack.c.l.bf16 %v214
      %v471 = vunpack.c.l.bf16 %v215
      %v472 = vunpack.c.l.bf16 %v216
      %v473 = vunpack.c.l.bf16 %v217
      %v474 = vunpack.c.l.bf16 %v218
      %v475 = vunpack.c.l.bf16 %v219
      %v476 = vunpack.c.l.bf16 %v220
      %v477 = vunpack.c.l.bf16 %v221
      %v478 = vunpack.c.l.bf16 %v222
      %v479 = vunpack.c.l.bf16 %v223
      %v480 = vunpack.c.l.bf16 %v224
      %v481 = vunpack.c.l.bf16 %v225
      %v482 = vunpack.c.l.bf16 %v226
      %v483 = vunpack.c.l.bf16 %v227
      %v484 = vunpack.c.l.bf16 %v228
      %v485 = vunpack.c.l.bf16 %v229
      %v486 = vunpack.c.l.bf16 %v230
      %v487 = vunpack.c.l.bf16 %v231
      %v488 = vunpack.c.l.bf16 %v232
      %v489 = vunpack.c.l.bf16 %v233
      %v490 = vunpack.c.l.bf16 %v234
      %v491 = vunpack.c.l.bf16 %v235
      %v492 = vunpack.c.l.bf16 %v236
      %v493 = vunpack.c.l.bf16 %v237
      %v494 = vunpack.c.l.bf16 %v238
      %v495 = vunpack.c.l.bf16 %v239
      %v496 = vunpack.c.l.bf16 %v240
      %v497 = vunpack.c.l.bf16 %v241
      %v498 = vunpack.c.l.bf16 %v242
      %v499 = vunpack.c.l.bf16 %v243
      %v500 = vunpack.c.l.bf16 %v244
      %v501 = vunpack.c.l.bf16 %v245
      %v502 = vunpack.c.l.bf16 %v246
      %v503 = vunpack.c.l.bf16 %v247
      %v504 = vunpack.c.l.bf16 %v248
      %v505 = vunpack.c.l.bf16 %v249
      %v506 = vunpack.c.l.bf16 %v250
      %v507 = vunpack.c.l.bf16 %v251
      %v508 = vunpack.c.l.bf16 %v252
      %v509 = vunpack.c.l.bf16 %v253
      %v510 = vunpack.c.l.bf16 %v254
      %v511 = vunpack.c.l.bf16 %v255
      %v512 = vunpack.c.l.bf16 %v256
      %v513 = vunpack.c.l.bf16 %v257
      %v514 = vunpack.c.l.bf16 %v258
      %v515 = vunpack.c.l.bf16 %v259
      %v516 = vunpack.c.l.bf16 %v260
      %v517 = vunpack.c.l.bf16 %v261
      %v518 = vunpack.c.l.bf16 %v262
      %v519 = vunpack.c.l.bf16 %v263
      %v520 = vunpack.c.l.bf16 %v264
      %v521 = vunpack.c.l.bf16 %v265
      %v522 = vunpack.c.l.bf16 %v266
      %v523 = vunpack.c.l.bf16 %v267
      %v524 = vunpack.c.l.bf16 %v268
      %v525 = vunpack.c.l.bf16 %v269
      %v526 = vunpack.c.l.bf16 %v270
      %v527 = vunpack.c.l.bf16 %v271
      %v528 = vunpack.c.l.bf16 %v272
      %v529 = vunpack.c.l.bf16 %v273
      %v530 = vunpack.c.l.bf16 %v274
      %v531 = vunpack.c.l.bf16 %v275
      %v532 = vunpack.c.l.bf16 %v276
      %v533 = vunpack.c.l.bf16 %v277
      %v534 = vunpack.c.l.bf16 %v278
      %v535 = vunpack.c.l.bf16 %v279
      %v536 = vunpack.c.l.bf16 %v280
      %v537 = vunpack.c.l.bf16 %v281
      %v538 = vunpack.c.l.bf16 %v282
      %v539 = vunpack.c.l.bf16 %v283
      %v540 = vunpack.c.l.bf16 %v284
      %v541 = vunpack.c.l.bf16 %v285
      %v542 = vunpack.c.l.bf16 %v286
      %v543 = vunpack.c.l.bf16 %v287
      %v544 = vunpack.c.l.bf16 %v288
      %v545 = vunpack.c.l.bf16 %v289
      %v546 = vunpack.c.l.bf16 %v290
      %v547 = vunpack.c.l.bf16 %v291
      %v548 = vunpack.c.l.bf16 %v292
      %v549 = vunpack.c.l.bf16 %v293
      %v550 = vunpack.c.l.bf16 %v294
      %v551 = vunpack.c.l.bf16 %v295
      %v552 = vunpack.c.l.bf16 %v296
      %v553 = vunpack.c.l.bf16 %v297
      %v554 = vunpack.c.l.bf16 %v298
      %v555 = vunpack.c.l.bf16 %v299
      %v556 = vunpack.c.l.bf16 %v300
      %v557 = vunpack.c.l.bf16 %v301
      %v558 = vunpack.c.l.bf16 %v302
      %v559 = vunpack.c.l.bf16 %v303
      %v560 = vunpack.c.l.bf16 %v304
      %v561 = vunpack.c.l.bf16 %v305
      %v562 = vunpack.c.l.bf16 %v306
      %v563 = vunpack.c.l.bf16 %v307
      %v564 = vunpack.c.l.bf16 %v308
      %v565 = vunpack.c.l.bf16 %v309
      %v566 = vunpack.c.l.bf16 %v310
      %v567 = vunpack.c.l.bf16 %v311
      %v568 = vunpack.c.l.bf16 %v312
      %v569 = vunpack.c.l.bf16 %v313
      %v570 = vunpack.c.l.bf16 %v314
      %v571 = vunpack.c.l.bf16 %v315
      %v572 = vunpack.c.l.bf16 %v316
      %v573 = vunpack.c.l.bf16 %v317
      %v574 = vunpack.c.l.bf16 %v318
      %v575 = vunpack.c.l.bf16 %v319
      %v576 = vunpack.c.l.bf16 %v320
      %v577 = vunpack.c.l.bf16 %v321
      %v578 = vunpack.c.l.bf16 %v322
      %v579 = vunpack.c.l.bf16 %v323
      %v580 = vunpack.c.l.bf16 %v324
      %v581 = vunpack.c.l.bf16 %v325
      %v582 = vunpack.c.l.bf16 %v326
      %v583 = vunpack.c.l.bf16 %v327
      %v584 = vunpack.c.l.bf16 %v328
      %v585 = vunpack.c.l.bf16 %v329
      %v586 = vunpack.c.l.bf16 %v330
      %v587 = vunpack.c.l.bf16 %v331
      %v588 = vunpack.c.l.bf16 %v332
      %v589 = vunpack.c.l.bf16 %v333
      %v590 = vunpack.c.l.bf16 %v334
      %v591 = vunpack.c.l.bf16 %v335
      %v592 = vunpack.c.l.bf16 %v336
      %v593 = vunpack.c.l.bf16 %v337
      %v594 = vunpack.c.l.bf16 %v338
      %v595 = vunpack.c.l.bf16 %v339
      %v596 = vunpack.c.l.bf16 %v340
      %v597 = vunpack.c.l.bf16 %v341
      %v598 = vunpack.c.l.bf16 %v342
      %v599 = vunpack.c.l.bf16 %v343
      %v600 = vunpack.c.l.bf16 %v344
      %v601 = vunpack.c.l.bf16 %v345
      %v602 = vunpack.c.l.bf16 %v346
      %v603 = vunpack.c.l.bf16 %v347
      %v604 = vunpack.c.l.bf16 %v348
      %v605 = vunpack.c.l.bf16 %v349
      %v606 = vunpack.c.l.bf16 %v350
      %v607 = vunpack.c.l.bf16 %v351
      %v608 = vunpack.c.l.bf16 %v352
      %v609 = vunpack.c.l.bf16 %v353
      %v610 = vunpack.c.l.bf16 %v354
      %v611 = vunpack.c.l.bf16 %v355
      %v612 = vunpack.c.l.bf16 %v356
      %v613 = vunpack.c.l.bf16 %v357
      %v614 = vunpack.c.l.bf16 %v358
      %v615 = vunpack.c.l.bf16 %v359
      %v616 = vunpack.c.l.bf16 %v360
      %v617 = vunpack.c.l.bf16 %v361
      %v618 = vunpack.c.l.bf16 %v362
      %v619 = vunpack.c.l.bf16 %v363
      %v620 = vunpack.c.l.bf16 %v364
      %v621 = vunpack.c.l.bf16 %v365
      %v622 = vunpack.c.l.bf16 %v366
      %v623 = vunpack.c.l.bf16 %v367
      %v624 = vunpack.c.l.bf16 %v368
      %v625 = vunpack.c.l.bf16 %v369
      %v626 = vunpack.c.l.bf16 %v370
      %v627 = vunpack.c.l.bf16 %v371
      %v628 = vunpack.c.l.bf16 %v372
      %v629 = vunpack.c.l.bf16 %v373
      %v630 = vunpack.c.l.bf16 %v374
      %v631 = vunpack.c.l.bf16 %v375
      %v632 = vunpack.c.l.bf16 %v376
      %v633 = vunpack.c.l.bf16 %v377
      %v634 = vunpack.c.l.bf16 %v378
      %v635 = vmax.f32 %v379, %v380
      %v636 = vmax.f32 %v635, %v381
      %vm637 = vcmask 1042432
      %v638 = vsel %vm637, %v382, -inf
      %v639 = vmax.f32 %v636, %v638
      %v640 = vrot.slane %v639, 4
      %v641 = vmax.f32 %v639, %v640
      %v642 = vrot.slane %v641, 2
      %v643 = vmax.f32 %v641, %v642
      %v644 = vrot.slane %v643, 1
      %v645 = vmax.f32 %v643, %v644
      %v646 = vmax.f32 %v383, %v384
      %v647 = vmax.f32 %v646, %v385
      %v648 = vsel %vm637, %v386, -inf
      %v649 = vmax.f32 %v647, %v648
      %v650 = vrot.slane %v649, 4
      %v651 = vmax.f32 %v649, %v650
      %v652 = vrot.slane %v651, 2
      %v653 = vmax.f32 %v651, %v652
      %v654 = vrot.slane %v653, 1
      %v655 = vmax.f32 %v653, %v654
      %v656 = vmax.f32 %v387, %v388
      %v657 = vmax.f32 %v656, %v389
      %v658 = vsel %vm637, %v390, -inf
      %v659 = vmax.f32 %v657, %v658
      %v660 = vrot.slane %v659, 4
      %v661 = vmax.f32 %v659, %v660
      %v662 = vrot.slane %v661, 2
      %v663 = vmax.f32 %v661, %v662
      %v664 = vrot.slane %v663, 1
      %v665 = vmax.f32 %v663, %v664
      %v666 = vmax.f32 %v391, %v392
      %v667 = vmax.f32 %v666, %v393
      %v668 = vsel %vm637, %v394, -inf
      %v669 = vmax.f32 %v667, %v668
      %v670 = vrot.slane %v669, 4
      %v671 = vmax.f32 %v669, %v670
      %v672 = vrot.slane %v671, 2
      %v673 = vmax.f32 %v671, %v672
      %v674 = vrot.slane %v673, 1
      %v675 = vmax.f32 %v673, %v674
      %v676 = vmax.f32 %v395, %v396
      %v677 = vmax.f32 %v676, %v397
      %v678 = vsel %vm637, %v398, -inf
      %v679 = vmax.f32 %v677, %v678
      %v680 = vrot.slane %v679, 4
      %v681 = vmax.f32 %v679, %v680
      %v682 = vrot.slane %v681, 2
      %v683 = vmax.f32 %v681, %v682
      %v684 = vrot.slane %v683, 1
      %v685 = vmax.f32 %v683, %v684
      %v686 = vmax.f32 %v399, %v400
      %v687 = vmax.f32 %v686, %v401
      %v688 = vsel %vm637, %v402, -inf
      %v689 = vmax.f32 %v687, %v688
      %v690 = vrot.slane %v689, 4
      %v691 = vmax.f32 %v689, %v690
      %v692 = vrot.slane %v691, 2
      %v693 = vmax.f32 %v691, %v692
      %v694 = vrot.slane %v693, 1
      %v695 = vmax.f32 %v693, %v694
      %v696 = vmax.f32 %v403, %v404
      %v697 = vmax.f32 %v696, %v405
      %v698 = vsel %vm637, %v406, -inf
      %v699 = vmax.f32 %v697, %v698
      %v700 = vrot.slane %v699, 4
      %v701 = vmax.f32 %v699, %v700
      %v702 = vrot.slane %v701, 2
      %v703 = vmax.f32 %v701, %v702
      %v704 = vrot.slane %v703, 1
      %v705 = vmax.f32 %v703, %v704
      %v706 = vmax.f32 %v407, %v408
      %v707 = vmax.f32 %v706, %v409
      %v708 = vsel %vm637, %v410, -inf
      %v709 = vmax.f32 %v707, %v708
      %v710 = vrot.slane %v709, 4
      %v711 = vmax.f32 %v709, %v710
      %v712 = vrot.slane %v711, 2
      %v713 = vmax.f32 %v711, %v712
      %v714 = vrot.slane %v713, 1
      %v715 = vmax.f32 %v713, %v714
      %v716 = vmax.f32 %v411, %v412
      %v717 = vmax.f32 %v716, %v413
      %v718 = vsel %vm637, %v414, -inf
      %v719 = vmax.f32 %v717, %v718
      %v720 = vrot.slane %v719, 4
      %v721 = vmax.f32 %v719, %v720
      %v722 = vrot.slane %v721, 2
      %v723 = vmax.f32 %v721, %v722
      %v724 = vrot.slane %v723, 1
      %v725 = vmax.f32 %v723, %v724
      %v726 = vmax.f32 %v415, %v416
      %v727 = vmax.f32 %v726, %v417
      %v728 = vsel %vm637, %v418, -inf
      %v729 = vmax.f32 %v727, %v728
      %v730 = vrot.slane %v729, 4
      %v731 = vmax.f32 %v729, %v730
      %v732 = vrot.slane %v731, 2
      %v733 = vmax.f32 %v731, %v732
      %v734 = vrot.slane %v733, 1
      %v735 = vmax.f32 %v733, %v734
      %v736 = vmax.f32 %v419, %v420
      %v737 = vmax.f32 %v736, %v421
      %v738 = vsel %vm637, %v422, -inf
      %v739 = vmax.f32 %v737, %v738
      %v740 = vrot.slane %v739, 4
      %v741 = vmax.f32 %v739, %v740
      %v742 = vrot.slane %v741, 2
      %v743 = vmax.f32 %v741, %v742
      %v744 = vrot.slane %v743, 1
      %v745 = vmax.f32 %v743, %v744
      %v746 = vmax.f32 %v423, %v424
      %v747 = vmax.f32 %v746, %v425
      %v748 = vsel %vm637, %v426, -inf
      %v749 = vmax.f32 %v747, %v748
      %v750 = vrot.slane %v749, 4
      %v751 = vmax.f32 %v749, %v750
      %v752 = vrot.slane %v751, 2
      %v753 = vmax.f32 %v751, %v752
      %v754 = vrot.slane %v753, 1
      %v755 = vmax.f32 %v753, %v754
      %v756 = vmax.f32 %v427, %v428
      %v757 = vmax.f32 %v756, %v429
      %v758 = vsel %vm637, %v430, -inf
      %v759 = vmax.f32 %v757, %v758
      %v760 = vrot.slane %v759, 4
      %v761 = vmax.f32 %v759, %v760
      %v762 = vrot.slane %v761, 2
      %v763 = vmax.f32 %v761, %v762
      %v764 = vrot.slane %v763, 1
      %v765 = vmax.f32 %v763, %v764
      %v766 = vmax.f32 %v431, %v432
      %v767 = vmax.f32 %v766, %v433
      %v768 = vsel %vm637, %v434, -inf
      %v769 = vmax.f32 %v767, %v768
      %v770 = vrot.slane %v769, 4
      %v771 = vmax.f32 %v769, %v770
      %v772 = vrot.slane %v771, 2
      %v773 = vmax.f32 %v771, %v772
      %v774 = vrot.slane %v773, 1
      %v775 = vmax.f32 %v773, %v774
      %v776 = vmax.f32 %v435, %v436
      %v777 = vmax.f32 %v776, %v437
      %v778 = vsel %vm637, %v438, -inf
      %v779 = vmax.f32 %v777, %v778
      %v780 = vrot.slane %v779, 4
      %v781 = vmax.f32 %v779, %v780
      %v782 = vrot.slane %v781, 2
      %v783 = vmax.f32 %v781, %v782
      %v784 = vrot.slane %v783, 1
      %v785 = vmax.f32 %v783, %v784
      %v786 = vmax.f32 %v439, %v440
      %v787 = vmax.f32 %v786, %v441
      %v788 = vsel %vm637, %v442, -inf
      %v789 = vmax.f32 %v787, %v788
      %v790 = vrot.slane %v789, 4
      %v791 = vmax.f32 %v789, %v790
      %v792 = vrot.slane %v791, 2
      %v793 = vmax.f32 %v791, %v792
      %v794 = vrot.slane %v793, 1
      %v795 = vmax.f32 %v793, %v794
      %v796 = vmax.f32 %v443, %v444
      %v797 = vmax.f32 %v796, %v445
      %v798 = vsel %vm637, %v446, -inf
      %v799 = vmax.f32 %v797, %v798
      %v800 = vrot.slane %v799, 4
      %v801 = vmax.f32 %v799, %v800
      %v802 = vrot.slane %v801, 2
      %v803 = vmax.f32 %v801, %v802
      %v804 = vrot.slane %v803, 1
      %v805 = vmax.f32 %v803, %v804
      %v806 = vmax.f32 %v447, %v448
      %v807 = vmax.f32 %v806, %v449
      %v808 = vsel %vm637, %v450, -inf
      %v809 = vmax.f32 %v807, %v808
      %v810 = vrot.slane %v809, 4
      %v811 = vmax.f32 %v809, %v810
      %v812 = vrot.slane %v811, 2
      %v813 = vmax.f32 %v811, %v812
      %v814 = vrot.slane %v813, 1
      %v815 = vmax.f32 %v813, %v814
      %v816 = vmax.f32 %v451, %v452
      %v817 = vmax.f32 %v816, %v453
      %v818 = vsel %vm637, %v454, -inf
      %v819 = vmax.f32 %v817, %v818
      %v820 = vrot.slane %v819, 4
      %v821 = vmax.f32 %v819, %v820
      %v822 = vrot.slane %v821, 2
      %v823 = vmax.f32 %v821, %v822
      %v824 = vrot.slane %v823, 1
      %v825 = vmax.f32 %v823, %v824
      %v826 = vmax.f32 %v455, %v456
      %v827 = vmax.f32 %v826, %v457
      %v828 = vsel %vm637, %v458, -inf
      %v829 = vmax.f32 %v827, %v828
      %v830 = vrot.slane %v829, 4
      %v831 = vmax.f32 %v829, %v830
      %v832 = vrot.slane %v831, 2
      %v833 = vmax.f32 %v831, %v832
      %v834 = vrot.slane %v833, 1
      %v835 = vmax.f32 %v833, %v834
      %v836 = vmax.f32 %v459, %v460
      %v837 = vmax.f32 %v836, %v461
      %v838 = vsel %vm637, %v462, -inf
      %v839 = vmax.f32 %v837, %v838
      %v840 = vrot.slane %v839, 4
      %v841 = vmax.f32 %v839, %v840
      %v842 = vrot.slane %v841, 2
      %v843 = vmax.f32 %v841, %v842
      %v844 = vrot.slane %v843, 1
      %v845 = vmax.f32 %v843, %v844
      %v846 = vmax.f32 %v463, %v464
      %v847 = vmax.f32 %v846, %v465
      %v848 = vsel %vm637, %v466, -inf
      %v849 = vmax.f32 %v847, %v848
      %v850 = vrot.slane %v849, 4
      %v851 = vmax.f32 %v849, %v850
      %v852 = vrot.slane %v851, 2
      %v853 = vmax.f32 %v851, %v852
      %v854 = vrot.slane %v853, 1
      %v855 = vmax.f32 %v853, %v854
      %v856 = vmax.f32 %v467, %v468
      %v857 = vmax.f32 %v856, %v469
      %v858 = vsel %vm637, %v470, -inf
      %v859 = vmax.f32 %v857, %v858
      %v860 = vrot.slane %v859, 4
      %v861 = vmax.f32 %v859, %v860
      %v862 = vrot.slane %v861, 2
      %v863 = vmax.f32 %v861, %v862
      %v864 = vrot.slane %v863, 1
      %v865 = vmax.f32 %v863, %v864
      %v866 = vmax.f32 %v471, %v472
      %v867 = vmax.f32 %v866, %v473
      %v868 = vsel %vm637, %v474, -inf
      %v869 = vmax.f32 %v867, %v868
      %v870 = vrot.slane %v869, 4
      %v871 = vmax.f32 %v869, %v870
      %v872 = vrot.slane %v871, 2
      %v873 = vmax.f32 %v871, %v872
      %v874 = vrot.slane %v873, 1
      %v875 = vmax.f32 %v873, %v874
      %v876 = vmax.f32 %v475, %v476
      %v877 = vmax.f32 %v876, %v477
      %v878 = vsel %vm637, %v478, -inf
      %v879 = vmax.f32 %v877, %v878
      %v880 = vrot.slane %v879, 4
      %v881 = vmax.f32 %v879, %v880
      %v882 = vrot.slane %v881, 2
      %v883 = vmax.f32 %v881, %v882
      %v884 = vrot.slane %v883, 1
      %v885 = vmax.f32 %v883, %v884
      %v886 = vmax.f32 %v479, %v480
      %v887 = vmax.f32 %v886, %v481
      %v888 = vsel %vm637, %v482, -inf
      %v889 = vmax.f32 %v887, %v888
      %v890 = vrot.slane %v889, 4
      %v891 = vmax.f32 %v889, %v890
      %v892 = vrot.slane %v891, 2
      %v893 = vmax.f32 %v891, %v892
      %v894 = vrot.slane %v893, 1
      %v895 = vmax.f32 %v893, %v894
      %v896 = vmax.f32 %v483, %v484
      %v897 = vmax.f32 %v896, %v485
      %v898 = vsel %vm637, %v486, -inf
      %v899 = vmax.f32 %v897, %v898
      %v900 = vrot.slane %v899, 4
      %v901 = vmax.f32 %v899, %v900
      %v902 = vrot.slane %v901, 2
      %v903 = vmax.f32 %v901, %v902
      %v904 = vrot.slane %v903, 1
      %v905 = vmax.f32 %v903, %v904
      %v906 = vmax.f32 %v487, %v488
      %v907 = vmax.f32 %v906, %v489
      %v908 = vsel %vm637, %v490, -inf
      %v909 = vmax.f32 %v907, %v908
      %v910 = vrot.slane %v909, 4
      %v911 = vmax.f32 %v909, %v910
      %v912 = vrot.slane %v911, 2
      %v913 = vmax.f32 %v911, %v912
      %v914 = vrot.slane %v913, 1
      %v915 = vmax.f32 %v913, %v914
      %v916 = vmax.f32 %v491, %v492
      %v917 = vmax.f32 %v916, %v493
      %v918 = vsel %vm637, %v494, -inf
      %v919 = vmax.f32 %v917, %v918
      %v920 = vrot.slane %v919, 4
      %v921 = vmax.f32 %v919, %v920
      %v922 = vrot.slane %v921, 2
      %v923 = vmax.f32 %v921, %v922
      %v924 = vrot.slane %v923, 1
      %v925 = vmax.f32 %v923, %v924
      %v926 = vmax.f32 %v495, %v496
      %v927 = vmax.f32 %v926, %v497
      %v928 = vsel %vm637, %v498, -inf
      %v929 = vmax.f32 %v927, %v928
      %v930 = vrot.slane %v929, 4
      %v931 = vmax.f32 %v929, %v930
      %v932 = vrot.slane %v931, 2
      %v933 = vmax.f32 %v931, %v932
      %v934 = vrot.slane %v933, 1
      %v935 = vmax.f32 %v933, %v934
      %v936 = vmax.f32 %v499, %v500
      %v937 = vmax.f32 %v936, %v501
      %v938 = vsel %vm637, %v502, -inf
      %v939 = vmax.f32 %v937, %v938
      %v940 = vrot.slane %v939, 4
      %v941 = vmax.f32 %v939, %v940
      %v942 = vrot.slane %v941, 2
      %v943 = vmax.f32 %v941, %v942
      %v944 = vrot.slane %v943, 1
      %v945 = vmax.f32 %v943, %v944
      %v946 = vmax.f32 %v503, %v504
      %v947 = vmax.f32 %v946, %v505
      %v948 = vsel %vm637, %v506, -inf
      %v949 = vmax.f32 %v947, %v948
      %v950 = vrot.slane %v949, 4
      %v951 = vmax.f32 %v949, %v950
      %v952 = vrot.slane %v951, 2
      %v953 = vmax.f32 %v951, %v952
      %v954 = vrot.slane %v953, 1
      %v955 = vmax.f32 %v953, %v954
      %v956 = vmax.f32 %v507, %v508
      %v957 = vmax.f32 %v956, %v509
      %v958 = vsel %vm637, %v510, -inf
      %v959 = vmax.f32 %v957, %v958
      %v960 = vrot.slane %v959, 4
      %v961 = vmax.f32 %v959, %v960
      %v962 = vrot.slane %v961, 2
      %v963 = vmax.f32 %v961, %v962
      %v964 = vrot.slane %v963, 1
      %v965 = vmax.f32 %v963, %v964
      %v966 = vmax.f32 %v511, %v512
      %v967 = vmax.f32 %v966, %v513
      %v968 = vsel %vm637, %v514, -inf
      %v969 = vmax.f32 %v967, %v968
      %v970 = vrot.slane %v969, 4
      %v971 = vmax.f32 %v969, %v970
      %v972 = vrot.slane %v971, 2
      %v973 = vmax.f32 %v971, %v972
      %v974 = vrot.slane %v973, 1
      %v975 = vmax.f32 %v973, %v974
      %v976 = vmax.f32 %v515, %v516
      %v977 = vmax.f32 %v976, %v517
      %v978 = vsel %vm637, %v518, -inf
      %v979 = vmax.f32 %v977, %v978
      %v980 = vrot.slane %v979, 4
      %v981 = vmax.f32 %v979, %v980
      %v982 = vrot.slane %v981, 2
      %v983 = vmax.f32 %v981, %v982
      %v984 = vrot.slane %v983, 1
      %v985 = vmax.f32 %v983, %v984
      %v986 = vmax.f32 %v519, %v520
      %v987 = vmax.f32 %v986, %v521
      %v988 = vsel %vm637, %v522, -inf
      %v989 = vmax.f32 %v987, %v988
      %v990 = vrot.slane %v989, 4
      %v991 = vmax.f32 %v989, %v990
      %v992 = vrot.slane %v991, 2
      %v993 = vmax.f32 %v991, %v992
      %v994 = vrot.slane %v993, 1
      %v995 = vmax.f32 %v993, %v994
      %v996 = vmax.f32 %v523, %v524
      %v997 = vmax.f32 %v996, %v525
      %v998 = vsel %vm637, %v526, -inf
      %v999 = vmax.f32 %v997, %v998
      %v1000 = vrot.slane %v999, 4
      %v1001 = vmax.f32 %v999, %v1000
      %v1002 = vrot.slane %v1001, 2
      %v1003 = vmax.f32 %v1001, %v1002
      %v1004 = vrot.slane %v1003, 1
      %v1005 = vmax.f32 %v1003, %v1004
      %v1006 = vmax.f32 %v527, %v528
      %v1007 = vmax.f32 %v1006, %v529
      %v1008 = vsel %vm637, %v530, -inf
      %v1009 = vmax.f32 %v1007, %v1008
      %v1010 = vrot.slane %v1009, 4
      %v1011 = vmax.f32 %v1009, %v1010
      %v1012 = vrot.slane %v1011, 2
      %v1013 = vmax.f32 %v1011, %v1012
      %v1014 = vrot.slane %v1013, 1
      %v1015 = vmax.f32 %v1013, %v1014
      %v1016 = vmax.f32 %v531, %v532
      %v1017 = vmax.f32 %v1016, %v533
      %v1018 = vsel %vm637, %v534, -inf
      %v1019 = vmax.f32 %v1017, %v1018
      %v1020 = vrot.slane %v1019, 4
      %v1021 = vmax.f32 %v1019, %v1020
      %v1022 = vrot.slane %v1021, 2
      %v1023 = vmax.f32 %v1021, %v1022
      %v1024 = vrot.slane %v1023, 1
      %v1025 = vmax.f32 %v1023, %v1024
      %v1026 = vmax.f32 %v535, %v536
      %v1027 = vmax.f32 %v1026, %v537
      %v1028 = vsel %vm637, %v538, -inf
      %v1029 = vmax.f32 %v1027, %v1028
      %v1030 = vrot.slane %v1029, 4
      %v1031 = vmax.f32 %v1029, %v1030
      %v1032 = vrot.slane %v1031, 2
      %v1033 = vmax.f32 %v1031, %v1032
      %v1034 = vrot.slane %v1033, 1
      %v1035 = vmax.f32 %v1033, %v1034
      %v1036 = vmax.f32 %v539, %v540
      %v1037 = vmax.f32 %v1036, %v541
      %v1038 = vsel %vm637, %v542, -inf
      %v1039 = vmax.f32 %v1037, %v1038
      %v1040 = vrot.slane %v1039, 4
      %v1041 = vmax.f32 %v1039, %v1040
      %v1042 = vrot.slane %v1041, 2
      %v1043 = vmax.f32 %v1041, %v1042
      %v1044 = vrot.slane %v1043, 1
      %v1045 = vmax.f32 %v1043, %v1044
      %v1046 = vmax.f32 %v543, %v544
      %v1047 = vmax.f32 %v1046, %v545
      %v1048 = vsel %vm637, %v546, -inf
      %v1049 = vmax.f32 %v1047, %v1048
      %v1050 = vrot.slane %v1049, 4
      %v1051 = vmax.f32 %v1049, %v1050
      %v1052 = vrot.slane %v1051, 2
      %v1053 = vmax.f32 %v1051, %v1052
      %v1054 = vrot.slane %v1053, 1
      %v1055 = vmax.f32 %v1053, %v1054
      %v1056 = vmax.f32 %v547, %v548
      %v1057 = vmax.f32 %v1056, %v549
      %v1058 = vsel %vm637, %v550, -inf
      %v1059 = vmax.f32 %v1057, %v1058
      %v1060 = vrot.slane %v1059, 4
      %v1061 = vmax.f32 %v1059, %v1060
      %v1062 = vrot.slane %v1061, 2
      %v1063 = vmax.f32 %v1061, %v1062
      %v1064 = vrot.slane %v1063, 1
      %v1065 = vmax.f32 %v1063, %v1064
      %v1066 = vmax.f32 %v551, %v552
      %v1067 = vmax.f32 %v1066, %v553
      %v1068 = vsel %vm637, %v554, -inf
      %v1069 = vmax.f32 %v1067, %v1068
      %v1070 = vrot.slane %v1069, 4
      %v1071 = vmax.f32 %v1069, %v1070
      %v1072 = vrot.slane %v1071, 2
      %v1073 = vmax.f32 %v1071, %v1072
      %v1074 = vrot.slane %v1073, 1
      %v1075 = vmax.f32 %v1073, %v1074
      %v1076 = vmax.f32 %v555, %v556
      %v1077 = vmax.f32 %v1076, %v557
      %v1078 = vsel %vm637, %v558, -inf
      %v1079 = vmax.f32 %v1077, %v1078
      %v1080 = vrot.slane %v1079, 4
      %v1081 = vmax.f32 %v1079, %v1080
      %v1082 = vrot.slane %v1081, 2
      %v1083 = vmax.f32 %v1081, %v1082
      %v1084 = vrot.slane %v1083, 1
      %v1085 = vmax.f32 %v1083, %v1084
      %v1086 = vmax.f32 %v559, %v560
      %v1087 = vmax.f32 %v1086, %v561
      %v1088 = vsel %vm637, %v562, -inf
      %v1089 = vmax.f32 %v1087, %v1088
      %v1090 = vrot.slane %v1089, 4
      %v1091 = vmax.f32 %v1089, %v1090
      %v1092 = vrot.slane %v1091, 2
      %v1093 = vmax.f32 %v1091, %v1092
      %v1094 = vrot.slane %v1093, 1
      %v1095 = vmax.f32 %v1093, %v1094
      %v1096 = vmax.f32 %v563, %v564
      %v1097 = vmax.f32 %v1096, %v565
      %v1098 = vsel %vm637, %v566, -inf
      %v1099 = vmax.f32 %v1097, %v1098
      %v1100 = vrot.slane %v1099, 4
      %v1101 = vmax.f32 %v1099, %v1100
      %v1102 = vrot.slane %v1101, 2
      %v1103 = vmax.f32 %v1101, %v1102
      %v1104 = vrot.slane %v1103, 1
      %v1105 = vmax.f32 %v1103, %v1104
      %v1106 = vmax.f32 %v567, %v568
      %v1107 = vmax.f32 %v1106, %v569
      %v1108 = vsel %vm637, %v570, -inf
      %v1109 = vmax.f32 %v1107, %v1108
      %v1110 = vrot.slane %v1109, 4
      %v1111 = vmax.f32 %v1109, %v1110
      %v1112 = vrot.slane %v1111, 2
      %v1113 = vmax.f32 %v1111, %v1112
      %v1114 = vrot.slane %v1113, 1
      %v1115 = vmax.f32 %v1113, %v1114
      %v1116 = vmax.f32 %v571, %v572
      %v1117 = vmax.f32 %v1116, %v573
      %v1118 = vsel %vm637, %v574, -inf
      %v1119 = vmax.f32 %v1117, %v1118
      %v1120 = vrot.slane %v1119, 4
      %v1121 = vmax.f32 %v1119, %v1120
      %v1122 = vrot.slane %v1121, 2
      %v1123 = vmax.f32 %v1121, %v1122
      %v1124 = vrot.slane %v1123, 1
      %v1125 = vmax.f32 %v1123, %v1124
      %v1126 = vmax.f32 %v575, %v576
      %v1127 = vmax.f32 %v1126, %v577
      %v1128 = vsel %vm637, %v578, -inf
      %v1129 = vmax.f32 %v1127, %v1128
      %v1130 = vrot.slane %v1129, 4
      %v1131 = vmax.f32 %v1129, %v1130
      %v1132 = vrot.slane %v1131, 2
      %v1133 = vmax.f32 %v1131, %v1132
      %v1134 = vrot.slane %v1133, 1
      %v1135 = vmax.f32 %v1133, %v1134
      %v1136 = vmax.f32 %v579, %v580
      %v1137 = vmax.f32 %v1136, %v581
      %v1138 = vsel %vm637, %v582, -inf
      %v1139 = vmax.f32 %v1137, %v1138
      %v1140 = vrot.slane %v1139, 4
      %v1141 = vmax.f32 %v1139, %v1140
      %v1142 = vrot.slane %v1141, 2
      %v1143 = vmax.f32 %v1141, %v1142
      %v1144 = vrot.slane %v1143, 1
      %v1145 = vmax.f32 %v1143, %v1144
      %v1146 = vmax.f32 %v583, %v584
      %v1147 = vmax.f32 %v1146, %v585
      %v1148 = vsel %vm637, %v586, -inf
      %v1149 = vmax.f32 %v1147, %v1148
      %v1150 = vrot.slane %v1149, 4
      %v1151 = vmax.f32 %v1149, %v1150
      %v1152 = vrot.slane %v1151, 2
      %v1153 = vmax.f32 %v1151, %v1152
      %v1154 = vrot.slane %v1153, 1
      %v1155 = vmax.f32 %v1153, %v1154
      %v1156 = vmax.f32 %v587, %v588
      %v1157 = vmax.f32 %v1156, %v589
      %v1158 = vsel %vm637, %v590, -inf
      %v1159 = vmax.f32 %v1157, %v1158
      %v1160 = vrot.slane %v1159, 4
      %v1161 = vmax.f32 %v1159, %v1160
      %v1162 = vrot.slane %v1161, 2
      %v1163 = vmax.f32 %v1161, %v1162
      %v1164 = vrot.slane %v1163, 1
      %v1165 = vmax.f32 %v1163, %v1164
      %v1166 = vmax.f32 %v591, %v592
      %v1167 = vmax.f32 %v1166, %v593
      %v1168 = vsel %vm637, %v594, -inf
      %v1169 = vmax.f32 %v1167, %v1168
      %v1170 = vrot.slane %v1169, 4
      %v1171 = vmax.f32 %v1169, %v1170
      %v1172 = vrot.slane %v1171, 2
      %v1173 = vmax.f32 %v1171, %v1172
      %v1174 = vrot.slane %v1173, 1
      %v1175 = vmax.f32 %v1173, %v1174
      %v1176 = vmax.f32 %v595, %v596
      %v1177 = vmax.f32 %v1176, %v597
      %v1178 = vsel %vm637, %v598, -inf
      %v1179 = vmax.f32 %v1177, %v1178
      %v1180 = vrot.slane %v1179, 4
      %v1181 = vmax.f32 %v1179, %v1180
      %v1182 = vrot.slane %v1181, 2
      %v1183 = vmax.f32 %v1181, %v1182
      %v1184 = vrot.slane %v1183, 1
      %v1185 = vmax.f32 %v1183, %v1184
      %v1186 = vmax.f32 %v599, %v600
      %v1187 = vmax.f32 %v1186, %v601
      %v1188 = vsel %vm637, %v602, -inf
      %v1189 = vmax.f32 %v1187, %v1188
      %v1190 = vrot.slane %v1189, 4
      %v1191 = vmax.f32 %v1189, %v1190
      %v1192 = vrot.slane %v1191, 2
      %v1193 = vmax.f32 %v1191, %v1192
      %v1194 = vrot.slane %v1193, 1
      %v1195 = vmax.f32 %v1193, %v1194
      %v1196 = vmax.f32 %v603, %v604
      %v1197 = vmax.f32 %v1196, %v605
      %v1198 = vsel %vm637, %v606, -inf
      %v1199 = vmax.f32 %v1197, %v1198
      %v1200 = vrot.slane %v1199, 4
      %v1201 = vmax.f32 %v1199, %v1200
      %v1202 = vrot.slane %v1201, 2
      %v1203 = vmax.f32 %v1201, %v1202
      %v1204 = vrot.slane %v1203, 1
      %v1205 = vmax.f32 %v1203, %v1204
      %v1206 = vmax.f32 %v607, %v608
      %v1207 = vmax.f32 %v1206, %v609
      %v1208 = vsel %vm637, %v610, -inf
      %v1209 = vmax.f32 %v1207, %v1208
      %v1210 = vrot.slane %v1209, 4
      %v1211 = vmax.f32 %v1209, %v1210
      %v1212 = vrot.slane %v1211, 2
      %v1213 = vmax.f32 %v1211, %v1212
      %v1214 = vrot.slane %v1213, 1
      %v1215 = vmax.f32 %v1213, %v1214
      %v1216 = vmax.f32 %v611, %v612
      %v1217 = vmax.f32 %v1216, %v613
      %v1218 = vsel %vm637, %v614, -inf
      %v1219 = vmax.f32 %v1217, %v1218
      %v1220 = vrot.slane %v1219, 4
      %v1221 = vmax.f32 %v1219, %v1220
      %v1222 = vrot.slane %v1221, 2
      %v1223 = vmax.f32 %v1221, %v1222
      %v1224 = vrot.slane %v1223, 1
      %v1225 = vmax.f32 %v1223, %v1224
      %v1226 = vmax.f32 %v615, %v616
      %v1227 = vmax.f32 %v1226, %v617
      %v1228 = vsel %vm637, %v618, -inf
      %v1229 = vmax.f32 %v1227, %v1228
      %v1230 = vrot.slane %v1229, 4
      %v1231 = vmax.f32 %v1229, %v1230
      %v1232 = vrot.slane %v1231, 2
      %v1233 = vmax.f32 %v1231, %v1232
      %v1234 = vrot.slane %v1233, 1
      %v1235 = vmax.f32 %v1233, %v1234
      %v1236 = vmax.f32 %v619, %v620
      %v1237 = vmax.f32 %v1236, %v621
      %v1238 = vsel %vm637, %v622, -inf
      %v1239 = vmax.f32 %v1237, %v1238
      %v1240 = vrot.slane %v1239, 4
      %v1241 = vmax.f32 %v1239, %v1240
      %v1242 = vrot.slane %v1241, 2
      %v1243 = vmax.f32 %v1241, %v1242
      %v1244 = vrot.slane %v1243, 1
      %v1245 = vmax.f32 %v1243, %v1244
      %v1246 = vmax.f32 %v623, %v624
      %v1247 = vmax.f32 %v1246, %v625
      %v1248 = vsel %vm637, %v626, -inf
      %v1249 = vmax.f32 %v1247, %v1248
      %v1250 = vrot.slane %v1249, 4
      %v1251 = vmax.f32 %v1249, %v1250
      %v1252 = vrot.slane %v1251, 2
      %v1253 = vmax.f32 %v1251, %v1252
      %v1254 = vrot.slane %v1253, 1
      %v1255 = vmax.f32 %v1253, %v1254
      %v1256 = vmax.f32 %v627, %v628
      %v1257 = vmax.f32 %v1256, %v629
      %v1258 = vsel %vm637, %v630, -inf
      %v1259 = vmax.f32 %v1257, %v1258
      %v1260 = vrot.slane %v1259, 4
      %v1261 = vmax.f32 %v1259, %v1260
      %v1262 = vrot.slane %v1261, 2
      %v1263 = vmax.f32 %v1261, %v1262
      %v1264 = vrot.slane %v1263, 1
      %v1265 = vmax.f32 %v1263, %v1264
      %v1266 = vmax.f32 %v631, %v632
      %v1267 = vmax.f32 %v1266, %v633
      %v1268 = vsel %vm637, %v634, -inf
      %v1269 = vmax.f32 %v1267, %v1268
      %v1270 = vrot.slane %v1269, 4
      %v1271 = vmax.f32 %v1269, %v1270
      %v1272 = vrot.slane %v1271, 2
      %v1273 = vmax.f32 %v1271, %v1272
      %v1274 = vrot.slane %v1273, 1
      %v1275 = vmax.f32 %v1273, %v1274
      %v1276 = vpack.c.bf16 %v645, %v645
      %v1277 = vpack.c.bf16 %v655, %v655
      %v1278 = vpack.c.bf16 %v665, %v665
      %v1279 = vpack.c.bf16 %v675, %v675
      %v1280 = vpack.c.bf16 %v685, %v685
      %v1281 = vpack.c.bf16 %v695, %v695
      %v1282 = vpack.c.bf16 %v705, %v705
      %v1283 = vpack.c.bf16 %v715, %v715
      %v1284 = vpack.c.bf16 %v725, %v725
      %v1285 = vpack.c.bf16 %v735, %v735
      %v1286 = vpack.c.bf16 %v745, %v745
      %v1287 = vpack.c.bf16 %v755, %v755
      %v1288 = vpack.c.bf16 %v765, %v765
      %v1289 = vpack.c.bf16 %v775, %v775
      %v1290 = vpack.c.bf16 %v785, %v785
      %v1291 = vpack.c.bf16 %v795, %v795
      %v1292 = vpack.c.bf16 %v805, %v805
      %v1293 = vpack.c.bf16 %v815, %v815
      %v1294 = vpack.c.bf16 %v825, %v825
      %v1295 = vpack.c.bf16 %v835, %v835
      %v1296 = vpack.c.bf16 %v845, %v845
      %v1297 = vpack.c.bf16 %v855, %v855
      %v1298 = vpack.c.bf16 %v865, %v865
      %v1299 = vpack.c.bf16 %v875, %v875
      %v1300 = vpack.c.bf16 %v885, %v885
      %v1301 = vpack.c.bf16 %v895, %v895
      %v1302 = vpack.c.bf16 %v905, %v905
      %v1303 = vpack.c.bf16 %v915, %v915
      %v1304 = vpack.c.bf16 %v925, %v925
      %v1305 = vpack.c.bf16 %v935, %v935
      %v1306 = vpack.c.bf16 %v945, %v945
      %v1307 = vpack.c.bf16 %v955, %v955
      %v1308 = vpack.c.bf16 %v965, %v965
      %v1309 = vpack.c.bf16 %v975, %v975
      %v1310 = vpack.c.bf16 %v985, %v985
      %v1311 = vpack.c.bf16 %v995, %v995
      %v1312 = vpack.c.bf16 %v1005, %v1005
      %v1313 = vpack.c.bf16 %v1015, %v1015
      %v1314 = vpack.c.bf16 %v1025, %v1025
      %v1315 = vpack.c.bf16 %v1035, %v1035
      %v1316 = vpack.c.bf16 %v1045, %v1045
      %v1317 = vpack.c.bf16 %v1055, %v1055
      %v1318 = vpack.c.bf16 %v1065, %v1065
      %v1319 = vpack.c.bf16 %v1075, %v1075
      %v1320 = vpack.c.bf16 %v1085, %v1085
      %v1321 = vpack.c.bf16 %v1095, %v1095
      %v1322 = vpack.c.bf16 %v1105, %v1105
      %v1323 = vpack.c.bf16 %v1115, %v1115
      %v1324 = vpack.c.bf16 %v1125, %v1125
      %v1325 = vpack.c.bf16 %v1135, %v1135
      %v1326 = vpack.c.bf16 %v1145, %v1145
      %v1327 = vpack.c.bf16 %v1155, %v1155
      %v1328 = vpack.c.bf16 %v1165, %v1165
      %v1329 = vpack.c.bf16 %v1175, %v1175
      %v1330 = vpack.c.bf16 %v1185, %v1185
      %v1331 = vpack.c.bf16 %v1195, %v1195
      %v1332 = vpack.c.bf16 %v1205, %v1205
      %v1333 = vpack.c.bf16 %v1215, %v1215
      %v1334 = vpack.c.bf16 %v1225, %v1225
      %v1335 = vpack.c.bf16 %v1235, %v1235
      %v1336 = vpack.c.bf16 %v1245, %v1245
      %v1337 = vpack.c.bf16 %v1255, %v1255
      %v1338 = vpack.c.bf16 %v1265, %v1265
      %v1339 = vpack.c.bf16 %v1275, %v1275
      %v1404 = vunpack.c.l.b16 %v1276
      %v1405 = vunpack.c.l.b16 %v1277
      %v1406 = vunpack.c.l.b16 %v1278
      %v1407 = vunpack.c.l.b16 %v1279
      %v1408 = vunpack.c.l.b16 %v1280
      %v1409 = vunpack.c.l.b16 %v1281
      %v1410 = vunpack.c.l.b16 %v1282
      %v1411 = vunpack.c.l.b16 %v1283
      %v1412 = vunpack.c.l.b16 %v1284
      %v1413 = vunpack.c.l.b16 %v1285
      %v1414 = vunpack.c.l.b16 %v1286
      %v1415 = vunpack.c.l.b16 %v1287
      %v1416 = vunpack.c.l.b16 %v1288
      %v1417 = vunpack.c.l.b16 %v1289
      %v1418 = vunpack.c.l.b16 %v1290
      %v1419 = vunpack.c.l.b16 %v1291
      %v1420 = vunpack.c.l.b16 %v1292
      %v1421 = vunpack.c.l.b16 %v1293
      %v1422 = vunpack.c.l.b16 %v1294
      %v1423 = vunpack.c.l.b16 %v1295
      %v1424 = vunpack.c.l.b16 %v1296
      %v1425 = vunpack.c.l.b16 %v1297
      %v1426 = vunpack.c.l.b16 %v1298
      %v1427 = vunpack.c.l.b16 %v1299
      %v1428 = vunpack.c.l.b16 %v1300
      %v1429 = vunpack.c.l.b16 %v1301
      %v1430 = vunpack.c.l.b16 %v1302
      %v1431 = vunpack.c.l.b16 %v1303
      %v1432 = vunpack.c.l.b16 %v1304
      %v1433 = vunpack.c.l.b16 %v1305
      %v1434 = vunpack.c.l.b16 %v1306
      %v1435 = vunpack.c.l.b16 %v1307
      %v1436 = vunpack.c.l.b16 %v1308
      %v1437 = vunpack.c.l.b16 %v1309
      %v1438 = vunpack.c.l.b16 %v1310
      %v1439 = vunpack.c.l.b16 %v1311
      %v1440 = vunpack.c.l.b16 %v1312
      %v1441 = vunpack.c.l.b16 %v1313
      %v1442 = vunpack.c.l.b16 %v1314
      %v1443 = vunpack.c.l.b16 %v1315
      %v1444 = vunpack.c.l.b16 %v1316
      %v1445 = vunpack.c.l.b16 %v1317
      %v1446 = vunpack.c.l.b16 %v1318
      %v1447 = vunpack.c.l.b16 %v1319
      %v1448 = vunpack.c.l.b16 %v1320
      %v1449 = vunpack.c.l.b16 %v1321
      %v1450 = vunpack.c.l.b16 %v1322
      %v1451 = vunpack.c.l.b16 %v1323
      %v1452 = vunpack.c.l.b16 %v1324
      %v1453 = vunpack.c.l.b16 %v1325
      %v1454 = vunpack.c.l.b16 %v1326
      %v1455 = vunpack.c.l.b16 %v1327
      %v1456 = vunpack.c.l.b16 %v1328
      %v1457 = vunpack.c.l.b16 %v1329
      %v1458 = vunpack.c.l.b16 %v1330
      %v1459 = vunpack.c.l.b16 %v1331
      %v1460 = vunpack.c.l.b16 %v1332
      %v1461 = vunpack.c.l.b16 %v1333
      %v1462 = vunpack.c.l.b16 %v1334
      %v1463 = vunpack.c.l.b16 %v1335
      %v1464 = vunpack.c.l.b16 %v1336
      %v1465 = vunpack.c.l.b16 %v1337
      %v1466 = vunpack.c.l.b16 %v1338
      %v1467 = vunpack.c.l.b16 %v1339
      %vm1468 = vcmask 1041409
      %v1469 = vsel %vm1468, %v1405, %v1404
      %vm1470 = vcmask 1042434
      %v1471 = vsel %vm1470, %v1406, %v1469
      %vm1472 = vcmask 1043459
      %v1473 = vsel %vm1472, %v1407, %v1471
      %vm1474 = vcmask 1044484
      %v1475 = vsel %vm1474, %v1408, %v1473
      %vm1476 = vcmask 1045509
      %v1477 = vsel %vm1476, %v1409, %v1475
      %vm1478 = vcmask 1046534
      %v1479 = vsel %vm1478, %v1410, %v1477
      %vm1480 = vcmask 1047559
      %v1481 = vsel %vm1480, %v1411, %v1479
      %v1482 = vsel %vm1468, %v1413, %v1412
      %v1483 = vsel %vm1470, %v1414, %v1482
      %v1484 = vsel %vm1472, %v1415, %v1483
      %v1485 = vsel %vm1474, %v1416, %v1484
      %v1486 = vsel %vm1476, %v1417, %v1485
      %v1487 = vsel %vm1478, %v1418, %v1486
      %v1488 = vsel %vm1480, %v1419, %v1487
      %v1489 = vsel %vm1468, %v1421, %v1420
      %v1490 = vsel %vm1470, %v1422, %v1489
      %v1491 = vsel %vm1472, %v1423, %v1490
      %v1492 = vsel %vm1474, %v1424, %v1491
      %v1493 = vsel %vm1476, %v1425, %v1492
      %v1494 = vsel %vm1478, %v1426, %v1493
      %v1495 = vsel %vm1480, %v1427, %v1494
      %v1496 = vsel %vm1468, %v1429, %v1428
      %v1497 = vsel %vm1470, %v1430, %v1496
      %v1498 = vsel %vm1472, %v1431, %v1497
      %v1499 = vsel %vm1474, %v1432, %v1498
      %v1500 = vsel %vm1476, %v1433, %v1499
      %v1501 = vsel %vm1478, %v1434, %v1500
      %v1502 = vsel %vm1480, %v1435, %v1501
      %v1503 = vsel %vm1468, %v1437, %v1436
      %v1504 = vsel %vm1470, %v1438, %v1503
      %v1505 = vsel %vm1472, %v1439, %v1504
      %v1506 = vsel %vm1474, %v1440, %v1505
      %v1507 = vsel %vm1476, %v1441, %v1506
      %v1508 = vsel %vm1478, %v1442, %v1507
      %v1509 = vsel %vm1480, %v1443, %v1508
      %v1510 = vsel %vm1468, %v1445, %v1444
      %v1511 = vsel %vm1470, %v1446, %v1510
      %v1512 = vsel %vm1472, %v1447, %v1511
      %v1513 = vsel %vm1474, %v1448, %v1512
      %v1514 = vsel %vm1476, %v1449, %v1513
      %v1515 = vsel %vm1478, %v1450, %v1514
      %v1516 = vsel %vm1480, %v1451, %v1515
      %v1517 = vsel %vm1468, %v1453, %v1452
      %v1518 = vsel %vm1470, %v1454, %v1517
      %v1519 = vsel %vm1472, %v1455, %v1518
      %v1520 = vsel %vm1474, %v1456, %v1519
      %v1521 = vsel %vm1476, %v1457, %v1520
      %v1522 = vsel %vm1478, %v1458, %v1521
      %v1523 = vsel %vm1480, %v1459, %v1522
      %v1524 = vsel %vm1468, %v1461, %v1460
      %v1525 = vsel %vm1470, %v1462, %v1524
      %v1526 = vsel %vm1472, %v1463, %v1525
      %v1527 = vsel %vm1474, %v1464, %v1526
      %v1528 = vsel %vm1476, %v1465, %v1527
      %v1529 = vsel %vm1478, %v1466, %v1528
      %v1530 = vsel %vm1480, %v1467, %v1529
      %v1531 = vpack.c.b16 %v1481, %v1481
      %v1532 = vpack.c.b16 %v1488, %v1488
      %v1533 = vpack.c.b16 %v1495, %v1495
      %v1534 = vpack.c.b16 %v1502, %v1502
      %v1535 = vpack.c.b16 %v1509, %v1509
      %v1536 = vpack.c.b16 %v1516, %v1516
      %v1537 = vpack.c.b16 %v1523, %v1523
      %v1538 = vpack.c.b16 %v1530, %v1530
      %1547 = vst [vmem:[%s121] sm:$0xf] %v1531
      %1548 = vst [vmem:[%s121 + $0x4] sm:$0xf] %v1532
      %1549 = vst [vmem:[%s121 + $0x8] sm:$0xf] %v1533
      %1550 = vst [vmem:[%s121 + $0xc] sm:$0xf] %v1534
      %1551 = vst [vmem:[%s121 + $0x10] sm:$0xf] %v1535
      %1552 = vst [vmem:[%s121 + $0x14] sm:$0xf] %v1536
      %1553 = vst [vmem:[%s121 + $0x18] sm:$0xf] %v1537
      %1554 = vst [vmem:[%s121 + $0x1c] sm:$0xf] %v1538
      %s1555 = smul.u32 8, %s12
      %p1556 = scmp.lt.s32.totalorder %s1555, 15
      %s1557 = scalar_select %p1556, %s1555, 15
      %s1558 = smul.addr %s1557, 4
      %s1559 = scalar_lea.vmem %s1, %s1558
      // Predicated region
      $region25: #{_lambda_.14} parent=23 // pred_check
        %p1560 = pneg %p56
      $region26: #{_lambda_.14} parent=23 // pred_check_branch
        %1562 = sbr.rel (%p1560) target = $region28
      $region27: #{_lambda_.14} parent=23 // pred_region
        %s1563 = smul.u32 8, %s12
      $region28: #{_lambda_.14} parent=23 // pred_fallthru
        _
    $region24: #{_lambda_.14} parent=5 // pred_fallthru
      _
    %p1564 = scmp.le.s32.totalorder 2, %s7
    // Predicated region
    $region29: #{_lambda_.14} parent=5 // pred_check
      %p1565 = pneg %p1564
    $region30: #{_lambda_.14} parent=5 // pred_check_branch
      %1567 = sbr.rel (%p1565) target = $region32
    $region31: #{_lambda_.14} parent=5 // pred_region
      %s1568 = ssub.s32 %s7, 2
      // Predicated region
      $region33: #{_lambda_.14} parent=31 // pred_check
        %p1569 = pneg %p62
      $region34: #{_lambda_.14} parent=31 // pred_check_branch
        %1571 = sbr.rel (%p1569) target = $region36
      $region35: #{_lambda_.14} parent=31 // pred_region
        %s1572 = smul.u32 8, %s13
        %p1573 = scmp.lt.s32.totalorder %s1572, 15
        %s1574 = scalar_select %p1573, %s1572, 15
        %s1575 = smul.addr %s1574, 4
        %s1576 = scalar_lea.vmem %s1, %s1575
      $region36: #{_lambda_.14} parent=31 // pred_fallthru
        _
    $region32: #{_lambda_.14} parent=5 // pred_fallthru
      _
  $region6: #{_lambda_.14} parent=0 // loop_footer
    %s11 = sadd.s32 1, %s7
  $region7: #{_lambda_.14} parent=0 // loop_footer_branch
    %6 = sbr.rel target = $region3
  $region8: #{_lambda_.14} parent=0 // loop_exit
    _

// kernel: _lambda_.15
$region0: #{_lambda_.15}
  #allocation0 [shape = 'u32[]', space=smem, size = 0x4, offset = 0x4, fixed_abs, tag = 'smem constant byte address 0x4 - core index']
  #allocation1 [shape = 'u32[72,128]{1,0:T(1,128)}', space=vmem, size = 0x9000, scoped, tag = 'internal scratch']
  %s0 = inlined_call_operand.vmem [shape: bf16[128,256], index: 0, kind: input, shape index: {}]
  %s1 = inlined_call_operand.vmem [shape: bf16[256,128], index: 1, kind: input, shape index: {}]
  %s2 = inlined_call_operand.vmem [shape: f32[1,128], index: 2, kind: input, shape index: {}]
  %s3 = inlined_call_operand.vmem [shape: bf16[128,128], index: 3, kind: output, shape index: {}]
  %s4 = sld [smem:[#allocation0]]
  $region45: #{_lambda_.15} parent=0
    _
  %s6 = ssub.s32 1, %s4
  %s7 = scalar_select 0, %s6, %s4
  loop: start=0, step=1, limit=4
  $region2: #{_lambda_.15} parent=0 // loop_pre_header
    _
  $region3: #{_lambda_.15} parent=0 // loop_header
    %s9 = sphi 0, %s13
    %p10 = scmp.ge.s32.totalorder %s9, 4
    %s19 = sphi 0, %s21
    %s22 = sphi 0, %s19
    %s23 = sphi 0, %s22
    %s39 = sphi 0, %s23
    %s43 = sphi 0, %s43
    %s45 = sphi 0, %s43
    %s46 = sphi 0, %s45
    %s60 = sphi 0, %s46
    %s64 = sphi 0, %s64
    %s66 = sphi 0, %s64
    %s67 = sphi 0, %s66
    %s81 = sphi 0, %s67
    %s87 = sphi 0, %s89
    %s90 = sphi 0, %s87
    %s91 = sphi 0, %s90
    %s107 = sphi 0, %s91
  $region4: #{_lambda_.15} parent=0 // loop_header_branch
    %12 = sbr.rel (%p10) target = $region8
  $region5: #{_lambda_.15} parent=0 // loop_body
    %s14 = ssub.s32 %s9, 1
    %s15 = ssub.s32 %s9, 2
    %s16 = sadd.s32 %s9, 1
    %s17 = ssub.s32 %s9, %s16
    %p18 = scmp.eq.s32.totalorder %s17, 0
    %s20 = sadd.s32 %s19, 1
    %s21 = scalar_select %p18, %s19, %s20
    %p24 = pneg %p18
    %p25 = scmp.eq.s32.totalorder %s9, 1
    %p26 = por %p24, %p25
    %p27 = scmp.ne.s32.totalorder %s19, %s22
    %p28 = scmp.eq.s32.totalorder %s9, 0
    %p29 = por %p27, %p28
    %p30 = scmp.ne.s32.totalorder %s19, %s22
    %p31 = scmp.eq.s32.totalorder %s14, 1
    %p32 = por %p30, %p31
    %p33 = scmp.ne.s32.totalorder %s22, %s23
    %p34 = scmp.eq.s32.totalorder %s14, 0
    %p35 = por %p33, %p34
    %p36 = scmp.ne.s32.totalorder %s22, %s23
    %p37 = scmp.eq.s32.totalorder %s15, 1
    %p38 = por %p36, %p37
    %p40 = scmp.ne.s32.totalorder %s23, %s39
    %p41 = scmp.eq.s32.totalorder %s15, 0
    %p42 = por %p40, %p41
    %s44 = sadd.s32 %s43, 1
    %p47 = scmp.eq.s32.totalorder %s9, 1
    %p48 = scmp.ne.s32.totalorder %s43, %s45
    %p49 = scmp.eq.s32.totalorder %s9, 0
    %p50 = por %p48, %p49
    %p51 = scmp.ne.s32.totalorder %s43, %s45
    %p52 = scmp.eq.s32.totalorder %s14, 1
    %p53 = por %p51, %p52
    %p54 = scmp.ne.s32.totalorder %s45, %s46
    %p55 = scmp.eq.s32.totalorder %s14, 0
    %p56 = por %p54, %p55
    %p57 = scmp.ne.s32.totalorder %s45, %s46
    %p58 = scmp.eq.s32.totalorder %s15, 1
    %p59 = por %p57, %p58
    %p61 = scmp.ne.s32.totalorder %s46, %s60
    %p62 = scmp.eq.s32.totalorder %s15, 0
    %p63 = por %p61, %p62
    %s65 = sadd.s32 %s64, 1
    %p68 = scmp.eq.s32.totalorder %s9, 1
    %p69 = scmp.ne.s32.totalorder %s64, %s66
    %p70 = scmp.eq.s32.totalorder %s9, 0
    %p71 = por %p69, %p70
    %p72 = scmp.ne.s32.totalorder %s64, %s66
    %p73 = scmp.eq.s32.totalorder %s14, 1
    %p74 = por %p72, %p73
    %p75 = scmp.ne.s32.totalorder %s66, %s67
    %p76 = scmp.eq.s32.totalorder %s14, 0
    %p77 = por %p75, %p76
    %p78 = scmp.ne.s32.totalorder %s66, %s67
    %p79 = scmp.eq.s32.totalorder %s15, 1
    %p80 = por %p78, %p79
    %p82 = scmp.ne.s32.totalorder %s67, %s81
    %p83 = scmp.eq.s32.totalorder %s15, 0
    %p84 = por %p82, %p83
    %s85 = ssub.s32 %s9, %s16
    %p86 = scmp.eq.s32.totalorder %s85, 0
    %s88 = sadd.s32 %s87, 1
    %s89 = scalar_select %p86, %s87, %s88
    %p92 = pneg %p86
    %p93 = scmp.eq.s32.totalorder %s9, 1
    %p94 = por %p92, %p93
    %p95 = scmp.ne.s32.totalorder %s87, %s90
    %p96 = scmp.eq.s32.totalorder %s9, 0
    %p97 = por %p95, %p96
    %p98 = scmp.ne.s32.totalorder %s87, %s90
    %p99 = scmp.eq.s32.totalorder %s14, 1
    %p100 = por %p98, %p99
    %p101 = scmp.ne.s32.totalorder %s90, %s91
    %p102 = scmp.eq.s32.totalorder %s14, 0
    %p103 = por %p101, %p102
    %p104 = scmp.ne.s32.totalorder %s90, %s91
    %p105 = scmp.eq.s32.totalorder %s15, 1
    %p106 = por %p104, %p105
    %p108 = scmp.ne.s32.totalorder %s91, %s107
    %p109 = scmp.eq.s32.totalorder %s15, 0
    %p110 = por %p108, %p109
    %p111 = scmp.le.s32.totalorder 1, %s9
    %p112 = scmp.lt.s32.totalorder %s9, 3
    %p113 = pnand %p111, %p112
    %p114 = pneg %p113
    // Predicated region
    $region9: #{_lambda_.15} parent=5 // pred_check
      _
    $region10: #{_lambda_.15} parent=5 // pred_check_branch
      %116 = sbr.rel (%p113) target = $region12
    $region11: #{_lambda_.15} parent=5 // pred_region
      %s117 = ssub.s32 %s9, 1
      // Predicated region
      $region13: #{_lambda_.15} parent=11 // pred_check
        %p118 = pneg %p56
      $region14: #{_lambda_.15} parent=11 // pred_check_branch
        %120 = sbr.rel (%p118) target = $region16
      $region15: #{_lambda_.15} parent=11 // pred_region
        _
      $region16: #{_lambda_.15} parent=11 // pred_fallthru
        _
      // Predicated region
      $region17: #{_lambda_.15} parent=11 // pred_check
        %p121 = pneg %p77
      $region18: #{_lambda_.15} parent=11 // pred_check_branch
        %123 = sbr.rel (%p121) target = $region20
      $region19: #{_lambda_.15} parent=11 // pred_region
        _
      $region20: #{_lambda_.15} parent=11 // pred_fallthru
        _
    $region12: #{_lambda_.15} parent=5 // pred_fallthru
      _
    %p124 = scmp.lt.s32.totalorder %s9, 2
    // Predicated region
    $region21: #{_lambda_.15} parent=5 // pred_check
      %p125 = pneg %p124
    $region22: #{_lambda_.15} parent=5 // pred_check_branch
      %127 = sbr.rel (%p125) target = $region24
    $region23: #{_lambda_.15} parent=5 // pred_region
      // Predicated region
      $region25: #{_lambda_.15} parent=23 // pred_check
        %p128 = pneg %p29
      $region26: #{_lambda_.15} parent=23 // pred_check_branch
        %130 = sbr.rel (%p128) target = $region28
      $region27: #{_lambda_.15} parent=23 // pred_region
        %s131 = smul.u32 8, %s9
        %p132 = scmp.lt.s32.totalorder %s131, 15
        %s133 = scalar_select %p132, %s131, 15
        %s134 = smul.addr %s133, 2
        %s135 = smul.addr %s134, 4
        %s136 = scalar_lea.vmem %s0, %s135
        %s137 = smul.u32 8, %s9
      $region28: #{_lambda_.15} parent=23 // pred_fallthru
        _
    $region24: #{_lambda_.15} parent=5 // pred_fallthru
      _
    %p138 = scmp.le.s32.totalorder 1, %s9
    %p139 = scmp.lt.s32.totalorder %s9, 3
    %p140 = pnand %p138, %p139
    %p141 = pneg %p140
    // Predicated region
    $region29: #{_lambda_.15} parent=5 // pred_check
      _
    $region30: #{_lambda_.15} parent=5 // pred_check_branch
      %143 = sbr.rel (%p140) target = $region32
    $region31: #{_lambda_.15} parent=5 // pred_region
      %s144 = ssub.s32 %s9, 1
      %s145 = smul.u32 8, %s14
      %p146 = scmp.lt.s32.totalorder %s145, 15
      %s147 = scalar_select %p146, %s145, 15
      %s148 = smul.addr %s147, 2
      %s149 = smul.addr %s148, 4
      %s150 = scalar_lea.vmem %s0, %s149
      %p151 = pneg %p35
      %p152 = pneg %p32
      %p153 = pneg %p56
      %p154 = pneg %p53
      %p155 = pneg %p77
      %p156 = pneg %p74
      %p157 = pneg %p103
      %p158 = pneg %p100
      %s159 = smul.u32 8, %s14
      %p160 = scmp.lt.s32.totalorder %s159, 15
      %s161 = scalar_select %p160, %s159, 15
      %s162 = smul.addr %s161, 4
      %s163 = scalar_lea.vmem %s3, %s162
      %s164 = smul.u32 8, %s14
      %p165 = scmp.lt.s32.totalorder %s164, 15
      %s166 = scalar_select %p165, %s164, 15
      %s167 = smul.addr %s166, 2
      %s168 = smul.addr %s167, 4
      %s169 = scalar_lea.vmem %s0, %s168
      %s170 = smul.u32 8, %s14
      %s171 = smul.u32 8, %s14
      %p172 = scmp.lt.s32.totalorder %s171, 15
      %s173 = scalar_select %p172, %s171, 15
      %s174 = smul.addr %s173, 4
      %s175 = scalar_lea.vmem %s3, %s174
      %s176 = smul.u32 8, %s14
      %v177 = vld [vmem:[%s169] sm:$0xff]
      %v178 = vld [vmem:[%s169 + $0x8] sm:$0xff]
      %v179 = vld [vmem:[%s169 + $0x10] sm:$0xff]
      %v180 = vld [vmem:[%s169 + $0x18] sm:$0xff]
      %v181 = vld [vmem:[%s169 + $0x20] sm:$0xff]
      %v182 = vld [vmem:[%s169 + $0x28] sm:$0xff]
      %v183 = vld [vmem:[%s169 + $0x30] sm:$0xff]
      %v184 = vld [vmem:[%s169 + $0x38] sm:$0xff]
      %v185 = vld [vmem:[%s1] sm:$0xf]
      %v186 = vld [vmem:[%s1 + $0x4] sm:$0xf]
      %v187 = vld [vmem:[%s1 + $0x8] sm:$0xf]
      %v188 = vld [vmem:[%s1 + $0xc] sm:$0xf]
      %v189 = vld [vmem:[%s1 + $0x10] sm:$0xf]
      %v190 = vld [vmem:[%s1 + $0x14] sm:$0xf]
      %v191 = vld [vmem:[%s1 + $0x18] sm:$0xf]
      %v192 = vld [vmem:[%s1 + $0x1c] sm:$0xf]
      %v193 = vld [vmem:[%s1 + $0x20] sm:$0xf]
      %v194 = vld [vmem:[%s1 + $0x24] sm:$0xf]
      %v195 = vld [vmem:[%s1 + $0x28] sm:$0xf]
      %v196 = vld [vmem:[%s1 + $0x2c] sm:$0xf]
      %v197 = vld [vmem:[%s1 + $0x30] sm:$0xf]
      %v198 = vld [vmem:[%s1 + $0x34] sm:$0xf]
      %v199 = vld [vmem:[%s1 + $0x38] sm:$0xf]
      %v200 = vld [vmem:[%s1 + $0x3c] sm:$0xf]
      %v201 = vld [vmem:[%s1 + $0x40] sm:$0xf]
      %v202 = vld [vmem:[%s1 + $0x44] sm:$0xf]
      %v203 = vld [vmem:[%s1 + $0x48] sm:$0xf]
      %v204 = vld [vmem:[%s1 + $0x4c] sm:$0xf]
      %v205 = vld [vmem:[%s1 + $0x50] sm:$0xf]
      %v206 = vld [vmem:[%s1 + $0x54] sm:$0xf]
      %v207 = vld [vmem:[%s1 + $0x58] sm:$0xf]
      %v208 = vld [vmem:[%s1 + $0x5c] sm:$0xf]
      %v209 = vld [vmem:[%s1 + $0x60] sm:$0xf]
      %v210 = vld [vmem:[%s1 + $0x64] sm:$0xf]
      %v211 = vld [vmem:[%s1 + $0x68] sm:$0xf]
      %v212 = vld [vmem:[%s1 + $0x6c] sm:$0xf]
      %v213 = vld [vmem:[%s1 + $0x70] sm:$0xf]
      %v214 = vld [vmem:[%s1 + $0x74] sm:$0xf]
      %v215 = vld [vmem:[%s1 + $0x78] sm:$0xf]
      %v216 = vld [vmem:[%s1 + $0x7c] sm:$0xf]
      %v217 = vld [vmem:[%s2] sm:$0x1]
      %v219 = vperm.slane %v217, 0
      %v229 = vunpack.c.l.b16 %v177
      %v230 = vunpack.c.h.b16 %v177
      %v231 = vunpack.c.l.b16 %v178
      %v232 = vunpack.c.h.b16 %v178
      %v233 = vunpack.c.l.b16 %v179
      %v234 = vunpack.c.h.b16 %v179
      %v235 = vunpack.c.l.b16 %v180
      %v236 = vunpack.c.h.b16 %v180
      %v237 = vunpack.c.l.b16 %v181
      %v238 = vunpack.c.h.b16 %v181
      %v239 = vunpack.c.l.b16 %v182
      %v240 = vunpack.c.h.b16 %v182
      %v241 = vunpack.c.l.b16 %v183
      %v242 = vunpack.c.h.b16 %v183
      %v243 = vunpack.c.l.b16 %v184
      %v244 = vunpack.c.h.b16 %v184
      %v245 = vpack.c.b16 %v231, %v229
      %v246 = vpack.c.b16 %v232, %v230
      %v247 = vpack.c.b16 %v235, %v233
      %v248 = vpack.c.b16 %v236, %v234
      %v249 = vpack.c.b16 %v239, %v237
      %v250 = vpack.c.b16 %v240, %v238
      %v251 = vpack.c.b16 %v243, %v241
      %v252 = vpack.c.b16 %v244, %v242
      %v293 = vunpack.c.l.b16 %v185
      %v294 = vunpack.c.l.b16 %v186
      %v295 = vunpack.c.l.b16 %v187
      %v296 = vunpack.c.l.b16 %v188
      %v297 = vunpack.c.l.b16 %v189
      %v298 = vunpack.c.l.b16 %v190
      %v299 = vunpack.c.l.b16 %v191
      %v300 = vunpack.c.l.b16 %v192
      %v301 = vunpack.c.l.b16 %v193
      %v302 = vunpack.c.l.b16 %v194
      %v303 = vunpack.c.l.b16 %v195
      %v304 = vunpack.c.l.b16 %v196
      %v305 = vunpack.c.l.b16 %v197
      %v306 = vunpack.c.l.b16 %v198
      %v307 = vunpack.c.l.b16 %v199
      %v308 = vunpack.c.l.b16 %v200
      %v309 = vunpack.c.l.b16 %v201
      %v310 = vunpack.c.l.b16 %v202
      %v311 = vunpack.c.l.b16 %v203
      %v312 = vunpack.c.l.b16 %v204
      %v313 = vunpack.c.l.b16 %v205
      %v314 = vunpack.c.l.b16 %v206
      %v315 = vunpack.c.l.b16 %v207
      %v316 = vunpack.c.l.b16 %v208
      %v317 = vunpack.c.l.b16 %v209
      %v318 = vunpack.c.l.b16 %v210
      %v319 = vunpack.c.l.b16 %v211
      %v320 = vunpack.c.l.b16 %v212
      %v321 = vunpack.c.l.b16 %v213
      %v322 = vunpack.c.l.b16 %v214
      %v323 = vunpack.c.l.b16 %v215
      %v324 = vunpack.c.l.b16 %v216
      %v325 = vpack.c.b16 %v294, %v293
      %v326 = vpack.c.b16 %v296, %v295
      %v327 = vpack.c.b16 %v298, %v297
      %v328 = vpack.c.b16 %v300, %v299
      %v329 = vpack.c.b16 %v302, %v301
      %v330 = vpack.c.b16 %v304, %v303
      %v331 = vpack.c.b16 %v306, %v305
      %v332 = vpack.c.b16 %v308, %v307
      %v333 = vpack.c.b16 %v310, %v309
      %v334 = vpack.c.b16 %v312, %v311
      %v335 = vpack.c.b16 %v314, %v313
      %v336 = vpack.c.b16 %v316, %v315
      %v337 = vpack.c.b16 %v318, %v317
      %v338 = vpack.c.b16 %v320, %v319
      %v339 = vpack.c.b16 %v322, %v321
      %v340 = vpack.c.b16 %v324, %v323
      %357 = vmatpush.bf16.msra.mxu0 %v332
      %358 = vmatpush.bf16.msra.mxu0 %v331
      %359 = vmatpush.bf16.msra.mxu0 %v330
      %360 = vmatpush.bf16.msra.mxu0 %v329
      %361 = vmatpush.bf16.msra.mxu0 %v328
      %362 = vmatpush.bf16.msra.mxu0 %v327
      %363 = vmatpush.bf16.msra.mxu0 %v326
      %364 = vmatpush.bf16.msra.mxu0 %v325
      %365 = vmatmul.bf16.gmra.mxu0 %v245
      %v366 = vpop.f32.mrf.mxu0
      %v367 = vadd.f32 %v219, %v366
      %v368 = vpop.f32.mrf.mxu0
      %v369 = vadd.f32 %v219, %v368
      %370 = vmatmul.bf16.gmra.mxu0 %v247
      %v371 = vpop.f32.mrf.mxu0
      %v372 = vadd.f32 %v219, %v371
      %v373 = vpop.f32.mrf.mxu0
      %v374 = vadd.f32 %v219, %v373
      %375 = vmatmul.bf16.gmra.mxu0 %v249
      %v376 = vpop.f32.mrf.mxu0
      %v377 = vadd.f32 %v219, %v376
      %v378 = vpop.f32.mrf.mxu0
      %v379 = vadd.f32 %v219, %v378
      %380 = vmatmul.bf16.gmra.mxu0 %v251
      %v381 = vpop.f32.mrf.mxu0
      %v382 = vadd.f32 %v219, %v381
      %v383 = vpop.f32.mrf.mxu0
      %v384 = vadd.f32 %v219, %v383
      %385 = vdwg.mxu0
      %386 = vmatpush.bf16.msra.mxu0 %v340
      %387 = vmatpush.bf16.msra.mxu0 %v339
      %388 = vmatpush.bf16.msra.mxu0 %v338
      %389 = vmatpush.bf16.msra.mxu0 %v337
      %390 = vmatpush.bf16.msra.mxu0 %v336
      %391 = vmatpush.bf16.msra.mxu0 %v335
      %392 = vmatpush.bf16.msra.mxu0 %v334
      %393 = vmatpush.bf16.msra.mxu0 %v333
      %394 = vmatmul.bf16.gmra.mxu0 %v246
      %v395 = vpop.f32.mrf.mxu0
      %v396 = vadd.f32 %v367, %v395
      %v397 = vpop.f32.mrf.mxu0
      %v398 = vadd.f32 %v369, %v397
      %399 = vmatmul.bf16.gmra.mxu0 %v248
      %v400 = vpop.f32.mrf.mxu0
      %v401 = vadd.f32 %v372, %v400
      %v402 = vpop.f32.mrf.mxu0
      %v403 = vadd.f32 %v374, %v402
      %404 = vmatmul.bf16.gmra.mxu0 %v250
      %v405 = vpop.f32.mrf.mxu0
      %v406 = vadd.f32 %v377, %v405
      %v407 = vpop.f32.mrf.mxu0
      %v408 = vadd.f32 %v379, %v407
      %409 = vmatmul.bf16.gmra.mxu0 %v252
      %v410 = vpop.f32.mrf.mxu0
      %v411 = vadd.f32 %v382, %v410
      %v412 = vpop.f32.mrf.mxu0
      %v413 = vadd.f32 %v384, %v412
      %414 = vdwg.mxu0
      %v415 = vmax.f32 %v396, 0.0
      %v416 = vmax.f32 %v398, 0.0
      %v417 = vmax.f32 %v401, 0.0
      %v418 = vmax.f32 %v403, 0.0
      %v419 = vmax.f32 %v406, 0.0
      %v420 = vmax.f32 %v408, 0.0
      %v421 = vmax.f32 %v411, 0.0
      %v422 = vmax.f32 %v413, 0.0
      %v423 = vpack.c.bf16 %v415, %v415
      %v424 = vpack.c.bf16 %v416, %v416
      %v425 = vpack.c.bf16 %v417, %v417
      %v426 = vpack.c.bf16 %v418, %v418
      %v427 = vpack.c.bf16 %v419, %v419
      %v428 = vpack.c.bf16 %v420, %v420
      %v429 = vpack.c.bf16 %v421, %v421
      %v430 = vpack.c.bf16 %v422, %v422
      %431 = vst [vmem:[%s175] sm:$0xf] %v423
      %432 = vst [vmem:[%s175 + $0x4] sm:$0xf] %v424
      %433 = vst [vmem:[%s175 + $0x8] sm:$0xf] %v425
      %434 = vst [vmem:[%s175 + $0xc] sm:$0xf] %v426
      %435 = vst [vmem:[%s175 + $0x10] sm:$0xf] %v427
      %436 = vst [vmem:[%s175 + $0x14] sm:$0xf] %v428
      %437 = vst [vmem:[%s175 + $0x18] sm:$0xf] %v429
      %438 = vst [vmem:[%s175 + $0x1c] sm:$0xf] %v430
      %s439 = smul.u32 8, %s14
      %p440 = scmp.lt.s32.totalorder %s439, 15
      %s441 = scalar_select %p440, %s439, 15
      %s442 = smul.addr %s441, 4
      %s443 = scalar_lea.vmem %s3, %s442
      // Predicated region
      $region33: #{_lambda_.15} parent=31 // pred_check
        %p444 = pneg %p100
      $region34: #{_lambda_.15} parent=31 // pred_check_branch
        %446 = sbr.rel (%p444) target = $region36
      $region35: #{_lambda_.15} parent=31 // pred_region
        %s447 = smul.u32 8, %s14
      $region36: #{_lambda_.15} parent=31 // pred_fallthru
        _
    $region32: #{_lambda_.15} parent=5 // pred_fallthru
      _
    %p448 = scmp.le.s32.totalorder 2, %s9
    // Predicated region
    $region37: #{_lambda_.15} parent=5 // pred_check
      %p449 = pneg %p448
    $region38: #{_lambda_.15} parent=5 // pred_check_branch
      %451 = sbr.rel (%p449) target = $region40
    $region39: #{_lambda_.15} parent=5 // pred_region
      %s452 = ssub.s32 %s9, 2
      // Predicated region
      $region41: #{_lambda_.15} parent=39 // pred_check
        %p453 = pneg %p106
      $region42: #{_lambda_.15} parent=39 // pred_check_branch
        %455 = sbr.rel (%p453) target = $region44
      $region43: #{_lambda_.15} parent=39 // pred_region
        %s456 = smul.u32 8, %s15
        %p457 = scmp.lt.s32.totalorder %s456, 15
        %s458 = scalar_select %p457, %s456, 15
        %s459 = smul.addr %s458, 4
        %s460 = scalar_lea.vmem %s3, %s459
      $region44: #{_lambda_.15} parent=39 // pred_fallthru
        _
    $region40: #{_lambda_.15} parent=5 // pred_fallthru
      _
  $region6: #{_lambda_.15} parent=0 // loop_footer
    %s13 = sadd.s32 1, %s9
  $region7: #{_lambda_.15} parent=0 // loop_footer_branch
    %8 = sbr.rel target = $region3
  $region8: #{_lambda_.15} parent=0 // loop_exit
    _

// kernel: _lambda_.16
$region0: #{_lambda_.16}
  #allocation0 [shape = 'u32[]', space=smem, size = 0x4, offset = 0x4, fixed_abs, tag = 'smem constant byte address 0x4 - core index']
  #allocation1 [shape = 'u32[72,128]{1,0:T(1,128)}', space=vmem, size = 0x9000, scoped, tag = 'internal scratch']
  %s0 = inlined_call_operand.vmem [shape: bf16[128,256], index: 0, kind: input, shape index: {}]
  %s1 = inlined_call_operand.vmem [shape: bf16[256,128], index: 1, kind: input, shape index: {}]
  %s2 = inlined_call_operand.vmem [shape: f32[1,128], index: 2, kind: input, shape index: {}]
  %s3 = inlined_call_operand.vmem [shape: bf16[128,128], index: 3, kind: input, shape index: {}]
  %s4 = inlined_call_operand.vmem [shape: bf16[128,128], index: 4, kind: output, shape index: {}]
  %s5 = sld [smem:[#allocation0]]
  $region49: #{_lambda_.16} parent=0
    _
  %s7 = ssub.s32 1, %s5
  %s8 = scalar_select 0, %s7, %s5
  loop: start=0, step=1, limit=4
  $region2: #{_lambda_.16} parent=0 // loop_pre_header
    _
  $region3: #{_lambda_.16} parent=0 // loop_header
    %s10 = sphi 0, %s14
    %p11 = scmp.ge.s32.totalorder %s10, 4
    %s20 = sphi 0, %s22
    %s23 = sphi 0, %s20
    %s24 = sphi 0, %s23
    %s40 = sphi 0, %s24
    %s44 = sphi 0, %s44
    %s46 = sphi 0, %s44
    %s47 = sphi 0, %s46
    %s61 = sphi 0, %s47
    %s65 = sphi 0, %s65
    %s67 = sphi 0, %s65
    %s68 = sphi 0, %s67
    %s82 = sphi 0, %s68
    %s88 = sphi 0, %s90
    %s91 = sphi 0, %s88
    %s92 = sphi 0, %s91
    %s108 = sphi 0, %s92
    %s114 = sphi 0, %s116
    %s117 = sphi 0, %s114
    %s118 = sphi 0, %s117
    %s134 = sphi 0, %s118
  $region4: #{_lambda_.16} parent=0 // loop_header_branch
    %13 = sbr.rel (%p11) target = $region8
  $region5: #{_lambda_.16} parent=0 // loop_body
    %s15 = ssub.s32 %s10, 1
    %s16 = ssub.s32 %s10, 2
    %s17 = sadd.s32 %s10, 1
    %s18 = ssub.s32 %s10, %s17
    %p19 = scmp.eq.s32.totalorder %s18, 0
    %s21 = sadd.s32 %s20, 1
    %s22 = scalar_select %p19, %s20, %s21
    %p25 = pneg %p19
    %p26 = scmp.eq.s32.totalorder %s10, 1
    %p27 = por %p25, %p26
    %p28 = scmp.ne.s32.totalorder %s20, %s23
    %p29 = scmp.eq.s32.totalorder %s10, 0
    %p30 = por %p28, %p29
    %p31 = scmp.ne.s32.totalorder %s20, %s23
    %p32 = scmp.eq.s32.totalorder %s15, 1
    %p33 = por %p31, %p32
    %p34 = scmp.ne.s32.totalorder %s23, %s24
    %p35 = scmp.eq.s32.totalorder %s15, 0
    %p36 = por %p34, %p35
    %p37 = scmp.ne.s32.totalorder %s23, %s24
    %p38 = scmp.eq.s32.totalorder %s16, 1
    %p39 = por %p37, %p38
    %p41 = scmp.ne.s32.totalorder %s24, %s40
    %p42 = scmp.eq.s32.totalorder %s16, 0
    %p43 = por %p41, %p42
    %s45 = sadd.s32 %s44, 1
    %p48 = scmp.eq.s32.totalorder %s10, 1
    %p49 = scmp.ne.s32.totalorder %s44, %s46
    %p50 = scmp.eq.s32.totalorder %s10, 0
    %p51 = por %p49, %p50
    %p52 = scmp.ne.s32.totalorder %s44, %s46
    %p53 = scmp.eq.s32.totalorder %s15, 1
    %p54 = por %p52, %p53
    %p55 = scmp.ne.s32.totalorder %s46, %s47
    %p56 = scmp.eq.s32.totalorder %s15, 0
    %p57 = por %p55, %p56
    %p58 = scmp.ne.s32.totalorder %s46, %s47
    %p59 = scmp.eq.s32.totalorder %s16, 1
    %p60 = por %p58, %p59
    %p62 = scmp.ne.s32.totalorder %s47, %s61
    %p63 = scmp.eq.s32.totalorder %s16, 0
    %p64 = por %p62, %p63
    %s66 = sadd.s32 %s65, 1
    %p69 = scmp.eq.s32.totalorder %s10, 1
    %p70 = scmp.ne.s32.totalorder %s65, %s67
    %p71 = scmp.eq.s32.totalorder %s10, 0
    %p72 = por %p70, %p71
    %p73 = scmp.ne.s32.totalorder %s65, %s67
    %p74 = scmp.eq.s32.totalorder %s15, 1
    %p75 = por %p73, %p74
    %p76 = scmp.ne.s32.totalorder %s67, %s68
    %p77 = scmp.eq.s32.totalorder %s15, 0
    %p78 = por %p76, %p77
    %p79 = scmp.ne.s32.totalorder %s67, %s68
    %p80 = scmp.eq.s32.totalorder %s16, 1
    %p81 = por %p79, %p80
    %p83 = scmp.ne.s32.totalorder %s68, %s82
    %p84 = scmp.eq.s32.totalorder %s16, 0
    %p85 = por %p83, %p84
    %s86 = ssub.s32 %s10, %s17
    %p87 = scmp.eq.s32.totalorder %s86, 0
    %s89 = sadd.s32 %s88, 1
    %s90 = scalar_select %p87, %s88, %s89
    %p93 = pneg %p87
    %p94 = scmp.eq.s32.totalorder %s10, 1
    %p95 = por %p93, %p94
    %p96 = scmp.ne.s32.totalorder %s88, %s91
    %p97 = scmp.eq.s32.totalorder %s10, 0
    %p98 = por %p96, %p97
    %p99 = scmp.ne.s32.totalorder %s88, %s91
    %p100 = scmp.eq.s32.totalorder %s15, 1
    %p101 = por %p99, %p100
    %p102 = scmp.ne.s32.totalorder %s91, %s92
    %p103 = scmp.eq.s32.totalorder %s15, 0
    %p104 = por %p102, %p103
    %p105 = scmp.ne.s32.totalorder %s91, %s92
    %p106 = scmp.eq.s32.totalorder %s16, 1
    %p107 = por %p105, %p106
    %p109 = scmp.ne.s32.totalorder %s92, %s108
    %p110 = scmp.eq.s32.totalorder %s16, 0
    %p111 = por %p109, %p110
    %s112 = ssub.s32 %s10, %s17
    %p113 = scmp.eq.s32.totalorder %s112, 0
    %s115 = sadd.s32 %s114, 1
    %s116 = scalar_select %p113, %s114, %s115
    %p119 = pneg %p113
    %p120 = scmp.eq.s32.totalorder %s10, 1
    %p121 = por %p119, %p120
    %p122 = scmp.ne.s32.totalorder %s114, %s117
    %p123 = scmp.eq.s32.totalorder %s10, 0
    %p124 = por %p122, %p123
    %p125 = scmp.ne.s32.totalorder %s114, %s117
    %p126 = scmp.eq.s32.totalorder %s15, 1
    %p127 = por %p125, %p126
    %p128 = scmp.ne.s32.totalorder %s117, %s118
    %p129 = scmp.eq.s32.totalorder %s15, 0
    %p130 = por %p128, %p129
    %p131 = scmp.ne.s32.totalorder %s117, %s118
    %p132 = scmp.eq.s32.totalorder %s16, 1
    %p133 = por %p131, %p132
    %p135 = scmp.ne.s32.totalorder %s118, %s134
    %p136 = scmp.eq.s32.totalorder %s16, 0
    %p137 = por %p135, %p136
    %p138 = scmp.le.s32.totalorder 1, %s10
    %p139 = scmp.lt.s32.totalorder %s10, 3
    %p140 = pnand %p138, %p139
    %p141 = pneg %p140
    // Predicated region
    $region9: #{_lambda_.16} parent=5 // pred_check
      _
    $region10: #{_lambda_.16} parent=5 // pred_check_branch
      %143 = sbr.rel (%p140) target = $region12
    $region11: #{_lambda_.16} parent=5 // pred_region
      %s144 = ssub.s32 %s10, 1
      // Predicated region
      $region13: #{_lambda_.16} parent=11 // pred_check
        %p145 = pneg %p57
      $region14: #{_lambda_.16} parent=11 // pred_check_branch
        %147 = sbr.rel (%p145) target = $region16
      $region15: #{_lambda_.16} parent=11 // pred_region
        _
      $region16: #{_lambda_.16} parent=11 // pred_fallthru
        _
      // Predicated region
      $region17: #{_lambda_.16} parent=11 // pred_check
        %p148 = pneg %p78
      $region18: #{_lambda_.16} parent=11 // pred_check_branch
        %150 = sbr.rel (%p148) target = $region20
      $region19: #{_lambda_.16} parent=11 // pred_region
        _
      $region20: #{_lambda_.16} parent=11 // pred_fallthru
        _
    $region12: #{_lambda_.16} parent=5 // pred_fallthru
      _
    %p151 = scmp.lt.s32.totalorder %s10, 2
    // Predicated region
    $region21: #{_lambda_.16} parent=5 // pred_check
      %p152 = pneg %p151
    $region22: #{_lambda_.16} parent=5 // pred_check_branch
      %154 = sbr.rel (%p152) target = $region24
    $region23: #{_lambda_.16} parent=5 // pred_region
      // Predicated region
      $region25: #{_lambda_.16} parent=23 // pred_check
        %p155 = pneg %p30
      $region26: #{_lambda_.16} parent=23 // pred_check_branch
        %157 = sbr.rel (%p155) target = $region28
      $region27: #{_lambda_.16} parent=23 // pred_region
        %s158 = smul.u32 8, %s10
        %p159 = scmp.lt.s32.totalorder %s158, 15
        %s160 = scalar_select %p159, %s158, 15
        %s161 = smul.addr %s160, 2
        %s162 = smul.addr %s161, 4
        %s163 = scalar_lea.vmem %s0, %s162
        %s164 = smul.u32 8, %s10
      $region28: #{_lambda_.16} parent=23 // pred_fallthru
        _
      // Predicated region
      $region29: #{_lambda_.16} parent=23 // pred_check
        %p165 = pneg %p98
      $region30: #{_lambda_.16} parent=23 // pred_check_branch
        %167 = sbr.rel (%p165) target = $region32
      $region31: #{_lambda_.16} parent=23 // pred_region
        %s168 = smul.u32 8, %s10
        %p169 = scmp.lt.s32.totalorder %s168, 15
        %s170 = scalar_select %p169, %s168, 15
        %s171 = smul.addr %s170, 4
        %s172 = scalar_lea.vmem %s3, %s171
        %s173 = smul.u32 8, %s10
      $region32: #{_lambda_.16} parent=23 // pred_fallthru
        _
    $region24: #{_lambda_.16} parent=5 // pred_fallthru
      _
    %p174 = scmp.le.s32.totalorder 1, %s10
    %p175 = scmp.lt.s32.totalorder %s10, 3
    %p176 = pnand %p174, %p175
    %p177 = pneg %p176
    // Predicated region
    $region33: #{_lambda_.16} parent=5 // pred_check
      _
    $region34: #{_lambda_.16} parent=5 // pred_check_branch
      %179 = sbr.rel (%p176) target = $region36
    $region35: #{_lambda_.16} parent=5 // pred_region
      %s180 = ssub.s32 %s10, 1
      %s181 = smul.u32 8, %s15
      %p182 = scmp.lt.s32.totalorder %s181, 15
      %s183 = scalar_select %p182, %s181, 15
      %s184 = smul.addr %s183, 2
      %s185 = smul.addr %s184, 4
      %s186 = scalar_lea.vmem %s0, %s185
      %p187 = pneg %p36
      %p188 = pneg %p33
      %p189 = pneg %p57
      %p190 = pneg %p54
      %p191 = pneg %p78
      %p192 = pneg %p75
      %s193 = smul.u32 8, %s15
      %p194 = scmp.lt.s32.totalorder %s193, 15
      %s195 = scalar_select %p194, %s193, 15
      %s196 = smul.addr %s195, 4
      %s197 = scalar_lea.vmem %s3, %s196
      %p198 = pneg %p104
      %p199 = pneg %p101
      %p200 = pneg %p130
      %p201 = pneg %p127
      %s202 = smul.u32 8, %s15
      %p203 = scmp.lt.s32.totalorder %s202, 15
      %s204 = scalar_select %p203, %s202, 15
      %s205 = smul.addr %s204, 4
      %s206 = scalar_lea.vmem %s4, %s205
      %s207 = smul.u32 8, %s15
      %p208 = scmp.lt.s32.totalorder %s207, 15
      %s209 = scalar_select %p208, %s207, 15
      %s210 = smul.addr %s209, 2
      %s211 = smul.addr %s210, 4
      %s212 = scalar_lea.vmem %s0, %s211
      %s213 = smul.u32 8, %s15
      %s214 = smul.u32 8, %s15
      %p215 = scmp.lt.s32.totalorder %s214, 15
      %s216 = scalar_select %p215, %s214, 15
      %s217 = smul.addr %s216, 4
      %s218 = scalar_lea.vmem %s3, %s217
      %s219 = smul.u32 8, %s15
      %s220 = smul.u32 8, %s15
      %p221 = scmp.lt.s32.totalorder %s220, 15
      %s222 = scalar_select %p221, %s220, 15
      %s223 = smul.addr %s222, 4
      %s224 = scalar_lea.vmem %s4, %s223
      %s225 = smul.u32 8, %s15
      %v226 = vld [vmem:[%s212] sm:$0xff]
      %v227 = vld [vmem:[%s212 + $0x8] sm:$0xff]
      %v228 = vld [vmem:[%s212 + $0x10] sm:$0xff]
      %v229 = vld [vmem:[%s212 + $0x18] sm:$0xff]
      %v230 = vld [vmem:[%s212 + $0x20] sm:$0xff]
      %v231 = vld [vmem:[%s212 + $0x28] sm:$0xff]
      %v232 = vld [vmem:[%s212 + $0x30] sm:$0xff]
      %v233 = vld [vmem:[%s212 + $0x38] sm:$0xff]
      %v234 = vld [vmem:[%s1] sm:$0xf]
      %v235 = vld [vmem:[%s1 + $0x4] sm:$0xf]
      %v236 = vld [vmem:[%s1 + $0x8] sm:$0xf]
      %v237 = vld [vmem:[%s1 + $0xc] sm:$0xf]
      %v238 = vld [vmem:[%s1 + $0x10] sm:$0xf]
      %v239 = vld [vmem:[%s1 + $0x14] sm:$0xf]
      %v240 = vld [vmem:[%s1 + $0x18] sm:$0xf]
      %v241 = vld [vmem:[%s1 + $0x1c] sm:$0xf]
      %v242 = vld [vmem:[%s1 + $0x20] sm:$0xf]
      %v243 = vld [vmem:[%s1 + $0x24] sm:$0xf]
      %v244 = vld [vmem:[%s1 + $0x28] sm:$0xf]
      %v245 = vld [vmem:[%s1 + $0x2c] sm:$0xf]
      %v246 = vld [vmem:[%s1 + $0x30] sm:$0xf]
      %v247 = vld [vmem:[%s1 + $0x34] sm:$0xf]
      %v248 = vld [vmem:[%s1 + $0x38] sm:$0xf]
      %v249 = vld [vmem:[%s1 + $0x3c] sm:$0xf]
      %v250 = vld [vmem:[%s1 + $0x40] sm:$0xf]
      %v251 = vld [vmem:[%s1 + $0x44] sm:$0xf]
      %v252 = vld [vmem:[%s1 + $0x48] sm:$0xf]
      %v253 = vld [vmem:[%s1 + $0x4c] sm:$0xf]
      %v254 = vld [vmem:[%s1 + $0x50] sm:$0xf]
      %v255 = vld [vmem:[%s1 + $0x54] sm:$0xf]
      %v256 = vld [vmem:[%s1 + $0x58] sm:$0xf]
      %v257 = vld [vmem:[%s1 + $0x5c] sm:$0xf]
      %v258 = vld [vmem:[%s1 + $0x60] sm:$0xf]
      %v259 = vld [vmem:[%s1 + $0x64] sm:$0xf]
      %v260 = vld [vmem:[%s1 + $0x68] sm:$0xf]
      %v261 = vld [vmem:[%s1 + $0x6c] sm:$0xf]
      %v262 = vld [vmem:[%s1 + $0x70] sm:$0xf]
      %v263 = vld [vmem:[%s1 + $0x74] sm:$0xf]
      %v264 = vld [vmem:[%s1 + $0x78] sm:$0xf]
      %v265 = vld [vmem:[%s1 + $0x7c] sm:$0xf]
      %v266 = vld [vmem:[%s2] sm:$0x1]
      %v268 = vperm.slane %v266, 0
      %v278 = vunpack.c.l.b16 %v226
      %v279 = vunpack.c.h.b16 %v226
      %v280 = vunpack.c.l.b16 %v227
      %v281 = vunpack.c.h.b16 %v227
      %v282 = vunpack.c.l.b16 %v228
      %v283 = vunpack.c.h.b16 %v228
      %v284 = vunpack.c.l.b16 %v229
      %v285 = vunpack.c.h.b16 %v229
      %v286 = vunpack.c.l.b16 %v230
      %v287 = vunpack.c.h.b16 %v230
      %v288 = vunpack.c.l.b16 %v231
      %v289 = vunpack.c.h.b16 %v231
      %v290 = vunpack.c.l.b16 %v232
      %v291 = vunpack.c.h.b16 %v232
      %v292 = vunpack.c.l.b16 %v233
      %v293 = vunpack.c.h.b16 %v233
      %v294 = vpack.c.b16 %v280, %v278
      %v295 = vpack.c.b16 %v281, %v279
      %v296 = vpack.c.b16 %v284, %v282
      %v297 = vpack.c.b16 %v285, %v283
      %v298 = vpack.c.b16 %v288, %v286
      %v299 = vpack.c.b16 %v289, %v287
      %v300 = vpack.c.b16 %v292, %v290
      %v301 = vpack.c.b16 %v293, %v291
      %v342 = vunpack.c.l.b16 %v234
      %v343 = vunpack.c.l.b16 %v235
      %v344 = vunpack.c.l.b16 %v236
      %v345 = vunpack.c.l.b16 %v237
      %v346 = vunpack.c.l.b16 %v238
      %v347 = vunpack.c.l.b16 %v239
      %v348 = vunpack.c.l.b16 %v240
      %v349 = vunpack.c.l.b16 %v241
      %v350 = vunpack.c.l.b16 %v242
      %v351 = vunpack.c.l.b16 %v243
      %v352 = vunpack.c.l.b16 %v244
      %v353 = vunpack.c.l.b16 %v245
      %v354 = vunpack.c.l.b16 %v246
      %v355 = vunpack.c.l.b16 %v247
      %v356 = vunpack.c.l.b16 %v248
      %v357 = vunpack.c.l.b16 %v249
      %v358 = vunpack.c.l.b16 %v250
      %v359 = vunpack.c.l.b16 %v251
      %v360 = vunpack.c.l.b16 %v252
      %v361 = vunpack.c.l.b16 %v253
      %v362 = vunpack.c.l.b16 %v254
      %v363 = vunpack.c.l.b16 %v255
      %v364 = vunpack.c.l.b16 %v256
      %v365 = vunpack.c.l.b16 %v257
      %v366 = vunpack.c.l.b16 %v258
      %v367 = vunpack.c.l.b16 %v259
      %v368 = vunpack.c.l.b16 %v260
      %v369 = vunpack.c.l.b16 %v261
      %v370 = vunpack.c.l.b16 %v262
      %v371 = vunpack.c.l.b16 %v263
      %v372 = vunpack.c.l.b16 %v264
      %v373 = vunpack.c.l.b16 %v265
      %v374 = vpack.c.b16 %v343, %v342
      %v375 = vpack.c.b16 %v345, %v344
      %v376 = vpack.c.b16 %v347, %v346
      %v377 = vpack.c.b16 %v349, %v348
      %v378 = vpack.c.b16 %v351, %v350
      %v379 = vpack.c.b16 %v353, %v352
      %v380 = vpack.c.b16 %v355, %v354
      %v381 = vpack.c.b16 %v357, %v356
      %v382 = vpack.c.b16 %v359, %v358
      %v383 = vpack.c.b16 %v361, %v360
      %v384 = vpack.c.b16 %v363, %v362
      %v385 = vpack.c.b16 %v365, %v364
      %v386 = vpack.c.b16 %v367, %v366
      %v387 = vpack.c.b16 %v369, %v368
      %v388 = vpack.c.b16 %v371, %v370
      %v389 = vpack.c.b16 %v373, %v372
      %406 = vmatpush.bf16.msra.mxu0 %v381
      %407 = vmatpush.bf16.msra.mxu0 %v380
      %408 = vmatpush.bf16.msra.mxu0 %v379
      %409 = vmatpush.bf16.msra.mxu0 %v378
      %410 = vmatpush.bf16.msra.mxu0 %v377
      %411 = vmatpush.bf16.msra.mxu0 %v376
      %412 = vmatpush.bf16.msra.mxu0 %v375
      %413 = vmatpush.bf16.msra.mxu0 %v374
      %414 = vmatmul.bf16.gmra.mxu0 %v294
      %v415 = vpop.f32.mrf.mxu0
      %v416 = vadd.f32 %v268, %v415
      %v417 = vpop.f32.mrf.mxu0
      %v418 = vadd.f32 %v268, %v417
      %419 = vmatmul.bf16.gmra.mxu0 %v296
      %v420 = vpop.f32.mrf.mxu0
      %v421 = vadd.f32 %v268, %v420
      %v422 = vpop.f32.mrf.mxu0
      %v423 = vadd.f32 %v268, %v422
      %424 = vmatmul.bf16.gmra.mxu0 %v298
      %v425 = vpop.f32.mrf.mxu0
      %v426 = vadd.f32 %v268, %v425
      %v427 = vpop.f32.mrf.mxu0
      %v428 = vadd.f32 %v268, %v427
      %429 = vmatmul.bf16.gmra.mxu0 %v300
      %v430 = vpop.f32.mrf.mxu0
      %v431 = vadd.f32 %v268, %v430
      %v432 = vpop.f32.mrf.mxu0
      %v433 = vadd.f32 %v268, %v432
      %434 = vdwg.mxu0
      %435 = vmatpush.bf16.msra.mxu0 %v389
      %436 = vmatpush.bf16.msra.mxu0 %v388
      %437 = vmatpush.bf16.msra.mxu0 %v387
      %438 = vmatpush.bf16.msra.mxu0 %v386
      %439 = vmatpush.bf16.msra.mxu0 %v385
      %440 = vmatpush.bf16.msra.mxu0 %v384
      %441 = vmatpush.bf16.msra.mxu0 %v383
      %442 = vmatpush.bf16.msra.mxu0 %v382
      %443 = vmatmul.bf16.gmra.mxu0 %v295
      %v444 = vpop.f32.mrf.mxu0
      %v445 = vadd.f32 %v416, %v444
      %v446 = vpop.f32.mrf.mxu0
      %v447 = vadd.f32 %v418, %v446
      %448 = vmatmul.bf16.gmra.mxu0 %v297
      %v449 = vpop.f32.mrf.mxu0
      %v450 = vadd.f32 %v421, %v449
      %v451 = vpop.f32.mrf.mxu0
      %v452 = vadd.f32 %v423, %v451
      %453 = vmatmul.bf16.gmra.mxu0 %v299
      %v454 = vpop.f32.mrf.mxu0
      %v455 = vadd.f32 %v426, %v454
      %v456 = vpop.f32.mrf.mxu0
      %v457 = vadd.f32 %v428, %v456
      %458 = vmatmul.bf16.gmra.mxu0 %v301
      %v459 = vpop.f32.mrf.mxu0
      %v460 = vadd.f32 %v431, %v459
      %v461 = vpop.f32.mrf.mxu0
      %v462 = vadd.f32 %v433, %v461
      %463 = vdwg.mxu0
      %v464 = vld [vmem:[%s218] sm:$0xf]
      %v465 = vld [vmem:[%s218 + $0x4] sm:$0xf]
      %v466 = vld [vmem:[%s218 + $0x8] sm:$0xf]
      %v467 = vld [vmem:[%s218 + $0xc] sm:$0xf]
      %v468 = vld [vmem:[%s218 + $0x10] sm:$0xf]
      %v469 = vld [vmem:[%s218 + $0x14] sm:$0xf]
      %v470 = vld [vmem:[%s218 + $0x18] sm:$0xf]
      %v471 = vld [vmem:[%s218 + $0x1c] sm:$0xf]
      %v472 = vunpack.c.l.bf16 %v464
      %v473 = vunpack.c.l.bf16 %v465
      %v474 = vunpack.c.l.bf16 %v466
      %v475 = vunpack.c.l.bf16 %v467
      %v476 = vunpack.c.l.bf16 %v468
      %v477 = vunpack.c.l.bf16 %v469
      %v478 = vunpack.c.l.bf16 %v470
      %v479 = vunpack.c.l.bf16 %v471
      %v480 = vadd.f32 %v445, %v472
      %v481 = vadd.f32 %v447, %v473
      %v482 = vadd.f32 %v450, %v474
      %v483 = vadd.f32 %v452, %v475
      %v484 = vadd.f32 %v455, %v476
      %v485 = vadd.f32 %v457, %v477
      %v486 = vadd.f32 %v460, %v478
      %v487 = vadd.f32 %v462, %v479
      %v488 = vmax.f32 %v480, 0.0
      %v489 = vmax.f32 %v481, 0.0
      %v490 = vmax.f32 %v482, 0.0
      %v491 = vmax.f32 %v483, 0.0
      %v492 = vmax.f32 %v484, 0.0
      %v493 = vmax.f32 %v485, 0.0
      %v494 = vmax.f32 %v486, 0.0
      %v495 = vmax.f32 %v487, 0.0
      %v496 = vpack.c.bf16 %v488, %v488
      %v497 = vpack.c.bf16 %v489, %v489
      %v498 = vpack.c.bf16 %v490, %v490
      %v499 = vpack.c.bf16 %v491, %v491
      %v500 = vpack.c.bf16 %v492, %v492
      %v501 = vpack.c.bf16 %v493, %v493
      %v502 = vpack.c.bf16 %v494, %v494
      %v503 = vpack.c.bf16 %v495, %v495
      %504 = vst [vmem:[%s224] sm:$0xf] %v496
      %505 = vst [vmem:[%s224 + $0x4] sm:$0xf] %v497
      %506 = vst [vmem:[%s224 + $0x8] sm:$0xf] %v498
      %507 = vst [vmem:[%s224 + $0xc] sm:$0xf] %v499
      %508 = vst [vmem:[%s224 + $0x10] sm:$0xf] %v500
      %509 = vst [vmem:[%s224 + $0x14] sm:$0xf] %v501
      %510 = vst [vmem:[%s224 + $0x18] sm:$0xf] %v502
      %511 = vst [vmem:[%s224 + $0x1c] sm:$0xf] %v503
      %s512 = smul.u32 8, %s15
      %p513 = scmp.lt.s32.totalorder %s512, 15
      %s514 = scalar_select %p513, %s512, 15
      %s515 = smul.addr %s514, 4
      %s516 = scalar_lea.vmem %s4, %s515
      // Predicated region
      $region37: #{_lambda_.16} parent=35 // pred_check
        %p517 = pneg %p127
      $region38: #{_lambda_.16} parent=35 // pred_check_branch
        %519 = sbr.rel (%p517) target = $region40
      $region39: #{_lambda_.16} parent=35 // pred_region
        %s520 = smul.u32 8, %s15
      $region40: #{_lambda_.16} parent=35 // pred_fallthru
        _
    $region36: #{_lambda_.16} parent=5 // pred_fallthru
      _
    %p521 = scmp.le.s32.totalorder 2, %s10
    // Predicated region
    $region41: #{_lambda_.16} parent=5 // pred_check
      %p522 = pneg %p521
    $region42: #{_lambda_.16} parent=5 // pred_check_branch
      %524 = sbr.rel (%p522) target = $region44
    $region43: #{_lambda_.16} parent=5 // pred_region
      %s525 = ssub.s32 %s10, 2
      // Predicated region
      $region45: #{_lambda_.16} parent=43 // pred_check
        %p526 = pneg %p133
      $region46: #{_lambda_.16} parent=43 // pred_check_branch
        %528 = sbr.rel (%p526) target = $region48
      $region47: #{_lambda_.16} parent=43 // pred_region
        %s529 = smul.u32 8, %s16
        %p530 = scmp.lt.s32.totalorder %s529, 15
        %s531 = scalar_select %p530, %s529, 15
        %s532 = smul.addr %s531, 4
        %s533 = scalar_lea.vmem %s4, %s532
      $region48: #{_lambda_.16} parent=43 // pred_fallthru
        _
    $region44: #{_lambda_.16} parent=5 // pred_fallthru
      _
  $region6: #{_lambda_.16} parent=0 // loop_footer
    %s14 = sadd.s32 1, %s10
  $region7: #{_lambda_.16} parent=0 // loop_footer_branch
    %9 = sbr.rel target = $region3
  $region8: #{_lambda_.16} parent=0 // loop_exit
    _

// kernel: _lambda_.19
$region0: #{_lambda_.19}
  #allocation0 [shape = 'u32[]', space=smem, size = 0x4, offset = 0x4, fixed_abs, tag = 'smem constant byte address 0x4 - core index']
  #allocation1 [shape = 'u32[72,128]{1,0:T(1,128)}', space=vmem, size = 0x9000, scoped, tag = 'internal scratch']
  %s0 = inlined_call_operand.vmem [shape: bf16[16,256], index: 0, kind: input, shape index: {}]
  %s1 = inlined_call_operand.vmem [shape: bf16[256,128], index: 1, kind: input, shape index: {}]
  %s2 = inlined_call_operand.vmem [shape: f32[1,128], index: 2, kind: input, shape index: {}]
  %s3 = inlined_call_operand.vmem [shape: bf16[16,128], index: 3, kind: output, shape index: {}]
  %s4 = sld [smem:[#allocation0]]
  $region45: #{_lambda_.19} parent=0
    _
  %s6 = ssub.s32 1, %s4
  %s7 = scalar_select 0, %s6, %s4
  loop: start=0, step=1, limit=4
  $region2: #{_lambda_.19} parent=0 // loop_pre_header
    _
  $region3: #{_lambda_.19} parent=0 // loop_header
    %s9 = sphi 0, %s13
    %p10 = scmp.ge.s32.totalorder %s9, 4
    %s19 = sphi 0, %s21
    %s22 = sphi 0, %s19
    %s23 = sphi 0, %s22
    %s39 = sphi 0, %s23
    %s43 = sphi 0, %s43
    %s45 = sphi 0, %s43
    %s46 = sphi 0, %s45
    %s60 = sphi 0, %s46
    %s64 = sphi 0, %s64
    %s66 = sphi 0, %s64
    %s67 = sphi 0, %s66
    %s81 = sphi 0, %s67
    %s87 = sphi 0, %s89
    %s90 = sphi 0, %s87
    %s91 = sphi 0, %s90
    %s107 = sphi 0, %s91
  $region4: #{_lambda_.19} parent=0 // loop_header_branch
    %12 = sbr.rel (%p10) target = $region8
  $region5: #{_lambda_.19} parent=0 // loop_body
    %s14 = ssub.s32 %s9, 1
    %s15 = ssub.s32 %s9, 2
    %s16 = sadd.s32 %s9, 1
    %s17 = ssub.s32 %s9, %s16
    %p18 = scmp.eq.s32.totalorder %s17, 0
    %s20 = sadd.s32 %s19, 1
    %s21 = scalar_select %p18, %s19, %s20
    %p24 = pneg %p18
    %p25 = scmp.eq.s32.totalorder %s9, 1
    %p26 = por %p24, %p25
    %p27 = scmp.ne.s32.totalorder %s19, %s22
    %p28 = scmp.eq.s32.totalorder %s9, 0
    %p29 = por %p27, %p28
    %p30 = scmp.ne.s32.totalorder %s19, %s22
    %p31 = scmp.eq.s32.totalorder %s14, 1
    %p32 = por %p30, %p31
    %p33 = scmp.ne.s32.totalorder %s22, %s23
    %p34 = scmp.eq.s32.totalorder %s14, 0
    %p35 = por %p33, %p34
    %p36 = scmp.ne.s32.totalorder %s22, %s23
    %p37 = scmp.eq.s32.totalorder %s15, 1
    %p38 = por %p36, %p37
    %p40 = scmp.ne.s32.totalorder %s23, %s39
    %p41 = scmp.eq.s32.totalorder %s15, 0
    %p42 = por %p40, %p41
    %s44 = sadd.s32 %s43, 1
    %p47 = scmp.eq.s32.totalorder %s9, 1
    %p48 = scmp.ne.s32.totalorder %s43, %s45
    %p49 = scmp.eq.s32.totalorder %s9, 0
    %p50 = por %p48, %p49
    %p51 = scmp.ne.s32.totalorder %s43, %s45
    %p52 = scmp.eq.s32.totalorder %s14, 1
    %p53 = por %p51, %p52
    %p54 = scmp.ne.s32.totalorder %s45, %s46
    %p55 = scmp.eq.s32.totalorder %s14, 0
    %p56 = por %p54, %p55
    %p57 = scmp.ne.s32.totalorder %s45, %s46
    %p58 = scmp.eq.s32.totalorder %s15, 1
    %p59 = por %p57, %p58
    %p61 = scmp.ne.s32.totalorder %s46, %s60
    %p62 = scmp.eq.s32.totalorder %s15, 0
    %p63 = por %p61, %p62
    %s65 = sadd.s32 %s64, 1
    %p68 = scmp.eq.s32.totalorder %s9, 1
    %p69 = scmp.ne.s32.totalorder %s64, %s66
    %p70 = scmp.eq.s32.totalorder %s9, 0
    %p71 = por %p69, %p70
    %p72 = scmp.ne.s32.totalorder %s64, %s66
    %p73 = scmp.eq.s32.totalorder %s14, 1
    %p74 = por %p72, %p73
    %p75 = scmp.ne.s32.totalorder %s66, %s67
    %p76 = scmp.eq.s32.totalorder %s14, 0
    %p77 = por %p75, %p76
    %p78 = scmp.ne.s32.totalorder %s66, %s67
    %p79 = scmp.eq.s32.totalorder %s15, 1
    %p80 = por %p78, %p79
    %p82 = scmp.ne.s32.totalorder %s67, %s81
    %p83 = scmp.eq.s32.totalorder %s15, 0
    %p84 = por %p82, %p83
    %s85 = ssub.s32 %s9, %s16
    %p86 = scmp.eq.s32.totalorder %s85, 0
    %s88 = sadd.s32 %s87, 1
    %s89 = scalar_select %p86, %s87, %s88
    %p92 = pneg %p86
    %p93 = scmp.eq.s32.totalorder %s9, 1
    %p94 = por %p92, %p93
    %p95 = scmp.ne.s32.totalorder %s87, %s90
    %p96 = scmp.eq.s32.totalorder %s9, 0
    %p97 = por %p95, %p96
    %p98 = scmp.ne.s32.totalorder %s87, %s90
    %p99 = scmp.eq.s32.totalorder %s14, 1
    %p100 = por %p98, %p99
    %p101 = scmp.ne.s32.totalorder %s90, %s91
    %p102 = scmp.eq.s32.totalorder %s14, 0
    %p103 = por %p101, %p102
    %p104 = scmp.ne.s32.totalorder %s90, %s91
    %p105 = scmp.eq.s32.totalorder %s15, 1
    %p106 = por %p104, %p105
    %p108 = scmp.ne.s32.totalorder %s91, %s107
    %p109 = scmp.eq.s32.totalorder %s15, 0
    %p110 = por %p108, %p109
    %p111 = scmp.le.s32.totalorder 1, %s9
    %p112 = scmp.lt.s32.totalorder %s9, 3
    %p113 = pnand %p111, %p112
    %p114 = pneg %p113
    // Predicated region
    $region9: #{_lambda_.19} parent=5 // pred_check
      _
    $region10: #{_lambda_.19} parent=5 // pred_check_branch
      %116 = sbr.rel (%p113) target = $region12
    $region11: #{_lambda_.19} parent=5 // pred_region
      %s117 = ssub.s32 %s9, 1
      // Predicated region
      $region13: #{_lambda_.19} parent=11 // pred_check
        %p118 = pneg %p56
      $region14: #{_lambda_.19} parent=11 // pred_check_branch
        %120 = sbr.rel (%p118) target = $region16
      $region15: #{_lambda_.19} parent=11 // pred_region
        _
      $region16: #{_lambda_.19} parent=11 // pred_fallthru
        _
      // Predicated region
      $region17: #{_lambda_.19} parent=11 // pred_check
        %p121 = pneg %p77
      $region18: #{_lambda_.19} parent=11 // pred_check_branch
        %123 = sbr.rel (%p121) target = $region20
      $region19: #{_lambda_.19} parent=11 // pred_region
        _
      $region20: #{_lambda_.19} parent=11 // pred_fallthru
        _
    $region12: #{_lambda_.19} parent=5 // pred_fallthru
      _
    %p124 = scmp.lt.s32.totalorder %s9, 2
    // Predicated region
    $region21: #{_lambda_.19} parent=5 // pred_check
      %p125 = pneg %p124
    $region22: #{_lambda_.19} parent=5 // pred_check_branch
      %127 = sbr.rel (%p125) target = $region24
    $region23: #{_lambda_.19} parent=5 // pred_region
      // Predicated region
      $region25: #{_lambda_.19} parent=23 // pred_check
        %p128 = pneg %p29
      $region26: #{_lambda_.19} parent=23 // pred_check_branch
        %130 = sbr.rel (%p128) target = $region28
      $region27: #{_lambda_.19} parent=23 // pred_region
        %p131 = scmp.lt.s32.totalorder %s9, 1
        %s132 = scalar_select %p131, %s9, 1
        %s133 = smul.addr %s132, 2
        %s134 = smul.addr %s133, 4
        %s135 = scalar_lea.vmem %s0, %s134
      $region28: #{_lambda_.19} parent=23 // pred_fallthru
        _
    $region24: #{_lambda_.19} parent=5 // pred_fallthru
      _
    %p136 = scmp.le.s32.totalorder 1, %s9
    %p137 = scmp.lt.s32.totalorder %s9, 3
    %p138 = pnand %p136, %p137
    %p139 = pneg %p138
    // Predicated region
    $region29: #{_lambda_.19} parent=5 // pred_check
      _
    $region30: #{_lambda_.19} parent=5 // pred_check_branch
      %141 = sbr.rel (%p138) target = $region32
    $region31: #{_lambda_.19} parent=5 // pred_region
      %s142 = ssub.s32 %s9, 1
      %p143 = scmp.lt.s32.totalorder %s14, 1
      %s144 = scalar_select %p143, %s14, 1
      %s145 = smul.addr %s144, 2
      %s146 = smul.addr %s145, 4
      %s147 = scalar_lea.vmem %s0, %s146
      %p148 = pneg %p35
      %p149 = pneg %p32
      %p150 = pneg %p56
      %p151 = pneg %p53
      %p152 = pneg %p77
      %p153 = pneg %p74
      %p154 = pneg %p103
      %p155 = pneg %p100
      %p156 = scmp.lt.s32.totalorder %s14, 1
      %s157 = scalar_select %p156, %s14, 1
      %s158 = smul.addr %s157, 4
      %s159 = scalar_lea.vmem %s3, %s158
      %p160 = scmp.lt.s32.totalorder %s14, 1
      %s161 = scalar_select %p160, %s14, 1
      %s162 = smul.addr %s161, 2
      %s163 = smul.addr %s162, 4
      %s164 = scalar_lea.vmem %s0, %s163
      %p165 = scmp.lt.s32.totalorder %s14, 1
      %s166 = scalar_select %p165, %s14, 1
      %s167 = smul.addr %s166, 4
      %s168 = scalar_lea.vmem %s3, %s167
      %v169 = vld [vmem:[%s164] sm:$0xff]
      %v170 = vld [vmem:[%s1] sm:$0xf]
      %v171 = vld [vmem:[%s1 + $0x4] sm:$0xf]
      %v172 = vld [vmem:[%s1 + $0x8] sm:$0xf]
      %v173 = vld [vmem:[%s1 + $0xc] sm:$0xf]
      %v174 = vld [vmem:[%s1 + $0x10] sm:$0xf]
      %v175 = vld [vmem:[%s1 + $0x14] sm:$0xf]
      %v176 = vld [vmem:[%s1 + $0x18] sm:$0xf]
      %v177 = vld [vmem:[%s1 + $0x1c] sm:$0xf]
      %v178 = vld [vmem:[%s1 + $0x20] sm:$0xf]
      %v179 = vld [vmem:[%s1 + $0x24] sm:$0xf]
      %v180 = vld [vmem:[%s1 + $0x28] sm:$0xf]
      %v181 = vld [vmem:[%s1 + $0x2c] sm:$0xf]
      %v182 = vld [vmem:[%s1 + $0x30] sm:$0xf]
      %v183 = vld [vmem:[%s1 + $0x34] sm:$0xf]
      %v184 = vld [vmem:[%s1 + $0x38] sm:$0xf]
      %v185 = vld [vmem:[%s1 + $0x3c] sm:$0xf]
      %v186 = vld [vmem:[%s1 + $0x40] sm:$0xf]
      %v187 = vld [vmem:[%s1 + $0x44] sm:$0xf]
      %v188 = vld [vmem:[%s1 + $0x48] sm:$0xf]
      %v189 = vld [vmem:[%s1 + $0x4c] sm:$0xf]
      %v190 = vld [vmem:[%s1 + $0x50] sm:$0xf]
      %v191 = vld [vmem:[%s1 + $0x54] sm:$0xf]
      %v192 = vld [vmem:[%s1 + $0x58] sm:$0xf]
      %v193 = vld [vmem:[%s1 + $0x5c] sm:$0xf]
      %v194 = vld [vmem:[%s1 + $0x60] sm:$0xf]
      %v195 = vld [vmem:[%s1 + $0x64] sm:$0xf]
      %v196 = vld [vmem:[%s1 + $0x68] sm:$0xf]
      %v197 = vld [vmem:[%s1 + $0x6c] sm:$0xf]
      %v198 = vld [vmem:[%s1 + $0x70] sm:$0xf]
      %v199 = vld [vmem:[%s1 + $0x74] sm:$0xf]
      %v200 = vld [vmem:[%s1 + $0x78] sm:$0xf]
      %v201 = vld [vmem:[%s1 + $0x7c] sm:$0xf]
      %v202 = vld [vmem:[%s2] sm:$0x1]
      %v204 = vperm.slane %v202, 0
      %v207 = vunpack.c.l.b16 %v169
      %v208 = vunpack.c.h.b16 %v169
      %v209 = vpack.c.b16 %v207, %v207
      %v210 = vpack.c.b16 %v208, %v208
      %v245 = vunpack.c.l.b16 %v170
      %v246 = vunpack.c.l.b16 %v171
      %v247 = vunpack.c.l.b16 %v172
      %v248 = vunpack.c.l.b16 %v173
      %v249 = vunpack.c.l.b16 %v174
      %v250 = vunpack.c.l.b16 %v175
      %v251 = vunpack.c.l.b16 %v176
      %v252 = vunpack.c.l.b16 %v177
      %v253 = vunpack.c.l.b16 %v178
      %v254 = vunpack.c.l.b16 %v179
      %v255 = vunpack.c.l.b16 %v180
      %v256 = vunpack.c.l.b16 %v181
      %v257 = vunpack.c.l.b16 %v182
      %v258 = vunpack.c.l.b16 %v183
      %v259 = vunpack.c.l.b16 %v184
      %v260 = vunpack.c.l.b16 %v185
      %v261 = vunpack.c.l.b16 %v186
      %v262 = vunpack.c.l.b16 %v187
      %v263 = vunpack.c.l.b16 %v188
      %v264 = vunpack.c.l.b16 %v189
      %v265 = vunpack.c.l.b16 %v190
      %v266 = vunpack.c.l.b16 %v191
      %v267 = vunpack.c.l.b16 %v192
      %v268 = vunpack.c.l.b16 %v193
      %v269 = vunpack.c.l.b16 %v194
      %v270 = vunpack.c.l.b16 %v195
      %v271 = vunpack.c.l.b16 %v196
      %v272 = vunpack.c.l.b16 %v197
      %v273 = vunpack.c.l.b16 %v198
      %v274 = vunpack.c.l.b16 %v199
      %v275 = vunpack.c.l.b16 %v200
      %v276 = vunpack.c.l.b16 %v201
      %v277 = vpack.c.b16 %v246, %v245
      %v278 = vpack.c.b16 %v248, %v247
      %v279 = vpack.c.b16 %v250, %v249
      %v280 = vpack.c.b16 %v252, %v251
      %v281 = vpack.c.b16 %v254, %v253
      %v282 = vpack.c.b16 %v256, %v255
      %v283 = vpack.c.b16 %v258, %v257
      %v284 = vpack.c.b16 %v260, %v259
      %v285 = vpack.c.b16 %v262, %v261
      %v286 = vpack.c.b16 %v264, %v263
      %v287 = vpack.c.b16 %v266, %v265
      %v288 = vpack.c.b16 %v268, %v267
      %v289 = vpack.c.b16 %v270, %v269
      %v290 = vpack.c.b16 %v272, %v271
      %v291 = vpack.c.b16 %v274, %v273
      %v292 = vpack.c.b16 %v276, %v275
      %309 = vmatpush.bf16.msra.mxu0 %v284
      %310 = vmatpush.bf16.msra.mxu0 %v283
      %311 = vmatpush.bf16.msra.mxu0 %v282
      %312 = vmatpush.bf16.msra.mxu0 %v281
      %313 = vmatpush.bf16.msra.mxu0 %v280
      %314 = vmatpush.bf16.msra.mxu0 %v279
      %315 = vmatpush.bf16.msra.mxu0 %v278
      %316 = vmatpush.bf16.msra.mxu0 %v277
      %317 = vmatmul.bf16.gmra.mxu0 %v209
      %v318 = vpop.f32.mrf.mxu0
      %v319 = vadd.f32 %v204, %v318
      %v320 = vpop.f32.mrf.mxu0
      %321 = vdwg.mxu0
      %322 = vmatpush.bf16.msra.mxu0 %v292
      %323 = vmatpush.bf16.msra.mxu0 %v291
      %324 = vmatpush.bf16.msra.mxu0 %v290
      %325 = vmatpush.bf16.msra.mxu0 %v289
      %326 = vmatpush.bf16.msra.mxu0 %v288
      %327 = vmatpush.bf16.msra.mxu0 %v287
      %328 = vmatpush.bf16.msra.mxu0 %v286
      %329 = vmatpush.bf16.msra.mxu0 %v285
      %330 = vmatmul.bf16.gmra.mxu0 %v210
      %v331 = vpop.f32.mrf.mxu0
      %v332 = vadd.f32 %v319, %v331
      %v333 = vpop.f32.mrf.mxu0
      %334 = vdwg.mxu0
      %v335 = vmax.f32 %v332, 0.0
      %v336 = vpack.c.bf16 %v335, %v335
      %337 = vst [vmem:[%s168] sm:$0xf] %v336
      %p338 = scmp.lt.s32.totalorder %s14, 1
      %s339 = scalar_select %p338, %s14, 1
      %s340 = smul.addr %s339, 4
      %s341 = scalar_lea.vmem %s3, %s340
      // Predicated region
      $region33: #{_lambda_.19} parent=31 // pred_check
        %p342 = pneg %p100
      $region34: #{_lambda_.19} parent=31 // pred_check_branch
        %344 = sbr.rel (%p342) target = $region36
      $region35: #{_lambda_.19} parent=31 // pred_region
        _
      $region36: #{_lambda_.19} parent=31 // pred_fallthru
        _
    $region32: #{_lambda_.19} parent=5 // pred_fallthru
      _
    %p345 = scmp.le.s32.totalorder 2, %s9
    // Predicated region
    $region37: #{_lambda_.19} parent=5 // pred_check
      %p346 = pneg %p345
    $region38: #{_lambda_.19} parent=5 // pred_check_branch
      %348 = sbr.rel (%p346) target = $region40
    $region39: #{_lambda_.19} parent=5 // pred_region
      %s349 = ssub.s32 %s9, 2
      // Predicated region
      $region41: #{_lambda_.19} parent=39 // pred_check
        %p350 = pneg %p106
      $region42: #{_lambda_.19} parent=39 // pred_check_branch
        %352 = sbr.rel (%p350) target = $region44
      $region43: #{_lambda_.19} parent=39 // pred_region
        %p353 = scmp.lt.s32.totalorder %s15, 1
        %s354 = scalar_select %p353, %s15, 1
        %s355 = smul.addr %s354, 4
        %s356 = scalar_lea.vmem %s3, %s355
      $region44: #{_lambda_.19} parent=39 // pred_fallthru
        _
    $region40: #{_lambda_.19} parent=5 // pred_fallthru
      _
  $region6: #{_lambda_.19} parent=0 // loop_footer
    %s13 = sadd.s32 1, %s9
  $region7: #{_lambda_.19} parent=0 // loop_footer_branch
    %8 = sbr.rel target = $region3
  $region8: #{_lambda_.19} parent=0 // loop_exit
    _

// kernel: _lambda_.20
$region0: #{_lambda_.20}
  #allocation0 [shape = 'u32[]', space=smem, size = 0x4, offset = 0x4, fixed_abs, tag = 'smem constant byte address 0x4 - core index']
  #allocation1 [shape = 'u32[72,128]{1,0:T(1,128)}', space=vmem, size = 0x9000, scoped, tag = 'internal scratch']
  %s0 = inlined_call_operand.vmem [shape: bf16[16,512], index: 0, kind: input, shape index: {}]
  %s1 = inlined_call_operand.vmem [shape: bf16[512,128], index: 1, kind: input, shape index: {}]
  %s2 = inlined_call_operand.vmem [shape: f32[1,128], index: 2, kind: input, shape index: {}]
  %s3 = inlined_call_operand.vmem [shape: bf16[16,128], index: 3, kind: output, shape index: {}]
  %s4 = sld [smem:[#allocation0]]
  $region45: #{_lambda_.20} parent=0
    _
  %s6 = ssub.s32 1, %s4
  %s7 = scalar_select 0, %s6, %s4
  loop: start=0, step=1, limit=4
  $region2: #{_lambda_.20} parent=0 // loop_pre_header
    _
  $region3: #{_lambda_.20} parent=0 // loop_header
    %s9 = sphi 0, %s13
    %p10 = scmp.ge.s32.totalorder %s9, 4
    %s19 = sphi 0, %s21
    %s22 = sphi 0, %s19
    %s23 = sphi 0, %s22
    %s39 = sphi 0, %s23
    %s43 = sphi 0, %s43
    %s45 = sphi 0, %s43
    %s46 = sphi 0, %s45
    %s60 = sphi 0, %s46
    %s64 = sphi 0, %s64
    %s66 = sphi 0, %s64
    %s67 = sphi 0, %s66
    %s81 = sphi 0, %s67
    %s87 = sphi 0, %s89
    %s90 = sphi 0, %s87
    %s91 = sphi 0, %s90
    %s107 = sphi 0, %s91
  $region4: #{_lambda_.20} parent=0 // loop_header_branch
    %12 = sbr.rel (%p10) target = $region8
  $region5: #{_lambda_.20} parent=0 // loop_body
    %s14 = ssub.s32 %s9, 1
    %s15 = ssub.s32 %s9, 2
    %s16 = sadd.s32 %s9, 1
    %s17 = ssub.s32 %s9, %s16
    %p18 = scmp.eq.s32.totalorder %s17, 0
    %s20 = sadd.s32 %s19, 1
    %s21 = scalar_select %p18, %s19, %s20
    %p24 = pneg %p18
    %p25 = scmp.eq.s32.totalorder %s9, 1
    %p26 = por %p24, %p25
    %p27 = scmp.ne.s32.totalorder %s19, %s22
    %p28 = scmp.eq.s32.totalorder %s9, 0
    %p29 = por %p27, %p28
    %p30 = scmp.ne.s32.totalorder %s19, %s22
    %p31 = scmp.eq.s32.totalorder %s14, 1
    %p32 = por %p30, %p31
    %p33 = scmp.ne.s32.totalorder %s22, %s23
    %p34 = scmp.eq.s32.totalorder %s14, 0
    %p35 = por %p33, %p34
    %p36 = scmp.ne.s32.totalorder %s22, %s23
    %p37 = scmp.eq.s32.totalorder %s15, 1
    %p38 = por %p36, %p37
    %p40 = scmp.ne.s32.totalorder %s23, %s39
    %p41 = scmp.eq.s32.totalorder %s15, 0
    %p42 = por %p40, %p41
    %s44 = sadd.s32 %s43, 1
    %p47 = scmp.eq.s32.totalorder %s9, 1
    %p48 = scmp.ne.s32.totalorder %s43, %s45
    %p49 = scmp.eq.s32.totalorder %s9, 0
    %p50 = por %p48, %p49
    %p51 = scmp.ne.s32.totalorder %s43, %s45
    %p52 = scmp.eq.s32.totalorder %s14, 1
    %p53 = por %p51, %p52
    %p54 = scmp.ne.s32.totalorder %s45, %s46
    %p55 = scmp.eq.s32.totalorder %s14, 0
    %p56 = por %p54, %p55
    %p57 = scmp.ne.s32.totalorder %s45, %s46
    %p58 = scmp.eq.s32.totalorder %s15, 1
    %p59 = por %p57, %p58
    %p61 = scmp.ne.s32.totalorder %s46, %s60
    %p62 = scmp.eq.s32.totalorder %s15, 0
    %p63 = por %p61, %p62
    %s65 = sadd.s32 %s64, 1
    %p68 = scmp.eq.s32.totalorder %s9, 1
    %p69 = scmp.ne.s32.totalorder %s64, %s66
    %p70 = scmp.eq.s32.totalorder %s9, 0
    %p71 = por %p69, %p70
    %p72 = scmp.ne.s32.totalorder %s64, %s66
    %p73 = scmp.eq.s32.totalorder %s14, 1
    %p74 = por %p72, %p73
    %p75 = scmp.ne.s32.totalorder %s66, %s67
    %p76 = scmp.eq.s32.totalorder %s14, 0
    %p77 = por %p75, %p76
    %p78 = scmp.ne.s32.totalorder %s66, %s67
    %p79 = scmp.eq.s32.totalorder %s15, 1
    %p80 = por %p78, %p79
    %p82 = scmp.ne.s32.totalorder %s67, %s81
    %p83 = scmp.eq.s32.totalorder %s15, 0
    %p84 = por %p82, %p83
    %s85 = ssub.s32 %s9, %s16
    %p86 = scmp.eq.s32.totalorder %s85, 0
    %s88 = sadd.s32 %s87, 1
    %s89 = scalar_select %p86, %s87, %s88
    %p92 = pneg %p86
    %p93 = scmp.eq.s32.totalorder %s9, 1
    %p94 = por %p92, %p93
    %p95 = scmp.ne.s32.totalorder %s87, %s90
    %p96 = scmp.eq.s32.totalorder %s9, 0
    %p97 = por %p95, %p96
    %p98 = scmp.ne.s32.totalorder %s87, %s90
    %p99 = scmp.eq.s32.totalorder %s14, 1
    %p100 = por %p98, %p99
    %p101 = scmp.ne.s32.totalorder %s90, %s91
    %p102 = scmp.eq.s32.totalorder %s14, 0
    %p103 = por %p101, %p102
    %p104 = scmp.ne.s32.totalorder %s90, %s91
    %p105 = scmp.eq.s32.totalorder %s15, 1
    %p106 = por %p104, %p105
    %p108 = scmp.ne.s32.totalorder %s91, %s107
    %p109 = scmp.eq.s32.totalorder %s15, 0
    %p110 = por %p108, %p109
    %p111 = scmp.le.s32.totalorder 1, %s9
    %p112 = scmp.lt.s32.totalorder %s9, 3
    %p113 = pnand %p111, %p112
    %p114 = pneg %p113
    // Predicated region
    $region9: #{_lambda_.20} parent=5 // pred_check
      _
    $region10: #{_lambda_.20} parent=5 // pred_check_branch
      %116 = sbr.rel (%p113) target = $region12
    $region11: #{_lambda_.20} parent=5 // pred_region
      %s117 = ssub.s32 %s9, 1
      // Predicated region
      $region13: #{_lambda_.20} parent=11 // pred_check
        %p118 = pneg %p56
      $region14: #{_lambda_.20} parent=11 // pred_check_branch
        %120 = sbr.rel (%p118) target = $region16
      $region15: #{_lambda_.20} parent=11 // pred_region
        _
      $region16: #{_lambda_.20} parent=11 // pred_fallthru
        _
      // Predicated region
      $region17: #{_lambda_.20} parent=11 // pred_check
        %p121 = pneg %p77
      $region18: #{_lambda_.20} parent=11 // pred_check_branch
        %123 = sbr.rel (%p121) target = $region20
      $region19: #{_lambda_.20} parent=11 // pred_region
        _
      $region20: #{_lambda_.20} parent=11 // pred_fallthru
        _
    $region12: #{_lambda_.20} parent=5 // pred_fallthru
      _
    %p124 = scmp.lt.s32.totalorder %s9, 2
    // Predicated region
    $region21: #{_lambda_.20} parent=5 // pred_check
      %p125 = pneg %p124
    $region22: #{_lambda_.20} parent=5 // pred_check_branch
      %127 = sbr.rel (%p125) target = $region24
    $region23: #{_lambda_.20} parent=5 // pred_region
      // Predicated region
      $region25: #{_lambda_.20} parent=23 // pred_check
        %p128 = pneg %p29
      $region26: #{_lambda_.20} parent=23 // pred_check_branch
        %130 = sbr.rel (%p128) target = $region28
      $region27: #{_lambda_.20} parent=23 // pred_region
        %p131 = scmp.lt.s32.totalorder %s9, 1
        %s132 = scalar_select %p131, %s9, 1
        %s133 = smul.addr %s132, 4
        %s134 = smul.addr %s133, 4
        %s135 = scalar_lea.vmem %s0, %s134
      $region28: #{_lambda_.20} parent=23 // pred_fallthru
        _
    $region24: #{_lambda_.20} parent=5 // pred_fallthru
      _
    %p136 = scmp.le.s32.totalorder 1, %s9
    %p137 = scmp.lt.s32.totalorder %s9, 3
    %p138 = pnand %p136, %p137
    %p139 = pneg %p138
    // Predicated region
    $region29: #{_lambda_.20} parent=5 // pred_check
      _
    $region30: #{_lambda_.20} parent=5 // pred_check_branch
      %141 = sbr.rel (%p138) target = $region32
    $region31: #{_lambda_.20} parent=5 // pred_region
      %s142 = ssub.s32 %s9, 1
      %p143 = scmp.lt.s32.totalorder %s14, 1
      %s144 = scalar_select %p143, %s14, 1
      %s145 = smul.addr %s144, 4
      %s146 = smul.addr %s145, 4
      %s147 = scalar_lea.vmem %s0, %s146
      %p148 = pneg %p35
      %p149 = pneg %p32
      %p150 = pneg %p56
      %p151 = pneg %p53
      %p152 = pneg %p77
      %p153 = pneg %p74
      %p154 = pneg %p103
      %p155 = pneg %p100
      %p156 = scmp.lt.s32.totalorder %s14, 1
      %s157 = scalar_select %p156, %s14, 1
      %s158 = smul.addr %s157, 4
      %s159 = scalar_lea.vmem %s3, %s158
      %p160 = scmp.lt.s32.totalorder %s14, 1
      %s161 = scalar_select %p160, %s14, 1
      %s162 = smul.addr %s161, 4
      %s163 = smul.addr %s162, 4
      %s164 = scalar_lea.vmem %s0, %s163
      %p165 = scmp.lt.s32.totalorder %s14, 1
      %s166 = scalar_select %p165, %s14, 1
      %s167 = smul.addr %s166, 4
      %s168 = scalar_lea.vmem %s3, %s167
      %v169 = vld [vmem:[%s164] sm:$0xff]
      %v170 = vld [vmem:[%s164 + $0x8] sm:$0xff]
      %v171 = vld [vmem:[%s1] sm:$0xf]
      %v172 = vld [vmem:[%s1 + $0x4] sm:$0xf]
      %v173 = vld [vmem:[%s1 + $0x8] sm:$0xf]
      %v174 = vld [vmem:[%s1 + $0xc] sm:$0xf]
      %v175 = vld [vmem:[%s1 + $0x10] sm:$0xf]
      %v176 = vld [vmem:[%s1 + $0x14] sm:$0xf]
      %v177 = vld [vmem:[%s1 + $0x18] sm:$0xf]
      %v178 = vld [vmem:[%s1 + $0x1c] sm:$0xf]
      %v179 = vld [vmem:[%s1 + $0x20] sm:$0xf]
      %v180 = vld [vmem:[%s1 + $0x24] sm:$0xf]
      %v181 = vld [vmem:[%s1 + $0x28] sm:$0xf]
      %v182 = vld [vmem:[%s1 + $0x2c] sm:$0xf]
      %v183 = vld [vmem:[%s1 + $0x30] sm:$0xf]
      %v184 = vld [vmem:[%s1 + $0x34] sm:$0xf]
      %v185 = vld [vmem:[%s1 + $0x38] sm:$0xf]
      %v186 = vld [vmem:[%s1 + $0x3c] sm:$0xf]
      %v187 = vld [vmem:[%s1 + $0x40] sm:$0xf]
      %v188 = vld [vmem:[%s1 + $0x44] sm:$0xf]
      %v189 = vld [vmem:[%s1 + $0x48] sm:$0xf]
      %v190 = vld [vmem:[%s1 + $0x4c] sm:$0xf]
      %v191 = vld [vmem:[%s1 + $0x50] sm:$0xf]
      %v192 = vld [vmem:[%s1 + $0x54] sm:$0xf]
      %v193 = vld [vmem:[%s1 + $0x58] sm:$0xf]
      %v194 = vld [vmem:[%s1 + $0x5c] sm:$0xf]
      %v195 = vld [vmem:[%s1 + $0x60] sm:$0xf]
      %v196 = vld [vmem:[%s1 + $0x64] sm:$0xf]
      %v197 = vld [vmem:[%s1 + $0x68] sm:$0xf]
      %v198 = vld [vmem:[%s1 + $0x6c] sm:$0xf]
      %v199 = vld [vmem:[%s1 + $0x70] sm:$0xf]
      %v200 = vld [vmem:[%s1 + $0x74] sm:$0xf]
      %v201 = vld [vmem:[%s1 + $0x78] sm:$0xf]
      %v202 = vld [vmem:[%s1 + $0x7c] sm:$0xf]
      %v203 = vld [vmem:[%s1 + $0x80] sm:$0xf]
      %v204 = vld [vmem:[%s1 + $0x84] sm:$0xf]
      %v205 = vld [vmem:[%s1 + $0x88] sm:$0xf]
      %v206 = vld [vmem:[%s1 + $0x8c] sm:$0xf]
      %v207 = vld [vmem:[%s1 + $0x90] sm:$0xf]
      %v208 = vld [vmem:[%s1 + $0x94] sm:$0xf]
      %v209 = vld [vmem:[%s1 + $0x98] sm:$0xf]
      %v210 = vld [vmem:[%s1 + $0x9c] sm:$0xf]
      %v211 = vld [vmem:[%s1 + $0xa0] sm:$0xf]
      %v212 = vld [vmem:[%s1 + $0xa4] sm:$0xf]
      %v213 = vld [vmem:[%s1 + $0xa8] sm:$0xf]
      %v214 = vld [vmem:[%s1 + $0xac] sm:$0xf]
      %v215 = vld [vmem:[%s1 + $0xb0] sm:$0xf]
      %v216 = vld [vmem:[%s1 + $0xb4] sm:$0xf]
      %v217 = vld [vmem:[%s1 + $0xb8] sm:$0xf]
      %v218 = vld [vmem:[%s1 + $0xbc] sm:$0xf]
      %v219 = vld [vmem:[%s1 + $0xc0] sm:$0xf]
      %v220 = vld [vmem:[%s1 + $0xc4] sm:$0xf]
      %v221 = vld [vmem:[%s1 + $0xc8] sm:$0xf]
      %v222 = vld [vmem:[%s1 + $0xcc] sm:$0xf]
      %v223 = vld [vmem:[%s1 + $0xd0] sm:$0xf]
      %v224 = vld [vmem:[%s1 + $0xd4] sm:$0xf]
      %v225 = vld [vmem:[%s1 + $0xd8] sm:$0xf]
      %v226 = vld [vmem:[%s1 + $0xdc] sm:$0xf]
      %v227 = vld [vmem:[%s1 + $0xe0] sm:$0xf]
      %v228 = vld [vmem:[%s1 + $0xe4] sm:$0xf]
      %v229 = vld [vmem:[%s1 + $0xe8] sm:$0xf]
      %v230 = vld [vmem:[%s1 + $0xec] sm:$0xf]
      %v231 = vld [vmem:[%s1 + $0xf0] sm:$0xf]
      %v232 = vld [vmem:[%s1 + $0xf4] sm:$0xf]
      %v233 = vld [vmem:[%s1 + $0xf8] sm:$0xf]
      %v234 = vld [vmem:[%s1 + $0xfc] sm:$0xf]
      %v235 = vld [vmem:[%s2] sm:$0x1]
      %v237 = vperm.slane %v235, 0
      %v241 = vunpack.c.l.b16 %v169
      %v242 = vunpack.c.h.b16 %v169
      %v243 = vunpack.c.l.b16 %v170
      %v244 = vunpack.c.h.b16 %v170
      %v245 = vpack.c.b16 %v241, %v241
      %v246 = vpack.c.b16 %v242, %v242
      %v247 = vpack.c.b16 %v243, %v243
      %v248 = vpack.c.b16 %v244, %v244
      %v317 = vunpack.c.l.b16 %v171
      %v318 = vunpack.c.l.b16 %v172
      %v319 = vunpack.c.l.b16 %v173
      %v320 = vunpack.c.l.b16 %v174
      %v321 = vunpack.c.l.b16 %v175
      %v322 = vunpack.c.l.b16 %v176
      %v323 = vunpack.c.l.b16 %v177
      %v324 = vunpack.c.l.b16 %v178
      %v325 = vunpack.c.l.b16 %v179
      %v326 = vunpack.c.l.b16 %v180
      %v327 = vunpack.c.l.b16 %v181
      %v328 = vunpack.c.l.b16 %v182
      %v329 = vunpack.c.l.b16 %v183
      %v330 = vunpack.c.l.b16 %v184
      %v331 = vunpack.c.l.b16 %v185
      %v332 = vunpack.c.l.b16 %v186
      %v333 = vunpack.c.l.b16 %v187
      %v334 = vunpack.c.l.b16 %v188
      %v335 = vunpack.c.l.b16 %v189
      %v336 = vunpack.c.l.b16 %v190
      %v337 = vunpack.c.l.b16 %v191
      %v338 = vunpack.c.l.b16 %v192
      %v339 = vunpack.c.l.b16 %v193
      %v340 = vunpack.c.l.b16 %v194
      %v341 = vunpack.c.l.b16 %v195
      %v342 = vunpack.c.l.b16 %v196
      %v343 = vunpack.c.l.b16 %v197
      %v344 = vunpack.c.l.b16 %v198
      %v345 = vunpack.c.l.b16 %v199
      %v346 = vunpack.c.l.b16 %v200
      %v347 = vunpack.c.l.b16 %v201
      %v348 = vunpack.c.l.b16 %v202
      %v349 = vunpack.c.l.b16 %v203
      %v350 = vunpack.c.l.b16 %v204
      %v351 = vunpack.c.l.b16 %v205
      %v352 = vunpack.c.l.b16 %v206
      %v353 = vunpack.c.l.b16 %v207
      %v354 = vunpack.c.l.b16 %v208
      %v355 = vunpack.c.l.b16 %v209
      %v356 = vunpack.c.l.b16 %v210
      %v357 = vunpack.c.l.b16 %v211
      %v358 = vunpack.c.l.b16 %v212
      %v359 = vunpack.c.l.b16 %v213
      %v360 = vunpack.c.l.b16 %v214
      %v361 = vunpack.c.l.b16 %v215
      %v362 = vunpack.c.l.b16 %v216
      %v363 = vunpack.c.l.b16 %v217
      %v364 = vunpack.c.l.b16 %v218
      %v365 = vunpack.c.l.b16 %v219
      %v366 = vunpack.c.l.b16 %v220
      %v367 = vunpack.c.l.b16 %v221
      %v368 = vunpack.c.l.b16 %v222
      %v369 = vunpack.c.l.b16 %v223
      %v370 = vunpack.c.l.b16 %v224
      %v371 = vunpack.c.l.b16 %v225
      %v372 = vunpack.c.l.b16 %v226
      %v373 = vunpack.c.l.b16 %v227
      %v374 = vunpack.c.l.b16 %v228
      %v375 = vunpack.c.l.b16 %v229
      %v376 = vunpack.c.l.b16 %v230
      %v377 = vunpack.c.l.b16 %v231
      %v378 = vunpack.c.l.b16 %v232
      %v379 = vunpack.c.l.b16 %v233
      %v380 = vunpack.c.l.b16 %v234
      %v381 = vpack.c.b16 %v318, %v317
      %v382 = vpack.c.b16 %v320, %v319
      %v383 = vpack.c.b16 %v322, %v321
      %v384 = vpack.c.b16 %v324, %v323
      %v385 = vpack.c.b16 %v326, %v325
      %v386 = vpack.c.b16 %v328, %v327
      %v387 = vpack.c.b16 %v330, %v329
      %v388 = vpack.c.b16 %v332, %v331
      %v389 = vpack.c.b16 %v334, %v333
      %v390 = vpack.c.b16 %v336, %v335
      %v391 = vpack.c.b16 %v338, %v337
      %v392 = vpack.c.b16 %v340, %v339
      %v393 = vpack.c.b16 %v342, %v341
      %v394 = vpack.c.b16 %v344, %v343
      %v395 = vpack.c.b16 %v346, %v345
      %v396 = vpack.c.b16 %v348, %v347
      %v397 = vpack.c.b16 %v350, %v349
      %v398 = vpack.c.b16 %v352, %v351
      %v399 = vpack.c.b16 %v354, %v353
      %v400 = vpack.c.b16 %v356, %v355
      %v401 = vpack.c.b16 %v358, %v357
      %v402 = vpack.c.b16 %v360, %v359
      %v403 = vpack.c.b16 %v362, %v361
      %v404 = vpack.c.b16 %v364, %v363
      %v405 = vpack.c.b16 %v366, %v365
      %v406 = vpack.c.b16 %v368, %v367
      %v407 = vpack.c.b16 %v370, %v369
      %v408 = vpack.c.b16 %v372, %v371
      %v409 = vpack.c.b16 %v374, %v373
      %v410 = vpack.c.b16 %v376, %v375
      %v411 = vpack.c.b16 %v378, %v377
      %v412 = vpack.c.b16 %v380, %v379
      %445 = vmatpush.bf16.msra.mxu0 %v388
      %446 = vmatpush.bf16.msra.mxu0 %v387
      %447 = vmatpush.bf16.msra.mxu0 %v386
      %448 = vmatpush.bf16.msra.mxu0 %v385
      %449 = vmatpush.bf16.msra.mxu0 %v384
      %450 = vmatpush.bf16.msra.mxu0 %v383
      %451 = vmatpush.bf16.msra.mxu0 %v382
      %452 = vmatpush.bf16.msra.mxu0 %v381
      %453 = vmatmul.bf16.gmra.mxu0 %v245
      %v454 = vpop.f32.mrf.mxu0
      %v455 = vadd.f32 %v237, %v454
      %v456 = vpop.f32.mrf.mxu0
      %457 = vdwg.mxu0
      %458 = vmatpush.bf16.msra.mxu0 %v396
      %459 = vmatpush.bf16.msra.mxu0 %v395
      %460 = vmatpush.bf16.msra.mxu0 %v394
      %461 = vmatpush.bf16.msra.mxu0 %v393
      %462 = vmatpush.bf16.msra.mxu0 %v392
      %463 = vmatpush.bf16.msra.mxu0 %v391
      %464 = vmatpush.bf16.msra.mxu0 %v390
      %465 = vmatpush.bf16.msra.mxu0 %v389
      %466 = vmatmul.bf16.gmra.mxu0 %v246
      %v467 = vpop.f32.mrf.mxu0
      %v468 = vadd.f32 %v455, %v467
      %v469 = vpop.f32.mrf.mxu0
      %470 = vdwg.mxu0
      %471 = vmatpush.bf16.msra.mxu0 %v404
      %472 = vmatpush.bf16.msra.mxu0 %v403
      %473 = vmatpush.bf16.msra.mxu0 %v402
      %474 = vmatpush.bf16.msra.mxu0 %v401
      %475 = vmatpush.bf16.msra.mxu0 %v400
      %476 = vmatpush.bf16.msra.mxu0 %v399
      %477 = vmatpush.bf16.msra.mxu0 %v398
      %478 = vmatpush.bf16.msra.mxu0 %v397
      %479 = vmatmul.bf16.gmra.mxu0 %v247
      %v480 = vpop.f32.mrf.mxu0
      %v481 = vadd.f32 %v468, %v480
      %v482 = vpop.f32.mrf.mxu0
      %483 = vdwg.mxu0
      %484 = vmatpush.bf16.msra.mxu0 %v412
      %485 = vmatpush.bf16.msra.mxu0 %v411
      %486 = vmatpush.bf16.msra.mxu0 %v410
      %487 = vmatpush.bf16.msra.mxu0 %v409
      %488 = vmatpush.bf16.msra.mxu0 %v408
      %489 = vmatpush.bf16.msra.mxu0 %v407
      %490 = vmatpush.bf16.msra.mxu0 %v406
      %491 = vmatpush.bf16.msra.mxu0 %v405
      %492 = vmatmul.bf16.gmra.mxu0 %v248
      %v493 = vpop.f32.mrf.mxu0
      %v494 = vadd.f32 %v481, %v493
      %v495 = vpop.f32.mrf.mxu0
      %496 = vdwg.mxu0
      %v497 = vmax.f32 %v494, 0.0
      %v498 = vpack.c.bf16 %v497, %v497
      %499 = vst [vmem:[%s168] sm:$0xf] %v498
      %p500 = scmp.lt.s32.totalorder %s14, 1
      %s501 = scalar_select %p500, %s14, 1
      %s502 = smul.addr %s501, 4
      %s503 = scalar_lea.vmem %s3, %s502
      // Predicated region
      $region33: #{_lambda_.20} parent=31 // pred_check
        %p504 = pneg %p100
      $region34: #{_lambda_.20} parent=31 // pred_check_branch
        %506 = sbr.rel (%p504) target = $region36
      $region35: #{_lambda_.20} parent=31 // pred_region
        _
      $region36: #{_lambda_.20} parent=31 // pred_fallthru
        _
    $region32: #{_lambda_.20} parent=5 // pred_fallthru
      _
    %p507 = scmp.le.s32.totalorder 2, %s9
    // Predicated region
    $region37: #{_lambda_.20} parent=5 // pred_check
      %p508 = pneg %p507
    $region38: #{_lambda_.20} parent=5 // pred_check_branch
      %510 = sbr.rel (%p508) target = $region40
    $region39: #{_lambda_.20} parent=5 // pred_region
      %s511 = ssub.s32 %s9, 2
      // Predicated region
      $region41: #{_lambda_.20} parent=39 // pred_check
        %p512 = pneg %p106
      $region42: #{_lambda_.20} parent=39 // pred_check_branch
        %514 = sbr.rel (%p512) target = $region44
      $region43: #{_lambda_.20} parent=39 // pred_region
        %p515 = scmp.lt.s32.totalorder %s15, 1
        %s516 = scalar_select %p515, %s15, 1
        %s517 = smul.addr %s516, 4
        %s518 = scalar_lea.vmem %s3, %s517
      $region44: #{_lambda_.20} parent=39 // pred_fallthru
        _
    $region40: #{_lambda_.20} parent=5 // pred_fallthru
      _
  $region6: #{_lambda_.20} parent=0 // loop_footer
    %s13 = sadd.s32 1, %s9
  $region7: #{_lambda_.20} parent=0 // loop_footer_branch
    %8 = sbr.rel target = $region3
  $region8: #{_lambda_.20} parent=0 // loop_exit
    _

// kernel: _lambda_.21
$region0: #{_lambda_.21}
  #allocation0 [shape = 'u32[]', space=smem, size = 0x4, offset = 0x4, fixed_abs, tag = 'smem constant byte address 0x4 - core index']
  #allocation1 [shape = 'u32[72,128]{1,0:T(1,128)}', space=vmem, size = 0x9000, scoped, tag = 'internal scratch']
  %s0 = inlined_call_operand.vmem [shape: bf16[8,512], index: 0, kind: input, shape index: {}]
  %s1 = inlined_call_operand.vmem [shape: bf16[512,128], index: 1, kind: input, shape index: {}]
  %s2 = inlined_call_operand.vmem [shape: f32[1,128], index: 2, kind: input, shape index: {}]
  %s3 = inlined_call_operand.vmem [shape: bf16[8,128], index: 3, kind: output, shape index: {}]
  %s4 = sld [smem:[#allocation0]]
  $region22: #{_lambda_.21} parent=0
    _
  %s6 = ssub.s32 1, %s4
  %s7 = scalar_select 0, %s6, %s4
  // Predicated region
  $region2: #{_lambda_.21} parent=0 // pred_check
    _
  $region3: #{_lambda_.21} parent=0 // pred_check_branch
    %9 = sbr.rel (0) target = $region5
  $region4: #{_lambda_.21} parent=0 // pred_region
    _
  $region5: #{_lambda_.21} parent=0 // pred_fallthru
    _
  // Predicated region
  $region6: #{_lambda_.21} parent=0 // pred_check
    _
  $region7: #{_lambda_.21} parent=0 // pred_check_branch
    %11 = sbr.rel (0) target = $region9
  $region8: #{_lambda_.21} parent=0 // pred_region
    _
  $region9: #{_lambda_.21} parent=0 // pred_fallthru
    _
  // Predicated region
  $region10: #{_lambda_.21} parent=0 // pred_check
    _
  $region11: #{_lambda_.21} parent=0 // pred_check_branch
    %13 = sbr.rel (0) target = $region13
  $region12: #{_lambda_.21} parent=0 // pred_region
    _
  $region13: #{_lambda_.21} parent=0 // pred_fallthru
    _
  %v14 = vld [vmem:[%s0] sm:$0xff]
  %v15 = vld [vmem:[%s0 + $0x8] sm:$0xff]
  %v16 = vld [vmem:[%s1] sm:$0xf]
  %v17 = vld [vmem:[%s1 + $0x4] sm:$0xf]
  %v18 = vld [vmem:[%s1 + $0x8] sm:$0xf]
  %v19 = vld [vmem:[%s1 + $0xc] sm:$0xf]
  %v20 = vld [vmem:[%s1 + $0x10] sm:$0xf]
  %v21 = vld [vmem:[%s1 + $0x14] sm:$0xf]
  %v22 = vld [vmem:[%s1 + $0x18] sm:$0xf]
  %v23 = vld [vmem:[%s1 + $0x1c] sm:$0xf]
  %v24 = vld [vmem:[%s1 + $0x20] sm:$0xf]
  %v25 = vld [vmem:[%s1 + $0x24] sm:$0xf]
  %v26 = vld [vmem:[%s1 + $0x28] sm:$0xf]
  %v27 = vld [vmem:[%s1 + $0x2c] sm:$0xf]
  %v28 = vld [vmem:[%s1 + $0x30] sm:$0xf]
  %v29 = vld [vmem:[%s1 + $0x34] sm:$0xf]
  %v30 = vld [vmem:[%s1 + $0x38] sm:$0xf]
  %v31 = vld [vmem:[%s1 + $0x3c] sm:$0xf]
  %v32 = vld [vmem:[%s1 + $0x40] sm:$0xf]
  %v33 = vld [vmem:[%s1 + $0x44] sm:$0xf]
  %v34 = vld [vmem:[%s1 + $0x48] sm:$0xf]
  %v35 = vld [vmem:[%s1 + $0x4c] sm:$0xf]
  %v36 = vld [vmem:[%s1 + $0x50] sm:$0xf]
  %v37 = vld [vmem:[%s1 + $0x54] sm:$0xf]
  %v38 = vld [vmem:[%s1 + $0x58] sm:$0xf]
  %v39 = vld [vmem:[%s1 + $0x5c] sm:$0xf]
  %v40 = vld [vmem:[%s1 + $0x60] sm:$0xf]
  %v41 = vld [vmem:[%s1 + $0x64] sm:$0xf]
  %v42 = vld [vmem:[%s1 + $0x68] sm:$0xf]
  %v43 = vld [vmem:[%s1 + $0x6c] sm:$0xf]
  %v44 = vld [vmem:[%s1 + $0x70] sm:$0xf]
  %v45 = vld [vmem:[%s1 + $0x74] sm:$0xf]
  %v46 = vld [vmem:[%s1 + $0x78] sm:$0xf]
  %v47 = vld [vmem:[%s1 + $0x7c] sm:$0xf]
  %v48 = vld [vmem:[%s1 + $0x80] sm:$0xf]
  %v49 = vld [vmem:[%s1 + $0x84] sm:$0xf]
  %v50 = vld [vmem:[%s1 + $0x88] sm:$0xf]
  %v51 = vld [vmem:[%s1 + $0x8c] sm:$0xf]
  %v52 = vld [vmem:[%s1 + $0x90] sm:$0xf]
  %v53 = vld [vmem:[%s1 + $0x94] sm:$0xf]
  %v54 = vld [vmem:[%s1 + $0x98] sm:$0xf]
  %v55 = vld [vmem:[%s1 + $0x9c] sm:$0xf]
  %v56 = vld [vmem:[%s1 + $0xa0] sm:$0xf]
  %v57 = vld [vmem:[%s1 + $0xa4] sm:$0xf]
  %v58 = vld [vmem:[%s1 + $0xa8] sm:$0xf]
  %v59 = vld [vmem:[%s1 + $0xac] sm:$0xf]
  %v60 = vld [vmem:[%s1 + $0xb0] sm:$0xf]
  %v61 = vld [vmem:[%s1 + $0xb4] sm:$0xf]
  %v62 = vld [vmem:[%s1 + $0xb8] sm:$0xf]
  %v63 = vld [vmem:[%s1 + $0xbc] sm:$0xf]
  %v64 = vld [vmem:[%s1 + $0xc0] sm:$0xf]
  %v65 = vld [vmem:[%s1 + $0xc4] sm:$0xf]
  %v66 = vld [vmem:[%s1 + $0xc8] sm:$0xf]
  %v67 = vld [vmem:[%s1 + $0xcc] sm:$0xf]
  %v68 = vld [vmem:[%s1 + $0xd0] sm:$0xf]
  %v69 = vld [vmem:[%s1 + $0xd4] sm:$0xf]
  %v70 = vld [vmem:[%s1 + $0xd8] sm:$0xf]
  %v71 = vld [vmem:[%s1 + $0xdc] sm:$0xf]
  %v72 = vld [vmem:[%s1 + $0xe0] sm:$0xf]
  %v73 = vld [vmem:[%s1 + $0xe4] sm:$0xf]
  %v74 = vld [vmem:[%s1 + $0xe8] sm:$0xf]
  %v75 = vld [vmem:[%s1 + $0xec] sm:$0xf]
  %v76 = vld [vmem:[%s1 + $0xf0] sm:$0xf]
  %v77 = vld [vmem:[%s1 + $0xf4] sm:$0xf]
  %v78 = vld [vmem:[%s1 + $0xf8] sm:$0xf]
  %v79 = vld [vmem:[%s1 + $0xfc] sm:$0xf]
  %v80 = vld [vmem:[%s2] sm:$0x1]
  %v82 = vperm.slane %v80, 0
  %v86 = vunpack.c.l.b16 %v14
  %v87 = vunpack.c.h.b16 %v14
  %v88 = vunpack.c.l.b16 %v15
  %v89 = vunpack.c.h.b16 %v15
  %v90 = vpack.c.b16 %v86, %v86
  %v91 = vpack.c.b16 %v87, %v87
  %v92 = vpack.c.b16 %v88, %v88
  %v93 = vpack.c.b16 %v89, %v89
  %v162 = vunpack.c.l.b16 %v16
  %v163 = vunpack.c.l.b16 %v17
  %v164 = vunpack.c.l.b16 %v18
  %v165 = vunpack.c.l.b16 %v19
  %v166 = vunpack.c.l.b16 %v20
  %v167 = vunpack.c.l.b16 %v21
  %v168 = vunpack.c.l.b16 %v22
  %v169 = vunpack.c.l.b16 %v23
  %v170 = vunpack.c.l.b16 %v24
  %v171 = vunpack.c.l.b16 %v25
  %v172 = vunpack.c.l.b16 %v26
  %v173 = vunpack.c.l.b16 %v27
  %v174 = vunpack.c.l.b16 %v28
  %v175 = vunpack.c.l.b16 %v29
  %v176 = vunpack.c.l.b16 %v30
  %v177 = vunpack.c.l.b16 %v31
  %v178 = vunpack.c.l.b16 %v32
  %v179 = vunpack.c.l.b16 %v33
  %v180 = vunpack.c.l.b16 %v34
  %v181 = vunpack.c.l.b16 %v35
  %v182 = vunpack.c.l.b16 %v36
  %v183 = vunpack.c.l.b16 %v37
  %v184 = vunpack.c.l.b16 %v38
  %v185 = vunpack.c.l.b16 %v39
  %v186 = vunpack.c.l.b16 %v40
  %v187 = vunpack.c.l.b16 %v41
  %v188 = vunpack.c.l.b16 %v42
  %v189 = vunpack.c.l.b16 %v43
  %v190 = vunpack.c.l.b16 %v44
  %v191 = vunpack.c.l.b16 %v45
  %v192 = vunpack.c.l.b16 %v46
  %v193 = vunpack.c.l.b16 %v47
  %v194 = vunpack.c.l.b16 %v48
  %v195 = vunpack.c.l.b16 %v49
  %v196 = vunpack.c.l.b16 %v50
  %v197 = vunpack.c.l.b16 %v51
  %v198 = vunpack.c.l.b16 %v52
  %v199 = vunpack.c.l.b16 %v53
  %v200 = vunpack.c.l.b16 %v54
  %v201 = vunpack.c.l.b16 %v55
  %v202 = vunpack.c.l.b16 %v56
  %v203 = vunpack.c.l.b16 %v57
  %v204 = vunpack.c.l.b16 %v58
  %v205 = vunpack.c.l.b16 %v59
  %v206 = vunpack.c.l.b16 %v60
  %v207 = vunpack.c.l.b16 %v61
  %v208 = vunpack.c.l.b16 %v62
  %v209 = vunpack.c.l.b16 %v63
  %v210 = vunpack.c.l.b16 %v64
  %v211 = vunpack.c.l.b16 %v65
  %v212 = vunpack.c.l.b16 %v66
  %v213 = vunpack.c.l.b16 %v67
  %v214 = vunpack.c.l.b16 %v68
  %v215 = vunpack.c.l.b16 %v69
  %v216 = vunpack.c.l.b16 %v70
  %v217 = vunpack.c.l.b16 %v71
  %v218 = vunpack.c.l.b16 %v72
  %v219 = vunpack.c.l.b16 %v73
  %v220 = vunpack.c.l.b16 %v74
  %v221 = vunpack.c.l.b16 %v75
  %v222 = vunpack.c.l.b16 %v76
  %v223 = vunpack.c.l.b16 %v77
  %v224 = vunpack.c.l.b16 %v78
  %v225 = vunpack.c.l.b16 %v79
  %v226 = vpack.c.b16 %v163, %v162
  %v227 = vpack.c.b16 %v165, %v164
  %v228 = vpack.c.b16 %v167, %v166
  %v229 = vpack.c.b16 %v169, %v168
  %v230 = vpack.c.b16 %v171, %v170
  %v231 = vpack.c.b16 %v173, %v172
  %v232 = vpack.c.b16 %v175, %v174
  %v233 = vpack.c.b16 %v177, %v176
  %v234 = vpack.c.b16 %v179, %v178
  %v235 = vpack.c.b16 %v181, %v180
  %v236 = vpack.c.b16 %v183, %v182
  %v237 = vpack.c.b16 %v185, %v184
  %v238 = vpack.c.b16 %v187, %v186
  %v239 = vpack.c.b16 %v189, %v188
  %v240 = vpack.c.b16 %v191, %v190
  %v241 = vpack.c.b16 %v193, %v192
  %v242 = vpack.c.b16 %v195, %v194
  %v243 = vpack.c.b16 %v197, %v196
  %v244 = vpack.c.b16 %v199, %v198
  %v245 = vpack.c.b16 %v201, %v200
  %v246 = vpack.c.b16 %v203, %v202
  %v247 = vpack.c.b16 %v205, %v204
  %v248 = vpack.c.b16 %v207, %v206
  %v249 = vpack.c.b16 %v209, %v208
  %v250 = vpack.c.b16 %v211, %v210
  %v251 = vpack.c.b16 %v213, %v212
  %v252 = vpack.c.b16 %v215, %v214
  %v253 = vpack.c.b16 %v217, %v216
  %v254 = vpack.c.b16 %v219, %v218
  %v255 = vpack.c.b16 %v221, %v220
  %v256 = vpack.c.b16 %v223, %v222
  %v257 = vpack.c.b16 %v225, %v224
  %290 = vmatpush.bf16.msra.mxu0 %v233
  %291 = vmatpush.bf16.msra.mxu0 %v232
  %292 = vmatpush.bf16.msra.mxu0 %v231
  %293 = vmatpush.bf16.msra.mxu0 %v230
  %294 = vmatpush.bf16.msra.mxu0 %v229
  %295 = vmatpush.bf16.msra.mxu0 %v228
  %296 = vmatpush.bf16.msra.mxu0 %v227
  %297 = vmatpush.bf16.msra.mxu0 %v226
  %298 = vmatmul.bf16.gmra.mxu0 %v90
  %v299 = vpop.f32.mrf.mxu0
  %v300 = vadd.f32 %v82, %v299
  %v301 = vpop.f32.mrf.mxu0
  %302 = vdwg.mxu0
  %303 = vmatpush.bf16.msra.mxu0 %v241
  %304 = vmatpush.bf16.msra.mxu0 %v240
  %305 = vmatpush.bf16.msra.mxu0 %v239
  %306 = vmatpush.bf16.msra.mxu0 %v238
  %307 = vmatpush.bf16.msra.mxu0 %v237
  %308 = vmatpush.bf16.msra.mxu0 %v236
  %309 = vmatpush.bf16.msra.mxu0 %v235
  %310 = vmatpush.bf16.msra.mxu0 %v234
  %311 = vmatmul.bf16.gmra.mxu0 %v91
  %v312 = vpop.f32.mrf.mxu0
  %v313 = vadd.f32 %v300, %v312
  %v314 = vpop.f32.mrf.mxu0
  %315 = vdwg.mxu0
  %316 = vmatpush.bf16.msra.mxu0 %v249
  %317 = vmatpush.bf16.msra.mxu0 %v248
  %318 = vmatpush.bf16.msra.mxu0 %v247
  %319 = vmatpush.bf16.msra.mxu0 %v246
  %320 = vmatpush.bf16.msra.mxu0 %v245
  %321 = vmatpush.bf16.msra.mxu0 %v244
  %322 = vmatpush.bf16.msra.mxu0 %v243
  %323 = vmatpush.bf16.msra.mxu0 %v242
  %324 = vmatmul.bf16.gmra.mxu0 %v92
  %v325 = vpop.f32.mrf.mxu0
  %v326 = vadd.f32 %v313, %v325
  %v327 = vpop.f32.mrf.mxu0
  %328 = vdwg.mxu0
  %329 = vmatpush.bf16.msra.mxu0 %v257
  %330 = vmatpush.bf16.msra.mxu0 %v256
  %331 = vmatpush.bf16.msra.mxu0 %v255
  %332 = vmatpush.bf16.msra.mxu0 %v254
  %333 = vmatpush.bf16.msra.mxu0 %v253
  %334 = vmatpush.bf16.msra.mxu0 %v252
  %335 = vmatpush.bf16.msra.mxu0 %v251
  %336 = vmatpush.bf16.msra.mxu0 %v250
  %337 = vmatmul.bf16.gmra.mxu0 %v93
  %v338 = vpop.f32.mrf.mxu0
  %v339 = vadd.f32 %v326, %v338
  %v340 = vpop.f32.mrf.mxu0
  %341 = vdwg.mxu0
  %v342 = vmax.f32 %v339, 0.0
  %v343 = vpack.c.bf16 %v342, %v342
  %344 = vst [vmem:[%s3] sm:$0xf] %v343
  // Predicated region
  $region14: #{_lambda_.21} parent=0 // pred_check
    _
  $region15: #{_lambda_.21} parent=0 // pred_check_branch
    %346 = sbr.rel (0) target = $region17
  $region16: #{_lambda_.21} parent=0 // pred_region
    _
  $region17: #{_lambda_.21} parent=0 // pred_fallthru
    _
  // Predicated region
  $region18: #{_lambda_.21} parent=0 // pred_check
    _
  $region19: #{_lambda_.21} parent=0 // pred_check_branch
    %348 = sbr.rel (0) target = $region21
  $region20: #{_lambda_.21} parent=0 // pred_region
    _
  $region21: #{_lambda_.21} parent=0 // pred_fallthru
    _

// kernel: _lambda_.22
$region0: #{_lambda_.22}
  #allocation0 [shape = 'u32[]', space=smem, size = 0x4, offset = 0x4, fixed_abs, tag = 'smem constant byte address 0x4 - core index']
  #allocation1 [shape = 'u32[72,128]{1,0:T(1,128)}', space=vmem, size = 0x9000, scoped, tag = 'internal scratch']
  %s0 = inlined_call_operand.vmem [shape: bf16[8,896], index: 0, kind: input, shape index: {}]
  %s1 = inlined_call_operand.vmem [shape: bf16[896,128], index: 1, kind: input, shape index: {}]
  %s2 = inlined_call_operand.vmem [shape: f32[1,128], index: 2, kind: input, shape index: {}]
  %s3 = inlined_call_operand.vmem [shape: bf16[8,128], index: 3, kind: output, shape index: {}]
  %s4 = sld [smem:[#allocation0]]
  $region22: #{_lambda_.22} parent=0
    _
  %s6 = ssub.s32 1, %s4
  %s7 = scalar_select 0, %s6, %s4
  // Predicated region
  $region2: #{_lambda_.22} parent=0 // pred_check
    _
  $region3: #{_lambda_.22} parent=0 // pred_check_branch
    %9 = sbr.rel (0) target = $region5
  $region4: #{_lambda_.22} parent=0 // pred_region
    _
  $region5: #{_lambda_.22} parent=0 // pred_fallthru
    _
  // Predicated region
  $region6: #{_lambda_.22} parent=0 // pred_check
    _
  $region7: #{_lambda_.22} parent=0 // pred_check_branch
    %11 = sbr.rel (0) target = $region9
  $region8: #{_lambda_.22} parent=0 // pred_region
    _
  $region9: #{_lambda_.22} parent=0 // pred_fallthru
    _
  // Predicated region
  $region10: #{_lambda_.22} parent=0 // pred_check
    _
  $region11: #{_lambda_.22} parent=0 // pred_check_branch
    %13 = sbr.rel (0) target = $region13
  $region12: #{_lambda_.22} parent=0 // pred_region
    _
  $region13: #{_lambda_.22} parent=0 // pred_fallthru
    _
  %v14 = vld [vmem:[%s0] sm:$0xff]
  %v15 = vld [vmem:[%s0 + $0x8] sm:$0xff]
  %v16 = vld [vmem:[%s0 + $0x10] sm:$0xff]
  %v17 = vld [vmem:[%s0 + $0x18] sm:$0xf]
  %v18 = vld [vmem:[%s1] sm:$0xf]
  %v19 = vld [vmem:[%s1 + $0x4] sm:$0xf]
  %v20 = vld [vmem:[%s1 + $0x8] sm:$0xf]
  %v21 = vld [vmem:[%s1 + $0xc] sm:$0xf]
  %v22 = vld [vmem:[%s1 + $0x10] sm:$0xf]
  %v23 = vld [vmem:[%s1 + $0x14] sm:$0xf]
  %v24 = vld [vmem:[%s1 + $0x18] sm:$0xf]
  %v25 = vld [vmem:[%s1 + $0x1c] sm:$0xf]
  %v26 = vld [vmem:[%s1 + $0x20] sm:$0xf]
  %v27 = vld [vmem:[%s1 + $0x24] sm:$0xf]
  %v28 = vld [vmem:[%s1 + $0x28] sm:$0xf]
  %v29 = vld [vmem:[%s1 + $0x2c] sm:$0xf]
  %v30 = vld [vmem:[%s1 + $0x30] sm:$0xf]
  %v31 = vld [vmem:[%s1 + $0x34] sm:$0xf]
  %v32 = vld [vmem:[%s1 + $0x38] sm:$0xf]
  %v33 = vld [vmem:[%s1 + $0x3c] sm:$0xf]
  %v34 = vld [vmem:[%s1 + $0x40] sm:$0xf]
  %v35 = vld [vmem:[%s1 + $0x44] sm:$0xf]
  %v36 = vld [vmem:[%s1 + $0x48] sm:$0xf]
  %v37 = vld [vmem:[%s1 + $0x4c] sm:$0xf]
  %v38 = vld [vmem:[%s1 + $0x50] sm:$0xf]
  %v39 = vld [vmem:[%s1 + $0x54] sm:$0xf]
  %v40 = vld [vmem:[%s1 + $0x58] sm:$0xf]
  %v41 = vld [vmem:[%s1 + $0x5c] sm:$0xf]
  %v42 = vld [vmem:[%s1 + $0x60] sm:$0xf]
  %v43 = vld [vmem:[%s1 + $0x64] sm:$0xf]
  %v44 = vld [vmem:[%s1 + $0x68] sm:$0xf]
  %v45 = vld [vmem:[%s1 + $0x6c] sm:$0xf]
  %v46 = vld [vmem:[%s1 + $0x70] sm:$0xf]
  %v47 = vld [vmem:[%s1 + $0x74] sm:$0xf]
  %v48 = vld [vmem:[%s1 + $0x78] sm:$0xf]
  %v49 = vld [vmem:[%s1 + $0x7c] sm:$0xf]
  %v50 = vld [vmem:[%s1 + $0x80] sm:$0xf]
  %v51 = vld [vmem:[%s1 + $0x84] sm:$0xf]
  %v52 = vld [vmem:[%s1 + $0x88] sm:$0xf]
  %v53 = vld [vmem:[%s1 + $0x8c] sm:$0xf]
  %v54 = vld [vmem:[%s1 + $0x90] sm:$0xf]
  %v55 = vld [vmem:[%s1 + $0x94] sm:$0xf]
  %v56 = vld [vmem:[%s1 + $0x98] sm:$0xf]
  %v57 = vld [vmem:[%s1 + $0x9c] sm:$0xf]
  %v58 = vld [vmem:[%s1 + $0xa0] sm:$0xf]
  %v59 = vld [vmem:[%s1 + $0xa4] sm:$0xf]
  %v60 = vld [vmem:[%s1 + $0xa8] sm:$0xf]
  %v61 = vld [vmem:[%s1 + $0xac] sm:$0xf]
  %v62 = vld [vmem:[%s1 + $0xb0] sm:$0xf]
  %v63 = vld [vmem:[%s1 + $0xb4] sm:$0xf]
  %v64 = vld [vmem:[%s1 + $0xb8] sm:$0xf]
  %v65 = vld [vmem:[%s1 + $0xbc] sm:$0xf]
  %v66 = vld [vmem:[%s1 + $0xc0] sm:$0xf]
  %v67 = vld [vmem:[%s1 + $0xc4] sm:$0xf]
  %v68 = vld [vmem:[%s1 + $0xc8] sm:$0xf]
  %v69 = vld [vmem:[%s1 + $0xcc] sm:$0xf]
  %v70 = vld [vmem:[%s1 + $0xd0] sm:$0xf]
  %v71 = vld [vmem:[%s1 + $0xd4] sm:$0xf]
  %v72 = vld [vmem:[%s1 + $0xd8] sm:$0xf]
  %v73 = vld [vmem:[%s1 + $0xdc] sm:$0xf]
  %v74 = vld [vmem:[%s1 + $0xe0] sm:$0xf]
  %v75 = vld [vmem:[%s1 + $0xe4] sm:$0xf]
  %v76 = vld [vmem:[%s1 + $0xe8] sm:$0xf]
  %v77 = vld [vmem:[%s1 + $0xec] sm:$0xf]
  %v78 = vld [vmem:[%s1 + $0xf0] sm:$0xf]
  %v79 = vld [vmem:[%s1 + $0xf4] sm:$0xf]
  %v80 = vld [vmem:[%s1 + $0xf8] sm:$0xf]
  %v81 = vld [vmem:[%s1 + $0xfc] sm:$0xf]
  %v82 = vld [vmem:[%s1 + $0x100] sm:$0xf]
  %v83 = vld [vmem:[%s1 + $0x104] sm:$0xf]
  %v84 = vld [vmem:[%s1 + $0x108] sm:$0xf]
  %v85 = vld [vmem:[%s1 + $0x10c] sm:$0xf]
  %v86 = vld [vmem:[%s1 + $0x110] sm:$0xf]
  %v87 = vld [vmem:[%s1 + $0x114] sm:$0xf]
  %v88 = vld [vmem:[%s1 + $0x118] sm:$0xf]
  %v89 = vld [vmem:[%s1 + $0x11c] sm:$0xf]
  %v90 = vld [vmem:[%s1 + $0x120] sm:$0xf]
  %v91 = vld [vmem:[%s1 + $0x124] sm:$0xf]
  %v92 = vld [vmem:[%s1 + $0x128] sm:$0xf]
  %v93 = vld [vmem:[%s1 + $0x12c] sm:$0xf]
  %v94 = vld [vmem:[%s1 + $0x130] sm:$0xf]
  %v95 = vld [vmem:[%s1 + $0x134] sm:$0xf]
  %v96 = vld [vmem:[%s1 + $0x138] sm:$0xf]
  %v97 = vld [vmem:[%s1 + $0x13c] sm:$0xf]
  %v98 = vld [vmem:[%s1 + $0x140] sm:$0xf]
  %v99 = vld [vmem:[%s1 + $0x144] sm:$0xf]
  %v100 = vld [vmem:[%s1 + $0x148] sm:$0xf]
  %v101 = vld [vmem:[%s1 + $0x14c] sm:$0xf]
  %v102 = vld [vmem:[%s1 + $0x150] sm:$0xf]
  %v103 = vld [vmem:[%s1 + $0x154] sm:$0xf]
  %v104 = vld [vmem:[%s1 + $0x158] sm:$0xf]
  %v105 = vld [vmem:[%s1 + $0x15c] sm:$0xf]
  %v106 = vld [vmem:[%s1 + $0x160] sm:$0xf]
  %v107 = vld [vmem:[%s1 + $0x164] sm:$0xf]
  %v108 = vld [vmem:[%s1 + $0x168] sm:$0xf]
  %v109 = vld [vmem:[%s1 + $0x16c] sm:$0xf]
  %v110 = vld [vmem:[%s1 + $0x170] sm:$0xf]
  %v111 = vld [vmem:[%s1 + $0x174] sm:$0xf]
  %v112 = vld [vmem:[%s1 + $0x178] sm:$0xf]
  %v113 = vld [vmem:[%s1 + $0x17c] sm:$0xf]
  %v114 = vld [vmem:[%s1 + $0x180] sm:$0xf]
  %v115 = vld [vmem:[%s1 + $0x184] sm:$0xf]
  %v116 = vld [vmem:[%s1 + $0x188] sm:$0xf]
  %v117 = vld [vmem:[%s1 + $0x18c] sm:$0xf]
  %v118 = vld [vmem:[%s1 + $0x190] sm:$0xf]
  %v119 = vld [vmem:[%s1 + $0x194] sm:$0xf]
  %v120 = vld [vmem:[%s1 + $0x198] sm:$0xf]
  %v121 = vld [vmem:[%s1 + $0x19c] sm:$0xf]
  %v122 = vld [vmem:[%s1 + $0x1a0] sm:$0xf]
  %v123 = vld [vmem:[%s1 + $0x1a4] sm:$0xf]
  %v124 = vld [vmem:[%s1 + $0x1a8] sm:$0xf]
  %v125 = vld [vmem:[%s1 + $0x1ac] sm:$0xf]
  %v126 = vld [vmem:[%s1 + $0x1b0] sm:$0xf]
  %v127 = vld [vmem:[%s1 + $0x1b4] sm:$0xf]
  %v128 = vld [vmem:[%s1 + $0x1b8] sm:$0xf]
  %v129 = vld [vmem:[%s1 + $0x1bc] sm:$0xf]
  %v130 = vld [vmem:[%s2] sm:$0x1]
  %v132 = vperm.slane %v130, 0
  %v138 = vunpack.c.l.b16 %v14
  %v139 = vunpack.c.h.b16 %v14
  %v140 = vunpack.c.l.b16 %v15
  %v141 = vunpack.c.h.b16 %v15
  %v142 = vunpack.c.l.b16 %v16
  %v143 = vunpack.c.h.b16 %v16
  %v144 = vunpack.c.l.b16 %v17
  %v145 = vpack.c.b16 %v138, %v138
  %v146 = vpack.c.b16 %v139, %v139
  %v147 = vpack.c.b16 %v140, %v140
  %v148 = vpack.c.b16 %v141, %v141
  %v149 = vpack.c.b16 %v142, %v142
  %v150 = vpack.c.b16 %v143, %v143
  %v151 = vpack.c.b16 %v144, %v144
  %v271 = vunpack.c.l.b16 %v18
  %v272 = vunpack.c.l.b16 %v19
  %v273 = vunpack.c.l.b16 %v20
  %v274 = vunpack.c.l.b16 %v21
  %v275 = vunpack.c.l.b16 %v22
  %v276 = vunpack.c.l.b16 %v23
  %v277 = vunpack.c.l.b16 %v24
  %v278 = vunpack.c.l.b16 %v25
  %v279 = vunpack.c.l.b16 %v26
  %v280 = vunpack.c.l.b16 %v27
  %v281 = vunpack.c.l.b16 %v28
  %v282 = vunpack.c.l.b16 %v29
  %v283 = vunpack.c.l.b16 %v30
  %v284 = vunpack.c.l.b16 %v31
  %v285 = vunpack.c.l.b16 %v32
  %v286 = vunpack.c.l.b16 %v33
  %v287 = vunpack.c.l.b16 %v34
  %v288 = vunpack.c.l.b16 %v35
  %v289 = vunpack.c.l.b16 %v36
  %v290 = vunpack.c.l.b16 %v37
  %v291 = vunpack.c.l.b16 %v38
  %v292 = vunpack.c.l.b16 %v39
  %v293 = vunpack.c.l.b16 %v40
  %v294 = vunpack.c.l.b16 %v41
  %v295 = vunpack.c.l.b16 %v42
  %v296 = vunpack.c.l.b16 %v43
  %v297 = vunpack.c.l.b16 %v44
  %v298 = vunpack.c.l.b16 %v45
  %v299 = vunpack.c.l.b16 %v46
  %v300 = vunpack.c.l.b16 %v47
  %v301 = vunpack.c.l.b16 %v48
  %v302 = vunpack.c.l.b16 %v49
  %v303 = vunpack.c.l.b16 %v50
  %v304 = vunpack.c.l.b16 %v51
  %v305 = vunpack.c.l.b16 %v52
  %v306 = vunpack.c.l.b16 %v53
  %v307 = vunpack.c.l.b16 %v54
  %v308 = vunpack.c.l.b16 %v55
  %v309 = vunpack.c.l.b16 %v56
  %v310 = vunpack.c.l.b16 %v57
  %v311 = vunpack.c.l.b16 %v58
  %v312 = vunpack.c.l.b16 %v59
  %v313 = vunpack.c.l.b16 %v60
  %v314 = vunpack.c.l.b16 %v61
  %v315 = vunpack.c.l.b16 %v62
  %v316 = vunpack.c.l.b16 %v63
  %v317 = vunpack.c.l.b16 %v64
  %v318 = vunpack.c.l.b16 %v65
  %v319 = vunpack.c.l.b16 %v66
  %v320 = vunpack.c.l.b16 %v67
  %v321 = vunpack.c.l.b16 %v68
  %v322 = vunpack.c.l.b16 %v69
  %v323 = vunpack.c.l.b16 %v70
  %v324 = vunpack.c.l.b16 %v71
  %v325 = vunpack.c.l.b16 %v72
  %v326 = vunpack.c.l.b16 %v73
  %v327 = vunpack.c.l.b16 %v74
  %v328 = vunpack.c.l.b16 %v75
  %v329 = vunpack.c.l.b16 %v76
  %v330 = vunpack.c.l.b16 %v77
  %v331 = vunpack.c.l.b16 %v78
  %v332 = vunpack.c.l.b16 %v79
  %v333 = vunpack.c.l.b16 %v80
  %v334 = vunpack.c.l.b16 %v81
  %v335 = vunpack.c.l.b16 %v82
  %v336 = vunpack.c.l.b16 %v83
  %v337 = vunpack.c.l.b16 %v84
  %v338 = vunpack.c.l.b16 %v85
  %v339 = vunpack.c.l.b16 %v86
  %v340 = vunpack.c.l.b16 %v87
  %v341 = vunpack.c.l.b16 %v88
  %v342 = vunpack.c.l.b16 %v89
  %v343 = vunpack.c.l.b16 %v90
  %v344 = vunpack.c.l.b16 %v91
  %v345 = vunpack.c.l.b16 %v92
  %v346 = vunpack.c.l.b16 %v93
  %v347 = vunpack.c.l.b16 %v94
  %v348 = vunpack.c.l.b16 %v95
  %v349 = vunpack.c.l.b16 %v96
  %v350 = vunpack.c.l.b16 %v97
  %v351 = vunpack.c.l.b16 %v98
  %v352 = vunpack.c.l.b16 %v99
  %v353 = vunpack.c.l.b16 %v100
  %v354 = vunpack.c.l.b16 %v101
  %v355 = vunpack.c.l.b16 %v102
  %v356 = vunpack.c.l.b16 %v103
  %v357 = vunpack.c.l.b16 %v104
  %v358 = vunpack.c.l.b16 %v105
  %v359 = vunpack.c.l.b16 %v106
  %v360 = vunpack.c.l.b16 %v107
  %v361 = vunpack.c.l.b16 %v108
  %v362 = vunpack.c.l.b16 %v109
  %v363 = vunpack.c.l.b16 %v110
  %v364 = vunpack.c.l.b16 %v111
  %v365 = vunpack.c.l.b16 %v112
  %v366 = vunpack.c.l.b16 %v113
  %v367 = vunpack.c.l.b16 %v114
  %v368 = vunpack.c.l.b16 %v115
  %v369 = vunpack.c.l.b16 %v116
  %v370 = vunpack.c.l.b16 %v117
  %v371 = vunpack.c.l.b16 %v118
  %v372 = vunpack.c.l.b16 %v119
  %v373 = vunpack.c.l.b16 %v120
  %v374 = vunpack.c.l.b16 %v121
  %v375 = vunpack.c.l.b16 %v122
  %v376 = vunpack.c.l.b16 %v123
  %v377 = vunpack.c.l.b16 %v124
  %v378 = vunpack.c.l.b16 %v125
  %v379 = vunpack.c.l.b16 %v126
  %v380 = vunpack.c.l.b16 %v127
  %v381 = vunpack.c.l.b16 %v128
  %v382 = vunpack.c.l.b16 %v129
  %v383 = vpack.c.b16 %v272, %v271
  %v384 = vpack.c.b16 %v274, %v273
  %v385 = vpack.c.b16 %v276, %v275
  %v386 = vpack.c.b16 %v278, %v277
  %v387 = vpack.c.b16 %v280, %v279
  %v388 = vpack.c.b16 %v282, %v281
  %v389 = vpack.c.b16 %v284, %v283
  %v390 = vpack.c.b16 %v286, %v285
  %v391 = vpack.c.b16 %v288, %v287
  %v392 = vpack.c.b16 %v290, %v289
  %v393 = vpack.c.b16 %v292, %v291
  %v394 = vpack.c.b16 %v294, %v293
  %v395 = vpack.c.b16 %v296, %v295
  %v396 = vpack.c.b16 %v298, %v297
  %v397 = vpack.c.b16 %v300, %v299
  %v398 = vpack.c.b16 %v302, %v301
  %v399 = vpack.c.b16 %v304, %v303
  %v400 = vpack.c.b16 %v306, %v305
  %v401 = vpack.c.b16 %v308, %v307
  %v402 = vpack.c.b16 %v310, %v309
  %v403 = vpack.c.b16 %v312, %v311
  %v404 = vpack.c.b16 %v314, %v313
  %v405 = vpack.c.b16 %v316, %v315
  %v406 = vpack.c.b16 %v318, %v317
  %v407 = vpack.c.b16 %v320, %v319
  %v408 = vpack.c.b16 %v322, %v321
  %v409 = vpack.c.b16 %v324, %v323
  %v410 = vpack.c.b16 %v326, %v325
  %v411 = vpack.c.b16 %v328, %v327
  %v412 = vpack.c.b16 %v330, %v329
  %v413 = vpack.c.b16 %v332, %v331
  %v414 = vpack.c.b16 %v334, %v333
  %v415 = vpack.c.b16 %v336, %v335
  %v416 = vpack.c.b16 %v338, %v337
  %v417 = vpack.c.b16 %v340, %v339
  %v418 = vpack.c.b16 %v342, %v341
  %v419 = vpack.c.b16 %v344, %v343
  %v420 = vpack.c.b16 %v346, %v345
  %v421 = vpack.c.b16 %v348, %v347
  %v422 = vpack.c.b16 %v350, %v349
  %v423 = vpack.c.b16 %v352, %v351
  %v424 = vpack.c.b16 %v354, %v353
  %v425 = vpack.c.b16 %v356, %v355
  %v426 = vpack.c.b16 %v358, %v357
  %v427 = vpack.c.b16 %v360, %v359
  %v428 = vpack.c.b16 %v362, %v361
  %v429 = vpack.c.b16 %v364, %v363
  %v430 = vpack.c.b16 %v366, %v365
  %v431 = vpack.c.b16 %v368, %v367
  %v432 = vpack.c.b16 %v370, %v369
  %v433 = vpack.c.b16 %v372, %v371
  %v434 = vpack.c.b16 %v374, %v373
  %v435 = vpack.c.b16 %v376, %v375
  %v436 = vpack.c.b16 %v378, %v377
  %v437 = vpack.c.b16 %v380, %v379
  %v438 = vpack.c.b16 %v382, %v381
  %495 = vmatpush.bf16.msra.mxu0 %v390
  %496 = vmatpush.bf16.msra.mxu0 %v389
  %497 = vmatpush.bf16.msra.mxu0 %v388
  %498 = vmatpush.bf16.msra.mxu0 %v387
  %499 = vmatpush.bf16.msra.mxu0 %v386
  %500 = vmatpush.bf16.msra.mxu0 %v385
  %501 = vmatpush.bf16.msra.mxu0 %v384
  %502 = vmatpush.bf16.msra.mxu0 %v383
  %503 = vmatmul.bf16.gmra.mxu0 %v145
  %v504 = vpop.f32.mrf.mxu0
  %v505 = vadd.f32 %v132, %v504
  %v506 = vpop.f32.mrf.mxu0
  %507 = vdwg.mxu0
  %508 = vmatpush.bf16.msra.mxu0 %v398
  %509 = vmatpush.bf16.msra.mxu0 %v397
  %510 = vmatpush.bf16.msra.mxu0 %v396
  %511 = vmatpush.bf16.msra.mxu0 %v395
  %512 = vmatpush.bf16.msra.mxu0 %v394
  %513 = vmatpush.bf16.msra.mxu0 %v393
  %514 = vmatpush.bf16.msra.mxu0 %v392
  %515 = vmatpush.bf16.msra.mxu0 %v391
  %516 = vmatmul.bf16.gmra.mxu0 %v146
  %v517 = vpop.f32.mrf.mxu0
  %v518 = vadd.f32 %v505, %v517
  %v519 = vpop.f32.mrf.mxu0
  %520 = vdwg.mxu0
  %521 = vmatpush.bf16.msra.mxu0 %v406
  %522 = vmatpush.bf16.msra.mxu0 %v405
  %523 = vmatpush.bf16.msra.mxu0 %v404
  %524 = vmatpush.bf16.msra.mxu0 %v403
  %525 = vmatpush.bf16.msra.mxu0 %v402
  %526 = vmatpush.bf16.msra.mxu0 %v401
  %527 = vmatpush.bf16.msra.mxu0 %v400
  %528 = vmatpush.bf16.msra.mxu0 %v399
  %529 = vmatmul.bf16.gmra.mxu0 %v147
  %v530 = vpop.f32.mrf.mxu0
  %v531 = vadd.f32 %v518, %v530
  %v532 = vpop.f32.mrf.mxu0
  %533 = vdwg.mxu0
  %534 = vmatpush.bf16.msra.mxu0 %v414
  %535 = vmatpush.bf16.msra.mxu0 %v413
  %536 = vmatpush.bf16.msra.mxu0 %v412
  %537 = vmatpush.bf16.msra.mxu0 %v411
  %538 = vmatpush.bf16.msra.mxu0 %v410
  %539 = vmatpush.bf16.msra.mxu0 %v409
  %540 = vmatpush.bf16.msra.mxu0 %v408
  %541 = vmatpush.bf16.msra.mxu0 %v407
  %542 = vmatmul.bf16.gmra.mxu0 %v148
  %v543 = vpop.f32.mrf.mxu0
  %v544 = vadd.f32 %v531, %v543
  %v545 = vpop.f32.mrf.mxu0
  %546 = vdwg.mxu0
  %547 = vmatpush.bf16.msra.mxu0 %v422
  %548 = vmatpush.bf16.msra.mxu0 %v421
  %549 = vmatpush.bf16.msra.mxu0 %v420
  %550 = vmatpush.bf16.msra.mxu0 %v419
  %551 = vmatpush.bf16.msra.mxu0 %v418
  %552 = vmatpush.bf16.msra.mxu0 %v417
  %553 = vmatpush.bf16.msra.mxu0 %v416
  %554 = vmatpush.bf16.msra.mxu0 %v415
  %555 = vmatmul.bf16.gmra.mxu0 %v149
  %v556 = vpop.f32.mrf.mxu0
  %v557 = vadd.f32 %v544, %v556
  %v558 = vpop.f32.mrf.mxu0
  %559 = vdwg.mxu0
  %560 = vmatpush.bf16.msra.mxu0 %v430
  %561 = vmatpush.bf16.msra.mxu0 %v429
  %562 = vmatpush.bf16.msra.mxu0 %v428
  %563 = vmatpush.bf16.msra.mxu0 %v427
  %564 = vmatpush.bf16.msra.mxu0 %v426
  %565 = vmatpush.bf16.msra.mxu0 %v425
  %566 = vmatpush.bf16.msra.mxu0 %v424
  %567 = vmatpush.bf16.msra.mxu0 %v423
  %568 = vmatmul.bf16.gmra.mxu0 %v150
  %v569 = vpop.f32.mrf.mxu0
  %v570 = vadd.f32 %v557, %v569
  %v571 = vpop.f32.mrf.mxu0
  %572 = vdwg.mxu0
  %573 = vmatpush.bf16.msra.mxu0 %v438
  %574 = vmatpush.bf16.msra.mxu0 %v437
  %575 = vmatpush.bf16.msra.mxu0 %v436
  %576 = vmatpush.bf16.msra.mxu0 %v435
  %577 = vmatpush.bf16.msra.mxu0 %v434
  %578 = vmatpush.bf16.msra.mxu0 %v433
  %579 = vmatpush.bf16.msra.mxu0 %v432
  %580 = vmatpush.bf16.msra.mxu0 %v431
  %581 = vmatmul.bf16.gmra.mxu0 %v151
  %v582 = vpop.f32.mrf.mxu0
  %v583 = vadd.f32 %v570, %v582
  %v584 = vpop.f32.mrf.mxu0
  %585 = vdwg.mxu0
  %v586 = vmax.f32 %v583, 0.0
  %v587 = vpack.c.bf16 %v586, %v586
  %588 = vst [vmem:[%s3] sm:$0xf] %v587
  // Predicated region
  $region14: #{_lambda_.22} parent=0 // pred_check
    _
  $region15: #{_lambda_.22} parent=0 // pred_check_branch
    %590 = sbr.rel (0) target = $region17
  $region16: #{_lambda_.22} parent=0 // pred_region
    _
  $region17: #{_lambda_.22} parent=0 // pred_fallthru
    _
  // Predicated region
  $region18: #{_lambda_.22} parent=0 // pred_check
    _
  $region19: #{_lambda_.22} parent=0 // pred_check_branch
    %592 = sbr.rel (0) target = $region21
  $region20: #{_lambda_.22} parent=0 // pred_region
    _
  $region21: #{_lambda_.22} parent=0 // pred_fallthru
    _

// kernel: _lambda_.25
$region0: #{_lambda_.25}
  #allocation0 [shape = 'u32[]', space=smem, size = 0x4, offset = 0x4, fixed_abs, tag = 'smem constant byte address 0x4 - core index']
  #allocation1 [shape = 'u32[72,128]{1,0:T(1,128)}', space=vmem, size = 0x9000, scoped, tag = 'internal scratch']
  %s0 = inlined_call_operand.vmem [shape: bf16[8,1,128], index: 0, kind: input, shape index: {}]
  %s1 = inlined_call_operand.vmem [shape: bf16[128,128], index: 1, kind: input, shape index: {}]
  %s2 = inlined_call_operand.vmem [shape: f32[1,128], index: 2, kind: input, shape index: {}]
  %s3 = inlined_call_operand.vmem [shape: bf16[128,128], index: 3, kind: input, shape index: {}]
  %s4 = inlined_call_operand.vmem [shape: f32[1,128], index: 4, kind: input, shape index: {}]
  %s5 = inlined_call_operand.vmem [shape: f32[8,128], index: 5, kind: output, shape index: {}]
  %s6 = sld [smem:[#allocation0]]
  $region30: #{_lambda_.25} parent=0
    _
  %s8 = ssub.s32 1, %s6
  %s9 = scalar_select 0, %s8, %s6
  // Predicated region
  $region2: #{_lambda_.25} parent=0 // pred_check
    _
  $region3: #{_lambda_.25} parent=0 // pred_check_branch
    %11 = sbr.rel (0) target = $region5
  $region4: #{_lambda_.25} parent=0 // pred_region
    _
  $region5: #{_lambda_.25} parent=0 // pred_fallthru
    _
  // Predicated region
  $region6: #{_lambda_.25} parent=0 // pred_check
    _
  $region7: #{_lambda_.25} parent=0 // pred_check_branch
    %13 = sbr.rel (0) target = $region9
  $region8: #{_lambda_.25} parent=0 // pred_region
    _
  $region9: #{_lambda_.25} parent=0 // pred_fallthru
    _
  // Predicated region
  $region10: #{_lambda_.25} parent=0 // pred_check
    _
  $region11: #{_lambda_.25} parent=0 // pred_check_branch
    %15 = sbr.rel (0) target = $region13
  $region12: #{_lambda_.25} parent=0 // pred_region
    _
  $region13: #{_lambda_.25} parent=0 // pred_fallthru
    _
  // Predicated region
  $region14: #{_lambda_.25} parent=0 // pred_check
    _
  $region15: #{_lambda_.25} parent=0 // pred_check_branch
    %17 = sbr.rel (0) target = $region17
  $region16: #{_lambda_.25} parent=0 // pred_region
    _
  $region17: #{_lambda_.25} parent=0 // pred_fallthru
    _
  // Predicated region
  $region18: #{_lambda_.25} parent=0 // pred_check
    _
  $region19: #{_lambda_.25} parent=0 // pred_check_branch
    %19 = sbr.rel (0) target = $region21
  $region20: #{_lambda_.25} parent=0 // pred_region
    _
  $region21: #{_lambda_.25} parent=0 // pred_fallthru
    _
  %v20 = vld [vmem:[%s0] sm:$0x1]
  %v21 = vld [vmem:[%s0 + $0x1] sm:$0x1]
  %v22 = vld [vmem:[%s0 + $0x2] sm:$0x1]
  %v23 = vld [vmem:[%s0 + $0x3] sm:$0x1]
  %v24 = vld [vmem:[%s0 + $0x4] sm:$0x1]
  %v25 = vld [vmem:[%s0 + $0x5] sm:$0x1]
  %v26 = vld [vmem:[%s0 + $0x6] sm:$0x1]
  %v27 = vld [vmem:[%s0 + $0x7] sm:$0x1]
  %v28 = vunpack.c.l.bf16 %v20
  %v29 = vunpack.c.l.bf16 %v21
  %v30 = vunpack.c.l.bf16 %v22
  %v31 = vunpack.c.l.bf16 %v23
  %v32 = vunpack.c.l.bf16 %v24
  %v33 = vunpack.c.l.bf16 %v25
  %v34 = vunpack.c.l.bf16 %v26
  %v35 = vunpack.c.l.bf16 %v27
  %v36 = vadd.f32 %v28, 0.0
  %v37 = vadd.f32 %v29, 0.0
  %v38 = vadd.f32 %v30, 0.0
  %v39 = vadd.f32 %v31, 0.0
  %v40 = vadd.f32 %v32, 0.0
  %v41 = vadd.f32 %v33, 0.0
  %v42 = vadd.f32 %v34, 0.0
  %v43 = vadd.f32 %v35, 0.0
  %v44 = vpack.c.bf16 %v36, %v36
  %v45 = vpack.c.bf16 %v37, %v37
  %v46 = vpack.c.bf16 %v38, %v38
  %v47 = vpack.c.bf16 %v39, %v39
  %v48 = vpack.c.bf16 %v40, %v40
  %v49 = vpack.c.bf16 %v41, %v41
  %v50 = vpack.c.bf16 %v42, %v42
  %v51 = vpack.c.bf16 %v43, %v43
  %v52 = vld [vmem:[%s1] sm:$0xf]
  %v53 = vld [vmem:[%s1 + $0x4] sm:$0xf]
  %v54 = vld [vmem:[%s1 + $0x8] sm:$0xf]
  %v55 = vld [vmem:[%s1 + $0xc] sm:$0xf]
  %v56 = vld [vmem:[%s1 + $0x10] sm:$0xf]
  %v57 = vld [vmem:[%s1 + $0x14] sm:$0xf]
  %v58 = vld [vmem:[%s1 + $0x18] sm:$0xf]
  %v59 = vld [vmem:[%s1 + $0x1c] sm:$0xf]
  %v60 = vld [vmem:[%s1 + $0x20] sm:$0xf]
  %v61 = vld [vmem:[%s1 + $0x24] sm:$0xf]
  %v62 = vld [vmem:[%s1 + $0x28] sm:$0xf]
  %v63 = vld [vmem:[%s1 + $0x2c] sm:$0xf]
  %v64 = vld [vmem:[%s1 + $0x30] sm:$0xf]
  %v65 = vld [vmem:[%s1 + $0x34] sm:$0xf]
  %v66 = vld [vmem:[%s1 + $0x38] sm:$0xf]
  %v67 = vld [vmem:[%s1 + $0x3c] sm:$0xf]
  %v68 = vld [vmem:[%s2] sm:$0x1]
  %v70 = vperm.slane %v68, 0
  %v80 = vunpack.c.l.b16 %v44
  %v81 = vunpack.c.l.b16 %v45
  %v82 = vunpack.c.l.b16 %v46
  %v83 = vunpack.c.l.b16 %v47
  %v84 = vunpack.c.l.b16 %v48
  %v85 = vunpack.c.l.b16 %v49
  %v86 = vunpack.c.l.b16 %v50
  %v87 = vunpack.c.l.b16 %v51
  %v88 = vrot.slane %v81, 7
  %vm89 = vcmask 1041409
  %v90 = vsel %vm89, %v88, %v80
  %v91 = vrot.slane %v82, 6
  %vm92 = vcmask 1042434
  %v93 = vsel %vm92, %v91, %v90
  %v94 = vrot.slane %v83, 5
  %vm95 = vcmask 1043459
  %v96 = vsel %vm95, %v94, %v93
  %v97 = vrot.slane %v84, 4
  %vm98 = vcmask 1044484
  %v99 = vsel %vm98, %v97, %v96
  %v100 = vrot.slane %v85, 3
  %vm101 = vcmask 1045509
  %v102 = vsel %vm101, %v100, %v99
  %v103 = vrot.slane %v86, 2
  %vm104 = vcmask 1046534
  %v105 = vsel %vm104, %v103, %v102
  %v106 = vrot.slane %v87, 1
  %vm107 = vcmask 1047559
  %v108 = vsel %vm107, %v106, %v105
  %v109 = vpack.c.b16 %v108, %v108
  %v127 = vunpack.c.l.b16 %v52
  %v128 = vunpack.c.l.b16 %v53
  %v129 = vunpack.c.l.b16 %v54
  %v130 = vunpack.c.l.b16 %v55
  %v131 = vunpack.c.l.b16 %v56
  %v132 = vunpack.c.l.b16 %v57
  %v133 = vunpack.c.l.b16 %v58
  %v134 = vunpack.c.l.b16 %v59
  %v135 = vunpack.c.l.b16 %v60
  %v136 = vunpack.c.l.b16 %v61
  %v137 = vunpack.c.l.b16 %v62
  %v138 = vunpack.c.l.b16 %v63
  %v139 = vunpack.c.l.b16 %v64
  %v140 = vunpack.c.l.b16 %v65
  %v141 = vunpack.c.l.b16 %v66
  %v142 = vunpack.c.l.b16 %v67
  %v143 = vpack.c.b16 %v128, %v127
  %v144 = vpack.c.b16 %v130, %v129
  %v145 = vpack.c.b16 %v132, %v131
  %v146 = vpack.c.b16 %v134, %v133
  %v147 = vpack.c.b16 %v136, %v135
  %v148 = vpack.c.b16 %v138, %v137
  %v149 = vpack.c.b16 %v140, %v139
  %v150 = vpack.c.b16 %v142, %v141
  %159 = vmatpush.bf16.msra.mxu0 %v150
  %160 = vmatpush.bf16.msra.mxu0 %v149
  %161 = vmatpush.bf16.msra.mxu0 %v148
  %162 = vmatpush.bf16.msra.mxu0 %v147
  %163 = vmatpush.bf16.msra.mxu0 %v146
  %164 = vmatpush.bf16.msra.mxu0 %v145
  %165 = vmatpush.bf16.msra.mxu0 %v144
  %166 = vmatpush.bf16.msra.mxu0 %v143
  %167 = vmatmul.bf16.gmra.mxu0 %v109
  %v168 = vpop.f32.mrf.mxu0
  %v169 = vadd.f32 %v70, %v168
  %v170 = vpop.f32.mrf.mxu0
  %171 = vdwg.mxu0
  %v172 = vmax.f32 %v169, 0.0
  %v173 = vpack.c.bf16 %v172, %v172
  %v174 = vld [vmem:[%s3] sm:$0xf]
  %v175 = vld [vmem:[%s3 + $0x4] sm:$0xf]
  %v176 = vld [vmem:[%s3 + $0x8] sm:$0xf]
  %v177 = vld [vmem:[%s3 + $0xc] sm:$0xf]
  %v178 = vld [vmem:[%s3 + $0x10] sm:$0xf]
  %v179 = vld [vmem:[%s3 + $0x14] sm:$0xf]
  %v180 = vld [vmem:[%s3 + $0x18] sm:$0xf]
  %v181 = vld [vmem:[%s3 + $0x1c] sm:$0xf]
  %v182 = vld [vmem:[%s3 + $0x20] sm:$0xf]
  %v183 = vld [vmem:[%s3 + $0x24] sm:$0xf]
  %v184 = vld [vmem:[%s3 + $0x28] sm:$0xf]
  %v185 = vld [vmem:[%s3 + $0x2c] sm:$0xf]
  %v186 = vld [vmem:[%s3 + $0x30] sm:$0xf]
  %v187 = vld [vmem:[%s3 + $0x34] sm:$0xf]
  %v188 = vld [vmem:[%s3 + $0x38] sm:$0xf]
  %v189 = vld [vmem:[%s3 + $0x3c] sm:$0xf]
  %v190 = vld [vmem:[%s4] sm:$0x1]
  %v192 = vperm.slane %v190, 0
  %v210 = vunpack.c.l.b16 %v174
  %v211 = vunpack.c.l.b16 %v175
  %v212 = vunpack.c.l.b16 %v176
  %v213 = vunpack.c.l.b16 %v177
  %v214 = vunpack.c.l.b16 %v178
  %v215 = vunpack.c.l.b16 %v179
  %v216 = vunpack.c.l.b16 %v180
  %v217 = vunpack.c.l.b16 %v181
  %v218 = vunpack.c.l.b16 %v182
  %v219 = vunpack.c.l.b16 %v183
  %v220 = vunpack.c.l.b16 %v184
  %v221 = vunpack.c.l.b16 %v185
  %v222 = vunpack.c.l.b16 %v186
  %v223 = vunpack.c.l.b16 %v187
  %v224 = vunpack.c.l.b16 %v188
  %v225 = vunpack.c.l.b16 %v189
  %v226 = vpack.c.b16 %v211, %v210
  %v227 = vpack.c.b16 %v213, %v212
  %v228 = vpack.c.b16 %v215, %v214
  %v229 = vpack.c.b16 %v217, %v216
  %v230 = vpack.c.b16 %v219, %v218
  %v231 = vpack.c.b16 %v221, %v220
  %v232 = vpack.c.b16 %v223, %v222
  %v233 = vpack.c.b16 %v225, %v224
  %242 = vmatpush.bf16.msra.mxu0 %v233
  %243 = vmatpush.bf16.msra.mxu0 %v232
  %244 = vmatpush.bf16.msra.mxu0 %v231
  %245 = vmatpush.bf16.msra.mxu0 %v230
  %246 = vmatpush.bf16.msra.mxu0 %v229
  %247 = vmatpush.bf16.msra.mxu0 %v228
  %248 = vmatpush.bf16.msra.mxu0 %v227
  %249 = vmatpush.bf16.msra.mxu0 %v226
  %250 = vmatmul.bf16.gmra.mxu0 %v173
  %v251 = vpop.f32.mrf.mxu0
  %v252 = vadd.f32 %v192, %v251
  %v253 = vpop.f32.mrf.mxu0
  %254 = vdwg.mxu0
  %255 = vst [vmem:[%s5] sm:$0xff] %v252
  // Predicated region
  $region22: #{_lambda_.25} parent=0 // pred_check
    _
  $region23: #{_lambda_.25} parent=0 // pred_check_branch
    %257 = sbr.rel (0) target = $region25
  $region24: #{_lambda_.25} parent=0 // pred_region
    _
  $region25: #{_lambda_.25} parent=0 // pred_fallthru
    _
  // Predicated region
  $region26: #{_lambda_.25} parent=0 // pred_check
    _
  $region27: #{_lambda_.25} parent=0 // pred_check_branch
    %259 = sbr.rel (0) target = $region29
  $region28: #{_lambda_.25} parent=0 // pred_region
    _
  $region29: #{_lambda_.25} parent=0 // pred_fallthru
    _

// kernel: _lambda_.24
$region0: #{_lambda_.24}
  #allocation0 [shape = 'u32[]', space=smem, size = 0x4, offset = 0x4, fixed_abs, tag = 'smem constant byte address 0x4 - core index']
  #allocation1 [shape = 'u32[72,128]{1,0:T(1,128)}', space=vmem, size = 0x9000, scoped, tag = 'internal scratch']
  %s0 = inlined_call_operand.vmem [shape: bf16[8,1792], index: 0, kind: input, shape index: {}]
  %s1 = inlined_call_operand.vmem [shape: bf16[1792,128], index: 1, kind: input, shape index: {}]
  %s2 = inlined_call_operand.vmem [shape: f32[1,128], index: 2, kind: input, shape index: {}]
  %s3 = inlined_call_operand.vmem [shape: bf16[8,128], index: 3, kind: output, shape index: {}]
  %s4 = sld [smem:[#allocation0]]
  $region22: #{_lambda_.24} parent=0
    _
  %s6 = ssub.s32 1, %s4
  %s7 = scalar_select 0, %s6, %s4
  // Predicated region
  $region2: #{_lambda_.24} parent=0 // pred_check
    _
  $region3: #{_lambda_.24} parent=0 // pred_check_branch
    %9 = sbr.rel (0) target = $region5
  $region4: #{_lambda_.24} parent=0 // pred_region
    _
  $region5: #{_lambda_.24} parent=0 // pred_fallthru
    _
  // Predicated region
  $region6: #{_lambda_.24} parent=0 // pred_check
    _
  $region7: #{_lambda_.24} parent=0 // pred_check_branch
    %11 = sbr.rel (0) target = $region9
  $region8: #{_lambda_.24} parent=0 // pred_region
    _
  $region9: #{_lambda_.24} parent=0 // pred_fallthru
    _
  // Predicated region
  $region10: #{_lambda_.24} parent=0 // pred_check
    _
  $region11: #{_lambda_.24} parent=0 // pred_check_branch
    %13 = sbr.rel (0) target = $region13
  $region12: #{_lambda_.24} parent=0 // pred_region
    _
  $region13: #{_lambda_.24} parent=0 // pred_fallthru
    _
  %v14 = vld [vmem:[%s0] sm:$0xff]
  %v15 = vld [vmem:[%s0 + $0x8] sm:$0xff]
  %v16 = vld [vmem:[%s0 + $0x10] sm:$0xff]
  %v17 = vld [vmem:[%s0 + $0x18] sm:$0xff]
  %v18 = vld [vmem:[%s0 + $0x20] sm:$0xff]
  %v19 = vld [vmem:[%s0 + $0x28] sm:$0xff]
  %v20 = vld [vmem:[%s0 + $0x30] sm:$0xff]
  %v21 = vld [vmem:[%s1] sm:$0xf]
  %v22 = vld [vmem:[%s1 + $0x4] sm:$0xf]
  %v23 = vld [vmem:[%s1 + $0x8] sm:$0xf]
  %v24 = vld [vmem:[%s1 + $0xc] sm:$0xf]
  %v25 = vld [vmem:[%s1 + $0x10] sm:$0xf]
  %v26 = vld [vmem:[%s1 + $0x14] sm:$0xf]
  %v27 = vld [vmem:[%s1 + $0x18] sm:$0xf]
  %v28 = vld [vmem:[%s1 + $0x1c] sm:$0xf]
  %v29 = vld [vmem:[%s1 + $0x20] sm:$0xf]
  %v30 = vld [vmem:[%s1 + $0x24] sm:$0xf]
  %v31 = vld [vmem:[%s1 + $0x28] sm:$0xf]
  %v32 = vld [vmem:[%s1 + $0x2c] sm:$0xf]
  %v33 = vld [vmem:[%s1 + $0x30] sm:$0xf]
  %v34 = vld [vmem:[%s1 + $0x34] sm:$0xf]
  %v35 = vld [vmem:[%s1 + $0x38] sm:$0xf]
  %v36 = vld [vmem:[%s1 + $0x3c] sm:$0xf]
  %v37 = vld [vmem:[%s1 + $0x40] sm:$0xf]
  %v38 = vld [vmem:[%s1 + $0x44] sm:$0xf]
  %v39 = vld [vmem:[%s1 + $0x48] sm:$0xf]
  %v40 = vld [vmem:[%s1 + $0x4c] sm:$0xf]
  %v41 = vld [vmem:[%s1 + $0x50] sm:$0xf]
  %v42 = vld [vmem:[%s1 + $0x54] sm:$0xf]
  %v43 = vld [vmem:[%s1 + $0x58] sm:$0xf]
  %v44 = vld [vmem:[%s1 + $0x5c] sm:$0xf]
  %v45 = vld [vmem:[%s1 + $0x60] sm:$0xf]
  %v46 = vld [vmem:[%s1 + $0x64] sm:$0xf]
  %v47 = vld [vmem:[%s1 + $0x68] sm:$0xf]
  %v48 = vld [vmem:[%s1 + $0x6c] sm:$0xf]
  %v49 = vld [vmem:[%s1 + $0x70] sm:$0xf]
  %v50 = vld [vmem:[%s1 + $0x74] sm:$0xf]
  %v51 = vld [vmem:[%s1 + $0x78] sm:$0xf]
  %v52 = vld [vmem:[%s1 + $0x7c] sm:$0xf]
  %v53 = vld [vmem:[%s1 + $0x80] sm:$0xf]
  %v54 = vld [vmem:[%s1 + $0x84] sm:$0xf]
  %v55 = vld [vmem:[%s1 + $0x88] sm:$0xf]
  %v56 = vld [vmem:[%s1 + $0x8c] sm:$0xf]
  %v57 = vld [vmem:[%s1 + $0x90] sm:$0xf]
  %v58 = vld [vmem:[%s1 + $0x94] sm:$0xf]
  %v59 = vld [vmem:[%s1 + $0x98] sm:$0xf]
  %v60 = vld [vmem:[%s1 + $0x9c] sm:$0xf]
  %v61 = vld [vmem:[%s1 + $0xa0] sm:$0xf]
  %v62 = vld [vmem:[%s1 + $0xa4] sm:$0xf]
  %v63 = vld [vmem:[%s1 + $0xa8] sm:$0xf]
  %v64 = vld [vmem:[%s1 + $0xac] sm:$0xf]
  %v65 = vld [vmem:[%s1 + $0xb0] sm:$0xf]
  %v66 = vld [vmem:[%s1 + $0xb4] sm:$0xf]
  %v67 = vld [vmem:[%s1 + $0xb8] sm:$0xf]
  %v68 = vld [vmem:[%s1 + $0xbc] sm:$0xf]
  %v69 = vld [vmem:[%s1 + $0xc0] sm:$0xf]
  %v70 = vld [vmem:[%s1 + $0xc4] sm:$0xf]
  %v71 = vld [vmem:[%s1 + $0xc8] sm:$0xf]
  %v72 = vld [vmem:[%s1 + $0xcc] sm:$0xf]
  %v73 = vld [vmem:[%s1 + $0xd0] sm:$0xf]
  %v74 = vld [vmem:[%s1 + $0xd4] sm:$0xf]
  %v75 = vld [vmem:[%s1 + $0xd8] sm:$0xf]
  %v76 = vld [vmem:[%s1 + $0xdc] sm:$0xf]
  %v77 = vld [vmem:[%s1 + $0xe0] sm:$0xf]
  %v78 = vld [vmem:[%s1 + $0xe4] sm:$0xf]
  %v79 = vld [vmem:[%s1 + $0xe8] sm:$0xf]
  %v80 = vld [vmem:[%s1 + $0xec] sm:$0xf]
  %v81 = vld [vmem:[%s1 + $0xf0] sm:$0xf]
  %v82 = vld [vmem:[%s1 + $0xf4] sm:$0xf]
  %v83 = vld [vmem:[%s1 + $0xf8] sm:$0xf]
  %v84 = vld [vmem:[%s1 + $0xfc] sm:$0xf]
  %v85 = vld [vmem:[%s1 + $0x100] sm:$0xf]
  %v86 = vld [vmem:[%s1 + $0x104] sm:$0xf]
  %v87 = vld [vmem:[%s1 + $0x108] sm:$0xf]
  %v88 = vld [vmem:[%s1 + $0x10c] sm:$0xf]
  %v89 = vld [vmem:[%s1 + $0x110] sm:$0xf]
  %v90 = vld [vmem:[%s1 + $0x114] sm:$0xf]
  %v91 = vld [vmem:[%s1 + $0x118] sm:$0xf]
  %v92 = vld [vmem:[%s1 + $0x11c] sm:$0xf]
  %v93 = vld [vmem:[%s1 + $0x120] sm:$0xf]
  %v94 = vld [vmem:[%s1 + $0x124] sm:$0xf]
  %v95 = vld [vmem:[%s1 + $0x128] sm:$0xf]
  %v96 = vld [vmem:[%s1 + $0x12c] sm:$0xf]
  %v97 = vld [vmem:[%s1 + $0x130] sm:$0xf]
  %v98 = vld [vmem:[%s1 + $0x134] sm:$0xf]
  %v99 = vld [vmem:[%s1 + $0x138] sm:$0xf]
  %v100 = vld [vmem:[%s1 + $0x13c] sm:$0xf]
  %v101 = vld [vmem:[%s1 + $0x140] sm:$0xf]
  %v102 = vld [vmem:[%s1 + $0x144] sm:$0xf]
  %v103 = vld [vmem:[%s1 + $0x148] sm:$0xf]
  %v104 = vld [vmem:[%s1 + $0x14c] sm:$0xf]
  %v105 = vld [vmem:[%s1 + $0x150] sm:$0xf]
  %v106 = vld [vmem:[%s1 + $0x154] sm:$0xf]
  %v107 = vld [vmem:[%s1 + $0x158] sm:$0xf]
  %v108 = vld [vmem:[%s1 + $0x15c] sm:$0xf]
  %v109 = vld [vmem:[%s1 + $0x160] sm:$0xf]
  %v110 = vld [vmem:[%s1 + $0x164] sm:$0xf]
  %v111 = vld [vmem:[%s1 + $0x168] sm:$0xf]
  %v112 = vld [vmem:[%s1 + $0x16c] sm:$0xf]
  %v113 = vld [vmem:[%s1 + $0x170] sm:$0xf]
  %v114 = vld [vmem:[%s1 + $0x174] sm:$0xf]
  %v115 = vld [vmem:[%s1 + $0x178] sm:$0xf]
  %v116 = vld [vmem:[%s1 + $0x17c] sm:$0xf]
  %v117 = vld [vmem:[%s1 + $0x180] sm:$0xf]
  %v118 = vld [vmem:[%s1 + $0x184] sm:$0xf]
  %v119 = vld [vmem:[%s1 + $0x188] sm:$0xf]
  %v120 = vld [vmem:[%s1 + $0x18c] sm:$0xf]
  %v121 = vld [vmem:[%s1 + $0x190] sm:$0xf]
  %v122 = vld [vmem:[%s1 + $0x194] sm:$0xf]
  %v123 = vld [vmem:[%s1 + $0x198] sm:$0xf]
  %v124 = vld [vmem:[%s1 + $0x19c] sm:$0xf]
  %v125 = vld [vmem:[%s1 + $0x1a0] sm:$0xf]
  %v126 = vld [vmem:[%s1 + $0x1a4] sm:$0xf]
  %v127 = vld [vmem:[%s1 + $0x1a8] sm:$0xf]
  %v128 = vld [vmem:[%s1 + $0x1ac] sm:$0xf]
  %v129 = vld [vmem:[%s1 + $0x1b0] sm:$0xf]
  %v130 = vld [vmem:[%s1 + $0x1b4] sm:$0xf]
  %v131 = vld [vmem:[%s1 + $0x1b8] sm:$0xf]
  %v132 = vld [vmem:[%s1 + $0x1bc] sm:$0xf]
  %v133 = vld [vmem:[%s1 + $0x1c0] sm:$0xf]
  %v134 = vld [vmem:[%s1 + $0x1c4] sm:$0xf]
  %v135 = vld [vmem:[%s1 + $0x1c8] sm:$0xf]
  %v136 = vld [vmem:[%s1 + $0x1cc] sm:$0xf]
  %v137 = vld [vmem:[%s1 + $0x1d0] sm:$0xf]
  %v138 = vld [vmem:[%s1 + $0x1d4] sm:$0xf]
  %v139 = vld [vmem:[%s1 + $0x1d8] sm:$0xf]
  %v140 = vld [vmem:[%s1 + $0x1dc] sm:$0xf]
  %v141 = vld [vmem:[%s1 + $0x1e0] sm:$0xf]
  %v142 = vld [vmem:[%s1 + $0x1e4] sm:$0xf]
  %v143 = vld [vmem:[%s1 + $0x1e8] sm:$0xf]
  %v144 = vld [vmem:[%s1 + $0x1ec] sm:$0xf]
  %v145 = vld [vmem:[%s1 + $0x1f0] sm:$0xf]
  %v146 = vld [vmem:[%s1 + $0x1f4] sm:$0xf]
  %v147 = vld [vmem:[%s1 + $0x1f8] sm:$0xf]
  %v148 = vld [vmem:[%s1 + $0x1fc] sm:$0xf]
  %v149 = vld [vmem:[%s1 + $0x200] sm:$0xf]
  %v150 = vld [vmem:[%s1 + $0x204] sm:$0xf]
  %v151 = vld [vmem:[%s1 + $0x208] sm:$0xf]
  %v152 = vld [vmem:[%s1 + $0x20c] sm:$0xf]
  %v153 = vld [vmem:[%s1 + $0x210] sm:$0xf]
  %v154 = vld [vmem:[%s1 + $0x214] sm:$0xf]
  %v155 = vld [vmem:[%s1 + $0x218] sm:$0xf]
  %v156 = vld [vmem:[%s1 + $0x21c] sm:$0xf]
  %v157 = vld [vmem:[%s1 + $0x220] sm:$0xf]
  %v158 = vld [vmem:[%s1 + $0x224] sm:$0xf]
  %v159 = vld [vmem:[%s1 + $0x228] sm:$0xf]
  %v160 = vld [vmem:[%s1 + $0x22c] sm:$0xf]
  %v161 = vld [vmem:[%s1 + $0x230] sm:$0xf]
  %v162 = vld [vmem:[%s1 + $0x234] sm:$0xf]
  %v163 = vld [vmem:[%s1 + $0x238] sm:$0xf]
  %v164 = vld [vmem:[%s1 + $0x23c] sm:$0xf]
  %v165 = vld [vmem:[%s1 + $0x240] sm:$0xf]
  %v166 = vld [vmem:[%s1 + $0x244] sm:$0xf]
  %v167 = vld [vmem:[%s1 + $0x248] sm:$0xf]
  %v168 = vld [vmem:[%s1 + $0x24c] sm:$0xf]
  %v169 = vld [vmem:[%s1 + $0x250] sm:$0xf]
  %v170 = vld [vmem:[%s1 + $0x254] sm:$0xf]
  %v171 = vld [vmem:[%s1 + $0x258] sm:$0xf]
  %v172 = vld [vmem:[%s1 + $0x25c] sm:$0xf]
  %v173 = vld [vmem:[%s1 + $0x260] sm:$0xf]
  %v174 = vld [vmem:[%s1 + $0x264] sm:$0xf]
  %v175 = vld [vmem:[%s1 + $0x268] sm:$0xf]
  %v176 = vld [vmem:[%s1 + $0x26c] sm:$0xf]
  %v177 = vld [vmem:[%s1 + $0x270] sm:$0xf]
  %v178 = vld [vmem:[%s1 + $0x274] sm:$0xf]
  %v179 = vld [vmem:[%s1 + $0x278] sm:$0xf]
  %v180 = vld [vmem:[%s1 + $0x27c] sm:$0xf]
  %v181 = vld [vmem:[%s1 + $0x280] sm:$0xf]
  %v182 = vld [vmem:[%s1 + $0x284] sm:$0xf]
  %v183 = vld [vmem:[%s1 + $0x288] sm:$0xf]
  %v184 = vld [vmem:[%s1 + $0x28c] sm:$0xf]
  %v185 = vld [vmem:[%s1 + $0x290] sm:$0xf]
  %v186 = vld [vmem:[%s1 + $0x294] sm:$0xf]
  %v187 = vld [vmem:[%s1 + $0x298] sm:$0xf]
  %v188 = vld [vmem:[%s1 + $0x29c] sm:$0xf]
  %v189 = vld [vmem:[%s1 + $0x2a0] sm:$0xf]
  %v190 = vld [vmem:[%s1 + $0x2a4] sm:$0xf]
  %v191 = vld [vmem:[%s1 + $0x2a8] sm:$0xf]
  %v192 = vld [vmem:[%s1 + $0x2ac] sm:$0xf]
  %v193 = vld [vmem:[%s1 + $0x2b0] sm:$0xf]
  %v194 = vld [vmem:[%s1 + $0x2b4] sm:$0xf]
  %v195 = vld [vmem:[%s1 + $0x2b8] sm:$0xf]
  %v196 = vld [vmem:[%s1 + $0x2bc] sm:$0xf]
  %v197 = vld [vmem:[%s1 + $0x2c0] sm:$0xf]
  %v198 = vld [vmem:[%s1 + $0x2c4] sm:$0xf]
  %v199 = vld [vmem:[%s1 + $0x2c8] sm:$0xf]
  %v200 = vld [vmem:[%s1 + $0x2cc] sm:$0xf]
  %v201 = vld [vmem:[%s1 + $0x2d0] sm:$0xf]
  %v202 = vld [vmem:[%s1 + $0x2d4] sm:$0xf]
  %v203 = vld [vmem:[%s1 + $0x2d8] sm:$0xf]
  %v204 = vld [vmem:[%s1 + $0x2dc] sm:$0xf]
  %v205 = vld [vmem:[%s1 + $0x2e0] sm:$0xf]
  %v206 = vld [vmem:[%s1 + $0x2e4] sm:$0xf]
  %v207 = vld [vmem:[%s1 + $0x2e8] sm:$0xf]
  %v208 = vld [vmem:[%s1 + $0x2ec] sm:$0xf]
  %v209 = vld [vmem:[%s1 + $0x2f0] sm:$0xf]
  %v210 = vld [vmem:[%s1 + $0x2f4] sm:$0xf]
  %v211 = vld [vmem:[%s1 + $0x2f8] sm:$0xf]
  %v212 = vld [vmem:[%s1 + $0x2fc] sm:$0xf]
  %v213 = vld [vmem:[%s1 + $0x300] sm:$0xf]
  %v214 = vld [vmem:[%s1 + $0x304] sm:$0xf]
  %v215 = vld [vmem:[%s1 + $0x308] sm:$0xf]
  %v216 = vld [vmem:[%s1 + $0x30c] sm:$0xf]
  %v217 = vld [vmem:[%s1 + $0x310] sm:$0xf]
  %v218 = vld [vmem:[%s1 + $0x314] sm:$0xf]
  %v219 = vld [vmem:[%s1 + $0x318] sm:$0xf]
  %v220 = vld [vmem:[%s1 + $0x31c] sm:$0xf]
  %v221 = vld [vmem:[%s1 + $0x320] sm:$0xf]
  %v222 = vld [vmem:[%s1 + $0x324] sm:$0xf]
  %v223 = vld [vmem:[%s1 + $0x328] sm:$0xf]
  %v224 = vld [vmem:[%s1 + $0x32c] sm:$0xf]
  %v225 = vld [vmem:[%s1 + $0x330] sm:$0xf]
  %v226 = vld [vmem:[%s1 + $0x334] sm:$0xf]
  %v227 = vld [vmem:[%s1 + $0x338] sm:$0xf]
  %v228 = vld [vmem:[%s1 + $0x33c] sm:$0xf]
  %v229 = vld [vmem:[%s1 + $0x340] sm:$0xf]
  %v230 = vld [vmem:[%s1 + $0x344] sm:$0xf]
  %v231 = vld [vmem:[%s1 + $0x348] sm:$0xf]
  %v232 = vld [vmem:[%s1 + $0x34c] sm:$0xf]
  %v233 = vld [vmem:[%s1 + $0x350] sm:$0xf]
  %v234 = vld [vmem:[%s1 + $0x354] sm:$0xf]
  %v235 = vld [vmem:[%s1 + $0x358] sm:$0xf]
  %v236 = vld [vmem:[%s1 + $0x35c] sm:$0xf]
  %v237 = vld [vmem:[%s1 + $0x360] sm:$0xf]
  %v238 = vld [vmem:[%s1 + $0x364] sm:$0xf]
  %v239 = vld [vmem:[%s1 + $0x368] sm:$0xf]
  %v240 = vld [vmem:[%s1 + $0x36c] sm:$0xf]
  %v241 = vld [vmem:[%s1 + $0x370] sm:$0xf]
  %v242 = vld [vmem:[%s1 + $0x374] sm:$0xf]
  %v243 = vld [vmem:[%s1 + $0x378] sm:$0xf]
  %v244 = vld [vmem:[%s1 + $0x37c] sm:$0xf]
  %v245 = vld [vmem:[%s2] sm:$0x1]
  %v247 = vperm.slane %v245, 0
  %v256 = vunpack.c.l.b16 %v14
  %v257 = vunpack.c.h.b16 %v14
  %v258 = vunpack.c.l.b16 %v15
  %v259 = vunpack.c.h.b16 %v15
  %v260 = vunpack.c.l.b16 %v16
  %v261 = vunpack.c.h.b16 %v16
  %v262 = vunpack.c.l.b16 %v17
  %v263 = vunpack.c.h.b16 %v17
  %v264 = vunpack.c.l.b16 %v18
  %v265 = vunpack.c.h.b16 %v18
  %v266 = vunpack.c.l.b16 %v19
  %v267 = vunpack.c.h.b16 %v19
  %v268 = vunpack.c.l.b16 %v20
  %v269 = vunpack.c.h.b16 %v20
  %v270 = vpack.c.b16 %v256, %v256
  %v271 = vpack.c.b16 %v257, %v257
  %v272 = vpack.c.b16 %v258, %v258
  %v273 = vpack.c.b16 %v259, %v259
  %v274 = vpack.c.b16 %v260, %v260
  %v275 = vpack.c.b16 %v261, %v261
  %v276 = vpack.c.b16 %v262, %v262
  %v277 = vpack.c.b16 %v263, %v263
  %v278 = vpack.c.b16 %v264, %v264
  %v279 = vpack.c.b16 %v265, %v265
  %v280 = vpack.c.b16 %v266, %v266
  %v281 = vpack.c.b16 %v267, %v267
  %v282 = vpack.c.b16 %v268, %v268
  %v283 = vpack.c.b16 %v269, %v269
  %v522 = vunpack.c.l.b16 %v21
  %v523 = vunpack.c.l.b16 %v22
  %v524 = vunpack.c.l.b16 %v23
  %v525 = vunpack.c.l.b16 %v24
  %v526 = vunpack.c.l.b16 %v25
  %v527 = vunpack.c.l.b16 %v26
  %v528 = vunpack.c.l.b16 %v27
  %v529 = vunpack.c.l.b16 %v28
  %v530 = vunpack.c.l.b16 %v29
  %v531 = vunpack.c.l.b16 %v30
  %v532 = vunpack.c.l.b16 %v31
  %v533 = vunpack.c.l.b16 %v32
  %v534 = vunpack.c.l.b16 %v33
  %v535 = vunpack.c.l.b16 %v34
  %v536 = vunpack.c.l.b16 %v35
  %v537 = vunpack.c.l.b16 %v36
  %v538 = vunpack.c.l.b16 %v37
  %v539 = vunpack.c.l.b16 %v38
  %v540 = vunpack.c.l.b16 %v39
  %v541 = vunpack.c.l.b16 %v40
  %v542 = vunpack.c.l.b16 %v41
  %v543 = vunpack.c.l.b16 %v42
  %v544 = vunpack.c.l.b16 %v43
  %v545 = vunpack.c.l.b16 %v44
  %v546 = vunpack.c.l.b16 %v45
  %v547 = vunpack.c.l.b16 %v46
  %v548 = vunpack.c.l.b16 %v47
  %v549 = vunpack.c.l.b16 %v48
  %v550 = vunpack.c.l.b16 %v49
  %v551 = vunpack.c.l.b16 %v50
  %v552 = vunpack.c.l.b16 %v51
  %v553 = vunpack.c.l.b16 %v52
  %v554 = vunpack.c.l.b16 %v53
  %v555 = vunpack.c.l.b16 %v54
  %v556 = vunpack.c.l.b16 %v55
  %v557 = vunpack.c.l.b16 %v56
  %v558 = vunpack.c.l.b16 %v57
  %v559 = vunpack.c.l.b16 %v58
  %v560 = vunpack.c.l.b16 %v59
  %v561 = vunpack.c.l.b16 %v60
  %v562 = vunpack.c.l.b16 %v61
  %v563 = vunpack.c.l.b16 %v62
  %v564 = vunpack.c.l.b16 %v63
  %v565 = vunpack.c.l.b16 %v64
  %v566 = vunpack.c.l.b16 %v65
  %v567 = vunpack.c.l.b16 %v66
  %v568 = vunpack.c.l.b16 %v67
  %v569 = vunpack.c.l.b16 %v68
  %v570 = vunpack.c.l.b16 %v69
  %v571 = vunpack.c.l.b16 %v70
  %v572 = vunpack.c.l.b16 %v71
  %v573 = vunpack.c.l.b16 %v72
  %v574 = vunpack.c.l.b16 %v73
  %v575 = vunpack.c.l.b16 %v74
  %v576 = vunpack.c.l.b16 %v75
  %v577 = vunpack.c.l.b16 %v76
  %v578 = vunpack.c.l.b16 %v77
  %v579 = vunpack.c.l.b16 %v78
  %v580 = vunpack.c.l.b16 %v79
  %v581 = vunpack.c.l.b16 %v80
  %v582 = vunpack.c.l.b16 %v81
  %v583 = vunpack.c.l.b16 %v82
  %v584 = vunpack.c.l.b16 %v83
  %v585 = vunpack.c.l.b16 %v84
  %v586 = vunpack.c.l.b16 %v85
  %v587 = vunpack.c.l.b16 %v86
  %v588 = vunpack.c.l.b16 %v87
  %v589 = vunpack.c.l.b16 %v88
  %v590 = vunpack.c.l.b16 %v89
  %v591 = vunpack.c.l.b16 %v90
  %v592 = vunpack.c.l.b16 %v91
  %v593 = vunpack.c.l.b16 %v92
  %v594 = vunpack.c.l.b16 %v93
  %v595 = vunpack.c.l.b16 %v94
  %v596 = vunpack.c.l.b16 %v95
  %v597 = vunpack.c.l.b16 %v96
  %v598 = vunpack.c.l.b16 %v97
  %v599 = vunpack.c.l.b16 %v98
  %v600 = vunpack.c.l.b16 %v99
  %v601 = vunpack.c.l.b16 %v100
  %v602 = vunpack.c.l.b16 %v101
  %v603 = vunpack.c.l.b16 %v102
  %v604 = vunpack.c.l.b16 %v103
  %v605 = vunpack.c.l.b16 %v104
  %v606 = vunpack.c.l.b16 %v105
  %v607 = vunpack.c.l.b16 %v106
  %v608 = vunpack.c.l.b16 %v107
  %v609 = vunpack.c.l.b16 %v108
  %v610 = vunpack.c.l.b16 %v109
  %v611 = vunpack.c.l.b16 %v110
  %v612 = vunpack.c.l.b16 %v111
  %v613 = vunpack.c.l.b16 %v112
  %v614 = vunpack.c.l.b16 %v113
  %v615 = vunpack.c.l.b16 %v114
  %v616 = vunpack.c.l.b16 %v115
  %v617 = vunpack.c.l.b16 %v116
  %v618 = vunpack.c.l.b16 %v117
  %v619 = vunpack.c.l.b16 %v118
  %v620 = vunpack.c.l.b16 %v119
  %v621 = vunpack.c.l.b16 %v120
  %v622 = vunpack.c.l.b16 %v121
  %v623 = vunpack.c.l.b16 %v122
  %v624 = vunpack.c.l.b16 %v123
  %v625 = vunpack.c.l.b16 %v124
  %v626 = vunpack.c.l.b16 %v125
  %v627 = vunpack.c.l.b16 %v126
  %v628 = vunpack.c.l.b16 %v127
  %v629 = vunpack.c.l.b16 %v128
  %v630 = vunpack.c.l.b16 %v129
  %v631 = vunpack.c.l.b16 %v130
  %v632 = vunpack.c.l.b16 %v131
  %v633 = vunpack.c.l.b16 %v132
  %v634 = vunpack.c.l.b16 %v133
  %v635 = vunpack.c.l.b16 %v134
  %v636 = vunpack.c.l.b16 %v135
  %v637 = vunpack.c.l.b16 %v136
  %v638 = vunpack.c.l.b16 %v137
  %v639 = vunpack.c.l.b16 %v138
  %v640 = vunpack.c.l.b16 %v139
  %v641 = vunpack.c.l.b16 %v140
  %v642 = vunpack.c.l.b16 %v141
  %v643 = vunpack.c.l.b16 %v142
  %v644 = vunpack.c.l.b16 %v143
  %v645 = vunpack.c.l.b16 %v144
  %v646 = vunpack.c.l.b16 %v145
  %v647 = vunpack.c.l.b16 %v146
  %v648 = vunpack.c.l.b16 %v147
  %v649 = vunpack.c.l.b16 %v148
  %v650 = vunpack.c.l.b16 %v149
  %v651 = vunpack.c.l.b16 %v150
  %v652 = vunpack.c.l.b16 %v151
  %v653 = vunpack.c.l.b16 %v152
  %v654 = vunpack.c.l.b16 %v153
  %v655 = vunpack.c.l.b16 %v154
  %v656 = vunpack.c.l.b16 %v155
  %v657 = vunpack.c.l.b16 %v156
  %v658 = vunpack.c.l.b16 %v157
  %v659 = vunpack.c.l.b16 %v158
  %v660 = vunpack.c.l.b16 %v159
  %v661 = vunpack.c.l.b16 %v160
  %v662 = vunpack.c.l.b16 %v161
  %v663 = vunpack.c.l.b16 %v162
  %v664 = vunpack.c.l.b16 %v163
  %v665 = vunpack.c.l.b16 %v164
  %v666 = vunpack.c.l.b16 %v165
  %v667 = vunpack.c.l.b16 %v166
  %v668 = vunpack.c.l.b16 %v167
  %v669 = vunpack.c.l.b16 %v168
  %v670 = vunpack.c.l.b16 %v169
  %v671 = vunpack.c.l.b16 %v170
  %v672 = vunpack.c.l.b16 %v171
  %v673 = vunpack.c.l.b16 %v172
  %v674 = vunpack.c.l.b16 %v173
  %v675 = vunpack.c.l.b16 %v174
  %v676 = vunpack.c.l.b16 %v175
  %v677 = vunpack.c.l.b16 %v176
  %v678 = vunpack.c.l.b16 %v177
  %v679 = vunpack.c.l.b16 %v178
  %v680 = vunpack.c.l.b16 %v179
  %v681 = vunpack.c.l.b16 %v180
  %v682 = vunpack.c.l.b16 %v181
  %v683 = vunpack.c.l.b16 %v182
  %v684 = vunpack.c.l.b16 %v183
  %v685 = vunpack.c.l.b16 %v184
  %v686 = vunpack.c.l.b16 %v185
  %v687 = vunpack.c.l.b16 %v186
  %v688 = vunpack.c.l.b16 %v187
  %v689 = vunpack.c.l.b16 %v188
  %v690 = vunpack.c.l.b16 %v189
  %v691 = vunpack.c.l.b16 %v190
  %v692 = vunpack.c.l.b16 %v191
  %v693 = vunpack.c.l.b16 %v192
  %v694 = vunpack.c.l.b16 %v193
  %v695 = vunpack.c.l.b16 %v194
  %v696 = vunpack.c.l.b16 %v195
  %v697 = vunpack.c.l.b16 %v196
  %v698 = vunpack.c.l.b16 %v197
  %v699 = vunpack.c.l.b16 %v198
  %v700 = vunpack.c.l.b16 %v199
  %v701 = vunpack.c.l.b16 %v200
  %v702 = vunpack.c.l.b16 %v201
  %v703 = vunpack.c.l.b16 %v202
  %v704 = vunpack.c.l.b16 %v203
  %v705 = vunpack.c.l.b16 %v204
  %v706 = vunpack.c.l.b16 %v205
  %v707 = vunpack.c.l.b16 %v206
  %v708 = vunpack.c.l.b16 %v207
  %v709 = vunpack.c.l.b16 %v208
  %v710 = vunpack.c.l.b16 %v209
  %v711 = vunpack.c.l.b16 %v210
  %v712 = vunpack.c.l.b16 %v211
  %v713 = vunpack.c.l.b16 %v212
  %v714 = vunpack.c.l.b16 %v213
  %v715 = vunpack.c.l.b16 %v214
  %v716 = vunpack.c.l.b16 %v215
  %v717 = vunpack.c.l.b16 %v216
  %v718 = vunpack.c.l.b16 %v217
  %v719 = vunpack.c.l.b16 %v218
  %v720 = vunpack.c.l.b16 %v219
  %v721 = vunpack.c.l.b16 %v220
  %v722 = vunpack.c.l.b16 %v221
  %v723 = vunpack.c.l.b16 %v222
  %v724 = vunpack.c.l.b16 %v223
  %v725 = vunpack.c.l.b16 %v224
  %v726 = vunpack.c.l.b16 %v225
  %v727 = vunpack.c.l.b16 %v226
  %v728 = vunpack.c.l.b16 %v227
  %v729 = vunpack.c.l.b16 %v228
  %v730 = vunpack.c.l.b16 %v229
  %v731 = vunpack.c.l.b16 %v230
  %v732 = vunpack.c.l.b16 %v231
  %v733 = vunpack.c.l.b16 %v232
  %v734 = vunpack.c.l.b16 %v233
  %v735 = vunpack.c.l.b16 %v234
  %v736 = vunpack.c.l.b16 %v235
  %v737 = vunpack.c.l.b16 %v236
  %v738 = vunpack.c.l.b16 %v237
  %v739 = vunpack.c.l.b16 %v238
  %v740 = vunpack.c.l.b16 %v239
  %v741 = vunpack.c.l.b16 %v240
  %v742 = vunpack.c.l.b16 %v241
  %v743 = vunpack.c.l.b16 %v242
  %v744 = vunpack.c.l.b16 %v243
  %v745 = vunpack.c.l.b16 %v244
  %v746 = vpack.c.b16 %v523, %v522
  %v747 = vpack.c.b16 %v525, %v524
  %v748 = vpack.c.b16 %v527, %v526
  %v749 = vpack.c.b16 %v529, %v528
  %v750 = vpack.c.b16 %v531, %v530
  %v751 = vpack.c.b16 %v533, %v532
  %v752 = vpack.c.b16 %v535, %v534
  %v753 = vpack.c.b16 %v537, %v536
  %v754 = vpack.c.b16 %v539, %v538
  %v755 = vpack.c.b16 %v541, %v540
  %v756 = vpack.c.b16 %v543, %v542
  %v757 = vpack.c.b16 %v545, %v544
  %v758 = vpack.c.b16 %v547, %v546
  %v759 = vpack.c.b16 %v549, %v548
  %v760 = vpack.c.b16 %v551, %v550
  %v761 = vpack.c.b16 %v553, %v552
  %v762 = vpack.c.b16 %v555, %v554
  %v763 = vpack.c.b16 %v557, %v556
  %v764 = vpack.c.b16 %v559, %v558
  %v765 = vpack.c.b16 %v561, %v560
  %v766 = vpack.c.b16 %v563, %v562
  %v767 = vpack.c.b16 %v565, %v564
  %v768 = vpack.c.b16 %v567, %v566
  %v769 = vpack.c.b16 %v569, %v568
  %v770 = vpack.c.b16 %v571, %v570
  %v771 = vpack.c.b16 %v573, %v572
  %v772 = vpack.c.b16 %v575, %v574
  %v773 = vpack.c.b16 %v577, %v576
  %v774 = vpack.c.b16 %v579, %v578
  %v775 = vpack.c.b16 %v581, %v580
  %v776 = vpack.c.b16 %v583, %v582
  %v777 = vpack.c.b16 %v585, %v584
  %v778 = vpack.c.b16 %v587, %v586
  %v779 = vpack.c.b16 %v589, %v588
  %v780 = vpack.c.b16 %v591, %v590
  %v781 = vpack.c.b16 %v593, %v592
  %v782 = vpack.c.b16 %v595, %v594
  %v783 = vpack.c.b16 %v597, %v596
  %v784 = vpack.c.b16 %v599, %v598
  %v785 = vpack.c.b16 %v601, %v600
  %v786 = vpack.c.b16 %v603, %v602
  %v787 = vpack.c.b16 %v605, %v604
  %v788 = vpack.c.b16 %v607, %v606
  %v789 = vpack.c.b16 %v609, %v608
  %v790 = vpack.c.b16 %v611, %v610
  %v791 = vpack.c.b16 %v613, %v612
  %v792 = vpack.c.b16 %v615, %v614
  %v793 = vpack.c.b16 %v617, %v616
  %v794 = vpack.c.b16 %v619, %v618
  %v795 = vpack.c.b16 %v621, %v620
  %v796 = vpack.c.b16 %v623, %v622
  %v797 = vpack.c.b16 %v625, %v624
  %v798 = vpack.c.b16 %v627, %v626
  %v799 = vpack.c.b16 %v629, %v628
  %v800 = vpack.c.b16 %v631, %v630
  %v801 = vpack.c.b16 %v633, %v632
  %v802 = vpack.c.b16 %v635, %v634
  %v803 = vpack.c.b16 %v637, %v636
  %v804 = vpack.c.b16 %v639, %v638
  %v805 = vpack.c.b16 %v641, %v640
  %v806 = vpack.c.b16 %v643, %v642
  %v807 = vpack.c.b16 %v645, %v644
  %v808 = vpack.c.b16 %v647, %v646
  %v809 = vpack.c.b16 %v649, %v648
  %v810 = vpack.c.b16 %v651, %v650
  %v811 = vpack.c.b16 %v653, %v652
  %v812 = vpack.c.b16 %v655, %v654
  %v813 = vpack.c.b16 %v657, %v656
  %v814 = vpack.c.b16 %v659, %v658
  %v815 = vpack.c.b16 %v661, %v660
  %v816 = vpack.c.b16 %v663, %v662
  %v817 = vpack.c.b16 %v665, %v664
  %v818 = vpack.c.b16 %v667, %v666
  %v819 = vpack.c.b16 %v669, %v668
  %v820 = vpack.c.b16 %v671, %v670
  %v821 = vpack.c.b16 %v673, %v672
  %v822 = vpack.c.b16 %v675, %v674
  %v823 = vpack.c.b16 %v677, %v676
  %v824 = vpack.c.b16 %v679, %v678
  %v825 = vpack.c.b16 %v681, %v680
  %v826 = vpack.c.b16 %v683, %v682
  %v827 = vpack.c.b16 %v685, %v684
  %v828 = vpack.c.b16 %v687, %v686
  %v829 = vpack.c.b16 %v689, %v688
  %v830 = vpack.c.b16 %v691, %v690
  %v831 = vpack.c.b16 %v693, %v692
  %v832 = vpack.c.b16 %v695, %v694
  %v833 = vpack.c.b16 %v697, %v696
  %v834 = vpack.c.b16 %v699, %v698
  %v835 = vpack.c.b16 %v701, %v700
  %v836 = vpack.c.b16 %v703, %v702
  %v837 = vpack.c.b16 %v705, %v704
  %v838 = vpack.c.b16 %v707, %v706
  %v839 = vpack.c.b16 %v709, %v708
  %v840 = vpack.c.b16 %v711, %v710
  %v841 = vpack.c.b16 %v713, %v712
  %v842 = vpack.c.b16 %v715, %v714
  %v843 = vpack.c.b16 %v717, %v716
  %v844 = vpack.c.b16 %v719, %v718
  %v845 = vpack.c.b16 %v721, %v720
  %v846 = vpack.c.b16 %v723, %v722
  %v847 = vpack.c.b16 %v725, %v724
  %v848 = vpack.c.b16 %v727, %v726
  %v849 = vpack.c.b16 %v729, %v728
  %v850 = vpack.c.b16 %v731, %v730
  %v851 = vpack.c.b16 %v733, %v732
  %v852 = vpack.c.b16 %v735, %v734
  %v853 = vpack.c.b16 %v737, %v736
  %v854 = vpack.c.b16 %v739, %v738
  %v855 = vpack.c.b16 %v741, %v740
  %v856 = vpack.c.b16 %v743, %v742
  %v857 = vpack.c.b16 %v745, %v744
  %970 = vmatpush.bf16.msra.mxu0 %v753
  %971 = vmatpush.bf16.msra.mxu0 %v752
  %972 = vmatpush.bf16.msra.mxu0 %v751
  %973 = vmatpush.bf16.msra.mxu0 %v750
  %974 = vmatpush.bf16.msra.mxu0 %v749
  %975 = vmatpush.bf16.msra.mxu0 %v748
  %976 = vmatpush.bf16.msra.mxu0 %v747
  %977 = vmatpush.bf16.msra.mxu0 %v746
  %978 = vmatmul.bf16.gmra.mxu0 %v270
  %v979 = vpop.f32.mrf.mxu0
  %v980 = vadd.f32 %v247, %v979
  %v981 = vpop.f32.mrf.mxu0
  %982 = vdwg.mxu0
  %983 = vmatpush.bf16.msra.mxu0 %v761
  %984 = vmatpush.bf16.msra.mxu0 %v760
  %985 = vmatpush.bf16.msra.mxu0 %v759
  %986 = vmatpush.bf16.msra.mxu0 %v758
  %987 = vmatpush.bf16.msra.mxu0 %v757
  %988 = vmatpush.bf16.msra.mxu0 %v756
  %989 = vmatpush.bf16.msra.mxu0 %v755
  %990 = vmatpush.bf16.msra.mxu0 %v754
  %991 = vmatmul.bf16.gmra.mxu0 %v271
  %v992 = vpop.f32.mrf.mxu0
  %v993 = vadd.f32 %v980, %v992
  %v994 = vpop.f32.mrf.mxu0
  %995 = vdwg.mxu0
  %996 = vmatpush.bf16.msra.mxu0 %v769
  %997 = vmatpush.bf16.msra.mxu0 %v768
  %998 = vmatpush.bf16.msra.mxu0 %v767
  %999 = vmatpush.bf16.msra.mxu0 %v766
  %1000 = vmatpush.bf16.msra.mxu0 %v765
  %1001 = vmatpush.bf16.msra.mxu0 %v764
  %1002 = vmatpush.bf16.msra.mxu0 %v763
  %1003 = vmatpush.bf16.msra.mxu0 %v762
  %1004 = vmatmul.bf16.gmra.mxu0 %v272
  %v1005 = vpop.f32.mrf.mxu0
  %v1006 = vadd.f32 %v993, %v1005
  %v1007 = vpop.f32.mrf.mxu0
  %1008 = vdwg.mxu0
  %1009 = vmatpush.bf16.msra.mxu0 %v777
  %1010 = vmatpush.bf16.msra.mxu0 %v776
  %1011 = vmatpush.bf16.msra.mxu0 %v775
  %1012 = vmatpush.bf16.msra.mxu0 %v774
  %1013 = vmatpush.bf16.msra.mxu0 %v773
  %1014 = vmatpush.bf16.msra.mxu0 %v772
  %1015 = vmatpush.bf16.msra.mxu0 %v771
  %1016 = vmatpush.bf16.msra.mxu0 %v770
  %1017 = vmatmul.bf16.gmra.mxu0 %v273
  %v1018 = vpop.f32.mrf.mxu0
  %v1019 = vadd.f32 %v1006, %v1018
  %v1020 = vpop.f32.mrf.mxu0
  %1021 = vdwg.mxu0
  %1022 = vmatpush.bf16.msra.mxu0 %v785
  %1023 = vmatpush.bf16.msra.mxu0 %v784
  %1024 = vmatpush.bf16.msra.mxu0 %v783
  %1025 = vmatpush.bf16.msra.mxu0 %v782
  %1026 = vmatpush.bf16.msra.mxu0 %v781
  %1027 = vmatpush.bf16.msra.mxu0 %v780
  %1028 = vmatpush.bf16.msra.mxu0 %v779
  %1029 = vmatpush.bf16.msra.mxu0 %v778
  %1030 = vmatmul.bf16.gmra.mxu0 %v274
  %v1031 = vpop.f32.mrf.mxu0
  %v1032 = vadd.f32 %v1019, %v1031
  %v1033 = vpop.f32.mrf.mxu0
  %1034 = vdwg.mxu0
  %1035 = vmatpush.bf16.msra.mxu0 %v793
  %1036 = vmatpush.bf16.msra.mxu0 %v792
  %1037 = vmatpush.bf16.msra.mxu0 %v791
  %1038 = vmatpush.bf16.msra.mxu0 %v790
  %1039 = vmatpush.bf16.msra.mxu0 %v789
  %1040 = vmatpush.bf16.msra.mxu0 %v788
  %1041 = vmatpush.bf16.msra.mxu0 %v787
  %1042 = vmatpush.bf16.msra.mxu0 %v786
  %1043 = vmatmul.bf16.gmra.mxu0 %v275
  %v1044 = vpop.f32.mrf.mxu0
  %v1045 = vadd.f32 %v1032, %v1044
  %v1046 = vpop.f32.mrf.mxu0
  %1047 = vdwg.mxu0
  %1048 = vmatpush.bf16.msra.mxu0 %v801
  %1049 = vmatpush.bf16.msra.mxu0 %v800
  %1050 = vmatpush.bf16.msra.mxu0 %v799
  %1051 = vmatpush.bf16.msra.mxu0 %v798
  %1052 = vmatpush.bf16.msra.mxu0 %v797
  %1053 = vmatpush.bf16.msra.mxu0 %v796
  %1054 = vmatpush.bf16.msra.mxu0 %v795
  %1055 = vmatpush.bf16.msra.mxu0 %v794
  %1056 = vmatmul.bf16.gmra.mxu0 %v276
  %v1057 = vpop.f32.mrf.mxu0
  %v1058 = vadd.f32 %v1045, %v1057
  %v1059 = vpop.f32.mrf.mxu0
  %1060 = vdwg.mxu0
  %1061 = vmatpush.bf16.msra.mxu0 %v809
  %1062 = vmatpush.bf16.msra.mxu0 %v808
  %1063 = vmatpush.bf16.msra.mxu0 %v807
  %1064 = vmatpush.bf16.msra.mxu0 %v806
  %1065 = vmatpush.bf16.msra.mxu0 %v805
  %1066 = vmatpush.bf16.msra.mxu0 %v804
  %1067 = vmatpush.bf16.msra.mxu0 %v803
  %1068 = vmatpush.bf16.msra.mxu0 %v802
  %1069 = vmatmul.bf16.gmra.mxu0 %v277
  %v1070 = vpop.f32.mrf.mxu0
  %v1071 = vadd.f32 %v1058, %v1070
  %v1072 = vpop.f32.mrf.mxu0
  %1073 = vdwg.mxu0
  %1074 = vmatpush.bf16.msra.mxu0 %v817
  %1075 = vmatpush.bf16.msra.mxu0 %v816
  %1076 = vmatpush.bf16.msra.mxu0 %v815
  %1077 = vmatpush.bf16.msra.mxu0 %v814
  %1078 = vmatpush.bf16.msra.mxu0 %v813
  %1079 = vmatpush.bf16.msra.mxu0 %v812
  %1080 = vmatpush.bf16.msra.mxu0 %v811
  %1081 = vmatpush.bf16.msra.mxu0 %v810
  %1082 = vmatmul.bf16.gmra.mxu0 %v278
  %v1083 = vpop.f32.mrf.mxu0
  %v1084 = vadd.f32 %v1071, %v1083
  %v1085 = vpop.f32.mrf.mxu0
  %1086 = vdwg.mxu0
  %1087 = vmatpush.bf16.msra.mxu0 %v825
  %1088 = vmatpush.bf16.msra.mxu0 %v824
  %1089 = vmatpush.bf16.msra.mxu0 %v823
  %1090 = vmatpush.bf16.msra.mxu0 %v822
  %1091 = vmatpush.bf16.msra.mxu0 %v821
  %1092 = vmatpush.bf16.msra.mxu0 %v820
  %1093 = vmatpush.bf16.msra.mxu0 %v819
  %1094 = vmatpush.bf16.msra.mxu0 %v818
  %1095 = vmatmul.bf16.gmra.mxu0 %v279
  %v1096 = vpop.f32.mrf.mxu0
  %v1097 = vadd.f32 %v1084, %v1096
  %v1098 = vpop.f32.mrf.mxu0
  %1099 = vdwg.mxu0
  %1100 = vmatpush.bf16.msra.mxu0 %v833
  %1101 = vmatpush.bf16.msra.mxu0 %v832
  %1102 = vmatpush.bf16.msra.mxu0 %v831
  %1103 = vmatpush.bf16.msra.mxu0 %v830
  %1104 = vmatpush.bf16.msra.mxu0 %v829
  %1105 = vmatpush.bf16.msra.mxu0 %v828
  %1106 = vmatpush.bf16.msra.mxu0 %v827
  %1107 = vmatpush.bf16.msra.mxu0 %v826
  %1108 = vmatmul.bf16.gmra.mxu0 %v280
  %v1109 = vpop.f32.mrf.mxu0
  %v1110 = vadd.f32 %v1097, %v1109
  %v1111 = vpop.f32.mrf.mxu0
  %1112 = vdwg.mxu0
  %1113 = vmatpush.bf16.msra.mxu0 %v841
  %1114 = vmatpush.bf16.msra.mxu0 %v840
  %1115 = vmatpush.bf16.msra.mxu0 %v839
  %1116 = vmatpush.bf16.msra.mxu0 %v838
  %1117 = vmatpush.bf16.msra.mxu0 %v837
  %1118 = vmatpush.bf16.msra.mxu0 %v836
  %1119 = vmatpush.bf16.msra.mxu0 %v835
  %1120 = vmatpush.bf16.msra.mxu0 %v834
  %1121 = vmatmul.bf16.gmra.mxu0 %v281
  %v1122 = vpop.f32.mrf.mxu0
  %v1123 = vadd.f32 %v1110, %v1122
  %v1124 = vpop.f32.mrf.mxu0
  %1125 = vdwg.mxu0
  %1126 = vmatpush.bf16.msra.mxu0 %v849
  %1127 = vmatpush.bf16.msra.mxu0 %v848
  %1128 = vmatpush.bf16.msra.mxu0 %v847
  %1129 = vmatpush.bf16.msra.mxu0 %v846
  %1130 = vmatpush.bf16.msra.mxu0 %v845
  %1131 = vmatpush.bf16.msra.mxu0 %v844
  %1132 = vmatpush.bf16.msra.mxu0 %v843
  %1133 = vmatpush.bf16.msra.mxu0 %v842
  %1134 = vmatmul.bf16.gmra.mxu0 %v282
  %v1135 = vpop.f32.mrf.mxu0
  %v1136 = vadd.f32 %v1123, %v1135
  %v1137 = vpop.f32.mrf.mxu0
  %1138 = vdwg.mxu0
  %1139 = vmatpush.bf16.msra.mxu0 %v857
  %1140 = vmatpush.bf16.msra.mxu0 %v856
  %1141 = vmatpush.bf16.msra.mxu0 %v855
  %1142 = vmatpush.bf16.msra.mxu0 %v854
  %1143 = vmatpush.bf16.msra.mxu0 %v853
  %1144 = vmatpush.bf16.msra.mxu0 %v852
  %1145 = vmatpush.bf16.msra.mxu0 %v851
  %1146 = vmatpush.bf16.msra.mxu0 %v850
  %1147 = vmatmul.bf16.gmra.mxu0 %v283
  %v1148 = vpop.f32.mrf.mxu0
  %v1149 = vadd.f32 %v1136, %v1148
  %v1150 = vpop.f32.mrf.mxu0
  %1151 = vdwg.mxu0
  %v1152 = vmax.f32 %v1149, 0.0
  %v1153 = vpack.c.bf16 %v1152, %v1152
  %1154 = vst [vmem:[%s3] sm:$0xf] %v1153
  // Predicated region
  $region14: #{_lambda_.24} parent=0 // pred_check
    _
  $region15: #{_lambda_.24} parent=0 // pred_check_branch
    %1156 = sbr.rel (0) target = $region17
  $region16: #{_lambda_.24} parent=0 // pred_region
    _
  $region17: #{_lambda_.24} parent=0 // pred_fallthru
    _
  // Predicated region
  $region18: #{_lambda_.24} parent=0 // pred_check
    _
  $region19: #{_lambda_.24} parent=0 // pred_check_branch
    %1158 = sbr.rel (0) target = $region21
  $region20: #{_lambda_.24} parent=0 // pred_region
    _
  $region21: #{_lambda_.24} parent=0 // pred_fallthru
    _

</llo_original>
